<compile_context>
chip_gen: v6e
topology: v6e:2x2x1
jax: 0.10.0
libtpu: 0.0.40
codegen_flags: <defaults>
</compile_context>

<pallas_src>
import functools

import jax
import jax.numpy as jnp
from jax import lax
from jax.experimental import pallas as pl
from jax.experimental.pallas import tpu as pltpu

_SQRT_HALF = 0.7071067811865476
_GN_EPS = 1e-5


# ----------------------------------------------------------------------------
# In-kernel helpers (all operate on (C, H*W) lane-dense f32 tiles)
# ----------------------------------------------------------------------------
def _gelu(x):
    # Exact (erf-based) GELU matching torch.nn.GELU() default, with erf
    # evaluated via the Abramowitz & Stegun 7.1.26 rational approximation
    # (|err| < 1.5e-7, i.e. fp32-level).  The divide rides the EUP slot via
    # pl.reciprocal(approx=False); exp is already EUP.
    a1, a2, a3, a4, a5 = (0.254829592, -0.284496736, 1.421413741,
                          -1.453152027, 1.061405429)
    p = 0.3275911
    u = x * _SQRT_HALF
    sgn = jnp.where(u >= 0.0, 1.0, -1.0)
    au = jnp.abs(u)
    t = pl.reciprocal(1.0 + p * au, approx=False)
    poly = ((((a5 * t + a4) * t + a3) * t + a2) * t + a1) * t
    erf = sgn * (1.0 - poly * jnp.exp(-au * au))
    return 0.5 * x * (1.0 + erf)


def _group_norm(x, gamma, beta):
    # nn.GroupNorm(1, C): per-sample stats over all of (C, H*W), biased
    # variance, eps=1e-5, per-channel affine.  gamma/beta are (C, 1).
    n = float(x.shape[0] * x.shape[1])
    s = jnp.sum(x, axis=1, keepdims=True)             # (C, 1)  lane reduce (XLU)
    mean = jnp.sum(s, axis=0, keepdims=True) / n      # (1, 1)  sublane reduce
    d = x - mean
    s2 = jnp.sum(d * d, axis=1, keepdims=True)
    var = jnp.sum(s2, axis=0, keepdims=True) / n
    return d * lax.rsqrt(var + _GN_EPS) * gamma + beta


def _circular_shift(x, sh, sw, H, W, colw):
    """tap[c, h*W + w] = x[c, ((h+sh) % H)*W + ((w+sw) % W)] for static sh, sw.

    x is (C, H*W) with the flattened spatial index on the lane axis: the H
    shift is an exact lane rotation, and the W shift is a lane rotation plus a
    wrap-fix select on the |sw| edge columns of each row (needs |sw| < W,
    |sh| < H).  pltpu.roll follows jnp.roll semantics:
    roll(x, r)[j] == x[(j - r) % N].
    """
    HW = H * W
    base = (-(sh * W + sw)) % HW
    main = pltpu.roll(x, base, axis=1) if base else x
    if sw == 0:
        return main
    if sw > 0:
        alt = pltpu.roll(x, (base + W) % HW, axis=1)
        return jnp.where(colw < W - sw, main, alt)
    alt = pltpu.roll(x, (base - W) % HW, axis=1)
    return jnp.where(colw >= -sw, main, alt)


def _conv3x3_circular(x, w_flat, b, dilation, H, W, colw, apply_gelu):
    # Build the 9-tap im2col matrix (9*C, H*W) from the VMEM-resident
    # activation (XLU rolls + aligned sublane concat) and contract it in a
    # single MXU matmul with K = 9*C.  Tap ordering: k = ky*3 + kx, rows
    # [k*C, (k+1)*C) hold the input shifted by ((ky-1)*d, (kx-1)*d).
    taps = []
    for ky in range(3):
        for kx in range(3):
            taps.append(_circular_shift(x, (ky - 1) * dilation,
                                        (kx - 1) * dilation, H, W, colw))
    g = jnp.concatenate(taps, axis=0)                           # (9C, HW)
    y = jnp.dot(w_flat, g, preferred_element_type=jnp.float32) + b
    return _gelu(y) if apply_gelu else y


# ----------------------------------------------------------------------------
# Fused whole-model kernel: one grid step == one sample, all in VMEM
# ----------------------------------------------------------------------------
def _simple_cnn_kernel(*refs, n_block, dilation, H, W):
    # refs = [z, in_w, in_b, (12 weight refs per block)..., out_gn_g, out_gn_b,
    #         out_w, out_b, o]
    z_ref, o_ref = refs[0], refs[-1]
    wr = refs[1:-1]

    HW = H * W
    C = wr[0].shape[0]
    # Column (w) index of every flattened spatial position; hoisted and reused
    # by every conv's wrap-fix select.
    colw = lax.broadcasted_iota(jnp.int32, (C, HW), 1) % W

    z = z_ref[0]                                                # (latent, HW)

    i = 0
    in_w, in_b = wr[i][...], wr[i + 1][...]
    i += 2
    x = jnp.dot(in_w, z, preferred_element_type=jnp.float32) + in_b   # (C, HW)

    for _ in range(n_block):
        (gn1_g, gn1_b, c1_w, c1_b, c2_w, c2_b, c3_w, c3_b,
         gn2_g, gn2_b, f1_w, f2_w) = [wr[i + k][...] for k in range(12)]
        i += 12

        # conv branch: GN -> conv3 -> GELU -> conv3(dilated) -> GELU -> conv3
        h = _group_norm(x, gn1_g, gn1_b)
        h = _conv3x3_circular(h, c1_w, c1_b, 1, H, W, colw, True)
        h = _conv3x3_circular(h, c2_w, c2_b, dilation, H, W, colw, True)
        h = _conv3x3_circular(h, c3_w, c3_b, 1, H, W, colw, False)
        x = x + h

        # ffn branch: GN -> 1x1 (no bias) -> GELU -> 1x1 (no bias)
        f = _group_norm(x, gn2_g, gn2_b)
        f = _gelu(jnp.dot(f1_w, f, preferred_element_type=jnp.float32))
        f = jnp.dot(f2_w, f, preferred_element_type=jnp.float32)
        x = x + f

    # TODO(synk): the custom `GroupNorm(prop_n_embd)` class used in out_proj
    # was not provided; interpreted as nn.GroupNorm(1, prop_n_embd), consistent
    # with its use inside DilatedResidualBlock.
    out_gn_g, out_gn_b = wr[i][...], wr[i + 1][...]
    out_w, out_b = wr[i + 2][...], wr[i + 3][...]
    y = _group_norm(x, out_gn_g, out_gn_b)
    y = jnp.dot(out_w, y, preferred_element_type=jnp.float32) + out_b  # (latent, HW)
    o_ref[0] = y


# ----------------------------------------------------------------------------
# Wrapper
# ----------------------------------------------------------------------------
def simple_cnn_forward(z_nchw, params, dilation=2):
    B, latent, H, W = z_nchw.shape
    HW = H * W
    assert 0 < dilation < min(H, W), "shift logic assumes dilation < H, W"
    assert HW % 128 == 0, "lane-dense layout wants H*W to be a multiple of 128"

    # NCHW -> (B, C, H*W): a free reshape; the lane dim is the dense spatial axis.
    z3 = z_nchw.reshape(B, latent, HW).astype(jnp.float32)

    flat_w = [params["in_w"], params["in_b"]]
    for bp in params["blocks"]:
        flat_w += [bp["gn1_g"], bp["gn1_b"], bp["conv1_w"], bp["conv1_b"],
                   bp["conv2_w"], bp["conv2_b"], bp["conv3_w"], bp["conv3_b"],
                   bp["gn2_g"], bp["gn2_b"], bp["ffn1_w"], bp["ffn2_w"]]
    flat_w += [params["out_gn_g"], params["out_gn_b"],
               params["out_w"], params["out_b"]]

    kernel = functools.partial(_simple_cnn_kernel,
                               n_block=len(params["blocks"]),
                               dilation=dilation, H=H, W=W)

    in_specs = [pl.BlockSpec((1, latent, HW), lambda b: (b, 0, 0))]
    # All weights are rank-2, whole-array resident in VMEM (constant block
    # index => fetched once across the grid).
    in_specs += [pl.BlockSpec(w.shape, lambda b: (0, 0)) for w in flat_w]

    out = pl.pallas_call(
        kernel,
        out_shape=jax.ShapeDtypeStruct((B, latent, HW), jnp.float32),
        grid=(B,),
        in_specs=in_specs,
        out_specs=pl.BlockSpec((1, latent, HW), lambda b: (b, 0, 0)),
        compiler_params=pltpu.CompilerParams(
            dimension_semantics=("parallel",)),
    )(z3, *flat_w)
    return out.reshape(B, latent, H, W)


# ----------------------------------------------------------------------------
# Deterministic parameter init (synthetic; kernel-friendly layouts)
#   in_w   : (C, latent)      == PyTorch in_proj.weight[:, :, 0, 0]
#   in_b   : (C, 1)
#   convK_w: (C, 9*C)         column (ky*3+kx)*C + cin  <->  PyTorch
#                             weight[cout, cin, ky, kx] (i.e. permute(0,2,3,1))
#   convK_b: (C, 1)
#   ffnK_w : (C, C)           == PyTorch weight[:, :, 0, 0] (bias=False)
#   gn g/b : (C, 1)
#   out_w  : (latent, C), out_b: (latent, 1)
# ----------------------------------------------------------------------------
def init_params(key, latent_dim, prop_n_embd, prop_n_block):
    keys = jax.random.split(key, 4 + prop_n_block * 8)
    ki = iter(range(len(keys)))

    def nrm(shape, scale=0.1):
        return scale * jax.random.normal(keys[next(ki)], shape, jnp.float32)

    C = prop_n_embd
    params = {
        "in_w": nrm((C, latent_dim)),
        "in_b": nrm((C, 1), 0.01),
        "out_gn_g": jnp.ones((C, 1), jnp.float32),
        "out_gn_b": jnp.zeros((C, 1), jnp.float32),
        "out_w": nrm((latent_dim, C)),
        "out_b": nrm((latent_dim, 1), 0.01),
        "blocks": [],
    }
    for _ in range(prop_n_block):
        blk = {
            "gn1_g": jnp.ones((C, 1), jnp.float32),
            "gn1_b": jnp.zeros((C, 1), jnp.float32),
            "conv1_w": nrm((C, 9 * C)),
            "conv1_b": nrm((C, 1), 0.01),
            "conv2_w": nrm((C, 9 * C)),
            "conv2_b": nrm((C, 1), 0.01),
            "conv3_w": nrm((C, 9 * C)),
            "conv3_b": nrm((C, 1), 0.01),
            "gn2_g": jnp.ones((C, 1), jnp.float32),
            "gn2_b": jnp.zeros((C, 1), jnp.float32),
            "ffn1_w": nrm((C, C)),
            "ffn2_w": nrm((C, C)),
        }
        params["blocks"].append(blk)
    return params


if __name__ == "__main__":
    B, latent_dim, H, W = 2, 4, 16, 16
    prop_n_embd, prop_n_block, dilation = 32, 2, 2

    key = jax.random.PRNGKey(0)
    kz, kp = jax.random.split(key)
    z = jax.random.normal(kz, (B, latent_dim, H, W), jnp.float32)
    params = init_params(kp, latent_dim, prop_n_embd, prop_n_block)

    fwd = jax.jit(functools.partial(simple_cnn_forward, dilation=dilation))
    out = fwd(z, params)
    jax.block_until_ready(out)
    assert out.shape == (B, latent_dim, H, W)
    assert jnp.all(jnp.isfinite(out))
    print("KERNEL_OK")
</pallas_src>

<mosaic_0001>
module attributes {stable_mosaic.version = 11 : i64} {
  func.func @_simple_cnn_kernel(%arg0: i32, %arg1: memref<1x4x256xf32, #tpu.memory_space<vmem>>, %arg2: memref<32x4xf32, #tpu.memory_space<vmem>>, %arg3: memref<32x1xf32, #tpu.memory_space<vmem>>, %arg4: memref<32x1xf32, #tpu.memory_space<vmem>>, %arg5: memref<32x1xf32, #tpu.memory_space<vmem>>, %arg6: memref<32x288xf32, #tpu.memory_space<vmem>>, %arg7: memref<32x1xf32, #tpu.memory_space<vmem>>, %arg8: memref<32x288xf32, #tpu.memory_space<vmem>>, %arg9: memref<32x1xf32, #tpu.memory_space<vmem>>, %arg10: memref<32x288xf32, #tpu.memory_space<vmem>>, %arg11: memref<32x1xf32, #tpu.memory_space<vmem>>, %arg12: memref<32x1xf32, #tpu.memory_space<vmem>>, %arg13: memref<32x1xf32, #tpu.memory_space<vmem>>, %arg14: memref<32x32xf32, #tpu.memory_space<vmem>>, %arg15: memref<32x32xf32, #tpu.memory_space<vmem>>, %arg16: memref<32x1xf32, #tpu.memory_space<vmem>>, %arg17: memref<32x1xf32, #tpu.memory_space<vmem>>, %arg18: memref<32x288xf32, #tpu.memory_space<vmem>>, %arg19: memref<32x1xf32, #tpu.memory_space<vmem>>, %arg20: memref<32x288xf32, #tpu.memory_space<vmem>>, %arg21: memref<32x1xf32, #tpu.memory_space<vmem>>, %arg22: memref<32x288xf32, #tpu.memory_space<vmem>>, %arg23: memref<32x1xf32, #tpu.memory_space<vmem>>, %arg24: memref<32x1xf32, #tpu.memory_space<vmem>>, %arg25: memref<32x1xf32, #tpu.memory_space<vmem>>, %arg26: memref<32x32xf32, #tpu.memory_space<vmem>>, %arg27: memref<32x32xf32, #tpu.memory_space<vmem>>, %arg28: memref<32x1xf32, #tpu.memory_space<vmem>>, %arg29: memref<32x1xf32, #tpu.memory_space<vmem>>, %arg30: memref<4x32xf32, #tpu.memory_space<vmem>>, %arg31: memref<4x1xf32, #tpu.memory_space<vmem>>, %arg32: memref<1x4x256xf32, #tpu.memory_space<vmem>>) attributes {dimension_semantics = [#tpu.dimension_semantics<parallel>], iteration_bounds = array<i64: 2>, scalar_prefetch = 0 : i64, scratch_operands = 0 : i64, tpu.core_type = #tpu.core_type<tc>, window_params = [{transform_indices = @transform_0, window_bounds = array<i64: 1, 4, 256>}, {pipeline_mode = #tpu.pipeline_mode<synchronous>, transform_indices = @transform_1, window_bounds = array<i64: 32, 4>}, {pipeline_mode = #tpu.pipeline_mode<synchronous>, transform_indices = @transform_2, window_bounds = array<i64: 32, 1>}, {pipeline_mode = #tpu.pipeline_mode<synchronous>, transform_indices = @transform_3, window_bounds = array<i64: 32, 1>}, {pipeline_mode = #tpu.pipeline_mode<synchronous>, transform_indices = @transform_4, window_bounds = array<i64: 32, 1>}, {pipeline_mode = #tpu.pipeline_mode<synchronous>, transform_indices = @transform_5, window_bounds = array<i64: 32, 288>}, {pipeline_mode = #tpu.pipeline_mode<synchronous>, transform_indices = @transform_6, window_bounds = array<i64: 32, 1>}, {pipeline_mode = #tpu.pipeline_mode<synchronous>, transform_indices = @transform_7, window_bounds = array<i64: 32, 288>}, {pipeline_mode = #tpu.pipeline_mode<synchronous>, transform_indices = @transform_8, window_bounds = array<i64: 32, 1>}, {pipeline_mode = #tpu.pipeline_mode<synchronous>, transform_indices = @transform_9, window_bounds = array<i64: 32, 288>}, {pipeline_mode = #tpu.pipeline_mode<synchronous>, transform_indices = @transform_10, window_bounds = array<i64: 32, 1>}, {pipeline_mode = #tpu.pipeline_mode<synchronous>, transform_indices = @transform_11, window_bounds = array<i64: 32, 1>}, {pipeline_mode = #tpu.pipeline_mode<synchronous>, transform_indices = @transform_12, window_bounds = array<i64: 32, 1>}, {pipeline_mode = #tpu.pipeline_mode<synchronous>, transform_indices = @transform_13, window_bounds = array<i64: 32, 32>}, {pipeline_mode = #tpu.pipeline_mode<synchronous>, transform_indices = @transform_14, window_bounds = array<i64: 32, 32>}, {pipeline_mode = #tpu.pipeline_mode<synchronous>, transform_indices = @transform_15, window_bounds = array<i64: 32, 1>}, {pipeline_mode = #tpu.pipeline_mode<synchronous>, transform_indices = @transform_16, window_bounds = array<i64: 32, 1>}, {pipeline_mode = #tpu.pipeline_mode<synchronous>, transform_indices = @transform_17, window_bounds = array<i64: 32, 288>}, {pipeline_mode = #tpu.pipeline_mode<synchronous>, transform_indices = @transform_18, window_bounds = array<i64: 32, 1>}, {pipeline_mode = #tpu.pipeline_mode<synchronous>, transform_indices = @transform_19, window_bounds = array<i64: 32, 288>}, {pipeline_mode = #tpu.pipeline_mode<synchronous>, transform_indices = @transform_20, window_bounds = array<i64: 32, 1>}, {pipeline_mode = #tpu.pipeline_mode<synchronous>, transform_indices = @transform_21, window_bounds = array<i64: 32, 288>}, {pipeline_mode = #tpu.pipeline_mode<synchronous>, transform_indices = @transform_22, window_bounds = array<i64: 32, 1>}, {pipeline_mode = #tpu.pipeline_mode<synchronous>, transform_indices = @transform_23, window_bounds = array<i64: 32, 1>}, {pipeline_mode = #tpu.pipeline_mode<synchronous>, transform_indices = @transform_24, window_bounds = array<i64: 32, 1>}, {pipeline_mode = #tpu.pipeline_mode<synchronous>, transform_indices = @transform_25, window_bounds = array<i64: 32, 32>}, {pipeline_mode = #tpu.pipeline_mode<synchronous>, transform_indices = @transform_26, window_bounds = array<i64: 32, 32>}, {pipeline_mode = #tpu.pipeline_mode<synchronous>, transform_indices = @transform_27, window_bounds = array<i64: 32, 1>}, {pipeline_mode = #tpu.pipeline_mode<synchronous>, transform_indices = @transform_28, window_bounds = array<i64: 32, 1>}, {pipeline_mode = #tpu.pipeline_mode<synchronous>, transform_indices = @transform_29, window_bounds = array<i64: 4, 32>}, {pipeline_mode = #tpu.pipeline_mode<synchronous>, transform_indices = @transform_30, window_bounds = array<i64: 4, 1>}, {transform_indices = @transform_31, window_bounds = array<i64: 1, 4, 256>}]} {
    %0 = tpu.iota {dimensions = array<i32: 1>} : vector<32x256xi32>
    %c16_i32 = arith.constant 16 : i32
    %c0_i32 = arith.constant 0 : i32
    %1 = arith.cmpi eq, %c16_i32, %c0_i32 : i32
    %c1_i32 = arith.constant 1 : i32
    %2 = arith.select %1, %c1_i32, %c16_i32 : i32
    %3 = vector.broadcast %2 : i32 to vector<32x256xi32>
    %4 = arith.remsi %0, %3 : vector<32x256xi32>
    %c0_i32_0 = arith.constant 0 : i32
    %5 = vector.broadcast %c0_i32_0 : i32 to vector<32x256xi32>
    %6 = arith.cmpi ne, %4, %5 : vector<32x256xi32>
    %c0_i32_1 = arith.constant 0 : i32
    %7 = vector.broadcast %c0_i32_1 : i32 to vector<32x256xi32>
    %8 = arith.cmpi slt, %4, %7 : vector<32x256xi32>
    %c0_i32_2 = arith.constant 0 : i32
    %9 = arith.cmpi slt, %2, %c0_i32_2 : i32
    %10 = vector.broadcast %9 : i1 to vector<32x256xi1>
    %11 = vector.broadcast %10 : vector<32x256xi1> to vector<32x256xi1>
    %12 = arith.xori %8, %11 : vector<32x256xi1>
    %13 = arith.andi %12, %6 : vector<32x256xi1>
    %14 = vector.broadcast %2 : i32 to vector<32x256xi32>
    %15 = arith.addi %4, %14 : vector<32x256xi32>
    %16 = arith.select %13, %15, %4 : vector<32x256xi1>, vector<32x256xi32>
    %c0 = arith.constant 0 : index
    %c0_3 = arith.constant 0 : index
    %c0_4 = arith.constant 0 : index
    %17 = vector.load %arg1[%c0, %c0_3, %c0_4] : memref<1x4x256xf32, #tpu.memory_space<vmem>>, vector<1x4x256xf32>
    %18 = vector.shape_cast %17 : vector<1x4x256xf32> to vector<4x256xf32>
    %c0_5 = arith.constant 0 : index
    %c0_6 = arith.constant 0 : index
    %19 = vector.load %arg2[%c0_5, %c0_6] : memref<32x4xf32, #tpu.memory_space<vmem>>, vector<32x4xf32>
    %c0_7 = arith.constant 0 : index
    %c0_8 = arith.constant 0 : index
    %20 = vector.load %arg3[%c0_7, %c0_8] : memref<32x1xf32, #tpu.memory_space<vmem>>, vector<32x1xf32>
    %cst = arith.constant dense<0.000000e+00> : vector<32x256xf32>
    %21 = tpu.matmul %19, %18, %cst {dimension_numbers = #tpu.dot_dimension_numbers<[1], [0], [0], [1], [0, 0, 1, 1], [], []>} : vector<32x4xf32>, vector<4x256xf32>, vector<32x256xf32> -> vector<32x256xf32>
    %22 = vector.broadcast %20 : vector<32x1xf32> to vector<32x256xf32>
    %23 = arith.addf %21, %22 : vector<32x256xf32>
    %c0_9 = arith.constant 0 : index
    %c0_10 = arith.constant 0 : index
    %24 = vector.load %arg4[%c0_9, %c0_10] : memref<32x1xf32, #tpu.memory_space<vmem>>, vector<32x1xf32>
    %c0_11 = arith.constant 0 : index
    %c0_12 = arith.constant 0 : index
    %25 = vector.load %arg5[%c0_11, %c0_12] : memref<32x1xf32, #tpu.memory_space<vmem>>, vector<32x1xf32>
    %c0_13 = arith.constant 0 : index
    %c0_14 = arith.constant 0 : index
    %26 = vector.load %arg6[%c0_13, %c0_14] : memref<32x288xf32, #tpu.memory_space<vmem>>, vector<32x288xf32>
    %c0_15 = arith.constant 0 : index
    %c0_16 = arith.constant 0 : index
    %27 = vector.load %arg7[%c0_15, %c0_16] : memref<32x1xf32, #tpu.memory_space<vmem>>, vector<32x1xf32>
    %c0_17 = arith.constant 0 : index
    %c0_18 = arith.constant 0 : index
    %28 = vector.load %arg8[%c0_17, %c0_18] : memref<32x288xf32, #tpu.memory_space<vmem>>, vector<32x288xf32>
    %c0_19 = arith.constant 0 : index
    %c0_20 = arith.constant 0 : index
    %29 = vector.load %arg9[%c0_19, %c0_20] : memref<32x1xf32, #tpu.memory_space<vmem>>, vector<32x1xf32>
    %c0_21 = arith.constant 0 : index
    %c0_22 = arith.constant 0 : index
    %30 = vector.load %arg10[%c0_21, %c0_22] : memref<32x288xf32, #tpu.memory_space<vmem>>, vector<32x288xf32>
    %c0_23 = arith.constant 0 : index
    %c0_24 = arith.constant 0 : index
    %31 = vector.load %arg11[%c0_23, %c0_24] : memref<32x1xf32, #tpu.memory_space<vmem>>, vector<32x1xf32>
    %c0_25 = arith.constant 0 : index
    %c0_26 = arith.constant 0 : index
    %32 = vector.load %arg12[%c0_25, %c0_26] : memref<32x1xf32, #tpu.memory_space<vmem>>, vector<32x1xf32>
    %c0_27 = arith.constant 0 : index
    %c0_28 = arith.constant 0 : index
    %33 = vector.load %arg13[%c0_27, %c0_28] : memref<32x1xf32, #tpu.memory_space<vmem>>, vector<32x1xf32>
    %c0_29 = arith.constant 0 : index
    %c0_30 = arith.constant 0 : index
    %34 = vector.load %arg14[%c0_29, %c0_30] : memref<32x32xf32, #tpu.memory_space<vmem>>, vector<32x32xf32>
    %c0_31 = arith.constant 0 : index
    %c0_32 = arith.constant 0 : index
    %35 = vector.load %arg15[%c0_31, %c0_32] : memref<32x32xf32, #tpu.memory_space<vmem>>, vector<32x32xf32>
    %cst_33 = arith.constant dense<0.000000e+00> : vector<32xf32>
    %36 = vector.multi_reduction <add>, %23, %cst_33 [1] : vector<32x256xf32> to vector<32xf32>
    %37 = vector.shape_cast %36 : vector<32xf32> to vector<32x1xf32>
    %cst_34 = arith.constant dense<0.000000e+00> : vector<1xf32>
    %38 = vector.multi_reduction <add>, %37, %cst_34 [0] : vector<32x1xf32> to vector<1xf32>
    %39 = vector.shape_cast %38 : vector<1xf32> to vector<1x1xf32>
    %cst_35 = arith.constant 8.192000e+03 : f32
    %40 = vector.broadcast %cst_35 : f32 to vector<1x1xf32>
    %41 = arith.divf %39, %40 : vector<1x1xf32>
    %42 = vector.broadcast %41 : vector<1x1xf32> to vector<32x256xf32>
    %43 = arith.subf %23, %42 : vector<32x256xf32>
    %44 = arith.mulf %43, %43 : vector<32x256xf32>
    %cst_36 = arith.constant dense<0.000000e+00> : vector<32xf32>
    %45 = vector.multi_reduction <add>, %44, %cst_36 [1] : vector<32x256xf32> to vector<32xf32>
    %46 = vector.shape_cast %45 : vector<32xf32> to vector<32x1xf32>
    %cst_37 = arith.constant dense<0.000000e+00> : vector<1xf32>
    %47 = vector.multi_reduction <add>, %46, %cst_37 [0] : vector<32x1xf32> to vector<1xf32>
    %48 = vector.shape_cast %47 : vector<1xf32> to vector<1x1xf32>
    %cst_38 = arith.constant 8.192000e+03 : f32
    %49 = vector.broadcast %cst_38 : f32 to vector<1x1xf32>
    %50 = arith.divf %48, %49 : vector<1x1xf32>
    %cst_39 = arith.constant 9.99999974E-6 : f32
    %51 = vector.broadcast %cst_39 : f32 to vector<1x1xf32>
    %52 = arith.addf %50, %51 : vector<1x1xf32>
    %53 = math.rsqrt %52 : vector<1x1xf32>
    %54 = vector.broadcast %53 : vector<1x1xf32> to vector<32x256xf32>
    %55 = arith.mulf %43, %54 : vector<32x256xf32>
    %56 = vector.broadcast %24 : vector<32x1xf32> to vector<32x256xf32>
    %57 = arith.mulf %55, %56 : vector<32x256xf32>
    %58 = vector.broadcast %25 : vector<32x1xf32> to vector<32x256xf32>
    %59 = arith.addf %57, %58 : vector<32x256xf32>
    %c17_i32 = arith.constant 17 : i32
    %60 = tpu.dynamic_rotate %59 by %c17_i32 dim 1 : vector<32x256xf32>, i32 -> vector<32x256xf32>
    %c1_i32_40 = arith.constant 1 : i32
    %61 = tpu.dynamic_rotate %59 by %c1_i32_40 dim 1 : vector<32x256xf32>, i32 -> vector<32x256xf32>
    %c1_i32_41 = arith.constant 1 : i32
    %62 = vector.broadcast %c1_i32_41 : i32 to vector<32x256xi32>
    %63 = arith.cmpi sge, %16, %62 : vector<32x256xi32>
    %64 = arith.select %63, %60, %61 : vector<32x256xi1>, vector<32x256xf32>
    %c16_i32_42 = arith.constant 16 : i32
    %65 = tpu.dynamic_rotate %59 by %c16_i32_42 dim 1 : vector<32x256xf32>, i32 -> vector<32x256xf32>
    %c15_i32 = arith.constant 15 : i32
    %66 = tpu.dynamic_rotate %59 by %c15_i32 dim 1 : vector<32x256xf32>, i32 -> vector<32x256xf32>
    %c31_i32 = arith.constant 31 : i32
    %67 = tpu.dynamic_rotate %59 by %c31_i32 dim 1 : vector<32x256xf32>, i32 -> vector<32x256xf32>
    %c15_i32_43 = arith.constant 15 : i32
    %68 = vector.broadcast %c15_i32_43 : i32 to vector<32x256xi32>
    %69 = arith.cmpi slt, %16, %68 : vector<32x256xi32>
    %70 = arith.select %69, %66, %67 : vector<32x256xi1>, vector<32x256xf32>
    %c1_i32_44 = arith.constant 1 : i32
    %71 = tpu.dynamic_rotate %59 by %c1_i32_44 dim 1 : vector<32x256xf32>, i32 -> vector<32x256xf32>
    %c241_i32 = arith.constant 241 : i32
    %72 = tpu.dynamic_rotate %59 by %c241_i32 dim 1 : vector<32x256xf32>, i32 -> vector<32x256xf32>
    %c1_i32_45 = arith.constant 1 : i32
    %73 = vector.broadcast %c1_i32_45 : i32 to vector<32x256xi32>
    %74 = arith.cmpi sge, %16, %73 : vector<32x256xi32>
    %75 = arith.select %74, %71, %72 : vector<32x256xi1>, vector<32x256xf32>
    %c255_i32 = arith.constant 255 : i32
    %76 = tpu.dynamic_rotate %59 by %c255_i32 dim 1 : vector<32x256xf32>, i32 -> vector<32x256xf32>
    %c15_i32_46 = arith.constant 15 : i32
    %77 = tpu.dynamic_rotate %59 by %c15_i32_46 dim 1 : vector<32x256xf32>, i32 -> vector<32x256xf32>
    %c15_i32_47 = arith.constant 15 : i32
    %78 = vector.broadcast %c15_i32_47 : i32 to vector<32x256xi32>
    %79 = arith.cmpi slt, %16, %78 : vector<32x256xi32>
    %80 = arith.select %79, %76, %77 : vector<32x256xi1>, vector<32x256xf32>
    %c241_i32_48 = arith.constant 241 : i32
    %81 = tpu.dynamic_rotate %59 by %c241_i32_48 dim 1 : vector<32x256xf32>, i32 -> vector<32x256xf32>
    %c225_i32 = arith.constant 225 : i32
    %82 = tpu.dynamic_rotate %59 by %c225_i32 dim 1 : vector<32x256xf32>, i32 -> vector<32x256xf32>
    %c1_i32_49 = arith.constant 1 : i32
    %83 = vector.broadcast %c1_i32_49 : i32 to vector<32x256xi32>
    %84 = arith.cmpi sge, %16, %83 : vector<32x256xi32>
    %85 = arith.select %84, %81, %82 : vector<32x256xi1>, vector<32x256xf32>
    %c240_i32 = arith.constant 240 : i32
    %86 = tpu.dynamic_rotate %59 by %c240_i32 dim 1 : vector<32x256xf32>, i32 -> vector<32x256xf32>
    %c239_i32 = arith.constant 239 : i32
    %87 = tpu.dynamic_rotate %59 by %c239_i32 dim 1 : vector<32x256xf32>, i32 -> vector<32x256xf32>
    %c255_i32_50 = arith.constant 255 : i32
    %88 = tpu.dynamic_rotate %59 by %c255_i32_50 dim 1 : vector<32x256xf32>, i32 -> vector<32x256xf32>
    %c15_i32_51 = arith.constant 15 : i32
    %89 = vector.broadcast %c15_i32_51 : i32 to vector<32x256xi32>
    %90 = arith.cmpi slt, %16, %89 : vector<32x256xi32>
    %91 = arith.select %90, %87, %88 : vector<32x256xi1>, vector<32x256xf32>
    %92 = tpu.concatenate %64, %65, %70, %75, %59, %80, %85, %86, %91 in 0 : vector<32x256xf32>, vector<32x256xf32>, vector<32x256xf32>, vector<32x256xf32>, vector<32x256xf32>, vector<32x256xf32>, vector<32x256xf32>, vector<32x256xf32>, vector<32x256xf32> -> vector<288x256xf32>
    %cst_52 = arith.constant dense<0.000000e+00> : vector<32x256xf32>
    %93 = tpu.matmul %26, %92, %cst_52 {dimension_numbers = #tpu.dot_dimension_numbers<[1], [0], [0], [1], [0, 0, 1, 1], [], []>} : vector<32x288xf32>, vector<288x256xf32>, vector<32x256xf32> -> vector<32x256xf32>
    %94 = vector.broadcast %27 : vector<32x1xf32> to vector<32x256xf32>
    %95 = arith.addf %93, %94 : vector<32x256xf32>
    %cst_53 = arith.constant 0.707106769 : f32
    %96 = vector.broadcast %cst_53 : f32 to vector<32x256xf32>
    %97 = arith.mulf %95, %96 : vector<32x256xf32>
    %cst_54 = arith.constant 0.000000e+00 : f32
    %98 = vector.broadcast %cst_54 : f32 to vector<32x256xf32>
    %99 = arith.cmpf oge, %97, %98 : vector<32x256xf32>
    %cst_55 = arith.constant 1.000000e+00 : f32
    %cst_56 = arith.constant -1.000000e+00 : f32
    %100 = vector.broadcast %cst_55 : f32 to vector<32x256xf32>
    %101 = vector.broadcast %cst_56 : f32 to vector<32x256xf32>
    %102 = arith.select %99, %100, %101 : vector<32x256xi1>, vector<32x256xf32>
    %103 = math.absf %97 : vector<32x256xf32>
    %cst_57 = arith.constant 0.327591091 : f32
    %104 = vector.broadcast %cst_57 : f32 to vector<32x256xf32>
    %105 = arith.mulf %104, %103 : vector<32x256xf32>
    %cst_58 = arith.constant 1.000000e+00 : f32
    %106 = vector.broadcast %cst_58 : f32 to vector<32x256xf32>
    %107 = arith.addf %106, %105 : vector<32x256xf32>
    %108 = tpu.reciprocal %107 : vector<32x256xf32> -> vector<32x256xf32>
    %cst_59 = arith.constant 1.06140542 : f32
    %109 = vector.broadcast %cst_59 : f32 to vector<32x256xf32>
    %110 = arith.mulf %109, %108 : vector<32x256xf32>
    %cst_60 = arith.constant -1.45315206 : f32
    %111 = vector.broadcast %cst_60 : f32 to vector<32x256xf32>
    %112 = arith.addf %110, %111 : vector<32x256xf32>
    %113 = arith.mulf %112, %108 : vector<32x256xf32>
    %cst_61 = arith.constant 1.42141378 : f32
    %114 = vector.broadcast %cst_61 : f32 to vector<32x256xf32>
    %115 = arith.addf %113, %114 : vector<32x256xf32>
    %116 = arith.mulf %115, %108 : vector<32x256xf32>
    %cst_62 = arith.constant -0.284496725 : f32
    %117 = vector.broadcast %cst_62 : f32 to vector<32x256xf32>
    %118 = arith.addf %116, %117 : vector<32x256xf32>
    %119 = arith.mulf %118, %108 : vector<32x256xf32>
    %cst_63 = arith.constant 0.254829586 : f32
    %120 = vector.broadcast %cst_63 : f32 to vector<32x256xf32>
    %121 = arith.addf %119, %120 : vector<32x256xf32>
    %122 = arith.mulf %121, %108 : vector<32x256xf32>
    %cst_64 = arith.constant 0.000000e+00 : f32
    %123 = vector.broadcast %cst_64 : f32 to vector<32x256xf32>
    %124 = arith.subf %123, %103 : vector<32x256xf32>
    %125 = arith.mulf %124, %103 : vector<32x256xf32>
    %126 = math.exp %125 : vector<32x256xf32>
    %127 = arith.mulf %122, %126 : vector<32x256xf32>
    %cst_65 = arith.constant 1.000000e+00 : f32
    %128 = vector.broadcast %cst_65 : f32 to vector<32x256xf32>
    %129 = arith.subf %128, %127 : vector<32x256xf32>
    %130 = arith.mulf %102, %129 : vector<32x256xf32>
    %cst_66 = arith.constant 5.000000e-01 : f32
    %131 = vector.broadcast %cst_66 : f32 to vector<32x256xf32>
    %132 = arith.mulf %131, %95 : vector<32x256xf32>
    %cst_67 = arith.constant 1.000000e+00 : f32
    %133 = vector.broadcast %cst_67 : f32 to vector<32x256xf32>
    %134 = arith.addf %133, %130 : vector<32x256xf32>
    %135 = arith.mulf %132, %134 : vector<32x256xf32>
    %c34_i32 = arith.constant 34 : i32
    %136 = tpu.dynamic_rotate %135 by %c34_i32 dim 1 : vector<32x256xf32>, i32 -> vector<32x256xf32>
    %c18_i32 = arith.constant 18 : i32
    %137 = tpu.dynamic_rotate %135 by %c18_i32 dim 1 : vector<32x256xf32>, i32 -> vector<32x256xf32>
    %c2_i32 = arith.constant 2 : i32
    %138 = vector.broadcast %c2_i32 : i32 to vector<32x256xi32>
    %139 = arith.cmpi sge, %16, %138 : vector<32x256xi32>
    %140 = arith.select %139, %136, %137 : vector<32x256xi1>, vector<32x256xf32>
    %c32_i32 = arith.constant 32 : i32
    %141 = tpu.dynamic_rotate %135 by %c32_i32 dim 1 : vector<32x256xf32>, i32 -> vector<32x256xf32>
    %c30_i32 = arith.constant 30 : i32
    %142 = tpu.dynamic_rotate %135 by %c30_i32 dim 1 : vector<32x256xf32>, i32 -> vector<32x256xf32>
    %c46_i32 = arith.constant 46 : i32
    %143 = tpu.dynamic_rotate %135 by %c46_i32 dim 1 : vector<32x256xf32>, i32 -> vector<32x256xf32>
    %c14_i32 = arith.constant 14 : i32
    %144 = vector.broadcast %c14_i32 : i32 to vector<32x256xi32>
    %145 = arith.cmpi slt, %16, %144 : vector<32x256xi32>
    %146 = arith.select %145, %142, %143 : vector<32x256xi1>, vector<32x256xf32>
    %c2_i32_68 = arith.constant 2 : i32
    %147 = tpu.dynamic_rotate %135 by %c2_i32_68 dim 1 : vector<32x256xf32>, i32 -> vector<32x256xf32>
    %c242_i32 = arith.constant 242 : i32
    %148 = tpu.dynamic_rotate %135 by %c242_i32 dim 1 : vector<32x256xf32>, i32 -> vector<32x256xf32>
    %c2_i32_69 = arith.constant 2 : i32
    %149 = vector.broadcast %c2_i32_69 : i32 to vector<32x256xi32>
    %150 = arith.cmpi sge, %16, %149 : vector<32x256xi32>
    %151 = arith.select %150, %147, %148 : vector<32x256xi1>, vector<32x256xf32>
    %c254_i32 = arith.constant 254 : i32
    %152 = tpu.dynamic_rotate %135 by %c254_i32 dim 1 : vector<32x256xf32>, i32 -> vector<32x256xf32>
    %c14_i32_70 = arith.constant 14 : i32
    %153 = tpu.dynamic_rotate %135 by %c14_i32_70 dim 1 : vector<32x256xf32>, i32 -> vector<32x256xf32>
    %c14_i32_71 = arith.constant 14 : i32
    %154 = vector.broadcast %c14_i32_71 : i32 to vector<32x256xi32>
    %155 = arith.cmpi slt, %16, %154 : vector<32x256xi32>
    %156 = arith.select %155, %152, %153 : vector<32x256xi1>, vector<32x256xf32>
    %c226_i32 = arith.constant 226 : i32
    %157 = tpu.dynamic_rotate %135 by %c226_i32 dim 1 : vector<32x256xf32>, i32 -> vector<32x256xf32>
    %c210_i32 = arith.constant 210 : i32
    %158 = tpu.dynamic_rotate %135 by %c210_i32 dim 1 : vector<32x256xf32>, i32 -> vector<32x256xf32>
    %c2_i32_72 = arith.constant 2 : i32
    %159 = vector.broadcast %c2_i32_72 : i32 to vector<32x256xi32>
    %160 = arith.cmpi sge, %16, %159 : vector<32x256xi32>
    %161 = arith.select %160, %157, %158 : vector<32x256xi1>, vector<32x256xf32>
    %c224_i32 = arith.constant 224 : i32
    %162 = tpu.dynamic_rotate %135 by %c224_i32 dim 1 : vector<32x256xf32>, i32 -> vector<32x256xf32>
    %c222_i32 = arith.constant 222 : i32
    %163 = tpu.dynamic_rotate %135 by %c222_i32 dim 1 : vector<32x256xf32>, i32 -> vector<32x256xf32>
    %c238_i32 = arith.constant 238 : i32
    %164 = tpu.dynamic_rotate %135 by %c238_i32 dim 1 : vector<32x256xf32>, i32 -> vector<32x256xf32>
    %c14_i32_73 = arith.constant 14 : i32
    %165 = vector.broadcast %c14_i32_73 : i32 to vector<32x256xi32>
    %166 = arith.cmpi slt, %16, %165 : vector<32x256xi32>
    %167 = arith.select %166, %163, %164 : vector<32x256xi1>, vector<32x256xf32>
    %168 = tpu.concatenate %140, %141, %146, %151, %135, %156, %161, %162, %167 in 0 : vector<32x256xf32>, vector<32x256xf32>, vector<32x256xf32>, vector<32x256xf32>, vector<32x256xf32>, vector<32x256xf32>, vector<32x256xf32>, vector<32x256xf32>, vector<32x256xf32> -> vector<288x256xf32>
    %cst_74 = arith.constant dense<0.000000e+00> : vector<32x256xf32>
    %169 = tpu.matmul %28, %168, %cst_74 {dimension_numbers = #tpu.dot_dimension_numbers<[1], [0], [0], [1], [0, 0, 1, 1], [], []>} : vector<32x288xf32>, vector<288x256xf32>, vector<32x256xf32> -> vector<32x256xf32>
    %170 = vector.broadcast %29 : vector<32x1xf32> to vector<32x256xf32>
    %171 = arith.addf %169, %170 : vector<32x256xf32>
    %cst_75 = arith.constant 0.707106769 : f32
    %172 = vector.broadcast %cst_75 : f32 to vector<32x256xf32>
    %173 = arith.mulf %171, %172 : vector<32x256xf32>
    %cst_76 = arith.constant 0.000000e+00 : f32
    %174 = vector.broadcast %cst_76 : f32 to vector<32x256xf32>
    %175 = arith.cmpf oge, %173, %174 : vector<32x256xf32>
    %cst_77 = arith.constant 1.000000e+00 : f32
    %cst_78 = arith.constant -1.000000e+00 : f32
    %176 = vector.broadcast %cst_77 : f32 to vector<32x256xf32>
    %177 = vector.broadcast %cst_78 : f32 to vector<32x256xf32>
    %178 = arith.select %175, %176, %177 : vector<32x256xi1>, vector<32x256xf32>
    %179 = math.absf %173 : vector<32x256xf32>
    %cst_79 = arith.constant 0.327591091 : f32
    %180 = vector.broadcast %cst_79 : f32 to vector<32x256xf32>
    %181 = arith.mulf %180, %179 : vector<32x256xf32>
    %cst_80 = arith.constant 1.000000e+00 : f32
    %182 = vector.broadcast %cst_80 : f32 to vector<32x256xf32>
    %183 = arith.addf %182, %181 : vector<32x256xf32>
    %184 = tpu.reciprocal %183 : vector<32x256xf32> -> vector<32x256xf32>
    %cst_81 = arith.constant 1.06140542 : f32
    %185 = vector.broadcast %cst_81 : f32 to vector<32x256xf32>
    %186 = arith.mulf %185, %184 : vector<32x256xf32>
    %cst_82 = arith.constant -1.45315206 : f32
    %187 = vector.broadcast %cst_82 : f32 to vector<32x256xf32>
    %188 = arith.addf %186, %187 : vector<32x256xf32>
    %189 = arith.mulf %188, %184 : vector<32x256xf32>
    %cst_83 = arith.constant 1.42141378 : f32
    %190 = vector.broadcast %cst_83 : f32 to vector<32x256xf32>
    %191 = arith.addf %189, %190 : vector<32x256xf32>
    %192 = arith.mulf %191, %184 : vector<32x256xf32>
    %cst_84 = arith.constant -0.284496725 : f32
    %193 = vector.broadcast %cst_84 : f32 to vector<32x256xf32>
    %194 = arith.addf %192, %193 : vector<32x256xf32>
    %195 = arith.mulf %194, %184 : vector<32x256xf32>
    %cst_85 = arith.constant 0.254829586 : f32
    %196 = vector.broadcast %cst_85 : f32 to vector<32x256xf32>
    %197 = arith.addf %195, %196 : vector<32x256xf32>
    %198 = arith.mulf %197, %184 : vector<32x256xf32>
    %cst_86 = arith.constant 0.000000e+00 : f32
    %199 = vector.broadcast %cst_86 : f32 to vector<32x256xf32>
    %200 = arith.subf %199, %179 : vector<32x256xf32>
    %201 = arith.mulf %200, %179 : vector<32x256xf32>
    %202 = math.exp %201 : vector<32x256xf32>
    %203 = arith.mulf %198, %202 : vector<32x256xf32>
    %cst_87 = arith.constant 1.000000e+00 : f32
    %204 = vector.broadcast %cst_87 : f32 to vector<32x256xf32>
    %205 = arith.subf %204, %203 : vector<32x256xf32>
    %206 = arith.mulf %178, %205 : vector<32x256xf32>
    %cst_88 = arith.constant 5.000000e-01 : f32
    %207 = vector.broadcast %cst_88 : f32 to vector<32x256xf32>
    %208 = arith.mulf %207, %171 : vector<32x256xf32>
    %cst_89 = arith.constant 1.000000e+00 : f32
    %209 = vector.broadcast %cst_89 : f32 to vector<32x256xf32>
    %210 = arith.addf %209, %206 : vector<32x256xf32>
    %211 = arith.mulf %208, %210 : vector<32x256xf32>
    %c17_i32_90 = arith.constant 17 : i32
    %212 = tpu.dynamic_rotate %211 by %c17_i32_90 dim 1 : vector<32x256xf32>, i32 -> vector<32x256xf32>
    %c1_i32_91 = arith.constant 1 : i32
    %213 = tpu.dynamic_rotate %211 by %c1_i32_91 dim 1 : vector<32x256xf32>, i32 -> vector<32x256xf32>
    %c1_i32_92 = arith.constant 1 : i32
    %214 = vector.broadcast %c1_i32_92 : i32 to vector<32x256xi32>
    %215 = arith.cmpi sge, %16, %214 : vector<32x256xi32>
    %216 = arith.select %215, %212, %213 : vector<32x256xi1>, vector<32x256xf32>
    %c16_i32_93 = arith.constant 16 : i32
    %217 = tpu.dynamic_rotate %211 by %c16_i32_93 dim 1 : vector<32x256xf32>, i32 -> vector<32x256xf32>
    %c15_i32_94 = arith.constant 15 : i32
    %218 = tpu.dynamic_rotate %211 by %c15_i32_94 dim 1 : vector<32x256xf32>, i32 -> vector<32x256xf32>
    %c31_i32_95 = arith.constant 31 : i32
    %219 = tpu.dynamic_rotate %211 by %c31_i32_95 dim 1 : vector<32x256xf32>, i32 -> vector<32x256xf32>
    %c15_i32_96 = arith.constant 15 : i32
    %220 = vector.broadcast %c15_i32_96 : i32 to vector<32x256xi32>
    %221 = arith.cmpi slt, %16, %220 : vector<32x256xi32>
    %222 = arith.select %221, %218, %219 : vector<32x256xi1>, vector<32x256xf32>
    %c1_i32_97 = arith.constant 1 : i32
    %223 = tpu.dynamic_rotate %211 by %c1_i32_97 dim 1 : vector<32x256xf32>, i32 -> vector<32x256xf32>
    %c241_i32_98 = arith.constant 241 : i32
    %224 = tpu.dynamic_rotate %211 by %c241_i32_98 dim 1 : vector<32x256xf32>, i32 -> vector<32x256xf32>
    %c1_i32_99 = arith.constant 1 : i32
    %225 = vector.broadcast %c1_i32_99 : i32 to vector<32x256xi32>
    %226 = arith.cmpi sge, %16, %225 : vector<32x256xi32>
    %227 = arith.select %226, %223, %224 : vector<32x256xi1>, vector<32x256xf32>
    %c255_i32_100 = arith.constant 255 : i32
    %228 = tpu.dynamic_rotate %211 by %c255_i32_100 dim 1 : vector<32x256xf32>, i32 -> vector<32x256xf32>
    %c15_i32_101 = arith.constant 15 : i32
    %229 = tpu.dynamic_rotate %211 by %c15_i32_101 dim 1 : vector<32x256xf32>, i32 -> vector<32x256xf32>
    %c15_i32_102 = arith.constant 15 : i32
    %230 = vector.broadcast %c15_i32_102 : i32 to vector<32x256xi32>
    %231 = arith.cmpi slt, %16, %230 : vector<32x256xi32>
    %232 = arith.select %231, %228, %229 : vector<32x256xi1>, vector<32x256xf32>
    %c241_i32_103 = arith.constant 241 : i32
    %233 = tpu.dynamic_rotate %211 by %c241_i32_103 dim 1 : vector<32x256xf32>, i32 -> vector<32x256xf32>
    %c225_i32_104 = arith.constant 225 : i32
    %234 = tpu.dynamic_rotate %211 by %c225_i32_104 dim 1 : vector<32x256xf32>, i32 -> vector<32x256xf32>
    %c1_i32_105 = arith.constant 1 : i32
    %235 = vector.broadcast %c1_i32_105 : i32 to vector<32x256xi32>
    %236 = arith.cmpi sge, %16, %235 : vector<32x256xi32>
    %237 = arith.select %236, %233, %234 : vector<32x256xi1>, vector<32x256xf32>
    %c240_i32_106 = arith.constant 240 : i32
    %238 = tpu.dynamic_rotate %211 by %c240_i32_106 dim 1 : vector<32x256xf32>, i32 -> vector<32x256xf32>
    %c239_i32_107 = arith.constant 239 : i32
    %239 = tpu.dynamic_rotate %211 by %c239_i32_107 dim 1 : vector<32x256xf32>, i32 -> vector<32x256xf32>
    %c255_i32_108 = arith.constant 255 : i32
    %240 = tpu.dynamic_rotate %211 by %c255_i32_108 dim 1 : vector<32x256xf32>, i32 -> vector<32x256xf32>
    %c15_i32_109 = arith.constant 15 : i32
    %241 = vector.broadcast %c15_i32_109 : i32 to vector<32x256xi32>
    %242 = arith.cmpi slt, %16, %241 : vector<32x256xi32>
    %243 = arith.select %242, %239, %240 : vector<32x256xi1>, vector<32x256xf32>
    %244 = tpu.concatenate %216, %217, %222, %227, %211, %232, %237, %238, %243 in 0 : vector<32x256xf32>, vector<32x256xf32>, vector<32x256xf32>, vector<32x256xf32>, vector<32x256xf32>, vector<32x256xf32>, vector<32x256xf32>, vector<32x256xf32>, vector<32x256xf32> -> vector<288x256xf32>
    %cst_110 = arith.constant dense<0.000000e+00> : vector<32x256xf32>
    %245 = tpu.matmul %30, %244, %cst_110 {dimension_numbers = #tpu.dot_dimension_numbers<[1], [0], [0], [1], [0, 0, 1, 1], [], []>} : vector<32x288xf32>, vector<288x256xf32>, vector<32x256xf32> -> vector<32x256xf32>
    %246 = vector.broadcast %31 : vector<32x1xf32> to vector<32x256xf32>
    %247 = arith.addf %245, %246 : vector<32x256xf32>
    %248 = arith.addf %23, %247 : vector<32x256xf32>
    %cst_111 = arith.constant dense<0.000000e+00> : vector<32xf32>
    %249 = vector.multi_reduction <add>, %248, %cst_111 [1] : vector<32x256xf32> to vector<32xf32>
    %250 = vector.shape_cast %249 : vector<32xf32> to vector<32x1xf32>
    %cst_112 = arith.constant dense<0.000000e+00> : vector<1xf32>
    %251 = vector.multi_reduction <add>, %250, %cst_112 [0] : vector<32x1xf32> to vector<1xf32>
    %252 = vector.shape_cast %251 : vector<1xf32> to vector<1x1xf32>
    %cst_113 = arith.constant 8.192000e+03 : f32
    %253 = vector.broadcast %cst_113 : f32 to vector<1x1xf32>
    %254 = arith.divf %252, %253 : vector<1x1xf32>
    %255 = vector.broadcast %254 : vector<1x1xf32> to vector<32x256xf32>
    %256 = arith.subf %248, %255 : vector<32x256xf32>
    %257 = arith.mulf %256, %256 : vector<32x256xf32>
    %cst_114 = arith.constant dense<0.000000e+00> : vector<32xf32>
    %258 = vector.multi_reduction <add>, %257, %cst_114 [1] : vector<32x256xf32> to vector<32xf32>
    %259 = vector.shape_cast %258 : vector<32xf32> to vector<32x1xf32>
    %cst_115 = arith.constant dense<0.000000e+00> : vector<1xf32>
    %260 = vector.multi_reduction <add>, %259, %cst_115 [0] : vector<32x1xf32> to vector<1xf32>
    %261 = vector.shape_cast %260 : vector<1xf32> to vector<1x1xf32>
    %cst_116 = arith.constant 8.192000e+03 : f32
    %262 = vector.broadcast %cst_116 : f32 to vector<1x1xf32>
    %263 = arith.divf %261, %262 : vector<1x1xf32>
    %cst_117 = arith.constant 9.99999974E-6 : f32
    %264 = vector.broadcast %cst_117 : f32 to vector<1x1xf32>
    %265 = arith.addf %263, %264 : vector<1x1xf32>
    %266 = math.rsqrt %265 : vector<1x1xf32>
    %267 = vector.broadcast %266 : vector<1x1xf32> to vector<32x256xf32>
    %268 = arith.mulf %256, %267 : vector<32x256xf32>
    %269 = vector.broadcast %32 : vector<32x1xf32> to vector<32x256xf32>
    %270 = arith.mulf %268, %269 : vector<32x256xf32>
    %271 = vector.broadcast %33 : vector<32x1xf32> to vector<32x256xf32>
    %272 = arith.addf %270, %271 : vector<32x256xf32>
    %cst_118 = arith.constant dense<0.000000e+00> : vector<32x256xf32>
    %273 = tpu.matmul %34, %272, %cst_118 {dimension_numbers = #tpu.dot_dimension_numbers<[1], [0], [0], [1], [0, 0, 1, 1], [], []>} : vector<32x32xf32>, vector<32x256xf32>, vector<32x256xf32> -> vector<32x256xf32>
    %cst_119 = arith.constant 0.707106769 : f32
    %274 = vector.broadcast %cst_119 : f32 to vector<32x256xf32>
    %275 = arith.mulf %273, %274 : vector<32x256xf32>
    %cst_120 = arith.constant 0.000000e+00 : f32
    %276 = vector.broadcast %cst_120 : f32 to vector<32x256xf32>
    %277 = arith.cmpf oge, %275, %276 : vector<32x256xf32>
    %cst_121 = arith.constant 1.000000e+00 : f32
    %cst_122 = arith.constant -1.000000e+00 : f32
    %278 = vector.broadcast %cst_121 : f32 to vector<32x256xf32>
    %279 = vector.broadcast %cst_122 : f32 to vector<32x256xf32>
    %280 = arith.select %277, %278, %279 : vector<32x256xi1>, vector<32x256xf32>
    %281 = math.absf %275 : vector<32x256xf32>
    %cst_123 = arith.constant 0.327591091 : f32
    %282 = vector.broadcast %cst_123 : f32 to vector<32x256xf32>
    %283 = arith.mulf %282, %281 : vector<32x256xf32>
    %cst_124 = arith.constant 1.000000e+00 : f32
    %284 = vector.broadcast %cst_124 : f32 to vector<32x256xf32>
    %285 = arith.addf %284, %283 : vector<32x256xf32>
    %286 = tpu.reciprocal %285 : vector<32x256xf32> -> vector<32x256xf32>
    %cst_125 = arith.constant 1.06140542 : f32
    %287 = vector.broadcast %cst_125 : f32 to vector<32x256xf32>
    %288 = arith.mulf %287, %286 : vector<32x256xf32>
    %cst_126 = arith.constant -1.45315206 : f32
    %289 = vector.broadcast %cst_126 : f32 to vector<32x256xf32>
    %290 = arith.addf %288, %289 : vector<32x256xf32>
    %291 = arith.mulf %290, %286 : vector<32x256xf32>
    %cst_127 = arith.constant 1.42141378 : f32
    %292 = vector.broadcast %cst_127 : f32 to vector<32x256xf32>
    %293 = arith.addf %291, %292 : vector<32x256xf32>
    %294 = arith.mulf %293, %286 : vector<32x256xf32>
    %cst_128 = arith.constant -0.284496725 : f32
    %295 = vector.broadcast %cst_128 : f32 to vector<32x256xf32>
    %296 = arith.addf %294, %295 : vector<32x256xf32>
    %297 = arith.mulf %296, %286 : vector<32x256xf32>
    %cst_129 = arith.constant 0.254829586 : f32
    %298 = vector.broadcast %cst_129 : f32 to vector<32x256xf32>
    %299 = arith.addf %297, %298 : vector<32x256xf32>
    %300 = arith.mulf %299, %286 : vector<32x256xf32>
    %cst_130 = arith.constant 0.000000e+00 : f32
    %301 = vector.broadcast %cst_130 : f32 to vector<32x256xf32>
    %302 = arith.subf %301, %281 : vector<32x256xf32>
    %303 = arith.mulf %302, %281 : vector<32x256xf32>
    %304 = math.exp %303 : vector<32x256xf32>
    %305 = arith.mulf %300, %304 : vector<32x256xf32>
    %cst_131 = arith.constant 1.000000e+00 : f32
    %306 = vector.broadcast %cst_131 : f32 to vector<32x256xf32>
    %307 = arith.subf %306, %305 : vector<32x256xf32>
    %308 = arith.mulf %280, %307 : vector<32x256xf32>
    %cst_132 = arith.constant 5.000000e-01 : f32
    %309 = vector.broadcast %cst_132 : f32 to vector<32x256xf32>
    %310 = arith.mulf %309, %273 : vector<32x256xf32>
    %cst_133 = arith.constant 1.000000e+00 : f32
    %311 = vector.broadcast %cst_133 : f32 to vector<32x256xf32>
    %312 = arith.addf %311, %308 : vector<32x256xf32>
    %313 = arith.mulf %310, %312 : vector<32x256xf32>
    %cst_134 = arith.constant dense<0.000000e+00> : vector<32x256xf32>
    %314 = tpu.matmul %35, %313, %cst_134 {dimension_numbers = #tpu.dot_dimension_numbers<[1], [0], [0], [1], [0, 0, 1, 1], [], []>} : vector<32x32xf32>, vector<32x256xf32>, vector<32x256xf32> -> vector<32x256xf32>
    %315 = arith.addf %248, %314 : vector<32x256xf32>
    %c0_135 = arith.constant 0 : index
    %c0_136 = arith.constant 0 : index
    %316 = vector.load %arg16[%c0_135, %c0_136] : memref<32x1xf32, #tpu.memory_space<vmem>>, vector<32x1xf32>
    %c0_137 = arith.constant 0 : index
    %c0_138 = arith.constant 0 : index
    %317 = vector.load %arg17[%c0_137, %c0_138] : memref<32x1xf32, #tpu.memory_space<vmem>>, vector<32x1xf32>
    %c0_139 = arith.constant 0 : index
    %c0_140 = arith.constant 0 : index
    %318 = vector.load %arg18[%c0_139, %c0_140] : memref<32x288xf32, #tpu.memory_space<vmem>>, vector<32x288xf32>
    %c0_141 = arith.constant 0 : index
    %c0_142 = arith.constant 0 : index
    %319 = vector.load %arg19[%c0_141, %c0_142] : memref<32x1xf32, #tpu.memory_space<vmem>>, vector<32x1xf32>
    %c0_143 = arith.constant 0 : index
    %c0_144 = arith.constant 0 : index
    %320 = vector.load %arg20[%c0_143, %c0_144] : memref<32x288xf32, #tpu.memory_space<vmem>>, vector<32x288xf32>
    %c0_145 = arith.constant 0 : index
    %c0_146 = arith.constant 0 : index
    %321 = vector.load %arg21[%c0_145, %c0_146] : memref<32x1xf32, #tpu.memory_space<vmem>>, vector<32x1xf32>
    %c0_147 = arith.constant 0 : index
    %c0_148 = arith.constant 0 : index
    %322 = vector.load %arg22[%c0_147, %c0_148] : memref<32x288xf32, #tpu.memory_space<vmem>>, vector<32x288xf32>
    %c0_149 = arith.constant 0 : index
    %c0_150 = arith.constant 0 : index
    %323 = vector.load %arg23[%c0_149, %c0_150] : memref<32x1xf32, #tpu.memory_space<vmem>>, vector<32x1xf32>
    %c0_151 = arith.constant 0 : index
    %c0_152 = arith.constant 0 : index
    %324 = vector.load %arg24[%c0_151, %c0_152] : memref<32x1xf32, #tpu.memory_space<vmem>>, vector<32x1xf32>
    %c0_153 = arith.constant 0 : index
    %c0_154 = arith.constant 0 : index
    %325 = vector.load %arg25[%c0_153, %c0_154] : memref<32x1xf32, #tpu.memory_space<vmem>>, vector<32x1xf32>
    %c0_155 = arith.constant 0 : index
    %c0_156 = arith.constant 0 : index
    %326 = vector.load %arg26[%c0_155, %c0_156] : memref<32x32xf32, #tpu.memory_space<vmem>>, vector<32x32xf32>
    %c0_157 = arith.constant 0 : index
    %c0_158 = arith.constant 0 : index
    %327 = vector.load %arg27[%c0_157, %c0_158] : memref<32x32xf32, #tpu.memory_space<vmem>>, vector<32x32xf32>
    %cst_159 = arith.constant dense<0.000000e+00> : vector<32xf32>
    %328 = vector.multi_reduction <add>, %315, %cst_159 [1] : vector<32x256xf32> to vector<32xf32>
    %329 = vector.shape_cast %328 : vector<32xf32> to vector<32x1xf32>
    %cst_160 = arith.constant dense<0.000000e+00> : vector<1xf32>
    %330 = vector.multi_reduction <add>, %329, %cst_160 [0] : vector<32x1xf32> to vector<1xf32>
    %331 = vector.shape_cast %330 : vector<1xf32> to vector<1x1xf32>
    %cst_161 = arith.constant 8.192000e+03 : f32
    %332 = vector.broadcast %cst_161 : f32 to vector<1x1xf32>
    %333 = arith.divf %331, %332 : vector<1x1xf32>
    %334 = vector.broadcast %333 : vector<1x1xf32> to vector<32x256xf32>
    %335 = arith.subf %315, %334 : vector<32x256xf32>
    %336 = arith.mulf %335, %335 : vector<32x256xf32>
    %cst_162 = arith.constant dense<0.000000e+00> : vector<32xf32>
    %337 = vector.multi_reduction <add>, %336, %cst_162 [1] : vector<32x256xf32> to vector<32xf32>
    %338 = vector.shape_cast %337 : vector<32xf32> to vector<32x1xf32>
    %cst_163 = arith.constant dense<0.000000e+00> : vector<1xf32>
    %339 = vector.multi_reduction <add>, %338, %cst_163 [0] : vector<32x1xf32> to vector<1xf32>
    %340 = vector.shape_cast %339 : vector<1xf32> to vector<1x1xf32>
    %cst_164 = arith.constant 8.192000e+03 : f32
    %341 = vector.broadcast %cst_164 : f32 to vector<1x1xf32>
    %342 = arith.divf %340, %341 : vector<1x1xf32>
    %cst_165 = arith.constant 9.99999974E-6 : f32
    %343 = vector.broadcast %cst_165 : f32 to vector<1x1xf32>
    %344 = arith.addf %342, %343 : vector<1x1xf32>
    %345 = math.rsqrt %344 : vector<1x1xf32>
    %346 = vector.broadcast %345 : vector<1x1xf32> to vector<32x256xf32>
    %347 = arith.mulf %335, %346 : vector<32x256xf32>
    %348 = vector.broadcast %316 : vector<32x1xf32> to vector<32x256xf32>
    %349 = arith.mulf %347, %348 : vector<32x256xf32>
    %350 = vector.broadcast %317 : vector<32x1xf32> to vector<32x256xf32>
    %351 = arith.addf %349, %350 : vector<32x256xf32>
    %c17_i32_166 = arith.constant 17 : i32
    %352 = tpu.dynamic_rotate %351 by %c17_i32_166 dim 1 : vector<32x256xf32>, i32 -> vector<32x256xf32>
    %c1_i32_167 = arith.constant 1 : i32
    %353 = tpu.dynamic_rotate %351 by %c1_i32_167 dim 1 : vector<32x256xf32>, i32 -> vector<32x256xf32>
    %c1_i32_168 = arith.constant 1 : i32
    %354 = vector.broadcast %c1_i32_168 : i32 to vector<32x256xi32>
    %355 = arith.cmpi sge, %16, %354 : vector<32x256xi32>
    %356 = arith.select %355, %352, %353 : vector<32x256xi1>, vector<32x256xf32>
    %c16_i32_169 = arith.constant 16 : i32
    %357 = tpu.dynamic_rotate %351 by %c16_i32_169 dim 1 : vector<32x256xf32>, i32 -> vector<32x256xf32>
    %c15_i32_170 = arith.constant 15 : i32
    %358 = tpu.dynamic_rotate %351 by %c15_i32_170 dim 1 : vector<32x256xf32>, i32 -> vector<32x256xf32>
    %c31_i32_171 = arith.constant 31 : i32
    %359 = tpu.dynamic_rotate %351 by %c31_i32_171 dim 1 : vector<32x256xf32>, i32 -> vector<32x256xf32>
    %c15_i32_172 = arith.constant 15 : i32
    %360 = vector.broadcast %c15_i32_172 : i32 to vector<32x256xi32>
    %361 = arith.cmpi slt, %16, %360 : vector<32x256xi32>
    %362 = arith.select %361, %358, %359 : vector<32x256xi1>, vector<32x256xf32>
    %c1_i32_173 = arith.constant 1 : i32
    %363 = tpu.dynamic_rotate %351 by %c1_i32_173 dim 1 : vector<32x256xf32>, i32 -> vector<32x256xf32>
    %c241_i32_174 = arith.constant 241 : i32
    %364 = tpu.dynamic_rotate %351 by %c241_i32_174 dim 1 : vector<32x256xf32>, i32 -> vector<32x256xf32>
    %c1_i32_175 = arith.constant 1 : i32
    %365 = vector.broadcast %c1_i32_175 : i32 to vector<32x256xi32>
    %366 = arith.cmpi sge, %16, %365 : vector<32x256xi32>
    %367 = arith.select %366, %363, %364 : vector<32x256xi1>, vector<32x256xf32>
    %c255_i32_176 = arith.constant 255 : i32
    %368 = tpu.dynamic_rotate %351 by %c255_i32_176 dim 1 : vector<32x256xf32>, i32 -> vector<32x256xf32>
    %c15_i32_177 = arith.constant 15 : i32
    %369 = tpu.dynamic_rotate %351 by %c15_i32_177 dim 1 : vector<32x256xf32>, i32 -> vector<32x256xf32>
    %c15_i32_178 = arith.constant 15 : i32
    %370 = vector.broadcast %c15_i32_178 : i32 to vector<32x256xi32>
    %371 = arith.cmpi slt, %16, %370 : vector<32x256xi32>
    %372 = arith.select %371, %368, %369 : vector<32x256xi1>, vector<32x256xf32>
    %c241_i32_179 = arith.constant 241 : i32
    %373 = tpu.dynamic_rotate %351 by %c241_i32_179 dim 1 : vector<32x256xf32>, i32 -> vector<32x256xf32>
    %c225_i32_180 = arith.constant 225 : i32
    %374 = tpu.dynamic_rotate %351 by %c225_i32_180 dim 1 : vector<32x256xf32>, i32 -> vector<32x256xf32>
    %c1_i32_181 = arith.constant 1 : i32
    %375 = vector.broadcast %c1_i32_181 : i32 to vector<32x256xi32>
    %376 = arith.cmpi sge, %16, %375 : vector<32x256xi32>
    %377 = arith.select %376, %373, %374 : vector<32x256xi1>, vector<32x256xf32>
    %c240_i32_182 = arith.constant 240 : i32
    %378 = tpu.dynamic_rotate %351 by %c240_i32_182 dim 1 : vector<32x256xf32>, i32 -> vector<32x256xf32>
    %c239_i32_183 = arith.constant 239 : i32
    %379 = tpu.dynamic_rotate %351 by %c239_i32_183 dim 1 : vector<32x256xf32>, i32 -> vector<32x256xf32>
    %c255_i32_184 = arith.constant 255 : i32
    %380 = tpu.dynamic_rotate %351 by %c255_i32_184 dim 1 : vector<32x256xf32>, i32 -> vector<32x256xf32>
    %c15_i32_185 = arith.constant 15 : i32
    %381 = vector.broadcast %c15_i32_185 : i32 to vector<32x256xi32>
    %382 = arith.cmpi slt, %16, %381 : vector<32x256xi32>
    %383 = arith.select %382, %379, %380 : vector<32x256xi1>, vector<32x256xf32>
    %384 = tpu.concatenate %356, %357, %362, %367, %351, %372, %377, %378, %383 in 0 : vector<32x256xf32>, vector<32x256xf32>, vector<32x256xf32>, vector<32x256xf32>, vector<32x256xf32>, vector<32x256xf32>, vector<32x256xf32>, vector<32x256xf32>, vector<32x256xf32> -> vector<288x256xf32>
    %cst_186 = arith.constant dense<0.000000e+00> : vector<32x256xf32>
    %385 = tpu.matmul %318, %384, %cst_186 {dimension_numbers = #tpu.dot_dimension_numbers<[1], [0], [0], [1], [0, 0, 1, 1], [], []>} : vector<32x288xf32>, vector<288x256xf32>, vector<32x256xf32> -> vector<32x256xf32>
    %386 = vector.broadcast %319 : vector<32x1xf32> to vector<32x256xf32>
    %387 = arith.addf %385, %386 : vector<32x256xf32>
    %cst_187 = arith.constant 0.707106769 : f32
    %388 = vector.broadcast %cst_187 : f32 to vector<32x256xf32>
    %389 = arith.mulf %387, %388 : vector<32x256xf32>
    %cst_188 = arith.constant 0.000000e+00 : f32
    %390 = vector.broadcast %cst_188 : f32 to vector<32x256xf32>
    %391 = arith.cmpf oge, %389, %390 : vector<32x256xf32>
    %cst_189 = arith.constant 1.000000e+00 : f32
    %cst_190 = arith.constant -1.000000e+00 : f32
    %392 = vector.broadcast %cst_189 : f32 to vector<32x256xf32>
    %393 = vector.broadcast %cst_190 : f32 to vector<32x256xf32>
    %394 = arith.select %391, %392, %393 : vector<32x256xi1>, vector<32x256xf32>
    %395 = math.absf %389 : vector<32x256xf32>
    %cst_191 = arith.constant 0.327591091 : f32
    %396 = vector.broadcast %cst_191 : f32 to vector<32x256xf32>
    %397 = arith.mulf %396, %395 : vector<32x256xf32>
    %cst_192 = arith.constant 1.000000e+00 : f32
    %398 = vector.broadcast %cst_192 : f32 to vector<32x256xf32>
    %399 = arith.addf %398, %397 : vector<32x256xf32>
    %400 = tpu.reciprocal %399 : vector<32x256xf32> -> vector<32x256xf32>
    %cst_193 = arith.constant 1.06140542 : f32
    %401 = vector.broadcast %cst_193 : f32 to vector<32x256xf32>
    %402 = arith.mulf %401, %400 : vector<32x256xf32>
    %cst_194 = arith.constant -1.45315206 : f32
    %403 = vector.broadcast %cst_194 : f32 to vector<32x256xf32>
    %404 = arith.addf %402, %403 : vector<32x256xf32>
    %405 = arith.mulf %404, %400 : vector<32x256xf32>
    %cst_195 = arith.constant 1.42141378 : f32
    %406 = vector.broadcast %cst_195 : f32 to vector<32x256xf32>
    %407 = arith.addf %405, %406 : vector<32x256xf32>
    %408 = arith.mulf %407, %400 : vector<32x256xf32>
    %cst_196 = arith.constant -0.284496725 : f32
    %409 = vector.broadcast %cst_196 : f32 to vector<32x256xf32>
    %410 = arith.addf %408, %409 : vector<32x256xf32>
    %411 = arith.mulf %410, %400 : vector<32x256xf32>
    %cst_197 = arith.constant 0.254829586 : f32
    %412 = vector.broadcast %cst_197 : f32 to vector<32x256xf32>
    %413 = arith.addf %411, %412 : vector<32x256xf32>
    %414 = arith.mulf %413, %400 : vector<32x256xf32>
    %cst_198 = arith.constant 0.000000e+00 : f32
    %415 = vector.broadcast %cst_198 : f32 to vector<32x256xf32>
    %416 = arith.subf %415, %395 : vector<32x256xf32>
    %417 = arith.mulf %416, %395 : vector<32x256xf32>
    %418 = math.exp %417 : vector<32x256xf32>
    %419 = arith.mulf %414, %418 : vector<32x256xf32>
    %cst_199 = arith.constant 1.000000e+00 : f32
    %420 = vector.broadcast %cst_199 : f32 to vector<32x256xf32>
    %421 = arith.subf %420, %419 : vector<32x256xf32>
    %422 = arith.mulf %394, %421 : vector<32x256xf32>
    %cst_200 = arith.constant 5.000000e-01 : f32
    %423 = vector.broadcast %cst_200 : f32 to vector<32x256xf32>
    %424 = arith.mulf %423, %387 : vector<32x256xf32>
    %cst_201 = arith.constant 1.000000e+00 : f32
    %425 = vector.broadcast %cst_201 : f32 to vector<32x256xf32>
    %426 = arith.addf %425, %422 : vector<32x256xf32>
    %427 = arith.mulf %424, %426 : vector<32x256xf32>
    %c34_i32_202 = arith.constant 34 : i32
    %428 = tpu.dynamic_rotate %427 by %c34_i32_202 dim 1 : vector<32x256xf32>, i32 -> vector<32x256xf32>
    %c18_i32_203 = arith.constant 18 : i32
    %429 = tpu.dynamic_rotate %427 by %c18_i32_203 dim 1 : vector<32x256xf32>, i32 -> vector<32x256xf32>
    %c2_i32_204 = arith.constant 2 : i32
    %430 = vector.broadcast %c2_i32_204 : i32 to vector<32x256xi32>
    %431 = arith.cmpi sge, %16, %430 : vector<32x256xi32>
    %432 = arith.select %431, %428, %429 : vector<32x256xi1>, vector<32x256xf32>
    %c32_i32_205 = arith.constant 32 : i32
    %433 = tpu.dynamic_rotate %427 by %c32_i32_205 dim 1 : vector<32x256xf32>, i32 -> vector<32x256xf32>
    %c30_i32_206 = arith.constant 30 : i32
    %434 = tpu.dynamic_rotate %427 by %c30_i32_206 dim 1 : vector<32x256xf32>, i32 -> vector<32x256xf32>
    %c46_i32_207 = arith.constant 46 : i32
    %435 = tpu.dynamic_rotate %427 by %c46_i32_207 dim 1 : vector<32x256xf32>, i32 -> vector<32x256xf32>
    %c14_i32_208 = arith.constant 14 : i32
    %436 = vector.broadcast %c14_i32_208 : i32 to vector<32x256xi32>
    %437 = arith.cmpi slt, %16, %436 : vector<32x256xi32>
    %438 = arith.select %437, %434, %435 : vector<32x256xi1>, vector<32x256xf32>
    %c2_i32_209 = arith.constant 2 : i32
    %439 = tpu.dynamic_rotate %427 by %c2_i32_209 dim 1 : vector<32x256xf32>, i32 -> vector<32x256xf32>
    %c242_i32_210 = arith.constant 242 : i32
    %440 = tpu.dynamic_rotate %427 by %c242_i32_210 dim 1 : vector<32x256xf32>, i32 -> vector<32x256xf32>
    %c2_i32_211 = arith.constant 2 : i32
    %441 = vector.broadcast %c2_i32_211 : i32 to vector<32x256xi32>
    %442 = arith.cmpi sge, %16, %441 : vector<32x256xi32>
    %443 = arith.select %442, %439, %440 : vector<32x256xi1>, vector<32x256xf32>
    %c254_i32_212 = arith.constant 254 : i32
    %444 = tpu.dynamic_rotate %427 by %c254_i32_212 dim 1 : vector<32x256xf32>, i32 -> vector<32x256xf32>
    %c14_i32_213 = arith.constant 14 : i32
    %445 = tpu.dynamic_rotate %427 by %c14_i32_213 dim 1 : vector<32x256xf32>, i32 -> vector<32x256xf32>
    %c14_i32_214 = arith.constant 14 : i32
    %446 = vector.broadcast %c14_i32_214 : i32 to vector<32x256xi32>
    %447 = arith.cmpi slt, %16, %446 : vector<32x256xi32>
    %448 = arith.select %447, %444, %445 : vector<32x256xi1>, vector<32x256xf32>
    %c226_i32_215 = arith.constant 226 : i32
    %449 = tpu.dynamic_rotate %427 by %c226_i32_215 dim 1 : vector<32x256xf32>, i32 -> vector<32x256xf32>
    %c210_i32_216 = arith.constant 210 : i32
    %450 = tpu.dynamic_rotate %427 by %c210_i32_216 dim 1 : vector<32x256xf32>, i32 -> vector<32x256xf32>
    %c2_i32_217 = arith.constant 2 : i32
    %451 = vector.broadcast %c2_i32_217 : i32 to vector<32x256xi32>
    %452 = arith.cmpi sge, %16, %451 : vector<32x256xi32>
    %453 = arith.select %452, %449, %450 : vector<32x256xi1>, vector<32x256xf32>
    %c224_i32_218 = arith.constant 224 : i32
    %454 = tpu.dynamic_rotate %427 by %c224_i32_218 dim 1 : vector<32x256xf32>, i32 -> vector<32x256xf32>
    %c222_i32_219 = arith.constant 222 : i32
    %455 = tpu.dynamic_rotate %427 by %c222_i32_219 dim 1 : vector<32x256xf32>, i32 -> vector<32x256xf32>
    %c238_i32_220 = arith.constant 238 : i32
    %456 = tpu.dynamic_rotate %427 by %c238_i32_220 dim 1 : vector<32x256xf32>, i32 -> vector<32x256xf32>
    %c14_i32_221 = arith.constant 14 : i32
    %457 = vector.broadcast %c14_i32_221 : i32 to vector<32x256xi32>
    %458 = arith.cmpi slt, %16, %457 : vector<32x256xi32>
    %459 = arith.select %458, %455, %456 : vector<32x256xi1>, vector<32x256xf32>
    %460 = tpu.concatenate %432, %433, %438, %443, %427, %448, %453, %454, %459 in 0 : vector<32x256xf32>, vector<32x256xf32>, vector<32x256xf32>, vector<32x256xf32>, vector<32x256xf32>, vector<32x256xf32>, vector<32x256xf32>, vector<32x256xf32>, vector<32x256xf32> -> vector<288x256xf32>
    %cst_222 = arith.constant dense<0.000000e+00> : vector<32x256xf32>
    %461 = tpu.matmul %320, %460, %cst_222 {dimension_numbers = #tpu.dot_dimension_numbers<[1], [0], [0], [1], [0, 0, 1, 1], [], []>} : vector<32x288xf32>, vector<288x256xf32>, vector<32x256xf32> -> vector<32x256xf32>
    %462 = vector.broadcast %321 : vector<32x1xf32> to vector<32x256xf32>
    %463 = arith.addf %461, %462 : vector<32x256xf32>
    %cst_223 = arith.constant 0.707106769 : f32
    %464 = vector.broadcast %cst_223 : f32 to vector<32x256xf32>
    %465 = arith.mulf %463, %464 : vector<32x256xf32>
    %cst_224 = arith.constant 0.000000e+00 : f32
    %466 = vector.broadcast %cst_224 : f32 to vector<32x256xf32>
    %467 = arith.cmpf oge, %465, %466 : vector<32x256xf32>
    %cst_225 = arith.constant 1.000000e+00 : f32
    %cst_226 = arith.constant -1.000000e+00 : f32
    %468 = vector.broadcast %cst_225 : f32 to vector<32x256xf32>
    %469 = vector.broadcast %cst_226 : f32 to vector<32x256xf32>
    %470 = arith.select %467, %468, %469 : vector<32x256xi1>, vector<32x256xf32>
    %471 = math.absf %465 : vector<32x256xf32>
    %cst_227 = arith.constant 0.327591091 : f32
    %472 = vector.broadcast %cst_227 : f32 to vector<32x256xf32>
    %473 = arith.mulf %472, %471 : vector<32x256xf32>
    %cst_228 = arith.constant 1.000000e+00 : f32
    %474 = vector.broadcast %cst_228 : f32 to vector<32x256xf32>
    %475 = arith.addf %474, %473 : vector<32x256xf32>
    %476 = tpu.reciprocal %475 : vector<32x256xf32> -> vector<32x256xf32>
    %cst_229 = arith.constant 1.06140542 : f32
    %477 = vector.broadcast %cst_229 : f32 to vector<32x256xf32>
    %478 = arith.mulf %477, %476 : vector<32x256xf32>
    %cst_230 = arith.constant -1.45315206 : f32
    %479 = vector.broadcast %cst_230 : f32 to vector<32x256xf32>
    %480 = arith.addf %478, %479 : vector<32x256xf32>
    %481 = arith.mulf %480, %476 : vector<32x256xf32>
    %cst_231 = arith.constant 1.42141378 : f32
    %482 = vector.broadcast %cst_231 : f32 to vector<32x256xf32>
    %483 = arith.addf %481, %482 : vector<32x256xf32>
    %484 = arith.mulf %483, %476 : vector<32x256xf32>
    %cst_232 = arith.constant -0.284496725 : f32
    %485 = vector.broadcast %cst_232 : f32 to vector<32x256xf32>
    %486 = arith.addf %484, %485 : vector<32x256xf32>
    %487 = arith.mulf %486, %476 : vector<32x256xf32>
    %cst_233 = arith.constant 0.254829586 : f32
    %488 = vector.broadcast %cst_233 : f32 to vector<32x256xf32>
    %489 = arith.addf %487, %488 : vector<32x256xf32>
    %490 = arith.mulf %489, %476 : vector<32x256xf32>
    %cst_234 = arith.constant 0.000000e+00 : f32
    %491 = vector.broadcast %cst_234 : f32 to vector<32x256xf32>
    %492 = arith.subf %491, %471 : vector<32x256xf32>
    %493 = arith.mulf %492, %471 : vector<32x256xf32>
    %494 = math.exp %493 : vector<32x256xf32>
    %495 = arith.mulf %490, %494 : vector<32x256xf32>
    %cst_235 = arith.constant 1.000000e+00 : f32
    %496 = vector.broadcast %cst_235 : f32 to vector<32x256xf32>
    %497 = arith.subf %496, %495 : vector<32x256xf32>
    %498 = arith.mulf %470, %497 : vector<32x256xf32>
    %cst_236 = arith.constant 5.000000e-01 : f32
    %499 = vector.broadcast %cst_236 : f32 to vector<32x256xf32>
    %500 = arith.mulf %499, %463 : vector<32x256xf32>
    %cst_237 = arith.constant 1.000000e+00 : f32
    %501 = vector.broadcast %cst_237 : f32 to vector<32x256xf32>
    %502 = arith.addf %501, %498 : vector<32x256xf32>
    %503 = arith.mulf %500, %502 : vector<32x256xf32>
    %c17_i32_238 = arith.constant 17 : i32
    %504 = tpu.dynamic_rotate %503 by %c17_i32_238 dim 1 : vector<32x256xf32>, i32 -> vector<32x256xf32>
    %c1_i32_239 = arith.constant 1 : i32
    %505 = tpu.dynamic_rotate %503 by %c1_i32_239 dim 1 : vector<32x256xf32>, i32 -> vector<32x256xf32>
    %c1_i32_240 = arith.constant 1 : i32
    %506 = vector.broadcast %c1_i32_240 : i32 to vector<32x256xi32>
    %507 = arith.cmpi sge, %16, %506 : vector<32x256xi32>
    %508 = arith.select %507, %504, %505 : vector<32x256xi1>, vector<32x256xf32>
    %c16_i32_241 = arith.constant 16 : i32
    %509 = tpu.dynamic_rotate %503 by %c16_i32_241 dim 1 : vector<32x256xf32>, i32 -> vector<32x256xf32>
    %c15_i32_242 = arith.constant 15 : i32
    %510 = tpu.dynamic_rotate %503 by %c15_i32_242 dim 1 : vector<32x256xf32>, i32 -> vector<32x256xf32>
    %c31_i32_243 = arith.constant 31 : i32
    %511 = tpu.dynamic_rotate %503 by %c31_i32_243 dim 1 : vector<32x256xf32>, i32 -> vector<32x256xf32>
    %c15_i32_244 = arith.constant 15 : i32
    %512 = vector.broadcast %c15_i32_244 : i32 to vector<32x256xi32>
    %513 = arith.cmpi slt, %16, %512 : vector<32x256xi32>
    %514 = arith.select %513, %510, %511 : vector<32x256xi1>, vector<32x256xf32>
    %c1_i32_245 = arith.constant 1 : i32
    %515 = tpu.dynamic_rotate %503 by %c1_i32_245 dim 1 : vector<32x256xf32>, i32 -> vector<32x256xf32>
    %c241_i32_246 = arith.constant 241 : i32
    %516 = tpu.dynamic_rotate %503 by %c241_i32_246 dim 1 : vector<32x256xf32>, i32 -> vector<32x256xf32>
    %c1_i32_247 = arith.constant 1 : i32
    %517 = vector.broadcast %c1_i32_247 : i32 to vector<32x256xi32>
    %518 = arith.cmpi sge, %16, %517 : vector<32x256xi32>
    %519 = arith.select %518, %515, %516 : vector<32x256xi1>, vector<32x256xf32>
    %c255_i32_248 = arith.constant 255 : i32
    %520 = tpu.dynamic_rotate %503 by %c255_i32_248 dim 1 : vector<32x256xf32>, i32 -> vector<32x256xf32>
    %c15_i32_249 = arith.constant 15 : i32
    %521 = tpu.dynamic_rotate %503 by %c15_i32_249 dim 1 : vector<32x256xf32>, i32 -> vector<32x256xf32>
    %c15_i32_250 = arith.constant 15 : i32
    %522 = vector.broadcast %c15_i32_250 : i32 to vector<32x256xi32>
    %523 = arith.cmpi slt, %16, %522 : vector<32x256xi32>
    %524 = arith.select %523, %520, %521 : vector<32x256xi1>, vector<32x256xf32>
    %c241_i32_251 = arith.constant 241 : i32
    %525 = tpu.dynamic_rotate %503 by %c241_i32_251 dim 1 : vector<32x256xf32>, i32 -> vector<32x256xf32>
    %c225_i32_252 = arith.constant 225 : i32
    %526 = tpu.dynamic_rotate %503 by %c225_i32_252 dim 1 : vector<32x256xf32>, i32 -> vector<32x256xf32>
    %c1_i32_253 = arith.constant 1 : i32
    %527 = vector.broadcast %c1_i32_253 : i32 to vector<32x256xi32>
    %528 = arith.cmpi sge, %16, %527 : vector<32x256xi32>
    %529 = arith.select %528, %525, %526 : vector<32x256xi1>, vector<32x256xf32>
    %c240_i32_254 = arith.constant 240 : i32
    %530 = tpu.dynamic_rotate %503 by %c240_i32_254 dim 1 : vector<32x256xf32>, i32 -> vector<32x256xf32>
    %c239_i32_255 = arith.constant 239 : i32
    %531 = tpu.dynamic_rotate %503 by %c239_i32_255 dim 1 : vector<32x256xf32>, i32 -> vector<32x256xf32>
    %c255_i32_256 = arith.constant 255 : i32
    %532 = tpu.dynamic_rotate %503 by %c255_i32_256 dim 1 : vector<32x256xf32>, i32 -> vector<32x256xf32>
    %c15_i32_257 = arith.constant 15 : i32
    %533 = vector.broadcast %c15_i32_257 : i32 to vector<32x256xi32>
    %534 = arith.cmpi slt, %16, %533 : vector<32x256xi32>
    %535 = arith.select %534, %531, %532 : vector<32x256xi1>, vector<32x256xf32>
    %536 = tpu.concatenate %508, %509, %514, %519, %503, %524, %529, %530, %535 in 0 : vector<32x256xf32>, vector<32x256xf32>, vector<32x256xf32>, vector<32x256xf32>, vector<32x256xf32>, vector<32x256xf32>, vector<32x256xf32>, vector<32x256xf32>, vector<32x256xf32> -> vector<288x256xf32>
    %cst_258 = arith.constant dense<0.000000e+00> : vector<32x256xf32>
    %537 = tpu.matmul %322, %536, %cst_258 {dimension_numbers = #tpu.dot_dimension_numbers<[1], [0], [0], [1], [0, 0, 1, 1], [], []>} : vector<32x288xf32>, vector<288x256xf32>, vector<32x256xf32> -> vector<32x256xf32>
    %538 = vector.broadcast %323 : vector<32x1xf32> to vector<32x256xf32>
    %539 = arith.addf %537, %538 : vector<32x256xf32>
    %540 = arith.addf %315, %539 : vector<32x256xf32>
    %cst_259 = arith.constant dense<0.000000e+00> : vector<32xf32>
    %541 = vector.multi_reduction <add>, %540, %cst_259 [1] : vector<32x256xf32> to vector<32xf32>
    %542 = vector.shape_cast %541 : vector<32xf32> to vector<32x1xf32>
    %cst_260 = arith.constant dense<0.000000e+00> : vector<1xf32>
    %543 = vector.multi_reduction <add>, %542, %cst_260 [0] : vector<32x1xf32> to vector<1xf32>
    %544 = vector.shape_cast %543 : vector<1xf32> to vector<1x1xf32>
    %cst_261 = arith.constant 8.192000e+03 : f32
    %545 = vector.broadcast %cst_261 : f32 to vector<1x1xf32>
    %546 = arith.divf %544, %545 : vector<1x1xf32>
    %547 = vector.broadcast %546 : vector<1x1xf32> to vector<32x256xf32>
    %548 = arith.subf %540, %547 : vector<32x256xf32>
    %549 = arith.mulf %548, %548 : vector<32x256xf32>
    %cst_262 = arith.constant dense<0.000000e+00> : vector<32xf32>
    %550 = vector.multi_reduction <add>, %549, %cst_262 [1] : vector<32x256xf32> to vector<32xf32>
    %551 = vector.shape_cast %550 : vector<32xf32> to vector<32x1xf32>
    %cst_263 = arith.constant dense<0.000000e+00> : vector<1xf32>
    %552 = vector.multi_reduction <add>, %551, %cst_263 [0] : vector<32x1xf32> to vector<1xf32>
    %553 = vector.shape_cast %552 : vector<1xf32> to vector<1x1xf32>
    %cst_264 = arith.constant 8.192000e+03 : f32
    %554 = vector.broadcast %cst_264 : f32 to vector<1x1xf32>
    %555 = arith.divf %553, %554 : vector<1x1xf32>
    %cst_265 = arith.constant 9.99999974E-6 : f32
    %556 = vector.broadcast %cst_265 : f32 to vector<1x1xf32>
    %557 = arith.addf %555, %556 : vector<1x1xf32>
    %558 = math.rsqrt %557 : vector<1x1xf32>
    %559 = vector.broadcast %558 : vector<1x1xf32> to vector<32x256xf32>
    %560 = arith.mulf %548, %559 : vector<32x256xf32>
    %561 = vector.broadcast %324 : vector<32x1xf32> to vector<32x256xf32>
    %562 = arith.mulf %560, %561 : vector<32x256xf32>
    %563 = vector.broadcast %325 : vector<32x1xf32> to vector<32x256xf32>
    %564 = arith.addf %562, %563 : vector<32x256xf32>
    %cst_266 = arith.constant dense<0.000000e+00> : vector<32x256xf32>
    %565 = tpu.matmul %326, %564, %cst_266 {dimension_numbers = #tpu.dot_dimension_numbers<[1], [0], [0], [1], [0, 0, 1, 1], [], []>} : vector<32x32xf32>, vector<32x256xf32>, vector<32x256xf32> -> vector<32x256xf32>
    %cst_267 = arith.constant 0.707106769 : f32
    %566 = vector.broadcast %cst_267 : f32 to vector<32x256xf32>
    %567 = arith.mulf %565, %566 : vector<32x256xf32>
    %cst_268 = arith.constant 0.000000e+00 : f32
    %568 = vector.broadcast %cst_268 : f32 to vector<32x256xf32>
    %569 = arith.cmpf oge, %567, %568 : vector<32x256xf32>
    %cst_269 = arith.constant 1.000000e+00 : f32
    %cst_270 = arith.constant -1.000000e+00 : f32
    %570 = vector.broadcast %cst_269 : f32 to vector<32x256xf32>
    %571 = vector.broadcast %cst_270 : f32 to vector<32x256xf32>
    %572 = arith.select %569, %570, %571 : vector<32x256xi1>, vector<32x256xf32>
    %573 = math.absf %567 : vector<32x256xf32>
    %cst_271 = arith.constant 0.327591091 : f32
    %574 = vector.broadcast %cst_271 : f32 to vector<32x256xf32>
    %575 = arith.mulf %574, %573 : vector<32x256xf32>
    %cst_272 = arith.constant 1.000000e+00 : f32
    %576 = vector.broadcast %cst_272 : f32 to vector<32x256xf32>
    %577 = arith.addf %576, %575 : vector<32x256xf32>
    %578 = tpu.reciprocal %577 : vector<32x256xf32> -> vector<32x256xf32>
    %cst_273 = arith.constant 1.06140542 : f32
    %579 = vector.broadcast %cst_273 : f32 to vector<32x256xf32>
    %580 = arith.mulf %579, %578 : vector<32x256xf32>
    %cst_274 = arith.constant -1.45315206 : f32
    %581 = vector.broadcast %cst_274 : f32 to vector<32x256xf32>
    %582 = arith.addf %580, %581 : vector<32x256xf32>
    %583 = arith.mulf %582, %578 : vector<32x256xf32>
    %cst_275 = arith.constant 1.42141378 : f32
    %584 = vector.broadcast %cst_275 : f32 to vector<32x256xf32>
    %585 = arith.addf %583, %584 : vector<32x256xf32>
    %586 = arith.mulf %585, %578 : vector<32x256xf32>
    %cst_276 = arith.constant -0.284496725 : f32
    %587 = vector.broadcast %cst_276 : f32 to vector<32x256xf32>
    %588 = arith.addf %586, %587 : vector<32x256xf32>
    %589 = arith.mulf %588, %578 : vector<32x256xf32>
    %cst_277 = arith.constant 0.254829586 : f32
    %590 = vector.broadcast %cst_277 : f32 to vector<32x256xf32>
    %591 = arith.addf %589, %590 : vector<32x256xf32>
    %592 = arith.mulf %591, %578 : vector<32x256xf32>
    %cst_278 = arith.constant 0.000000e+00 : f32
    %593 = vector.broadcast %cst_278 : f32 to vector<32x256xf32>
    %594 = arith.subf %593, %573 : vector<32x256xf32>
    %595 = arith.mulf %594, %573 : vector<32x256xf32>
    %596 = math.exp %595 : vector<32x256xf32>
    %597 = arith.mulf %592, %596 : vector<32x256xf32>
    %cst_279 = arith.constant 1.000000e+00 : f32
    %598 = vector.broadcast %cst_279 : f32 to vector<32x256xf32>
    %599 = arith.subf %598, %597 : vector<32x256xf32>
    %600 = arith.mulf %572, %599 : vector<32x256xf32>
    %cst_280 = arith.constant 5.000000e-01 : f32
    %601 = vector.broadcast %cst_280 : f32 to vector<32x256xf32>
    %602 = arith.mulf %601, %565 : vector<32x256xf32>
    %cst_281 = arith.constant 1.000000e+00 : f32
    %603 = vector.broadcast %cst_281 : f32 to vector<32x256xf32>
    %604 = arith.addf %603, %600 : vector<32x256xf32>
    %605 = arith.mulf %602, %604 : vector<32x256xf32>
    %cst_282 = arith.constant dense<0.000000e+00> : vector<32x256xf32>
    %606 = tpu.matmul %327, %605, %cst_282 {dimension_numbers = #tpu.dot_dimension_numbers<[1], [0], [0], [1], [0, 0, 1, 1], [], []>} : vector<32x32xf32>, vector<32x256xf32>, vector<32x256xf32> -> vector<32x256xf32>
    %607 = arith.addf %540, %606 : vector<32x256xf32>
    %c0_283 = arith.constant 0 : index
    %c0_284 = arith.constant 0 : index
    %608 = vector.load %arg28[%c0_283, %c0_284] : memref<32x1xf32, #tpu.memory_space<vmem>>, vector<32x1xf32>
    %c0_285 = arith.constant 0 : index
    %c0_286 = arith.constant 0 : index
    %609 = vector.load %arg29[%c0_285, %c0_286] : memref<32x1xf32, #tpu.memory_space<vmem>>, vector<32x1xf32>
    %c0_287 = arith.constant 0 : index
    %c0_288 = arith.constant 0 : index
    %610 = vector.load %arg30[%c0_287, %c0_288] : memref<4x32xf32, #tpu.memory_space<vmem>>, vector<4x32xf32>
    %c0_289 = arith.constant 0 : index
    %c0_290 = arith.constant 0 : index
    %611 = vector.load %arg31[%c0_289, %c0_290] : memref<4x1xf32, #tpu.memory_space<vmem>>, vector<4x1xf32>
    %cst_291 = arith.constant dense<0.000000e+00> : vector<32xf32>
    %612 = vector.multi_reduction <add>, %607, %cst_291 [1] : vector<32x256xf32> to vector<32xf32>
    %613 = vector.shape_cast %612 : vector<32xf32> to vector<32x1xf32>
    %cst_292 = arith.constant dense<0.000000e+00> : vector<1xf32>
    %614 = vector.multi_reduction <add>, %613, %cst_292 [0] : vector<32x1xf32> to vector<1xf32>
    %615 = vector.shape_cast %614 : vector<1xf32> to vector<1x1xf32>
    %cst_293 = arith.constant 8.192000e+03 : f32
    %616 = vector.broadcast %cst_293 : f32 to vector<1x1xf32>
    %617 = arith.divf %615, %616 : vector<1x1xf32>
    %618 = vector.broadcast %617 : vector<1x1xf32> to vector<32x256xf32>
    %619 = arith.subf %607, %618 : vector<32x256xf32>
    %620 = arith.mulf %619, %619 : vector<32x256xf32>
    %cst_294 = arith.constant dense<0.000000e+00> : vector<32xf32>
    %621 = vector.multi_reduction <add>, %620, %cst_294 [1] : vector<32x256xf32> to vector<32xf32>
    %622 = vector.shape_cast %621 : vector<32xf32> to vector<32x1xf32>
    %cst_295 = arith.constant dense<0.000000e+00> : vector<1xf32>
    %623 = vector.multi_reduction <add>, %622, %cst_295 [0] : vector<32x1xf32> to vector<1xf32>
    %624 = vector.shape_cast %623 : vector<1xf32> to vector<1x1xf32>
    %cst_296 = arith.constant 8.192000e+03 : f32
    %625 = vector.broadcast %cst_296 : f32 to vector<1x1xf32>
    %626 = arith.divf %624, %625 : vector<1x1xf32>
    %cst_297 = arith.constant 9.99999974E-6 : f32
    %627 = vector.broadcast %cst_297 : f32 to vector<1x1xf32>
    %628 = arith.addf %626, %627 : vector<1x1xf32>
    %629 = math.rsqrt %628 : vector<1x1xf32>
    %630 = vector.broadcast %629 : vector<1x1xf32> to vector<32x256xf32>
    %631 = arith.mulf %619, %630 : vector<32x256xf32>
    %632 = vector.broadcast %608 : vector<32x1xf32> to vector<32x256xf32>
    %633 = arith.mulf %631, %632 : vector<32x256xf32>
    %634 = vector.broadcast %609 : vector<32x1xf32> to vector<32x256xf32>
    %635 = arith.addf %633, %634 : vector<32x256xf32>
    %cst_298 = arith.constant dense<0.000000e+00> : vector<4x256xf32>
    %636 = tpu.matmul %610, %635, %cst_298 {dimension_numbers = #tpu.dot_dimension_numbers<[1], [0], [0], [1], [0, 0, 1, 1], [], []>} : vector<4x32xf32>, vector<32x256xf32>, vector<4x256xf32> -> vector<4x256xf32>
    %637 = vector.broadcast %611 : vector<4x1xf32> to vector<4x256xf32>
    %638 = arith.addf %636, %637 : vector<4x256xf32>
    %c0_299 = arith.constant 0 : index
    %c0_300 = arith.constant 0 : index
    %c0_301 = arith.constant 0 : index
    %639 = vector.load %arg32[%c0_299, %c0_300, %c0_301] : memref<1x4x256xf32, #tpu.memory_space<vmem>>, vector<1x4x256xf32>
    %640 = vector.shape_cast %639 : vector<1x4x256xf32> to vector<4x256xf32>
    %641 = vector.shape_cast %638 : vector<4x256xf32> to vector<1x4x256xf32>
    tpu.vector_store %arg32[%c0_299, %c0_300, %c0_301], %641 {strides = array<i32>} : memref<1x4x256xf32, #tpu.memory_space<vmem>>, vector<1x4x256xf32>,
    return
  }
  func.func @transform_0(%arg0: i32) -> (i32, i32, i32) {
    %c0_i32 = arith.constant 0 : i32
    %c0_i32_0 = arith.constant 0 : i32
    %c0_i32_1 = arith.constant 0 : i32
    return %arg0, %c0_i32, %c0_i32_0 : i32, i32, i32
  }
  func.func @transform_1(%arg0: i32) -> (i32, i32) {
    %c0_i32 = arith.constant 0 : i32
    %c0_i32_0 = arith.constant 0 : i32
    %c0_i32_1 = arith.constant 0 : i32
    return %c0_i32, %c0_i32_0 : i32, i32
  }
  func.func @transform_2(%arg0: i32) -> (i32, i32) {
    %c0_i32 = arith.constant 0 : i32
    %c0_i32_0 = arith.constant 0 : i32
    %c0_i32_1 = arith.constant 0 : i32
    return %c0_i32, %c0_i32_0 : i32, i32
  }
  func.func @transform_3(%arg0: i32) -> (i32, i32) {
    %c0_i32 = arith.constant 0 : i32
    %c0_i32_0 = arith.constant 0 : i32
    %c0_i32_1 = arith.constant 0 : i32
    return %c0_i32, %c0_i32_0 : i32, i32
  }
  func.func @transform_4(%arg0: i32) -> (i32, i32) {
    %c0_i32 = arith.constant 0 : i32
    %c0_i32_0 = arith.constant 0 : i32
    %c0_i32_1 = arith.constant 0 : i32
    return %c0_i32, %c0_i32_0 : i32, i32
  }
  func.func @transform_5(%arg0: i32) -> (i32, i32) {
    %c0_i32 = arith.constant 0 : i32
    %c0_i32_0 = arith.constant 0 : i32
    %c0_i32_1 = arith.constant 0 : i32
    return %c0_i32, %c0_i32_0 : i32, i32
  }
  func.func @transform_6(%arg0: i32) -> (i32, i32) {
    %c0_i32 = arith.constant 0 : i32
    %c0_i32_0 = arith.constant 0 : i32
    %c0_i32_1 = arith.constant 0 : i32
    return %c0_i32, %c0_i32_0 : i32, i32
  }
  func.func @transform_7(%arg0: i32) -> (i32, i32) {
    %c0_i32 = arith.constant 0 : i32
    %c0_i32_0 = arith.constant 0 : i32
    %c0_i32_1 = arith.constant 0 : i32
    return %c0_i32, %c0_i32_0 : i32, i32
  }
  func.func @transform_8(%arg0: i32) -> (i32, i32) {
    %c0_i32 = arith.constant 0 : i32
    %c0_i32_0 = arith.constant 0 : i32
    %c0_i32_1 = arith.constant 0 : i32
    return %c0_i32, %c0_i32_0 : i32, i32
  }
  func.func @transform_9(%arg0: i32) -> (i32, i32) {
    %c0_i32 = arith.constant 0 : i32
    %c0_i32_0 = arith.constant 0 : i32
    %c0_i32_1 = arith.constant 0 : i32
    return %c0_i32, %c0_i32_0 : i32, i32
  }
  func.func @transform_10(%arg0: i32) -> (i32, i32) {
    %c0_i32 = arith.constant 0 : i32
    %c0_i32_0 = arith.constant 0 : i32
    %c0_i32_1 = arith.constant 0 : i32
    return %c0_i32, %c0_i32_0 : i32, i32
  }
  func.func @transform_11(%arg0: i32) -> (i32, i32) {
    %c0_i32 = arith.constant 0 : i32
    %c0_i32_0 = arith.constant 0 : i32
    %c0_i32_1 = arith.constant 0 : i32
    return %c0_i32, %c0_i32_0 : i32, i32
  }
  func.func @transform_12(%arg0: i32) -> (i32, i32) {
    %c0_i32 = arith.constant 0 : i32
    %c0_i32_0 = arith.constant 0 : i32
    %c0_i32_1 = arith.constant 0 : i32
    return %c0_i32, %c0_i32_0 : i32, i32
  }
  func.func @transform_13(%arg0: i32) -> (i32, i32) {
    %c0_i32 = arith.constant 0 : i32
    %c0_i32_0 = arith.constant 0 : i32
    %c0_i32_1 = arith.constant 0 : i32
    return %c0_i32, %c0_i32_0 : i32, i32
  }
  func.func @transform_14(%arg0: i32) -> (i32, i32) {
    %c0_i32 = arith.constant 0 : i32
    %c0_i32_0 = arith.constant 0 : i32
    %c0_i32_1 = arith.constant 0 : i32
    return %c0_i32, %c0_i32_0 : i32, i32
  }
  func.func @transform_15(%arg0: i32) -> (i32, i32) {
    %c0_i32 = arith.constant 0 : i32
    %c0_i32_0 = arith.constant 0 : i32
    %c0_i32_1 = arith.constant 0 : i32
    return %c0_i32, %c0_i32_0 : i32, i32
  }
  func.func @transform_16(%arg0: i32) -> (i32, i32) {
    %c0_i32 = arith.constant 0 : i32
    %c0_i32_0 = arith.constant 0 : i32
    %c0_i32_1 = arith.constant 0 : i32
    return %c0_i32, %c0_i32_0 : i32, i32
  }
  func.func @transform_17(%arg0: i32) -> (i32, i32) {
    %c0_i32 = arith.constant 0 : i32
    %c0_i32_0 = arith.constant 0 : i32
    %c0_i32_1 = arith.constant 0 : i32
    return %c0_i32, %c0_i32_0 : i32, i32
  }
  func.func @transform_18(%arg0: i32) -> (i32, i32) {
    %c0_i32 = arith.constant 0 : i32
    %c0_i32_0 = arith.constant 0 : i32
    %c0_i32_1 = arith.constant 0 : i32
    return %c0_i32, %c0_i32_0 : i32, i32
  }
  func.func @transform_19(%arg0: i32) -> (i32, i32) {
    %c0_i32 = arith.constant 0 : i32
    %c0_i32_0 = arith.constant 0 : i32
    %c0_i32_1 = arith.constant 0 : i32
    return %c0_i32, %c0_i32_0 : i32, i32
  }
  func.func @transform_20(%arg0: i32) -> (i32, i32) {
    %c0_i32 = arith.constant 0 : i32
    %c0_i32_0 = arith.constant 0 : i32
    %c0_i32_1 = arith.constant 0 : i32
    return %c0_i32, %c0_i32_0 : i32, i32
  }
  func.func @transform_21(%arg0: i32) -> (i32, i32) {
    %c0_i32 = arith.constant 0 : i32
    %c0_i32_0 = arith.constant 0 : i32
    %c0_i32_1 = arith.constant 0 : i32
    return %c0_i32, %c0_i32_0 : i32, i32
  }
  func.func @transform_22(%arg0: i32) -> (i32, i32) {
    %c0_i32 = arith.constant 0 : i32
    %c0_i32_0 = arith.constant 0 : i32
    %c0_i32_1 = arith.constant 0 : i32
    return %c0_i32, %c0_i32_0 : i32, i32
  }
  func.func @transform_23(%arg0: i32) -> (i32, i32) {
    %c0_i32 = arith.constant 0 : i32
    %c0_i32_0 = arith.constant 0 : i32
    %c0_i32_1 = arith.constant 0 : i32
    return %c0_i32, %c0_i32_0 : i32, i32
  }
  func.func @transform_24(%arg0: i32) -> (i32, i32) {
    %c0_i32 = arith.constant 0 : i32
    %c0_i32_0 = arith.constant 0 : i32
    %c0_i32_1 = arith.constant 0 : i32
    return %c0_i32, %c0_i32_0 : i32, i32
  }
  func.func @transform_25(%arg0: i32) -> (i32, i32) {
    %c0_i32 = arith.constant 0 : i32
    %c0_i32_0 = arith.constant 0 : i32
    %c0_i32_1 = arith.constant 0 : i32
    return %c0_i32, %c0_i32_0 : i32, i32
  }
  func.func @transform_26(%arg0: i32) -> (i32, i32) {
    %c0_i32 = arith.constant 0 : i32
    %c0_i32_0 = arith.constant 0 : i32
    %c0_i32_1 = arith.constant 0 : i32
    return %c0_i32, %c0_i32_0 : i32, i32
  }
  func.func @transform_27(%arg0: i32) -> (i32, i32) {
    %c0_i32 = arith.constant 0 : i32
    %c0_i32_0 = arith.constant 0 : i32
    %c0_i32_1 = arith.constant 0 : i32
    return %c0_i32, %c0_i32_0 : i32, i32
  }
  func.func @transform_28(%arg0: i32) -> (i32, i32) {
    %c0_i32 = arith.constant 0 : i32
    %c0_i32_0 = arith.constant 0 : i32
    %c0_i32_1 = arith.constant 0 : i32
    return %c0_i32, %c0_i32_0 : i32, i32
  }
  func.func @transform_29(%arg0: i32) -> (i32, i32) {
    %c0_i32 = arith.constant 0 : i32
    %c0_i32_0 = arith.constant 0 : i32
    %c0_i32_1 = arith.constant 0 : i32
    return %c0_i32, %c0_i32_0 : i32, i32
  }
  func.func @transform_30(%arg0: i32) -> (i32, i32) {
    %c0_i32 = arith.constant 0 : i32
    %c0_i32_0 = arith.constant 0 : i32
    %c0_i32_1 = arith.constant 0 : i32
    return %c0_i32, %c0_i32_0 : i32, i32
  }
  func.func @transform_31(%arg0: i32) -> (i32, i32, i32) {
    %c0_i32 = arith.constant 0 : i32
    %c0_i32_0 = arith.constant 0 : i32
    %c0_i32_1 = arith.constant 0 : i32
    return %arg0, %c0_i32, %c0_i32_0 : i32, i32, i32
  }
}

</mosaic_0001>

<llo_original>
// kernel: simple_cnn_forward.1
$region0: #{simple_cnn_forward.1}
  #allocation0 [shape = 'u32[]', space=smem, size = 0x4, offset = 0x4, fixed_abs, tag = 'smem constant byte address 0x4 - core index']
  #allocation1 [shape = 'u32[144,128]{1,0:T(1,128)}', space=vmem, size = 0x12000, scoped, tag = 'internal scratch']
  %s0 = inlined_call_operand.smem [shape: u32[32], index: -1, kind: input, shape index: {}]
  %s1 = sld [smem:[%s0]]
  %s2 = scalar_lea.smem %s0, 1
  %s3 = sld [smem:[%s2]]
  %s4 = scalar_lea.smem %s0, 2
  %s5 = sld [smem:[%s4]]
  %s6 = scalar_lea.smem %s0, 3
  %s7 = sld [smem:[%s6]]
  %s8 = scalar_lea.smem %s0, 4
  %s9 = sld [smem:[%s8]]
  %s10 = scalar_lea.smem %s0, 5
  %s11 = sld [smem:[%s10]]
  %s12 = scalar_lea.smem %s0, 6
  %s13 = sld [smem:[%s12]]
  %s14 = scalar_lea.smem %s0, 7
  %s15 = sld [smem:[%s14]]
  %s16 = scalar_lea.smem %s0, 8
  %s17 = sld [smem:[%s16]]
  %s18 = scalar_lea.smem %s0, 9
  %s19 = sld [smem:[%s18]]
  %s20 = scalar_lea.smem %s0, 10
  %s21 = sld [smem:[%s20]]
  %s22 = scalar_lea.smem %s0, 11
  %s23 = sld [smem:[%s22]]
  %s24 = scalar_lea.smem %s0, 12
  %s25 = sld [smem:[%s24]]
  %s26 = scalar_lea.smem %s0, 13
  %s27 = sld [smem:[%s26]]
  %s28 = scalar_lea.smem %s0, 14
  %s29 = sld [smem:[%s28]]
  %s30 = scalar_lea.smem %s0, 15
  %s31 = sld [smem:[%s30]]
  %s32 = scalar_lea.smem %s0, 16
  %s33 = sld [smem:[%s32]]
  %s34 = scalar_lea.smem %s0, 17
  %s35 = sld [smem:[%s34]]
  %s36 = scalar_lea.smem %s0, 18
  %s37 = sld [smem:[%s36]]
  %s38 = scalar_lea.smem %s0, 19
  %s39 = sld [smem:[%s38]]
  %s40 = scalar_lea.smem %s0, 20
  %s41 = sld [smem:[%s40]]
  %s42 = scalar_lea.smem %s0, 21
  %s43 = sld [smem:[%s42]]
  %s44 = scalar_lea.smem %s0, 22
  %s45 = sld [smem:[%s44]]
  %s46 = scalar_lea.smem %s0, 23
  %s47 = sld [smem:[%s46]]
  %s48 = scalar_lea.smem %s0, 24
  %s49 = sld [smem:[%s48]]
  %s50 = scalar_lea.smem %s0, 25
  %s51 = sld [smem:[%s50]]
  %s52 = scalar_lea.smem %s0, 26
  %s53 = sld [smem:[%s52]]
  %s54 = scalar_lea.smem %s0, 27
  %s55 = sld [smem:[%s54]]
  %s56 = scalar_lea.smem %s0, 28
  %s57 = sld [smem:[%s56]]
  %s58 = scalar_lea.smem %s0, 29
  %s59 = sld [smem:[%s58]]
  %s60 = scalar_lea.smem %s0, 30
  %s61 = sld [smem:[%s60]]
  %s62 = scalar_lea.smem %s0, 31
  %s63 = sld [smem:[%s62]]
  %s64 = sld [smem:[#allocation0]]
  $region157: #{simple_cnn_forward.1} parent=0
    _
  %s66 = ssub.s32 1, %s64
  %s67 = scalar_select 0, %s66, %s64
  loop: start=0, step=1, limit=4
  $region2: #{simple_cnn_forward.1} parent=0 // loop_pre_header
    _
  $region3: #{simple_cnn_forward.1} parent=0 // loop_header
    %s69 = sphi 0, %s73
    %p70 = scmp.ge.s32.totalorder %s69, 4
    %s79 = sphi 0, %s81
    %s82 = sphi 0, %s79
    %s83 = sphi 0, %s82
    %s99 = sphi 0, %s83
    %s103 = sphi 0, %s103
    %s105 = sphi 0, %s103
    %s106 = sphi 0, %s105
    %s120 = sphi 0, %s106
    %s124 = sphi 0, %s124
    %s126 = sphi 0, %s124
    %s127 = sphi 0, %s126
    %s141 = sphi 0, %s127
    %s145 = sphi 0, %s145
    %s147 = sphi 0, %s145
    %s148 = sphi 0, %s147
    %s162 = sphi 0, %s148
    %s166 = sphi 0, %s166
    %s168 = sphi 0, %s166
    %s169 = sphi 0, %s168
    %s183 = sphi 0, %s169
    %s187 = sphi 0, %s187
    %s189 = sphi 0, %s187
    %s190 = sphi 0, %s189
    %s204 = sphi 0, %s190
    %s208 = sphi 0, %s208
    %s210 = sphi 0, %s208
    %s211 = sphi 0, %s210
    %s225 = sphi 0, %s211
    %s229 = sphi 0, %s229
    %s231 = sphi 0, %s229
    %s232 = sphi 0, %s231
    %s246 = sphi 0, %s232
    %s250 = sphi 0, %s250
    %s252 = sphi 0, %s250
    %s253 = sphi 0, %s252
    %s267 = sphi 0, %s253
    %s271 = sphi 0, %s271
    %s273 = sphi 0, %s271
    %s274 = sphi 0, %s273
    %s288 = sphi 0, %s274
    %s292 = sphi 0, %s292
    %s294 = sphi 0, %s292
    %s295 = sphi 0, %s294
    %s309 = sphi 0, %s295
    %s313 = sphi 0, %s313
    %s315 = sphi 0, %s313
    %s316 = sphi 0, %s315
    %s330 = sphi 0, %s316
    %s334 = sphi 0, %s334
    %s336 = sphi 0, %s334
    %s337 = sphi 0, %s336
    %s351 = sphi 0, %s337
    %s355 = sphi 0, %s355
    %s357 = sphi 0, %s355
    %s358 = sphi 0, %s357
    %s372 = sphi 0, %s358
    %s376 = sphi 0, %s376
    %s378 = sphi 0, %s376
    %s379 = sphi 0, %s378
    %s393 = sphi 0, %s379
    %s397 = sphi 0, %s397
    %s399 = sphi 0, %s397
    %s400 = sphi 0, %s399
    %s414 = sphi 0, %s400
    %s418 = sphi 0, %s418
    %s420 = sphi 0, %s418
    %s421 = sphi 0, %s420
    %s435 = sphi 0, %s421
    %s439 = sphi 0, %s439
    %s441 = sphi 0, %s439
    %s442 = sphi 0, %s441
    %s456 = sphi 0, %s442
    %s460 = sphi 0, %s460
    %s462 = sphi 0, %s460
    %s463 = sphi 0, %s462
    %s477 = sphi 0, %s463
    %s481 = sphi 0, %s481
    %s483 = sphi 0, %s481
    %s484 = sphi 0, %s483
    %s498 = sphi 0, %s484
    %s502 = sphi 0, %s502
    %s504 = sphi 0, %s502
    %s505 = sphi 0, %s504
    %s519 = sphi 0, %s505
    %s523 = sphi 0, %s523
    %s525 = sphi 0, %s523
    %s526 = sphi 0, %s525
    %s540 = sphi 0, %s526
    %s544 = sphi 0, %s544
    %s546 = sphi 0, %s544
    %s547 = sphi 0, %s546
    %s561 = sphi 0, %s547
    %s565 = sphi 0, %s565
    %s567 = sphi 0, %s565
    %s568 = sphi 0, %s567
    %s582 = sphi 0, %s568
    %s586 = sphi 0, %s586
    %s588 = sphi 0, %s586
    %s589 = sphi 0, %s588
    %s603 = sphi 0, %s589
    %s607 = sphi 0, %s607
    %s609 = sphi 0, %s607
    %s610 = sphi 0, %s609
    %s624 = sphi 0, %s610
    %s628 = sphi 0, %s628
    %s630 = sphi 0, %s628
    %s631 = sphi 0, %s630
    %s645 = sphi 0, %s631
    %s649 = sphi 0, %s649
    %s651 = sphi 0, %s649
    %s652 = sphi 0, %s651
    %s666 = sphi 0, %s652
    %s670 = sphi 0, %s670
    %s672 = sphi 0, %s670
    %s673 = sphi 0, %s672
    %s687 = sphi 0, %s673
    %s691 = sphi 0, %s691
    %s693 = sphi 0, %s691
    %s694 = sphi 0, %s693
    %s708 = sphi 0, %s694
    %s712 = sphi 0, %s712
    %s714 = sphi 0, %s712
    %s715 = sphi 0, %s714
    %s729 = sphi 0, %s715
    %s735 = sphi 0, %s737
    %s738 = sphi 0, %s735
    %s739 = sphi 0, %s738
    %s755 = sphi 0, %s739
  $region4: #{simple_cnn_forward.1} parent=0 // loop_header_branch
    %72 = sbr.rel (%p70) target = $region8
  $region5: #{simple_cnn_forward.1} parent=0 // loop_body
    %s74 = ssub.s32 %s69, 1
    %s75 = ssub.s32 %s69, 2
    %s76 = sadd.s32 %s69, 1
    %s77 = ssub.s32 %s69, %s76
    %p78 = scmp.eq.s32.totalorder %s77, 0
    %s80 = sadd.s32 %s79, 1
    %s81 = scalar_select %p78, %s79, %s80
    %p84 = pneg %p78
    %p85 = scmp.eq.s32.totalorder %s69, 1
    %p86 = por %p84, %p85
    %p87 = scmp.ne.s32.totalorder %s79, %s82
    %p88 = scmp.eq.s32.totalorder %s69, 0
    %p89 = por %p87, %p88
    %p90 = scmp.ne.s32.totalorder %s79, %s82
    %p91 = scmp.eq.s32.totalorder %s74, 1
    %p92 = por %p90, %p91
    %p93 = scmp.ne.s32.totalorder %s82, %s83
    %p94 = scmp.eq.s32.totalorder %s74, 0
    %p95 = por %p93, %p94
    %p96 = scmp.ne.s32.totalorder %s82, %s83
    %p97 = scmp.eq.s32.totalorder %s75, 1
    %p98 = por %p96, %p97
    %p100 = scmp.ne.s32.totalorder %s83, %s99
    %p101 = scmp.eq.s32.totalorder %s75, 0
    %p102 = por %p100, %p101
    %s104 = sadd.s32 %s103, 1
    %p107 = scmp.eq.s32.totalorder %s69, 1
    %p108 = scmp.ne.s32.totalorder %s103, %s105
    %p109 = scmp.eq.s32.totalorder %s69, 0
    %p110 = por %p108, %p109
    %p111 = scmp.ne.s32.totalorder %s103, %s105
    %p112 = scmp.eq.s32.totalorder %s74, 1
    %p113 = por %p111, %p112
    %p114 = scmp.ne.s32.totalorder %s105, %s106
    %p115 = scmp.eq.s32.totalorder %s74, 0
    %p116 = por %p114, %p115
    %p117 = scmp.ne.s32.totalorder %s105, %s106
    %p118 = scmp.eq.s32.totalorder %s75, 1
    %p119 = por %p117, %p118
    %p121 = scmp.ne.s32.totalorder %s106, %s120
    %p122 = scmp.eq.s32.totalorder %s75, 0
    %p123 = por %p121, %p122
    %s125 = sadd.s32 %s124, 1
    %p128 = scmp.eq.s32.totalorder %s69, 1
    %p129 = scmp.ne.s32.totalorder %s124, %s126
    %p130 = scmp.eq.s32.totalorder %s69, 0
    %p131 = por %p129, %p130
    %p132 = scmp.ne.s32.totalorder %s124, %s126
    %p133 = scmp.eq.s32.totalorder %s74, 1
    %p134 = por %p132, %p133
    %p135 = scmp.ne.s32.totalorder %s126, %s127
    %p136 = scmp.eq.s32.totalorder %s74, 0
    %p137 = por %p135, %p136
    %p138 = scmp.ne.s32.totalorder %s126, %s127
    %p139 = scmp.eq.s32.totalorder %s75, 1
    %p140 = por %p138, %p139
    %p142 = scmp.ne.s32.totalorder %s127, %s141
    %p143 = scmp.eq.s32.totalorder %s75, 0
    %p144 = por %p142, %p143
    %s146 = sadd.s32 %s145, 1
    %p149 = scmp.eq.s32.totalorder %s69, 1
    %p150 = scmp.ne.s32.totalorder %s145, %s147
    %p151 = scmp.eq.s32.totalorder %s69, 0
    %p152 = por %p150, %p151
    %p153 = scmp.ne.s32.totalorder %s145, %s147
    %p154 = scmp.eq.s32.totalorder %s74, 1
    %p155 = por %p153, %p154
    %p156 = scmp.ne.s32.totalorder %s147, %s148
    %p157 = scmp.eq.s32.totalorder %s74, 0
    %p158 = por %p156, %p157
    %p159 = scmp.ne.s32.totalorder %s147, %s148
    %p160 = scmp.eq.s32.totalorder %s75, 1
    %p161 = por %p159, %p160
    %p163 = scmp.ne.s32.totalorder %s148, %s162
    %p164 = scmp.eq.s32.totalorder %s75, 0
    %p165 = por %p163, %p164
    %s167 = sadd.s32 %s166, 1
    %p170 = scmp.eq.s32.totalorder %s69, 1
    %p171 = scmp.ne.s32.totalorder %s166, %s168
    %p172 = scmp.eq.s32.totalorder %s69, 0
    %p173 = por %p171, %p172
    %p174 = scmp.ne.s32.totalorder %s166, %s168
    %p175 = scmp.eq.s32.totalorder %s74, 1
    %p176 = por %p174, %p175
    %p177 = scmp.ne.s32.totalorder %s168, %s169
    %p178 = scmp.eq.s32.totalorder %s74, 0
    %p179 = por %p177, %p178
    %p180 = scmp.ne.s32.totalorder %s168, %s169
    %p181 = scmp.eq.s32.totalorder %s75, 1
    %p182 = por %p180, %p181
    %p184 = scmp.ne.s32.totalorder %s169, %s183
    %p185 = scmp.eq.s32.totalorder %s75, 0
    %p186 = por %p184, %p185
    %s188 = sadd.s32 %s187, 1
    %p191 = scmp.eq.s32.totalorder %s69, 1
    %p192 = scmp.ne.s32.totalorder %s187, %s189
    %p193 = scmp.eq.s32.totalorder %s69, 0
    %p194 = por %p192, %p193
    %p195 = scmp.ne.s32.totalorder %s187, %s189
    %p196 = scmp.eq.s32.totalorder %s74, 1
    %p197 = por %p195, %p196
    %p198 = scmp.ne.s32.totalorder %s189, %s190
    %p199 = scmp.eq.s32.totalorder %s74, 0
    %p200 = por %p198, %p199
    %p201 = scmp.ne.s32.totalorder %s189, %s190
    %p202 = scmp.eq.s32.totalorder %s75, 1
    %p203 = por %p201, %p202
    %p205 = scmp.ne.s32.totalorder %s190, %s204
    %p206 = scmp.eq.s32.totalorder %s75, 0
    %p207 = por %p205, %p206
    %s209 = sadd.s32 %s208, 1
    %p212 = scmp.eq.s32.totalorder %s69, 1
    %p213 = scmp.ne.s32.totalorder %s208, %s210
    %p214 = scmp.eq.s32.totalorder %s69, 0
    %p215 = por %p213, %p214
    %p216 = scmp.ne.s32.totalorder %s208, %s210
    %p217 = scmp.eq.s32.totalorder %s74, 1
    %p218 = por %p216, %p217
    %p219 = scmp.ne.s32.totalorder %s210, %s211
    %p220 = scmp.eq.s32.totalorder %s74, 0
    %p221 = por %p219, %p220
    %p222 = scmp.ne.s32.totalorder %s210, %s211
    %p223 = scmp.eq.s32.totalorder %s75, 1
    %p224 = por %p222, %p223
    %p226 = scmp.ne.s32.totalorder %s211, %s225
    %p227 = scmp.eq.s32.totalorder %s75, 0
    %p228 = por %p226, %p227
    %s230 = sadd.s32 %s229, 1
    %p233 = scmp.eq.s32.totalorder %s69, 1
    %p234 = scmp.ne.s32.totalorder %s229, %s231
    %p235 = scmp.eq.s32.totalorder %s69, 0
    %p236 = por %p234, %p235
    %p237 = scmp.ne.s32.totalorder %s229, %s231
    %p238 = scmp.eq.s32.totalorder %s74, 1
    %p239 = por %p237, %p238
    %p240 = scmp.ne.s32.totalorder %s231, %s232
    %p241 = scmp.eq.s32.totalorder %s74, 0
    %p242 = por %p240, %p241
    %p243 = scmp.ne.s32.totalorder %s231, %s232
    %p244 = scmp.eq.s32.totalorder %s75, 1
    %p245 = por %p243, %p244
    %p247 = scmp.ne.s32.totalorder %s232, %s246
    %p248 = scmp.eq.s32.totalorder %s75, 0
    %p249 = por %p247, %p248
    %s251 = sadd.s32 %s250, 1
    %p254 = scmp.eq.s32.totalorder %s69, 1
    %p255 = scmp.ne.s32.totalorder %s250, %s252
    %p256 = scmp.eq.s32.totalorder %s69, 0
    %p257 = por %p255, %p256
    %p258 = scmp.ne.s32.totalorder %s250, %s252
    %p259 = scmp.eq.s32.totalorder %s74, 1
    %p260 = por %p258, %p259
    %p261 = scmp.ne.s32.totalorder %s252, %s253
    %p262 = scmp.eq.s32.totalorder %s74, 0
    %p263 = por %p261, %p262
    %p264 = scmp.ne.s32.totalorder %s252, %s253
    %p265 = scmp.eq.s32.totalorder %s75, 1
    %p266 = por %p264, %p265
    %p268 = scmp.ne.s32.totalorder %s253, %s267
    %p269 = scmp.eq.s32.totalorder %s75, 0
    %p270 = por %p268, %p269
    %s272 = sadd.s32 %s271, 1
    %p275 = scmp.eq.s32.totalorder %s69, 1
    %p276 = scmp.ne.s32.totalorder %s271, %s273
    %p277 = scmp.eq.s32.totalorder %s69, 0
    %p278 = por %p276, %p277
    %p279 = scmp.ne.s32.totalorder %s271, %s273
    %p280 = scmp.eq.s32.totalorder %s74, 1
    %p281 = por %p279, %p280
    %p282 = scmp.ne.s32.totalorder %s273, %s274
    %p283 = scmp.eq.s32.totalorder %s74, 0
    %p284 = por %p282, %p283
    %p285 = scmp.ne.s32.totalorder %s273, %s274
    %p286 = scmp.eq.s32.totalorder %s75, 1
    %p287 = por %p285, %p286
    %p289 = scmp.ne.s32.totalorder %s274, %s288
    %p290 = scmp.eq.s32.totalorder %s75, 0
    %p291 = por %p289, %p290
    %s293 = sadd.s32 %s292, 1
    %p296 = scmp.eq.s32.totalorder %s69, 1
    %p297 = scmp.ne.s32.totalorder %s292, %s294
    %p298 = scmp.eq.s32.totalorder %s69, 0
    %p299 = por %p297, %p298
    %p300 = scmp.ne.s32.totalorder %s292, %s294
    %p301 = scmp.eq.s32.totalorder %s74, 1
    %p302 = por %p300, %p301
    %p303 = scmp.ne.s32.totalorder %s294, %s295
    %p304 = scmp.eq.s32.totalorder %s74, 0
    %p305 = por %p303, %p304
    %p306 = scmp.ne.s32.totalorder %s294, %s295
    %p307 = scmp.eq.s32.totalorder %s75, 1
    %p308 = por %p306, %p307
    %p310 = scmp.ne.s32.totalorder %s295, %s309
    %p311 = scmp.eq.s32.totalorder %s75, 0
    %p312 = por %p310, %p311
    %s314 = sadd.s32 %s313, 1
    %p317 = scmp.eq.s32.totalorder %s69, 1
    %p318 = scmp.ne.s32.totalorder %s313, %s315
    %p319 = scmp.eq.s32.totalorder %s69, 0
    %p320 = por %p318, %p319
    %p321 = scmp.ne.s32.totalorder %s313, %s315
    %p322 = scmp.eq.s32.totalorder %s74, 1
    %p323 = por %p321, %p322
    %p324 = scmp.ne.s32.totalorder %s315, %s316
    %p325 = scmp.eq.s32.totalorder %s74, 0
    %p326 = por %p324, %p325
    %p327 = scmp.ne.s32.totalorder %s315, %s316
    %p328 = scmp.eq.s32.totalorder %s75, 1
    %p329 = por %p327, %p328
    %p331 = scmp.ne.s32.totalorder %s316, %s330
    %p332 = scmp.eq.s32.totalorder %s75, 0
    %p333 = por %p331, %p332
    %s335 = sadd.s32 %s334, 1
    %p338 = scmp.eq.s32.totalorder %s69, 1
    %p339 = scmp.ne.s32.totalorder %s334, %s336
    %p340 = scmp.eq.s32.totalorder %s69, 0
    %p341 = por %p339, %p340
    %p342 = scmp.ne.s32.totalorder %s334, %s336
    %p343 = scmp.eq.s32.totalorder %s74, 1
    %p344 = por %p342, %p343
    %p345 = scmp.ne.s32.totalorder %s336, %s337
    %p346 = scmp.eq.s32.totalorder %s74, 0
    %p347 = por %p345, %p346
    %p348 = scmp.ne.s32.totalorder %s336, %s337
    %p349 = scmp.eq.s32.totalorder %s75, 1
    %p350 = por %p348, %p349
    %p352 = scmp.ne.s32.totalorder %s337, %s351
    %p353 = scmp.eq.s32.totalorder %s75, 0
    %p354 = por %p352, %p353
    %s356 = sadd.s32 %s355, 1
    %p359 = scmp.eq.s32.totalorder %s69, 1
    %p360 = scmp.ne.s32.totalorder %s355, %s357
    %p361 = scmp.eq.s32.totalorder %s69, 0
    %p362 = por %p360, %p361
    %p363 = scmp.ne.s32.totalorder %s355, %s357
    %p364 = scmp.eq.s32.totalorder %s74, 1
    %p365 = por %p363, %p364
    %p366 = scmp.ne.s32.totalorder %s357, %s358
    %p367 = scmp.eq.s32.totalorder %s74, 0
    %p368 = por %p366, %p367
    %p369 = scmp.ne.s32.totalorder %s357, %s358
    %p370 = scmp.eq.s32.totalorder %s75, 1
    %p371 = por %p369, %p370
    %p373 = scmp.ne.s32.totalorder %s358, %s372
    %p374 = scmp.eq.s32.totalorder %s75, 0
    %p375 = por %p373, %p374
    %s377 = sadd.s32 %s376, 1
    %p380 = scmp.eq.s32.totalorder %s69, 1
    %p381 = scmp.ne.s32.totalorder %s376, %s378
    %p382 = scmp.eq.s32.totalorder %s69, 0
    %p383 = por %p381, %p382
    %p384 = scmp.ne.s32.totalorder %s376, %s378
    %p385 = scmp.eq.s32.totalorder %s74, 1
    %p386 = por %p384, %p385
    %p387 = scmp.ne.s32.totalorder %s378, %s379
    %p388 = scmp.eq.s32.totalorder %s74, 0
    %p389 = por %p387, %p388
    %p390 = scmp.ne.s32.totalorder %s378, %s379
    %p391 = scmp.eq.s32.totalorder %s75, 1
    %p392 = por %p390, %p391
    %p394 = scmp.ne.s32.totalorder %s379, %s393
    %p395 = scmp.eq.s32.totalorder %s75, 0
    %p396 = por %p394, %p395
    %s398 = sadd.s32 %s397, 1
    %p401 = scmp.eq.s32.totalorder %s69, 1
    %p402 = scmp.ne.s32.totalorder %s397, %s399
    %p403 = scmp.eq.s32.totalorder %s69, 0
    %p404 = por %p402, %p403
    %p405 = scmp.ne.s32.totalorder %s397, %s399
    %p406 = scmp.eq.s32.totalorder %s74, 1
    %p407 = por %p405, %p406
    %p408 = scmp.ne.s32.totalorder %s399, %s400
    %p409 = scmp.eq.s32.totalorder %s74, 0
    %p410 = por %p408, %p409
    %p411 = scmp.ne.s32.totalorder %s399, %s400
    %p412 = scmp.eq.s32.totalorder %s75, 1
    %p413 = por %p411, %p412
    %p415 = scmp.ne.s32.totalorder %s400, %s414
    %p416 = scmp.eq.s32.totalorder %s75, 0
    %p417 = por %p415, %p416
    %s419 = sadd.s32 %s418, 1
    %p422 = scmp.eq.s32.totalorder %s69, 1
    %p423 = scmp.ne.s32.totalorder %s418, %s420
    %p424 = scmp.eq.s32.totalorder %s69, 0
    %p425 = por %p423, %p424
    %p426 = scmp.ne.s32.totalorder %s418, %s420
    %p427 = scmp.eq.s32.totalorder %s74, 1
    %p428 = por %p426, %p427
    %p429 = scmp.ne.s32.totalorder %s420, %s421
    %p430 = scmp.eq.s32.totalorder %s74, 0
    %p431 = por %p429, %p430
    %p432 = scmp.ne.s32.totalorder %s420, %s421
    %p433 = scmp.eq.s32.totalorder %s75, 1
    %p434 = por %p432, %p433
    %p436 = scmp.ne.s32.totalorder %s421, %s435
    %p437 = scmp.eq.s32.totalorder %s75, 0
    %p438 = por %p436, %p437
    %s440 = sadd.s32 %s439, 1
    %p443 = scmp.eq.s32.totalorder %s69, 1
    %p444 = scmp.ne.s32.totalorder %s439, %s441
    %p445 = scmp.eq.s32.totalorder %s69, 0
    %p446 = por %p444, %p445
    %p447 = scmp.ne.s32.totalorder %s439, %s441
    %p448 = scmp.eq.s32.totalorder %s74, 1
    %p449 = por %p447, %p448
    %p450 = scmp.ne.s32.totalorder %s441, %s442
    %p451 = scmp.eq.s32.totalorder %s74, 0
    %p452 = por %p450, %p451
    %p453 = scmp.ne.s32.totalorder %s441, %s442
    %p454 = scmp.eq.s32.totalorder %s75, 1
    %p455 = por %p453, %p454
    %p457 = scmp.ne.s32.totalorder %s442, %s456
    %p458 = scmp.eq.s32.totalorder %s75, 0
    %p459 = por %p457, %p458
    %s461 = sadd.s32 %s460, 1
    %p464 = scmp.eq.s32.totalorder %s69, 1
    %p465 = scmp.ne.s32.totalorder %s460, %s462
    %p466 = scmp.eq.s32.totalorder %s69, 0
    %p467 = por %p465, %p466
    %p468 = scmp.ne.s32.totalorder %s460, %s462
    %p469 = scmp.eq.s32.totalorder %s74, 1
    %p470 = por %p468, %p469
    %p471 = scmp.ne.s32.totalorder %s462, %s463
    %p472 = scmp.eq.s32.totalorder %s74, 0
    %p473 = por %p471, %p472
    %p474 = scmp.ne.s32.totalorder %s462, %s463
    %p475 = scmp.eq.s32.totalorder %s75, 1
    %p476 = por %p474, %p475
    %p478 = scmp.ne.s32.totalorder %s463, %s477
    %p479 = scmp.eq.s32.totalorder %s75, 0
    %p480 = por %p478, %p479
    %s482 = sadd.s32 %s481, 1
    %p485 = scmp.eq.s32.totalorder %s69, 1
    %p486 = scmp.ne.s32.totalorder %s481, %s483
    %p487 = scmp.eq.s32.totalorder %s69, 0
    %p488 = por %p486, %p487
    %p489 = scmp.ne.s32.totalorder %s481, %s483
    %p490 = scmp.eq.s32.totalorder %s74, 1
    %p491 = por %p489, %p490
    %p492 = scmp.ne.s32.totalorder %s483, %s484
    %p493 = scmp.eq.s32.totalorder %s74, 0
    %p494 = por %p492, %p493
    %p495 = scmp.ne.s32.totalorder %s483, %s484
    %p496 = scmp.eq.s32.totalorder %s75, 1
    %p497 = por %p495, %p496
    %p499 = scmp.ne.s32.totalorder %s484, %s498
    %p500 = scmp.eq.s32.totalorder %s75, 0
    %p501 = por %p499, %p500
    %s503 = sadd.s32 %s502, 1
    %p506 = scmp.eq.s32.totalorder %s69, 1
    %p507 = scmp.ne.s32.totalorder %s502, %s504
    %p508 = scmp.eq.s32.totalorder %s69, 0
    %p509 = por %p507, %p508
    %p510 = scmp.ne.s32.totalorder %s502, %s504
    %p511 = scmp.eq.s32.totalorder %s74, 1
    %p512 = por %p510, %p511
    %p513 = scmp.ne.s32.totalorder %s504, %s505
    %p514 = scmp.eq.s32.totalorder %s74, 0
    %p515 = por %p513, %p514
    %p516 = scmp.ne.s32.totalorder %s504, %s505
    %p517 = scmp.eq.s32.totalorder %s75, 1
    %p518 = por %p516, %p517
    %p520 = scmp.ne.s32.totalorder %s505, %s519
    %p521 = scmp.eq.s32.totalorder %s75, 0
    %p522 = por %p520, %p521
    %s524 = sadd.s32 %s523, 1
    %p527 = scmp.eq.s32.totalorder %s69, 1
    %p528 = scmp.ne.s32.totalorder %s523, %s525
    %p529 = scmp.eq.s32.totalorder %s69, 0
    %p530 = por %p528, %p529
    %p531 = scmp.ne.s32.totalorder %s523, %s525
    %p532 = scmp.eq.s32.totalorder %s74, 1
    %p533 = por %p531, %p532
    %p534 = scmp.ne.s32.totalorder %s525, %s526
    %p535 = scmp.eq.s32.totalorder %s74, 0
    %p536 = por %p534, %p535
    %p537 = scmp.ne.s32.totalorder %s525, %s526
    %p538 = scmp.eq.s32.totalorder %s75, 1
    %p539 = por %p537, %p538
    %p541 = scmp.ne.s32.totalorder %s526, %s540
    %p542 = scmp.eq.s32.totalorder %s75, 0
    %p543 = por %p541, %p542
    %s545 = sadd.s32 %s544, 1
    %p548 = scmp.eq.s32.totalorder %s69, 1
    %p549 = scmp.ne.s32.totalorder %s544, %s546
    %p550 = scmp.eq.s32.totalorder %s69, 0
    %p551 = por %p549, %p550
    %p552 = scmp.ne.s32.totalorder %s544, %s546
    %p553 = scmp.eq.s32.totalorder %s74, 1
    %p554 = por %p552, %p553
    %p555 = scmp.ne.s32.totalorder %s546, %s547
    %p556 = scmp.eq.s32.totalorder %s74, 0
    %p557 = por %p555, %p556
    %p558 = scmp.ne.s32.totalorder %s546, %s547
    %p559 = scmp.eq.s32.totalorder %s75, 1
    %p560 = por %p558, %p559
    %p562 = scmp.ne.s32.totalorder %s547, %s561
    %p563 = scmp.eq.s32.totalorder %s75, 0
    %p564 = por %p562, %p563
    %s566 = sadd.s32 %s565, 1
    %p569 = scmp.eq.s32.totalorder %s69, 1
    %p570 = scmp.ne.s32.totalorder %s565, %s567
    %p571 = scmp.eq.s32.totalorder %s69, 0
    %p572 = por %p570, %p571
    %p573 = scmp.ne.s32.totalorder %s565, %s567
    %p574 = scmp.eq.s32.totalorder %s74, 1
    %p575 = por %p573, %p574
    %p576 = scmp.ne.s32.totalorder %s567, %s568
    %p577 = scmp.eq.s32.totalorder %s74, 0
    %p578 = por %p576, %p577
    %p579 = scmp.ne.s32.totalorder %s567, %s568
    %p580 = scmp.eq.s32.totalorder %s75, 1
    %p581 = por %p579, %p580
    %p583 = scmp.ne.s32.totalorder %s568, %s582
    %p584 = scmp.eq.s32.totalorder %s75, 0
    %p585 = por %p583, %p584
    %s587 = sadd.s32 %s586, 1
    %p590 = scmp.eq.s32.totalorder %s69, 1
    %p591 = scmp.ne.s32.totalorder %s586, %s588
    %p592 = scmp.eq.s32.totalorder %s69, 0
    %p593 = por %p591, %p592
    %p594 = scmp.ne.s32.totalorder %s586, %s588
    %p595 = scmp.eq.s32.totalorder %s74, 1
    %p596 = por %p594, %p595
    %p597 = scmp.ne.s32.totalorder %s588, %s589
    %p598 = scmp.eq.s32.totalorder %s74, 0
    %p599 = por %p597, %p598
    %p600 = scmp.ne.s32.totalorder %s588, %s589
    %p601 = scmp.eq.s32.totalorder %s75, 1
    %p602 = por %p600, %p601
    %p604 = scmp.ne.s32.totalorder %s589, %s603
    %p605 = scmp.eq.s32.totalorder %s75, 0
    %p606 = por %p604, %p605
    %s608 = sadd.s32 %s607, 1
    %p611 = scmp.eq.s32.totalorder %s69, 1
    %p612 = scmp.ne.s32.totalorder %s607, %s609
    %p613 = scmp.eq.s32.totalorder %s69, 0
    %p614 = por %p612, %p613
    %p615 = scmp.ne.s32.totalorder %s607, %s609
    %p616 = scmp.eq.s32.totalorder %s74, 1
    %p617 = por %p615, %p616
    %p618 = scmp.ne.s32.totalorder %s609, %s610
    %p619 = scmp.eq.s32.totalorder %s74, 0
    %p620 = por %p618, %p619
    %p621 = scmp.ne.s32.totalorder %s609, %s610
    %p622 = scmp.eq.s32.totalorder %s75, 1
    %p623 = por %p621, %p622
    %p625 = scmp.ne.s32.totalorder %s610, %s624
    %p626 = scmp.eq.s32.totalorder %s75, 0
    %p627 = por %p625, %p626
    %s629 = sadd.s32 %s628, 1
    %p632 = scmp.eq.s32.totalorder %s69, 1
    %p633 = scmp.ne.s32.totalorder %s628, %s630
    %p634 = scmp.eq.s32.totalorder %s69, 0
    %p635 = por %p633, %p634
    %p636 = scmp.ne.s32.totalorder %s628, %s630
    %p637 = scmp.eq.s32.totalorder %s74, 1
    %p638 = por %p636, %p637
    %p639 = scmp.ne.s32.totalorder %s630, %s631
    %p640 = scmp.eq.s32.totalorder %s74, 0
    %p641 = por %p639, %p640
    %p642 = scmp.ne.s32.totalorder %s630, %s631
    %p643 = scmp.eq.s32.totalorder %s75, 1
    %p644 = por %p642, %p643
    %p646 = scmp.ne.s32.totalorder %s631, %s645
    %p647 = scmp.eq.s32.totalorder %s75, 0
    %p648 = por %p646, %p647
    %s650 = sadd.s32 %s649, 1
    %p653 = scmp.eq.s32.totalorder %s69, 1
    %p654 = scmp.ne.s32.totalorder %s649, %s651
    %p655 = scmp.eq.s32.totalorder %s69, 0
    %p656 = por %p654, %p655
    %p657 = scmp.ne.s32.totalorder %s649, %s651
    %p658 = scmp.eq.s32.totalorder %s74, 1
    %p659 = por %p657, %p658
    %p660 = scmp.ne.s32.totalorder %s651, %s652
    %p661 = scmp.eq.s32.totalorder %s74, 0
    %p662 = por %p660, %p661
    %p663 = scmp.ne.s32.totalorder %s651, %s652
    %p664 = scmp.eq.s32.totalorder %s75, 1
    %p665 = por %p663, %p664
    %p667 = scmp.ne.s32.totalorder %s652, %s666
    %p668 = scmp.eq.s32.totalorder %s75, 0
    %p669 = por %p667, %p668
    %s671 = sadd.s32 %s670, 1
    %p674 = scmp.eq.s32.totalorder %s69, 1
    %p675 = scmp.ne.s32.totalorder %s670, %s672
    %p676 = scmp.eq.s32.totalorder %s69, 0
    %p677 = por %p675, %p676
    %p678 = scmp.ne.s32.totalorder %s670, %s672
    %p679 = scmp.eq.s32.totalorder %s74, 1
    %p680 = por %p678, %p679
    %p681 = scmp.ne.s32.totalorder %s672, %s673
    %p682 = scmp.eq.s32.totalorder %s74, 0
    %p683 = por %p681, %p682
    %p684 = scmp.ne.s32.totalorder %s672, %s673
    %p685 = scmp.eq.s32.totalorder %s75, 1
    %p686 = por %p684, %p685
    %p688 = scmp.ne.s32.totalorder %s673, %s687
    %p689 = scmp.eq.s32.totalorder %s75, 0
    %p690 = por %p688, %p689
    %s692 = sadd.s32 %s691, 1
    %p695 = scmp.eq.s32.totalorder %s69, 1
    %p696 = scmp.ne.s32.totalorder %s691, %s693
    %p697 = scmp.eq.s32.totalorder %s69, 0
    %p698 = por %p696, %p697
    %p699 = scmp.ne.s32.totalorder %s691, %s693
    %p700 = scmp.eq.s32.totalorder %s74, 1
    %p701 = por %p699, %p700
    %p702 = scmp.ne.s32.totalorder %s693, %s694
    %p703 = scmp.eq.s32.totalorder %s74, 0
    %p704 = por %p702, %p703
    %p705 = scmp.ne.s32.totalorder %s693, %s694
    %p706 = scmp.eq.s32.totalorder %s75, 1
    %p707 = por %p705, %p706
    %p709 = scmp.ne.s32.totalorder %s694, %s708
    %p710 = scmp.eq.s32.totalorder %s75, 0
    %p711 = por %p709, %p710
    %s713 = sadd.s32 %s712, 1
    %p716 = scmp.eq.s32.totalorder %s69, 1
    %p717 = scmp.ne.s32.totalorder %s712, %s714
    %p718 = scmp.eq.s32.totalorder %s69, 0
    %p719 = por %p717, %p718
    %p720 = scmp.ne.s32.totalorder %s712, %s714
    %p721 = scmp.eq.s32.totalorder %s74, 1
    %p722 = por %p720, %p721
    %p723 = scmp.ne.s32.totalorder %s714, %s715
    %p724 = scmp.eq.s32.totalorder %s74, 0
    %p725 = por %p723, %p724
    %p726 = scmp.ne.s32.totalorder %s714, %s715
    %p727 = scmp.eq.s32.totalorder %s75, 1
    %p728 = por %p726, %p727
    %p730 = scmp.ne.s32.totalorder %s715, %s729
    %p731 = scmp.eq.s32.totalorder %s75, 0
    %p732 = por %p730, %p731
    %s733 = ssub.s32 %s69, %s76
    %p734 = scmp.eq.s32.totalorder %s733, 0
    %s736 = sadd.s32 %s735, 1
    %s737 = scalar_select %p734, %s735, %s736
    %p740 = pneg %p734
    %p741 = scmp.eq.s32.totalorder %s69, 1
    %p742 = por %p740, %p741
    %p743 = scmp.ne.s32.totalorder %s735, %s738
    %p744 = scmp.eq.s32.totalorder %s69, 0
    %p745 = por %p743, %p744
    %p746 = scmp.ne.s32.totalorder %s735, %s738
    %p747 = scmp.eq.s32.totalorder %s74, 1
    %p748 = por %p746, %p747
    %p749 = scmp.ne.s32.totalorder %s738, %s739
    %p750 = scmp.eq.s32.totalorder %s74, 0
    %p751 = por %p749, %p750
    %p752 = scmp.ne.s32.totalorder %s738, %s739
    %p753 = scmp.eq.s32.totalorder %s75, 1
    %p754 = por %p752, %p753
    %p756 = scmp.ne.s32.totalorder %s739, %s755
    %p757 = scmp.eq.s32.totalorder %s75, 0
    %p758 = por %p756, %p757
    %p759 = scmp.le.s32.totalorder 1, %s69
    %p760 = scmp.lt.s32.totalorder %s69, 3
    %p761 = pnand %p759, %p760
    %p762 = pneg %p761
    // Predicated region
    $region9: #{simple_cnn_forward.1} parent=5 // pred_check
      _
    $region10: #{simple_cnn_forward.1} parent=5 // pred_check_branch
      %764 = sbr.rel (%p761) target = $region12
    $region11: #{simple_cnn_forward.1} parent=5 // pred_region
      %s765 = ssub.s32 %s69, 1
      // Predicated region
      $region13: #{simple_cnn_forward.1} parent=11 // pred_check
        %p766 = pneg %p116
      $region14: #{simple_cnn_forward.1} parent=11 // pred_check_branch
        %768 = sbr.rel (%p766) target = $region16
      $region15: #{simple_cnn_forward.1} parent=11 // pred_region
        _
      $region16: #{simple_cnn_forward.1} parent=11 // pred_fallthru
        _
      // Predicated region
      $region17: #{simple_cnn_forward.1} parent=11 // pred_check
        %p769 = pneg %p137
      $region18: #{simple_cnn_forward.1} parent=11 // pred_check_branch
        %771 = sbr.rel (%p769) target = $region20
      $region19: #{simple_cnn_forward.1} parent=11 // pred_region
        _
      $region20: #{simple_cnn_forward.1} parent=11 // pred_fallthru
        _
      // Predicated region
      $region21: #{simple_cnn_forward.1} parent=11 // pred_check
        %p772 = pneg %p158
      $region22: #{simple_cnn_forward.1} parent=11 // pred_check_branch
        %774 = sbr.rel (%p772) target = $region24
      $region23: #{simple_cnn_forward.1} parent=11 // pred_region
        _
      $region24: #{simple_cnn_forward.1} parent=11 // pred_fallthru
        _
      // Predicated region
      $region25: #{simple_cnn_forward.1} parent=11 // pred_check
        %p775 = pneg %p179
      $region26: #{simple_cnn_forward.1} parent=11 // pred_check_branch
        %777 = sbr.rel (%p775) target = $region28
      $region27: #{simple_cnn_forward.1} parent=11 // pred_region
        _
      $region28: #{simple_cnn_forward.1} parent=11 // pred_fallthru
        _
      // Predicated region
      $region29: #{simple_cnn_forward.1} parent=11 // pred_check
        %p778 = pneg %p200
      $region30: #{simple_cnn_forward.1} parent=11 // pred_check_branch
        %780 = sbr.rel (%p778) target = $region32
      $region31: #{simple_cnn_forward.1} parent=11 // pred_region
        _
      $region32: #{simple_cnn_forward.1} parent=11 // pred_fallthru
        _
      // Predicated region
      $region33: #{simple_cnn_forward.1} parent=11 // pred_check
        %p781 = pneg %p221
      $region34: #{simple_cnn_forward.1} parent=11 // pred_check_branch
        %783 = sbr.rel (%p781) target = $region36
      $region35: #{simple_cnn_forward.1} parent=11 // pred_region
        _
      $region36: #{simple_cnn_forward.1} parent=11 // pred_fallthru
        _
      // Predicated region
      $region37: #{simple_cnn_forward.1} parent=11 // pred_check
        %p784 = pneg %p242
      $region38: #{simple_cnn_forward.1} parent=11 // pred_check_branch
        %786 = sbr.rel (%p784) target = $region40
      $region39: #{simple_cnn_forward.1} parent=11 // pred_region
        _
      $region40: #{simple_cnn_forward.1} parent=11 // pred_fallthru
        _
      // Predicated region
      $region41: #{simple_cnn_forward.1} parent=11 // pred_check
        %p787 = pneg %p263
      $region42: #{simple_cnn_forward.1} parent=11 // pred_check_branch
        %789 = sbr.rel (%p787) target = $region44
      $region43: #{simple_cnn_forward.1} parent=11 // pred_region
        _
      $region44: #{simple_cnn_forward.1} parent=11 // pred_fallthru
        _
      // Predicated region
      $region45: #{simple_cnn_forward.1} parent=11 // pred_check
        %p790 = pneg %p284
      $region46: #{simple_cnn_forward.1} parent=11 // pred_check_branch
        %792 = sbr.rel (%p790) target = $region48
      $region47: #{simple_cnn_forward.1} parent=11 // pred_region
        _
      $region48: #{simple_cnn_forward.1} parent=11 // pred_fallthru
        _
      // Predicated region
      $region49: #{simple_cnn_forward.1} parent=11 // pred_check
        %p793 = pneg %p305
      $region50: #{simple_cnn_forward.1} parent=11 // pred_check_branch
        %795 = sbr.rel (%p793) target = $region52
      $region51: #{simple_cnn_forward.1} parent=11 // pred_region
        _
      $region52: #{simple_cnn_forward.1} parent=11 // pred_fallthru
        _
      // Predicated region
      $region53: #{simple_cnn_forward.1} parent=11 // pred_check
        %p796 = pneg %p326
      $region54: #{simple_cnn_forward.1} parent=11 // pred_check_branch
        %798 = sbr.rel (%p796) target = $region56
      $region55: #{simple_cnn_forward.1} parent=11 // pred_region
        _
      $region56: #{simple_cnn_forward.1} parent=11 // pred_fallthru
        _
      // Predicated region
      $region57: #{simple_cnn_forward.1} parent=11 // pred_check
        %p799 = pneg %p347
      $region58: #{simple_cnn_forward.1} parent=11 // pred_check_branch
        %801 = sbr.rel (%p799) target = $region60
      $region59: #{simple_cnn_forward.1} parent=11 // pred_region
        _
      $region60: #{simple_cnn_forward.1} parent=11 // pred_fallthru
        _
      // Predicated region
      $region61: #{simple_cnn_forward.1} parent=11 // pred_check
        %p802 = pneg %p368
      $region62: #{simple_cnn_forward.1} parent=11 // pred_check_branch
        %804 = sbr.rel (%p802) target = $region64
      $region63: #{simple_cnn_forward.1} parent=11 // pred_region
        _
      $region64: #{simple_cnn_forward.1} parent=11 // pred_fallthru
        _
      // Predicated region
      $region65: #{simple_cnn_forward.1} parent=11 // pred_check
        %p805 = pneg %p389
      $region66: #{simple_cnn_forward.1} parent=11 // pred_check_branch
        %807 = sbr.rel (%p805) target = $region68
      $region67: #{simple_cnn_forward.1} parent=11 // pred_region
        _
      $region68: #{simple_cnn_forward.1} parent=11 // pred_fallthru
        _
      // Predicated region
      $region69: #{simple_cnn_forward.1} parent=11 // pred_check
        %p808 = pneg %p410
      $region70: #{simple_cnn_forward.1} parent=11 // pred_check_branch
        %810 = sbr.rel (%p808) target = $region72
      $region71: #{simple_cnn_forward.1} parent=11 // pred_region
        _
      $region72: #{simple_cnn_forward.1} parent=11 // pred_fallthru
        _
      // Predicated region
      $region73: #{simple_cnn_forward.1} parent=11 // pred_check
        %p811 = pneg %p431
      $region74: #{simple_cnn_forward.1} parent=11 // pred_check_branch
        %813 = sbr.rel (%p811) target = $region76
      $region75: #{simple_cnn_forward.1} parent=11 // pred_region
        _
      $region76: #{simple_cnn_forward.1} parent=11 // pred_fallthru
        _
      // Predicated region
      $region77: #{simple_cnn_forward.1} parent=11 // pred_check
        %p814 = pneg %p452
      $region78: #{simple_cnn_forward.1} parent=11 // pred_check_branch
        %816 = sbr.rel (%p814) target = $region80
      $region79: #{simple_cnn_forward.1} parent=11 // pred_region
        _
      $region80: #{simple_cnn_forward.1} parent=11 // pred_fallthru
        _
      // Predicated region
      $region81: #{simple_cnn_forward.1} parent=11 // pred_check
        %p817 = pneg %p473
      $region82: #{simple_cnn_forward.1} parent=11 // pred_check_branch
        %819 = sbr.rel (%p817) target = $region84
      $region83: #{simple_cnn_forward.1} parent=11 // pred_region
        _
      $region84: #{simple_cnn_forward.1} parent=11 // pred_fallthru
        _
      // Predicated region
      $region85: #{simple_cnn_forward.1} parent=11 // pred_check
        %p820 = pneg %p494
      $region86: #{simple_cnn_forward.1} parent=11 // pred_check_branch
        %822 = sbr.rel (%p820) target = $region88
      $region87: #{simple_cnn_forward.1} parent=11 // pred_region
        _
      $region88: #{simple_cnn_forward.1} parent=11 // pred_fallthru
        _
      // Predicated region
      $region89: #{simple_cnn_forward.1} parent=11 // pred_check
        %p823 = pneg %p515
      $region90: #{simple_cnn_forward.1} parent=11 // pred_check_branch
        %825 = sbr.rel (%p823) target = $region92
      $region91: #{simple_cnn_forward.1} parent=11 // pred_region
        _
      $region92: #{simple_cnn_forward.1} parent=11 // pred_fallthru
        _
      // Predicated region
      $region93: #{simple_cnn_forward.1} parent=11 // pred_check
        %p826 = pneg %p536
      $region94: #{simple_cnn_forward.1} parent=11 // pred_check_branch
        %828 = sbr.rel (%p826) target = $region96
      $region95: #{simple_cnn_forward.1} parent=11 // pred_region
        _
      $region96: #{simple_cnn_forward.1} parent=11 // pred_fallthru
        _
      // Predicated region
      $region97: #{simple_cnn_forward.1} parent=11 // pred_check
        %p829 = pneg %p557
      $region98: #{simple_cnn_forward.1} parent=11 // pred_check_branch
        %831 = sbr.rel (%p829) target = $region100
      $region99: #{simple_cnn_forward.1} parent=11 // pred_region
        _
      $region100: #{simple_cnn_forward.1} parent=11 // pred_fallthru
        _
      // Predicated region
      $region101: #{simple_cnn_forward.1} parent=11 // pred_check
        %p832 = pneg %p578
      $region102: #{simple_cnn_forward.1} parent=11 // pred_check_branch
        %834 = sbr.rel (%p832) target = $region104
      $region103: #{simple_cnn_forward.1} parent=11 // pred_region
        _
      $region104: #{simple_cnn_forward.1} parent=11 // pred_fallthru
        _
      // Predicated region
      $region105: #{simple_cnn_forward.1} parent=11 // pred_check
        %p835 = pneg %p599
      $region106: #{simple_cnn_forward.1} parent=11 // pred_check_branch
        %837 = sbr.rel (%p835) target = $region108
      $region107: #{simple_cnn_forward.1} parent=11 // pred_region
        _
      $region108: #{simple_cnn_forward.1} parent=11 // pred_fallthru
        _
      // Predicated region
      $region109: #{simple_cnn_forward.1} parent=11 // pred_check
        %p838 = pneg %p620
      $region110: #{simple_cnn_forward.1} parent=11 // pred_check_branch
        %840 = sbr.rel (%p838) target = $region112
      $region111: #{simple_cnn_forward.1} parent=11 // pred_region
        _
      $region112: #{simple_cnn_forward.1} parent=11 // pred_fallthru
        _
      // Predicated region
      $region113: #{simple_cnn_forward.1} parent=11 // pred_check
        %p841 = pneg %p641
      $region114: #{simple_cnn_forward.1} parent=11 // pred_check_branch
        %843 = sbr.rel (%p841) target = $region116
      $region115: #{simple_cnn_forward.1} parent=11 // pred_region
        _
      $region116: #{simple_cnn_forward.1} parent=11 // pred_fallthru
        _
      // Predicated region
      $region117: #{simple_cnn_forward.1} parent=11 // pred_check
        %p844 = pneg %p662
      $region118: #{simple_cnn_forward.1} parent=11 // pred_check_branch
        %846 = sbr.rel (%p844) target = $region120
      $region119: #{simple_cnn_forward.1} parent=11 // pred_region
        _
      $region120: #{simple_cnn_forward.1} parent=11 // pred_fallthru
        _
      // Predicated region
      $region121: #{simple_cnn_forward.1} parent=11 // pred_check
        %p847 = pneg %p683
      $region122: #{simple_cnn_forward.1} parent=11 // pred_check_branch
        %849 = sbr.rel (%p847) target = $region124
      $region123: #{simple_cnn_forward.1} parent=11 // pred_region
        _
      $region124: #{simple_cnn_forward.1} parent=11 // pred_fallthru
        _
      // Predicated region
      $region125: #{simple_cnn_forward.1} parent=11 // pred_check
        %p850 = pneg %p704
      $region126: #{simple_cnn_forward.1} parent=11 // pred_check_branch
        %852 = sbr.rel (%p850) target = $region128
      $region127: #{simple_cnn_forward.1} parent=11 // pred_region
        _
      $region128: #{simple_cnn_forward.1} parent=11 // pred_fallthru
        _
      // Predicated region
      $region129: #{simple_cnn_forward.1} parent=11 // pred_check
        %p853 = pneg %p725
      $region130: #{simple_cnn_forward.1} parent=11 // pred_check_branch
        %855 = sbr.rel (%p853) target = $region132
      $region131: #{simple_cnn_forward.1} parent=11 // pred_region
        _
      $region132: #{simple_cnn_forward.1} parent=11 // pred_fallthru
        _
    $region12: #{simple_cnn_forward.1} parent=5 // pred_fallthru
      _
    %p856 = scmp.lt.s32.totalorder %s69, 2
    // Predicated region
    $region133: #{simple_cnn_forward.1} parent=5 // pred_check
      %p857 = pneg %p856
    $region134: #{simple_cnn_forward.1} parent=5 // pred_check_branch
      %859 = sbr.rel (%p857) target = $region136
    $region135: #{simple_cnn_forward.1} parent=5 // pred_region
      // Predicated region
      $region137: #{simple_cnn_forward.1} parent=135 // pred_check
        %p860 = pneg %p89
      $region138: #{simple_cnn_forward.1} parent=135 // pred_check_branch
        %862 = sbr.rel (%p860) target = $region140
      $region139: #{simple_cnn_forward.1} parent=135 // pred_region
        %p863 = scmp.lt.s32.totalorder %s69, 1
        %s864 = scalar_select %p863, %s69, 1
        %s865 = smul.addr %s864, 2
        %s866 = smul.addr %s865, 4
        %s867 = scalar_lea.vmem %s1, %s866
      $region140: #{simple_cnn_forward.1} parent=135 // pred_fallthru
        _
    $region136: #{simple_cnn_forward.1} parent=5 // pred_fallthru
      _
    %p868 = scmp.le.s32.totalorder 1, %s69
    %p869 = scmp.lt.s32.totalorder %s69, 3
    %p870 = pnand %p868, %p869
    %p871 = pneg %p870
    // Predicated region
    $region141: #{simple_cnn_forward.1} parent=5 // pred_check
      _
    $region142: #{simple_cnn_forward.1} parent=5 // pred_check_branch
      %873 = sbr.rel (%p870) target = $region144
    $region143: #{simple_cnn_forward.1} parent=5 // pred_region
      %s874 = ssub.s32 %s69, 1
      %p875 = scmp.lt.s32.totalorder %s74, 1
      %s876 = scalar_select %p875, %s74, 1
      %s877 = smul.addr %s876, 2
      %s878 = smul.addr %s877, 4
      %s879 = scalar_lea.vmem %s1, %s878
      %p880 = pneg %p95
      %p881 = pneg %p92
      %p882 = pneg %p116
      %p883 = pneg %p113
      %p884 = pneg %p137
      %p885 = pneg %p134
      %p886 = pneg %p158
      %p887 = pneg %p155
      %p888 = pneg %p179
      %p889 = pneg %p176
      %p890 = pneg %p200
      %p891 = pneg %p197
      %p892 = pneg %p221
      %p893 = pneg %p218
      %p894 = pneg %p242
      %p895 = pneg %p239
      %p896 = pneg %p263
      %p897 = pneg %p260
      %p898 = pneg %p284
      %p899 = pneg %p281
      %p900 = pneg %p305
      %p901 = pneg %p302
      %p902 = pneg %p326
      %p903 = pneg %p323
      %p904 = pneg %p347
      %p905 = pneg %p344
      %p906 = pneg %p368
      %p907 = pneg %p365
      %p908 = pneg %p389
      %p909 = pneg %p386
      %p910 = pneg %p410
      %p911 = pneg %p407
      %p912 = pneg %p431
      %p913 = pneg %p428
      %p914 = pneg %p452
      %p915 = pneg %p449
      %p916 = pneg %p473
      %p917 = pneg %p470
      %p918 = pneg %p494
      %p919 = pneg %p491
      %p920 = pneg %p515
      %p921 = pneg %p512
      %p922 = pneg %p536
      %p923 = pneg %p533
      %p924 = pneg %p557
      %p925 = pneg %p554
      %p926 = pneg %p578
      %p927 = pneg %p575
      %p928 = pneg %p599
      %p929 = pneg %p596
      %p930 = pneg %p620
      %p931 = pneg %p617
      %p932 = pneg %p641
      %p933 = pneg %p638
      %p934 = pneg %p662
      %p935 = pneg %p659
      %p936 = pneg %p683
      %p937 = pneg %p680
      %p938 = pneg %p704
      %p939 = pneg %p701
      %p940 = pneg %p725
      %p941 = pneg %p722
      %p942 = pneg %p751
      %p943 = pneg %p748
      %p944 = scmp.lt.s32.totalorder %s74, 1
      %s945 = scalar_select %p944, %s74, 1
      %s946 = smul.addr %s945, 2
      %s947 = smul.addr %s946, 4
      %s948 = scalar_lea.vmem %s63, %s947
      %p949 = scmp.lt.s32.totalorder %s74, 1
      %s950 = scalar_select %p949, %s74, 1
      %s951 = smul.addr %s950, 2
      %s952 = smul.addr %s951, 4
      %s953 = scalar_lea.vmem %s1, %s952
      %p954 = scmp.lt.s32.totalorder %s74, 1
      %s955 = scalar_select %p954, %s74, 1
      %s956 = smul.addr %s955, 2
      %s957 = smul.addr %s956, 4
      %s958 = scalar_lea.vmem %s63, %s957
      %v959 = vlaneseq
      %v960 = vand.u32 %v959, 127
      %v961 = vadd.s32 %v960, 128
      %vm962 = vcmp.lt.s32.totalorder %v960, 0
      %v963 = vsub.s32 0, %v960
      %v964 = vsel %vm962, %v963, %v960
      %v965 = vshrl.u32 %v964, 4
      %v966 = vand.u32 %v964, 15
      %v967 = vsub.s32 0, %v966
      %v968 = vsel %vm962, %v967, %v966
      %vm969 = vcmp.lt.s32.totalorder %v961, 0
      %v970 = vsub.s32 0, %v961
      %v971 = vsel %vm969, %v970, %v961
      %v972 = vshrl.u32 %v971, 4
      %v973 = vand.u32 %v971, 15
      %v974 = vsub.s32 0, %v973
      %v975 = vsel %vm969, %v974, %v973
      %vm976 = vcmp.ne.s32.totalorder %v968, 0
      %vm977 = vcmp.ne.s32.totalorder %v975, 0
      %vm978 = vcmp.lt.s32.totalorder %v968, 0
      %vm979 = vcmp.lt.s32.totalorder %v975, 0
      %vm980 = vmand %vm978, %vm976
      %vm981 = vmand %vm979, %vm977
      %v982 = vadd.s32 %v968, 16
      %v983 = vadd.s32 %v975, 16
      %v984 = vsel %vm980, %v982, %v968
      %v985 = vsel %vm981, %v983, %v975
      %v986 = vld [vmem:[%s953] sm:$0xff]
      %v987 = vld [vmem:[%s3] sm:$0xff]
      %v988 = vld [vmem:[%s3 + $0x8] sm:$0xff]
      %v989 = vld [vmem:[%s3 + $0x10] sm:$0xff]
      %v990 = vld [vmem:[%s3 + $0x18] sm:$0xff]
      %v991 = vld [vmem:[%s5] sm:$0xff]
      %v992 = vld [vmem:[%s5 + $0x8] sm:$0xff]
      %v993 = vld [vmem:[%s5 + $0x10] sm:$0xff]
      %v994 = vld [vmem:[%s5 + $0x18] sm:$0xff]
      %996 = vset.pattern.permute.xlu0 0
      %997 = vperm.xlu0 %996, %v991
      %v998 = vpop.permute.xlu0 %997
      %1001 = vset.pattern.permute.xlu0 0
      %1002 = vperm.xlu0 %1001, %v992
      %v1003 = vpop.permute.xlu0 %1002
      %1006 = vset.pattern.permute.xlu0 0
      %1007 = vperm.xlu0 %1006, %v993
      %v1008 = vpop.permute.xlu0 %1007
      %1011 = vset.pattern.permute.xlu0 0
      %1012 = vperm.xlu0 %1011, %v994
      %v1013 = vpop.permute.xlu0 %1012
      %v1016 = vcombine.high %v986, %v986
      %vm1017 = vcmask 31744
      %v1019 = vsel %vm1017, %v987, 0
      %v1022 = vsel %vm1017, %v988, 0
      %v1025 = vsel %vm1017, %v989, 0
      %v1028 = vsel %vm1017, %v990, 0
      %vm1030 = vcmask 1043456
      %v1031 = vsel %vm1030, %v986, 0
      %v1033 = vsel %vm1030, %v1016, 0
      %1035 = vmatprep.subr.mxu0 0.0
      %1036 = vmatpush1.msra.mxu0 0.0
      %1037 = vmatprep.subr.mxu0 0.0
      %1038 = vmatpush1.msra.mxu0 0.0
      %1039 = vmatprep.subr.mxu0 0.0
      %1040 = vmatpush1.msra.mxu0 0.0
      %1041 = vmatprep.subr.mxu0 0.0
      %1042 = vmatpush1.msra.mxu0 0.0
      %1043 = vmatprep.subr.mxu0 0.0
      %1044 = vmatpush1.msra.mxu0 0.0
      %1045 = vmatprep.subr.mxu0 0.0
      %1046 = vmatpush1.msra.mxu0 0.0
      %1047 = vmatprep.subr.mxu0 0.0
      %1048 = vmatpush1.msra.mxu0 0.0
      %1049 = vmatprep.subr.mxu0 0.0
      %1050 = vmatpush1.msra.mxu0 0.0
      %1051 = vmatprep.subr.mxu0 0.0
      %1052 = vmatpush1.msra.mxu0 0.0
      %1053 = vmatprep.subr.mxu0 0.0
      %1054 = vmatpush1.msra.mxu0 0.0
      %1055 = vmatprep.subr.mxu0 0.0
      %1056 = vmatpush1.msra.mxu0 0.0
      %1057 = vmatprep.subr.mxu0 0.0
      %1058 = vmatpush1.msra.mxu0 0.0
      %1059 = vmatprep.subr.mxu0 0.0
      %1060 = vmatpush1.msra.mxu0 0.0
      %1061 = vmatprep.subr.mxu0 0.0
      %1062 = vmatpush1.msra.mxu0 0.0
      %1063 = vmatprep.subr.mxu0 0.0
      %1064 = vmatpush1.msra.mxu0 0.0
      %1065 = vmatprep.subr.mxu0 %v1033
      %1066 = vmatpush1.msra.mxu0 %v1031
      %1067 = vmatprep.subr.mxu0 0.0
      %1068 = vmatpush2.msra.mxu0 0.0
      %1069 = vmatprep.subr.mxu0 0.0
      %1070 = vmatpush2.msra.mxu0 0.0
      %1071 = vmatprep.subr.mxu0 0.0
      %1072 = vmatpush2.msra.mxu0 0.0
      %1073 = vmatprep.subr.mxu0 0.0
      %1074 = vmatpush2.msra.mxu0 0.0
      %1075 = vmatprep.subr.mxu0 0.0
      %1076 = vmatpush2.msra.mxu0 0.0
      %1077 = vmatprep.subr.mxu0 0.0
      %1078 = vmatpush2.msra.mxu0 0.0
      %1079 = vmatprep.subr.mxu0 0.0
      %1080 = vmatpush2.msra.mxu0 0.0
      %1081 = vmatprep.subr.mxu0 0.0
      %1082 = vmatpush2.msra.mxu0 0.0
      %1083 = vmatprep.subr.mxu0 0.0
      %1084 = vmatpush2.msra.mxu0 0.0
      %1085 = vmatprep.subr.mxu0 0.0
      %1086 = vmatpush2.msra.mxu0 0.0
      %1087 = vmatprep.subr.mxu0 0.0
      %1088 = vmatpush2.msra.mxu0 0.0
      %1089 = vmatprep.subr.mxu0 0.0
      %1090 = vmatpush2.msra.mxu0 0.0
      %1091 = vmatprep.subr.mxu0 0.0
      %1092 = vmatpush2.msra.mxu0 0.0
      %1093 = vmatprep.subr.mxu0 0.0
      %1094 = vmatpush2.msra.mxu0 0.0
      %1095 = vmatprep.subr.mxu0 0.0
      %1096 = vmatpush2.msra.mxu0 0.0
      %1097 = vmatprep.subr.mxu0 0.0
      %1098 = vmatpush2.msra.mxu0 0.0
      %1099 = vmatprep.mubr.f32.mxu0 0.0
      %1100 = vmatmul.mubr.f32.gmra.mxu0 %v1019
      %v1101 = vpop.f32.mrf.mxu0
      %v1102 = vadd.f32 %v998, %v1101
      %v1103 = vpop.f32.mrf.mxu0
      %v1104 = vadd.f32 %v998, %v1103
      %1105 = vmatprep.mubr.f32.mxu0 0.0
      %1106 = vmatmul.mubr.f32.gmra.mxu0 %v1022
      %v1107 = vpop.f32.mrf.mxu0
      %v1108 = vadd.f32 %v1003, %v1107
      %v1109 = vpop.f32.mrf.mxu0
      %v1110 = vadd.f32 %v1003, %v1109
      %1111 = vmatprep.mubr.f32.mxu0 0.0
      %1112 = vmatmul.mubr.f32.gmra.mxu0 %v1025
      %v1113 = vpop.f32.mrf.mxu0
      %v1114 = vadd.f32 %v1008, %v1113
      %v1115 = vpop.f32.mrf.mxu0
      %v1116 = vadd.f32 %v1008, %v1115
      %1117 = vmatprep.mubr.f32.mxu0 0.0
      %1118 = vmatmul.mubr.f32.gmra.mxu0 %v1028
      %v1119 = vpop.f32.mrf.mxu0
      %v1120 = vadd.f32 %v1013, %v1119
      %v1121 = vpop.f32.mrf.mxu0
      %v1122 = vadd.f32 %v1013, %v1121
      %1123 = vdwg.mxu0
      %v1124 = vld [vmem:[%s7] sm:$0xff]
      %v1125 = vld [vmem:[%s7 + $0x8] sm:$0xff]
      %v1126 = vld [vmem:[%s7 + $0x10] sm:$0xff]
      %v1127 = vld [vmem:[%s7 + $0x18] sm:$0xff]
      %v1128 = vld [vmem:[%s9] sm:$0xff]
      %v1129 = vld [vmem:[%s9 + $0x8] sm:$0xff]
      %v1130 = vld [vmem:[%s9 + $0x10] sm:$0xff]
      %v1131 = vld [vmem:[%s9 + $0x18] sm:$0xff]
      %v1132 = vld [vmem:[%s11] sm:$0xff]
      %v1133 = vld [vmem:[%s11 + $0x8] sm:$0xff]
      %v1134 = vld [vmem:[%s11 + $0x10] sm:$0xff]
      %v1135 = vld [vmem:[%s11 + $0x18] sm:$0xff]
      %v1136 = vld [vmem:[%s11 + $0x20] sm:$0xff]
      %v1137 = vld [vmem:[%s11 + $0x28] sm:$0xff]
      %v1138 = vld [vmem:[%s11 + $0x30] sm:$0xff]
      %v1139 = vld [vmem:[%s11 + $0x38] sm:$0xff]
      %v1140 = vld [vmem:[%s11 + $0x40] sm:$0xff]
      %v1141 = vld [vmem:[%s11 + $0x48] sm:$0xff]
      %v1142 = vld [vmem:[%s11 + $0x50] sm:$0xff]
      %v1143 = vld [vmem:[%s11 + $0x58] sm:$0xff]
      %v1144 = vld [vmem:[%s13] sm:$0xff]
      %v1145 = vld [vmem:[%s13 + $0x8] sm:$0xff]
      %v1146 = vld [vmem:[%s13 + $0x10] sm:$0xff]
      %v1147 = vld [vmem:[%s13 + $0x18] sm:$0xff]
      %v1148 = vld [vmem:[%s15] sm:$0xff]
      %v1149 = vld [vmem:[%s15 + $0x8] sm:$0xff]
      %v1150 = vld [vmem:[%s15 + $0x10] sm:$0xff]
      %v1151 = vld [vmem:[%s15 + $0x18] sm:$0xff]
      %v1152 = vld [vmem:[%s15 + $0x20] sm:$0xff]
      %v1153 = vld [vmem:[%s15 + $0x28] sm:$0xff]
      %v1154 = vld [vmem:[%s15 + $0x30] sm:$0xff]
      %v1155 = vld [vmem:[%s15 + $0x38] sm:$0xff]
      %v1156 = vld [vmem:[%s15 + $0x40] sm:$0xff]
      %v1157 = vld [vmem:[%s15 + $0x48] sm:$0xff]
      %v1158 = vld [vmem:[%s15 + $0x50] sm:$0xff]
      %v1159 = vld [vmem:[%s15 + $0x58] sm:$0xff]
      %v1160 = vld [vmem:[%s17] sm:$0xff]
      %v1161 = vld [vmem:[%s17 + $0x8] sm:$0xff]
      %v1162 = vld [vmem:[%s17 + $0x10] sm:$0xff]
      %v1163 = vld [vmem:[%s17 + $0x18] sm:$0xff]
      %v1164 = vld [vmem:[%s19] sm:$0xff]
      %v1165 = vld [vmem:[%s19 + $0x8] sm:$0xff]
      %v1166 = vld [vmem:[%s19 + $0x10] sm:$0xff]
      %v1167 = vld [vmem:[%s19 + $0x18] sm:$0xff]
      %v1168 = vld [vmem:[%s19 + $0x20] sm:$0xff]
      %v1169 = vld [vmem:[%s19 + $0x28] sm:$0xff]
      %v1170 = vld [vmem:[%s19 + $0x30] sm:$0xff]
      %v1171 = vld [vmem:[%s19 + $0x38] sm:$0xff]
      %v1172 = vld [vmem:[%s19 + $0x40] sm:$0xff]
      %v1173 = vld [vmem:[%s19 + $0x48] sm:$0xff]
      %v1174 = vld [vmem:[%s19 + $0x50] sm:$0xff]
      %v1175 = vld [vmem:[%s19 + $0x58] sm:$0xff]
      %v1176 = vld [vmem:[%s21] sm:$0xff]
      %v1177 = vld [vmem:[%s21 + $0x8] sm:$0xff]
      %v1178 = vld [vmem:[%s21 + $0x10] sm:$0xff]
      %v1179 = vld [vmem:[%s21 + $0x18] sm:$0xff]
      %v1180 = vld [vmem:[%s23] sm:$0xff]
      %v1181 = vld [vmem:[%s23 + $0x8] sm:$0xff]
      %v1182 = vld [vmem:[%s23 + $0x10] sm:$0xff]
      %v1183 = vld [vmem:[%s23 + $0x18] sm:$0xff]
      %v1184 = vld [vmem:[%s25] sm:$0xff]
      %v1185 = vld [vmem:[%s25 + $0x8] sm:$0xff]
      %v1186 = vld [vmem:[%s25 + $0x10] sm:$0xff]
      %v1187 = vld [vmem:[%s25 + $0x18] sm:$0xff]
      %v1188 = vld [vmem:[%s27] sm:$0xff]
      %v1189 = vld [vmem:[%s27 + $0x8] sm:$0xff]
      %v1190 = vld [vmem:[%s27 + $0x10] sm:$0xff]
      %v1191 = vld [vmem:[%s27 + $0x18] sm:$0xff]
      %v1192 = vld [vmem:[%s29] sm:$0xff]
      %v1193 = vld [vmem:[%s29 + $0x8] sm:$0xff]
      %v1194 = vld [vmem:[%s29 + $0x10] sm:$0xff]
      %v1195 = vld [vmem:[%s29 + $0x18] sm:$0xff]
      %v1196 = vadd.f32 %v1102, %v1104
      %1197 = vadd.xlane.f32.xlu0 %v1196
      %v1198 = vpop.xlane.xlu0 %1197
      %v1199 = vadd.f32 %v1108, %v1110
      %1200 = vadd.xlane.f32.xlu0 %v1199
      %v1201 = vpop.xlane.xlu0 %1200
      %v1202 = vadd.f32 %v1114, %v1116
      %1203 = vadd.xlane.f32.xlu0 %v1202
      %v1204 = vpop.xlane.xlu0 %1203
      %v1205 = vadd.f32 %v1120, %v1122
      %1206 = vadd.xlane.f32.xlu0 %v1205
      %v1207 = vpop.xlane.xlu0 %1206
      %v1208 = vadd.f32 %v1198, %v1201
      %v1209 = vadd.f32 %v1208, %v1204
      %v1210 = vadd.f32 %v1209, %v1207
      %v1211 = vrot.slane %v1210, 4
      %v1212 = vadd.f32 %v1210, %v1211
      %v1213 = vrot.slane %v1212, 2
      %v1214 = vadd.f32 %v1212, %v1213
      %v1215 = vrot.slane %v1214, 1
      %v1216 = vadd.f32 %v1214, %v1215
      %v1217 = vrcp.pop 8192.0
      %v1218 = vmul.f32 %v1216, %v1217
      %v1219 = vsub.f32 %v1102, %v1218
      %v1220 = vsub.f32 %v1104, %v1218
      %v1221 = vsub.f32 %v1108, %v1218
      %v1222 = vsub.f32 %v1110, %v1218
      %v1223 = vsub.f32 %v1114, %v1218
      %v1224 = vsub.f32 %v1116, %v1218
      %v1225 = vsub.f32 %v1120, %v1218
      %v1226 = vsub.f32 %v1122, %v1218
      %v1227 = vmul.f32 %v1219, %v1219
      %v1228 = vmul.f32 %v1220, %v1220
      %v1229 = vmul.f32 %v1221, %v1221
      %v1230 = vmul.f32 %v1222, %v1222
      %v1231 = vmul.f32 %v1223, %v1223
      %v1232 = vmul.f32 %v1224, %v1224
      %v1233 = vmul.f32 %v1225, %v1225
      %v1234 = vmul.f32 %v1226, %v1226
      %v1235 = vadd.f32 %v1227, %v1228
      %1236 = vadd.xlane.f32.xlu0 %v1235
      %v1237 = vpop.xlane.xlu0 %1236
      %v1238 = vadd.f32 %v1229, %v1230
      %1239 = vadd.xlane.f32.xlu0 %v1238
      %v1240 = vpop.xlane.xlu0 %1239
      %v1241 = vadd.f32 %v1231, %v1232
      %1242 = vadd.xlane.f32.xlu0 %v1241
      %v1243 = vpop.xlane.xlu0 %1242
      %v1244 = vadd.f32 %v1233, %v1234
      %1245 = vadd.xlane.f32.xlu0 %v1244
      %v1246 = vpop.xlane.xlu0 %1245
      %v1247 = vadd.f32 %v1237, %v1240
      %v1248 = vadd.f32 %v1247, %v1243
      %v1249 = vadd.f32 %v1248, %v1246
      %v1250 = vrot.slane %v1249, 4
      %v1251 = vadd.f32 %v1249, %v1250
      %v1252 = vrot.slane %v1251, 2
      %v1253 = vadd.f32 %v1251, %v1252
      %v1254 = vrot.slane %v1253, 1
      %v1255 = vadd.f32 %v1253, %v1254
      %v1256 = vmul.f32 %v1255, %v1217
      %v1257 = vadd.f32 %v1256, 1e-05
      %v1258 = vrsqrt.pop %v1257
      %v1259 = vmul.f32 %v1219, %v1258
      %v1260 = vmul.f32 %v1220, %v1258
      %v1261 = vmul.f32 %v1221, %v1258
      %v1262 = vmul.f32 %v1222, %v1258
      %v1263 = vmul.f32 %v1223, %v1258
      %v1264 = vmul.f32 %v1224, %v1258
      %v1265 = vmul.f32 %v1225, %v1258
      %v1266 = vmul.f32 %v1226, %v1258
      %1268 = vset.pattern.permute.xlu0 0
      %1269 = vperm.xlu0 %1268, %v1124
      %v1270 = vpop.permute.xlu0 %1269
      %1273 = vset.pattern.permute.xlu0 0
      %1274 = vperm.xlu0 %1273, %v1125
      %v1275 = vpop.permute.xlu0 %1274
      %1278 = vset.pattern.permute.xlu0 0
      %1279 = vperm.xlu0 %1278, %v1126
      %v1280 = vpop.permute.xlu0 %1279
      %1283 = vset.pattern.permute.xlu0 0
      %1284 = vperm.xlu0 %1283, %v1127
      %v1285 = vpop.permute.xlu0 %1284
      %v1287 = vmul.f32 %v1259, %v1270
      %v1288 = vmul.f32 %v1260, %v1270
      %v1289 = vmul.f32 %v1261, %v1275
      %v1290 = vmul.f32 %v1262, %v1275
      %v1291 = vmul.f32 %v1263, %v1280
      %v1292 = vmul.f32 %v1264, %v1280
      %v1293 = vmul.f32 %v1265, %v1285
      %v1294 = vmul.f32 %v1266, %v1285
      %1296 = vset.pattern.permute.xlu0 0
      %1297 = vperm.xlu0 %1296, %v1128
      %v1298 = vpop.permute.xlu0 %1297
      %1301 = vset.pattern.permute.xlu0 0
      %1302 = vperm.xlu0 %1301, %v1129
      %v1303 = vpop.permute.xlu0 %1302
      %1306 = vset.pattern.permute.xlu0 0
      %1307 = vperm.xlu0 %1306, %v1130
      %v1308 = vpop.permute.xlu0 %1307
      %1311 = vset.pattern.permute.xlu0 0
      %1312 = vperm.xlu0 %1311, %v1131
      %v1313 = vpop.permute.xlu0 %1312
      %v1315 = vadd.f32 %v1287, %v1298
      %v1316 = vadd.f32 %v1288, %v1298
      %v1317 = vadd.f32 %v1289, %v1303
      %v1318 = vadd.f32 %v1290, %v1303
      %v1319 = vadd.f32 %v1291, %v1308
      %v1320 = vadd.f32 %v1292, %v1308
      %v1321 = vadd.f32 %v1293, %v1313
      %v1322 = vadd.f32 %v1294, %v1313
      %1323 = vrot.lane.b32.xlu0 %v1315, 17
      %v1324 = vpop.permute.xlu0 %1323
      %1325 = vrot.lane.b32.xlu0 %v1317, 17
      %v1326 = vpop.permute.xlu0 %1325
      %1327 = vrot.lane.b32.xlu0 %v1319, 17
      %v1328 = vpop.permute.xlu0 %1327
      %1329 = vrot.lane.b32.xlu0 %v1321, 17
      %v1330 = vpop.permute.xlu0 %1329
      %1331 = vrot.lane.b32.xlu0 %v1316, 17
      %v1332 = vpop.permute.xlu0 %1331
      %1333 = vrot.lane.b32.xlu0 %v1318, 17
      %v1334 = vpop.permute.xlu0 %1333
      %1335 = vrot.lane.b32.xlu0 %v1320, 17
      %v1336 = vpop.permute.xlu0 %1335
      %1337 = vrot.lane.b32.xlu0 %v1322, 17
      %v1338 = vpop.permute.xlu0 %1337
      %vm1339 = vcmp.lt.s32.totalorder %v960, 17
      %v1340 = vsel %vm1339, %v1324, %v1332
      %v1341 = vsel %vm1339, %v1326, %v1334
      %v1342 = vsel %vm1339, %v1328, %v1336
      %v1343 = vsel %vm1339, %v1330, %v1338
      %v1344 = vsel %vm1339, %v1332, %v1324
      %v1345 = vsel %vm1339, %v1334, %v1326
      %v1346 = vsel %vm1339, %v1336, %v1328
      %v1347 = vsel %vm1339, %v1338, %v1330
      %1348 = vrot.lane.b32.xlu0 %v1315, 1
      %v1349 = vpop.permute.xlu0 %1348
      %1350 = vrot.lane.b32.xlu0 %v1317, 1
      %v1351 = vpop.permute.xlu0 %1350
      %1352 = vrot.lane.b32.xlu0 %v1319, 1
      %v1353 = vpop.permute.xlu0 %1352
      %1354 = vrot.lane.b32.xlu0 %v1321, 1
      %v1355 = vpop.permute.xlu0 %1354
      %1356 = vrot.lane.b32.xlu0 %v1316, 1
      %v1357 = vpop.permute.xlu0 %1356
      %1358 = vrot.lane.b32.xlu0 %v1318, 1
      %v1359 = vpop.permute.xlu0 %1358
      %1360 = vrot.lane.b32.xlu0 %v1320, 1
      %v1361 = vpop.permute.xlu0 %1360
      %1362 = vrot.lane.b32.xlu0 %v1322, 1
      %v1363 = vpop.permute.xlu0 %1362
      %vm1364 = vcmp.lt.s32.totalorder %v960, 1
      %v1365 = vsel %vm1364, %v1349, %v1357
      %v1366 = vsel %vm1364, %v1351, %v1359
      %v1367 = vsel %vm1364, %v1353, %v1361
      %v1368 = vsel %vm1364, %v1355, %v1363
      %v1369 = vsel %vm1364, %v1357, %v1349
      %v1370 = vsel %vm1364, %v1359, %v1351
      %v1371 = vsel %vm1364, %v1361, %v1353
      %v1372 = vsel %vm1364, %v1363, %v1355
      %vm1373 = vcmp.ge.s32.totalorder %v984, 1
      %vm1374 = vcmp.ge.s32.totalorder %v985, 1
      %v1375 = vsel %vm1373, %v1344, %v1369
      %v1376 = vsel %vm1374, %v1340, %v1365
      %v1377 = vsel %vm1373, %v1345, %v1370
      %v1378 = vsel %vm1374, %v1341, %v1366
      %v1379 = vsel %vm1373, %v1346, %v1371
      %v1380 = vsel %vm1374, %v1342, %v1367
      %v1381 = vsel %vm1373, %v1347, %v1372
      %v1382 = vsel %vm1374, %v1343, %v1368
      %1383 = vrot.lane.b32.xlu0 %v1315, 16
      %v1384 = vpop.permute.xlu0 %1383
      %1385 = vrot.lane.b32.xlu0 %v1317, 16
      %v1386 = vpop.permute.xlu0 %1385
      %1387 = vrot.lane.b32.xlu0 %v1319, 16
      %v1388 = vpop.permute.xlu0 %1387
      %1389 = vrot.lane.b32.xlu0 %v1321, 16
      %v1390 = vpop.permute.xlu0 %1389
      %1391 = vrot.lane.b32.xlu0 %v1316, 16
      %v1392 = vpop.permute.xlu0 %1391
      %1393 = vrot.lane.b32.xlu0 %v1318, 16
      %v1394 = vpop.permute.xlu0 %1393
      %1395 = vrot.lane.b32.xlu0 %v1320, 16
      %v1396 = vpop.permute.xlu0 %1395
      %1397 = vrot.lane.b32.xlu0 %v1322, 16
      %v1398 = vpop.permute.xlu0 %1397
      %vm1399 = vcmp.lt.s32.totalorder %v960, 16
      %v1400 = vsel %vm1399, %v1384, %v1392
      %v1401 = vsel %vm1399, %v1386, %v1394
      %v1402 = vsel %vm1399, %v1388, %v1396
      %v1403 = vsel %vm1399, %v1390, %v1398
      %v1404 = vsel %vm1399, %v1392, %v1384
      %v1405 = vsel %vm1399, %v1394, %v1386
      %v1406 = vsel %vm1399, %v1396, %v1388
      %v1407 = vsel %vm1399, %v1398, %v1390
      %1408 = vrot.lane.b32.xlu0 %v1315, 15
      %v1409 = vpop.permute.xlu0 %1408
      %1410 = vrot.lane.b32.xlu0 %v1317, 15
      %v1411 = vpop.permute.xlu0 %1410
      %1412 = vrot.lane.b32.xlu0 %v1319, 15
      %v1413 = vpop.permute.xlu0 %1412
      %1414 = vrot.lane.b32.xlu0 %v1321, 15
      %v1415 = vpop.permute.xlu0 %1414
      %1416 = vrot.lane.b32.xlu0 %v1316, 15
      %v1417 = vpop.permute.xlu0 %1416
      %1418 = vrot.lane.b32.xlu0 %v1318, 15
      %v1419 = vpop.permute.xlu0 %1418
      %1420 = vrot.lane.b32.xlu0 %v1320, 15
      %v1421 = vpop.permute.xlu0 %1420
      %1422 = vrot.lane.b32.xlu0 %v1322, 15
      %v1423 = vpop.permute.xlu0 %1422
      %vm1424 = vcmp.lt.s32.totalorder %v960, 15
      %v1425 = vsel %vm1424, %v1409, %v1417
      %v1426 = vsel %vm1424, %v1411, %v1419
      %v1427 = vsel %vm1424, %v1413, %v1421
      %v1428 = vsel %vm1424, %v1415, %v1423
      %v1429 = vsel %vm1424, %v1417, %v1409
      %v1430 = vsel %vm1424, %v1419, %v1411
      %v1431 = vsel %vm1424, %v1421, %v1413
      %v1432 = vsel %vm1424, %v1423, %v1415
      %1433 = vrot.lane.b32.xlu0 %v1315, 31
      %v1434 = vpop.permute.xlu0 %1433
      %1435 = vrot.lane.b32.xlu0 %v1317, 31
      %v1436 = vpop.permute.xlu0 %1435
      %1437 = vrot.lane.b32.xlu0 %v1319, 31
      %v1438 = vpop.permute.xlu0 %1437
      %1439 = vrot.lane.b32.xlu0 %v1321, 31
      %v1440 = vpop.permute.xlu0 %1439
      %1441 = vrot.lane.b32.xlu0 %v1316, 31
      %v1442 = vpop.permute.xlu0 %1441
      %1443 = vrot.lane.b32.xlu0 %v1318, 31
      %v1444 = vpop.permute.xlu0 %1443
      %1445 = vrot.lane.b32.xlu0 %v1320, 31
      %v1446 = vpop.permute.xlu0 %1445
      %1447 = vrot.lane.b32.xlu0 %v1322, 31
      %v1448 = vpop.permute.xlu0 %1447
      %vm1449 = vcmp.lt.s32.totalorder %v960, 31
      %v1450 = vsel %vm1449, %v1434, %v1442
      %v1451 = vsel %vm1449, %v1436, %v1444
      %v1452 = vsel %vm1449, %v1438, %v1446
      %v1453 = vsel %vm1449, %v1440, %v1448
      %v1454 = vsel %vm1449, %v1442, %v1434
      %v1455 = vsel %vm1449, %v1444, %v1436
      %v1456 = vsel %vm1449, %v1446, %v1438
      %v1457 = vsel %vm1449, %v1448, %v1440
      %vm1458 = vcmp.lt.s32.totalorder %v984, 15
      %vm1459 = vcmp.lt.s32.totalorder %v985, 15
      %v1460 = vsel %vm1458, %v1429, %v1454
      %v1461 = vsel %vm1459, %v1425, %v1450
      %v1462 = vsel %vm1458, %v1430, %v1455
      %v1463 = vsel %vm1459, %v1426, %v1451
      %v1464 = vsel %vm1458, %v1431, %v1456
      %v1465 = vsel %vm1459, %v1427, %v1452
      %v1466 = vsel %vm1458, %v1432, %v1457
      %v1467 = vsel %vm1459, %v1428, %v1453
      %1468 = vrot.lane.b32.xlu0 %v1315, 113
      %v1469 = vpop.permute.xlu0 %1468
      %1470 = vrot.lane.b32.xlu0 %v1317, 113
      %v1471 = vpop.permute.xlu0 %1470
      %1472 = vrot.lane.b32.xlu0 %v1319, 113
      %v1473 = vpop.permute.xlu0 %1472
      %1474 = vrot.lane.b32.xlu0 %v1321, 113
      %v1475 = vpop.permute.xlu0 %1474
      %1476 = vrot.lane.b32.xlu0 %v1316, 113
      %v1477 = vpop.permute.xlu0 %1476
      %1478 = vrot.lane.b32.xlu0 %v1318, 113
      %v1479 = vpop.permute.xlu0 %1478
      %1480 = vrot.lane.b32.xlu0 %v1320, 113
      %v1481 = vpop.permute.xlu0 %1480
      %1482 = vrot.lane.b32.xlu0 %v1322, 113
      %v1483 = vpop.permute.xlu0 %1482
      %vm1484 = vcmp.lt.s32.totalorder %v960, 113
      %v1485 = vsel %vm1484, %v1469, %v1477
      %v1486 = vsel %vm1484, %v1471, %v1479
      %v1487 = vsel %vm1484, %v1473, %v1481
      %v1488 = vsel %vm1484, %v1475, %v1483
      %v1489 = vsel %vm1484, %v1477, %v1469
      %v1490 = vsel %vm1484, %v1479, %v1471
      %v1491 = vsel %vm1484, %v1481, %v1473
      %v1492 = vsel %vm1484, %v1483, %v1475
      %v1493 = vsel %vm1373, %v1369, %v1485
      %v1494 = vsel %vm1374, %v1365, %v1489
      %v1495 = vsel %vm1373, %v1370, %v1486
      %v1496 = vsel %vm1374, %v1366, %v1490
      %v1497 = vsel %vm1373, %v1371, %v1487
      %v1498 = vsel %vm1374, %v1367, %v1491
      %v1499 = vsel %vm1373, %v1372, %v1488
      %v1500 = vsel %vm1374, %v1368, %v1492
      %1501 = vrot.lane.b32.xlu0 %v1315, 127
      %v1502 = vpop.permute.xlu0 %1501
      %1503 = vrot.lane.b32.xlu0 %v1317, 127
      %v1504 = vpop.permute.xlu0 %1503
      %1505 = vrot.lane.b32.xlu0 %v1319, 127
      %v1506 = vpop.permute.xlu0 %1505
      %1507 = vrot.lane.b32.xlu0 %v1321, 127
      %v1508 = vpop.permute.xlu0 %1507
      %1509 = vrot.lane.b32.xlu0 %v1316, 127
      %v1510 = vpop.permute.xlu0 %1509
      %1511 = vrot.lane.b32.xlu0 %v1318, 127
      %v1512 = vpop.permute.xlu0 %1511
      %1513 = vrot.lane.b32.xlu0 %v1320, 127
      %v1514 = vpop.permute.xlu0 %1513
      %1515 = vrot.lane.b32.xlu0 %v1322, 127
      %v1516 = vpop.permute.xlu0 %1515
      %vm1517 = vcmp.lt.s32.totalorder %v960, 127
      %v1518 = vsel %vm1517, %v1502, %v1510
      %v1519 = vsel %vm1517, %v1504, %v1512
      %v1520 = vsel %vm1517, %v1506, %v1514
      %v1521 = vsel %vm1517, %v1508, %v1516
      %v1522 = vsel %vm1517, %v1510, %v1502
      %v1523 = vsel %vm1517, %v1512, %v1504
      %v1524 = vsel %vm1517, %v1514, %v1506
      %v1525 = vsel %vm1517, %v1516, %v1508
      %v1526 = vsel %vm1458, %v1518, %v1429
      %v1527 = vsel %vm1459, %v1522, %v1425
      %v1528 = vsel %vm1458, %v1519, %v1430
      %v1529 = vsel %vm1459, %v1523, %v1426
      %v1530 = vsel %vm1458, %v1520, %v1431
      %v1531 = vsel %vm1459, %v1524, %v1427
      %v1532 = vsel %vm1458, %v1521, %v1432
      %v1533 = vsel %vm1459, %v1525, %v1428
      %1534 = vrot.lane.b32.xlu0 %v1315, 97
      %v1535 = vpop.permute.xlu0 %1534
      %1536 = vrot.lane.b32.xlu0 %v1317, 97
      %v1537 = vpop.permute.xlu0 %1536
      %1538 = vrot.lane.b32.xlu0 %v1319, 97
      %v1539 = vpop.permute.xlu0 %1538
      %1540 = vrot.lane.b32.xlu0 %v1321, 97
      %v1541 = vpop.permute.xlu0 %1540
      %1542 = vrot.lane.b32.xlu0 %v1316, 97
      %v1543 = vpop.permute.xlu0 %1542
      %1544 = vrot.lane.b32.xlu0 %v1318, 97
      %v1545 = vpop.permute.xlu0 %1544
      %1546 = vrot.lane.b32.xlu0 %v1320, 97
      %v1547 = vpop.permute.xlu0 %1546
      %1548 = vrot.lane.b32.xlu0 %v1322, 97
      %v1549 = vpop.permute.xlu0 %1548
      %vm1550 = vcmp.lt.s32.totalorder %v960, 97
      %v1551 = vsel %vm1550, %v1535, %v1543
      %v1552 = vsel %vm1550, %v1537, %v1545
      %v1553 = vsel %vm1550, %v1539, %v1547
      %v1554 = vsel %vm1550, %v1541, %v1549
      %v1555 = vsel %vm1550, %v1543, %v1535
      %v1556 = vsel %vm1550, %v1545, %v1537
      %v1557 = vsel %vm1550, %v1547, %v1539
      %v1558 = vsel %vm1550, %v1549, %v1541
      %v1559 = vsel %vm1373, %v1485, %v1551
      %v1560 = vsel %vm1374, %v1489, %v1555
      %v1561 = vsel %vm1373, %v1486, %v1552
      %v1562 = vsel %vm1374, %v1490, %v1556
      %v1563 = vsel %vm1373, %v1487, %v1553
      %v1564 = vsel %vm1374, %v1491, %v1557
      %v1565 = vsel %vm1373, %v1488, %v1554
      %v1566 = vsel %vm1374, %v1492, %v1558
      %1567 = vrot.lane.b32.xlu0 %v1315, 112
      %v1568 = vpop.permute.xlu0 %1567
      %1569 = vrot.lane.b32.xlu0 %v1317, 112
      %v1570 = vpop.permute.xlu0 %1569
      %1571 = vrot.lane.b32.xlu0 %v1319, 112
      %v1572 = vpop.permute.xlu0 %1571
      %1573 = vrot.lane.b32.xlu0 %v1321, 112
      %v1574 = vpop.permute.xlu0 %1573
      %1575 = vrot.lane.b32.xlu0 %v1316, 112
      %v1576 = vpop.permute.xlu0 %1575
      %1577 = vrot.lane.b32.xlu0 %v1318, 112
      %v1578 = vpop.permute.xlu0 %1577
      %1579 = vrot.lane.b32.xlu0 %v1320, 112
      %v1580 = vpop.permute.xlu0 %1579
      %1581 = vrot.lane.b32.xlu0 %v1322, 112
      %v1582 = vpop.permute.xlu0 %1581
      %vm1583 = vcmp.lt.s32.totalorder %v960, 112
      %v1584 = vsel %vm1583, %v1568, %v1576
      %v1585 = vsel %vm1583, %v1570, %v1578
      %v1586 = vsel %vm1583, %v1572, %v1580
      %v1587 = vsel %vm1583, %v1574, %v1582
      %v1588 = vsel %vm1583, %v1576, %v1568
      %v1589 = vsel %vm1583, %v1578, %v1570
      %v1590 = vsel %vm1583, %v1580, %v1572
      %v1591 = vsel %vm1583, %v1582, %v1574
      %1592 = vrot.lane.b32.xlu0 %v1315, 111
      %v1593 = vpop.permute.xlu0 %1592
      %1594 = vrot.lane.b32.xlu0 %v1317, 111
      %v1595 = vpop.permute.xlu0 %1594
      %1596 = vrot.lane.b32.xlu0 %v1319, 111
      %v1597 = vpop.permute.xlu0 %1596
      %1598 = vrot.lane.b32.xlu0 %v1321, 111
      %v1599 = vpop.permute.xlu0 %1598
      %1600 = vrot.lane.b32.xlu0 %v1316, 111
      %v1601 = vpop.permute.xlu0 %1600
      %1602 = vrot.lane.b32.xlu0 %v1318, 111
      %v1603 = vpop.permute.xlu0 %1602
      %1604 = vrot.lane.b32.xlu0 %v1320, 111
      %v1605 = vpop.permute.xlu0 %1604
      %1606 = vrot.lane.b32.xlu0 %v1322, 111
      %v1607 = vpop.permute.xlu0 %1606
      %vm1608 = vcmp.lt.s32.totalorder %v960, 111
      %v1609 = vsel %vm1608, %v1593, %v1601
      %v1610 = vsel %vm1608, %v1595, %v1603
      %v1611 = vsel %vm1608, %v1597, %v1605
      %v1612 = vsel %vm1608, %v1599, %v1607
      %v1613 = vsel %vm1608, %v1601, %v1593
      %v1614 = vsel %vm1608, %v1603, %v1595
      %v1615 = vsel %vm1608, %v1605, %v1597
      %v1616 = vsel %vm1608, %v1607, %v1599
      %v1617 = vsel %vm1458, %v1609, %v1518
      %v1618 = vsel %vm1459, %v1613, %v1522
      %v1619 = vsel %vm1458, %v1610, %v1519
      %v1620 = vsel %vm1459, %v1614, %v1523
      %v1621 = vsel %vm1458, %v1611, %v1520
      %v1622 = vsel %vm1459, %v1615, %v1524
      %v1623 = vsel %vm1458, %v1612, %v1521
      %v1624 = vsel %vm1459, %v1616, %v1525
      %1626 = vset.pattern.permute.xlu0 0
      %1627 = vperm.xlu0 %1626, %v1144
      %v1628 = vpop.permute.xlu0 %1627
      %1631 = vset.pattern.permute.xlu0 0
      %1632 = vperm.xlu0 %1631, %v1145
      %v1633 = vpop.permute.xlu0 %1632
      %1636 = vset.pattern.permute.xlu0 0
      %1637 = vperm.xlu0 %1636, %v1146
      %v1638 = vpop.permute.xlu0 %1637
      %1641 = vset.pattern.permute.xlu0 0
      %1642 = vperm.xlu0 %1641, %v1147
      %v1643 = vpop.permute.xlu0 %1642
      %vm1645 = vcmask 261120
      %v1647 = vsel %vm1645, %v1134, 0
      %v1650 = vsel %vm1645, %v1137, 0
      %v1653 = vsel %vm1645, %v1140, 0
      %v1656 = vsel %vm1645, %v1143, 0
      %1658 = vmatprep.subr.mxu0 %v1500
      %1659 = vmatpush1.msra.mxu0 %v1499
      %1660 = vmatprep.subr.mxu0 %v1498
      %1661 = vmatpush1.msra.mxu0 %v1497
      %1662 = vmatprep.subr.mxu0 %v1496
      %1663 = vmatpush1.msra.mxu0 %v1495
      %1664 = vmatprep.subr.mxu0 %v1494
      %1665 = vmatpush1.msra.mxu0 %v1493
      %1666 = vmatprep.subr.mxu0 %v1467
      %1667 = vmatpush1.msra.mxu0 %v1466
      %1668 = vmatprep.subr.mxu0 %v1465
      %1669 = vmatpush1.msra.mxu0 %v1464
      %1670 = vmatprep.subr.mxu0 %v1463
      %1671 = vmatpush1.msra.mxu0 %v1462
      %1672 = vmatprep.subr.mxu0 %v1461
      %1673 = vmatpush1.msra.mxu0 %v1460
      %1674 = vmatprep.subr.mxu0 %v1403
      %1675 = vmatpush1.msra.mxu0 %v1407
      %1676 = vmatprep.subr.mxu0 %v1402
      %1677 = vmatpush1.msra.mxu0 %v1406
      %1678 = vmatprep.subr.mxu0 %v1401
      %1679 = vmatpush1.msra.mxu0 %v1405
      %1680 = vmatprep.subr.mxu0 %v1400
      %1681 = vmatpush1.msra.mxu0 %v1404
      %1682 = vmatprep.subr.mxu0 %v1382
      %1683 = vmatpush1.msra.mxu0 %v1381
      %1684 = vmatprep.subr.mxu0 %v1380
      %1685 = vmatpush1.msra.mxu0 %v1379
      %1686 = vmatprep.subr.mxu0 %v1378
      %1687 = vmatpush1.msra.mxu0 %v1377
      %1688 = vmatprep.subr.mxu0 %v1376
      %1689 = vmatpush1.msra.mxu0 %v1375
      %1690 = vmatprep.subr.mxu0 %v1591
      %1691 = vmatpush2.msra.mxu0 %v1587
      %1692 = vmatprep.subr.mxu0 %v1590
      %1693 = vmatpush2.msra.mxu0 %v1586
      %1694 = vmatprep.subr.mxu0 %v1589
      %1695 = vmatpush2.msra.mxu0 %v1585
      %1696 = vmatprep.subr.mxu0 %v1588
      %1697 = vmatpush2.msra.mxu0 %v1584
      %1698 = vmatprep.subr.mxu0 %v1566
      %1699 = vmatpush2.msra.mxu0 %v1565
      %1700 = vmatprep.subr.mxu0 %v1564
      %1701 = vmatpush2.msra.mxu0 %v1563
      %1702 = vmatprep.subr.mxu0 %v1562
      %1703 = vmatpush2.msra.mxu0 %v1561
      %1704 = vmatprep.subr.mxu0 %v1560
      %1705 = vmatpush2.msra.mxu0 %v1559
      %1706 = vmatprep.subr.mxu0 %v1533
      %1707 = vmatpush2.msra.mxu0 %v1532
      %1708 = vmatprep.subr.mxu0 %v1531
      %1709 = vmatpush2.msra.mxu0 %v1530
      %1710 = vmatprep.subr.mxu0 %v1529
      %1711 = vmatpush2.msra.mxu0 %v1528
      %1712 = vmatprep.subr.mxu0 %v1527
      %1713 = vmatpush2.msra.mxu0 %v1526
      %1714 = vmatprep.subr.mxu0 %v1322
      %1715 = vmatpush2.msra.mxu0 %v1321
      %1716 = vmatprep.subr.mxu0 %v1320
      %1717 = vmatpush2.msra.mxu0 %v1319
      %1718 = vmatprep.subr.mxu0 %v1318
      %1719 = vmatpush2.msra.mxu0 %v1317
      %1720 = vmatprep.subr.mxu0 %v1316
      %1721 = vmatpush2.msra.mxu0 %v1315
      %1722 = vmatprep.mubr.f32.mxu0 %v1133
      %1723 = vmatmul.mubr.f32.gmra.mxu0 %v1132
      %v1724 = vpop.f32.mrf.mxu0
      %v1725 = vadd.f32 %v1628, %v1724
      %v1726 = vpop.f32.mrf.mxu0
      %v1727 = vadd.f32 %v1628, %v1726
      %1728 = vmatprep.mubr.f32.mxu0 %v1136
      %1729 = vmatmul.mubr.f32.gmra.mxu0 %v1135
      %v1730 = vpop.f32.mrf.mxu0
      %v1731 = vadd.f32 %v1633, %v1730
      %v1732 = vpop.f32.mrf.mxu0
      %v1733 = vadd.f32 %v1633, %v1732
      %1734 = vmatprep.mubr.f32.mxu0 %v1139
      %1735 = vmatmul.mubr.f32.gmra.mxu0 %v1138
      %v1736 = vpop.f32.mrf.mxu0
      %v1737 = vadd.f32 %v1638, %v1736
      %v1738 = vpop.f32.mrf.mxu0
      %v1739 = vadd.f32 %v1638, %v1738
      %1740 = vmatprep.mubr.f32.mxu0 %v1142
      %1741 = vmatmul.mubr.f32.gmra.mxu0 %v1141
      %v1742 = vpop.f32.mrf.mxu0
      %v1743 = vadd.f32 %v1643, %v1742
      %v1744 = vpop.f32.mrf.mxu0
      %v1745 = vadd.f32 %v1643, %v1744
      %1746 = vdwg.mxu0
      %1747 = vmatprep.subr.mxu0 0.0
      %1748 = vmatpush1.msra.mxu0 0.0
      %1749 = vmatprep.subr.mxu0 0.0
      %1750 = vmatpush1.msra.mxu0 0.0
      %1751 = vmatprep.subr.mxu0 0.0
      %1752 = vmatpush1.msra.mxu0 0.0
      %1753 = vmatprep.subr.mxu0 0.0
      %1754 = vmatpush1.msra.mxu0 0.0
      %1755 = vmatprep.subr.mxu0 0.0
      %1756 = vmatpush1.msra.mxu0 0.0
      %1757 = vmatprep.subr.mxu0 0.0
      %1758 = vmatpush1.msra.mxu0 0.0
      %1759 = vmatprep.subr.mxu0 0.0
      %1760 = vmatpush1.msra.mxu0 0.0
      %1761 = vmatprep.subr.mxu0 0.0
      %1762 = vmatpush1.msra.mxu0 0.0
      %1763 = vmatprep.subr.mxu0 0.0
      %1764 = vmatpush1.msra.mxu0 0.0
      %1765 = vmatprep.subr.mxu0 0.0
      %1766 = vmatpush1.msra.mxu0 0.0
      %1767 = vmatprep.subr.mxu0 0.0
      %1768 = vmatpush1.msra.mxu0 0.0
      %1769 = vmatprep.subr.mxu0 0.0
      %1770 = vmatpush1.msra.mxu0 0.0
      %1771 = vmatprep.subr.mxu0 %v1624
      %1772 = vmatpush1.msra.mxu0 %v1623
      %1773 = vmatprep.subr.mxu0 %v1622
      %1774 = vmatpush1.msra.mxu0 %v1621
      %1775 = vmatprep.subr.mxu0 %v1620
      %1776 = vmatpush1.msra.mxu0 %v1619
      %1777 = vmatprep.subr.mxu0 %v1618
      %1778 = vmatpush1.msra.mxu0 %v1617
      %1779 = vmatprep.subr.mxu0 0.0
      %1780 = vmatpush2.msra.mxu0 0.0
      %1781 = vmatprep.subr.mxu0 0.0
      %1782 = vmatpush2.msra.mxu0 0.0
      %1783 = vmatprep.subr.mxu0 0.0
      %1784 = vmatpush2.msra.mxu0 0.0
      %1785 = vmatprep.subr.mxu0 0.0
      %1786 = vmatpush2.msra.mxu0 0.0
      %1787 = vmatprep.subr.mxu0 0.0
      %1788 = vmatpush2.msra.mxu0 0.0
      %1789 = vmatprep.subr.mxu0 0.0
      %1790 = vmatpush2.msra.mxu0 0.0
      %1791 = vmatprep.subr.mxu0 0.0
      %1792 = vmatpush2.msra.mxu0 0.0
      %1793 = vmatprep.subr.mxu0 0.0
      %1794 = vmatpush2.msra.mxu0 0.0
      %1795 = vmatprep.subr.mxu0 0.0
      %1796 = vmatpush2.msra.mxu0 0.0
      %1797 = vmatprep.subr.mxu0 0.0
      %1798 = vmatpush2.msra.mxu0 0.0
      %1799 = vmatprep.subr.mxu0 0.0
      %1800 = vmatpush2.msra.mxu0 0.0
      %1801 = vmatprep.subr.mxu0 0.0
      %1802 = vmatpush2.msra.mxu0 0.0
      %1803 = vmatprep.subr.mxu0 0.0
      %1804 = vmatpush2.msra.mxu0 0.0
      %1805 = vmatprep.subr.mxu0 0.0
      %1806 = vmatpush2.msra.mxu0 0.0
      %1807 = vmatprep.subr.mxu0 0.0
      %1808 = vmatpush2.msra.mxu0 0.0
      %1809 = vmatprep.subr.mxu0 0.0
      %1810 = vmatpush2.msra.mxu0 0.0
      %1811 = vmatprep.mubr.f32.mxu0 0.0
      %1812 = vmatmul.mubr.f32.gmra.mxu0 %v1647
      %v1813 = vpop.f32.mrf.mxu0
      %v1814 = vadd.f32 %v1725, %v1813
      %v1815 = vpop.f32.mrf.mxu0
      %v1816 = vadd.f32 %v1727, %v1815
      %1817 = vmatprep.mubr.f32.mxu0 0.0
      %1818 = vmatmul.mubr.f32.gmra.mxu0 %v1650
      %v1819 = vpop.f32.mrf.mxu0
      %v1820 = vadd.f32 %v1731, %v1819
      %v1821 = vpop.f32.mrf.mxu0
      %v1822 = vadd.f32 %v1733, %v1821
      %1823 = vmatprep.mubr.f32.mxu0 0.0
      %1824 = vmatmul.mubr.f32.gmra.mxu0 %v1653
      %v1825 = vpop.f32.mrf.mxu0
      %v1826 = vadd.f32 %v1737, %v1825
      %v1827 = vpop.f32.mrf.mxu0
      %v1828 = vadd.f32 %v1739, %v1827
      %1829 = vmatprep.mubr.f32.mxu0 0.0
      %1830 = vmatmul.mubr.f32.gmra.mxu0 %v1656
      %v1831 = vpop.f32.mrf.mxu0
      %v1832 = vadd.f32 %v1743, %v1831
      %v1833 = vpop.f32.mrf.mxu0
      %v1834 = vadd.f32 %v1745, %v1833
      %1835 = vdwg.mxu0
      %v1836 = vmul.f32 %v1814, 0.70710677
      %v1837 = vmul.f32 %v1816, 0.70710677
      %v1838 = vmul.f32 %v1820, 0.70710677
      %v1839 = vmul.f32 %v1822, 0.70710677
      %v1840 = vmul.f32 %v1826, 0.70710677
      %v1841 = vmul.f32 %v1828, 0.70710677
      %v1842 = vmul.f32 %v1832, 0.70710677
      %v1843 = vmul.f32 %v1834, 0.70710677
      %vm1844 = vcmp.ge.f32.partialorder %v1836, 0.0
      %vm1845 = vcmp.ge.f32.partialorder %v1837, 0.0
      %vm1846 = vcmp.ge.f32.partialorder %v1838, 0.0
      %vm1847 = vcmp.ge.f32.partialorder %v1839, 0.0
      %vm1848 = vcmp.ge.f32.partialorder %v1840, 0.0
      %vm1849 = vcmp.ge.f32.partialorder %v1841, 0.0
      %vm1850 = vcmp.ge.f32.partialorder %v1842, 0.0
      %vm1851 = vcmp.ge.f32.partialorder %v1843, 0.0
      %v1852 = vsel %vm1844, 1.0, -1.0
      %v1853 = vsel %vm1845, 1.0, -1.0
      %v1854 = vsel %vm1846, 1.0, -1.0
      %v1855 = vsel %vm1847, 1.0, -1.0
      %v1856 = vsel %vm1848, 1.0, -1.0
      %v1857 = vsel %vm1849, 1.0, -1.0
      %v1858 = vsel %vm1850, 1.0, -1.0
      %v1859 = vsel %vm1851, 1.0, -1.0
      %v1860 = vand.u32 2147483647, %v1836
      %v1861 = vand.u32 2147483647, %v1837
      %v1862 = vand.u32 2147483647, %v1838
      %v1863 = vand.u32 2147483647, %v1839
      %v1864 = vand.u32 2147483647, %v1840
      %v1865 = vand.u32 2147483647, %v1841
      %v1866 = vand.u32 2147483647, %v1842
      %v1867 = vand.u32 2147483647, %v1843
      %v1868 = vmul.f32 %v1860, 0.3275911
      %v1869 = vmul.f32 %v1861, 0.3275911
      %v1870 = vmul.f32 %v1862, 0.3275911
      %v1871 = vmul.f32 %v1863, 0.3275911
      %v1872 = vmul.f32 %v1864, 0.3275911
      %v1873 = vmul.f32 %v1865, 0.3275911
      %v1874 = vmul.f32 %v1866, 0.3275911
      %v1875 = vmul.f32 %v1867, 0.3275911
      %v1876 = vadd.f32 %v1868, 1.0
      %v1877 = vadd.f32 %v1869, 1.0
      %v1878 = vadd.f32 %v1870, 1.0
      %v1879 = vadd.f32 %v1871, 1.0
      %v1880 = vadd.f32 %v1872, 1.0
      %v1881 = vadd.f32 %v1873, 1.0
      %v1882 = vadd.f32 %v1874, 1.0
      %v1883 = vadd.f32 %v1875, 1.0
      %v1884 = vrcp.pop %v1876
      %v1885 = vrcp.pop %v1877
      %v1886 = vrcp.pop %v1878
      %v1887 = vrcp.pop %v1879
      %v1888 = vrcp.pop %v1880
      %v1889 = vrcp.pop %v1881
      %v1890 = vrcp.pop %v1882
      %v1891 = vrcp.pop %v1883
      %v1892 = vmul.f32 %v1884, 1.0614054
      %v1893 = vmul.f32 %v1885, 1.0614054
      %v1894 = vmul.f32 %v1886, 1.0614054
      %v1895 = vmul.f32 %v1887, 1.0614054
      %v1896 = vmul.f32 %v1888, 1.0614054
      %v1897 = vmul.f32 %v1889, 1.0614054
      %v1898 = vmul.f32 %v1890, 1.0614054
      %v1899 = vmul.f32 %v1891, 1.0614054
      %v1900 = vadd.f32 %v1892, -1.4531521
      %v1901 = vadd.f32 %v1893, -1.4531521
      %v1902 = vadd.f32 %v1894, -1.4531521
      %v1903 = vadd.f32 %v1895, -1.4531521
      %v1904 = vadd.f32 %v1896, -1.4531521
      %v1905 = vadd.f32 %v1897, -1.4531521
      %v1906 = vadd.f32 %v1898, -1.4531521
      %v1907 = vadd.f32 %v1899, -1.4531521
      %v1908 = vmul.f32 %v1900, %v1884
      %v1909 = vmul.f32 %v1901, %v1885
      %v1910 = vmul.f32 %v1902, %v1886
      %v1911 = vmul.f32 %v1903, %v1887
      %v1912 = vmul.f32 %v1904, %v1888
      %v1913 = vmul.f32 %v1905, %v1889
      %v1914 = vmul.f32 %v1906, %v1890
      %v1915 = vmul.f32 %v1907, %v1891
      %v1916 = vadd.f32 %v1908, 1.4214138
      %v1917 = vadd.f32 %v1909, 1.4214138
      %v1918 = vadd.f32 %v1910, 1.4214138
      %v1919 = vadd.f32 %v1911, 1.4214138
      %v1920 = vadd.f32 %v1912, 1.4214138
      %v1921 = vadd.f32 %v1913, 1.4214138
      %v1922 = vadd.f32 %v1914, 1.4214138
      %v1923 = vadd.f32 %v1915, 1.4214138
      %v1924 = vmul.f32 %v1916, %v1884
      %v1925 = vmul.f32 %v1917, %v1885
      %v1926 = vmul.f32 %v1918, %v1886
      %v1927 = vmul.f32 %v1919, %v1887
      %v1928 = vmul.f32 %v1920, %v1888
      %v1929 = vmul.f32 %v1921, %v1889
      %v1930 = vmul.f32 %v1922, %v1890
      %v1931 = vmul.f32 %v1923, %v1891
      %v1932 = vadd.f32 %v1924, -0.28449672
      %v1933 = vadd.f32 %v1925, -0.28449672
      %v1934 = vadd.f32 %v1926, -0.28449672
      %v1935 = vadd.f32 %v1927, -0.28449672
      %v1936 = vadd.f32 %v1928, -0.28449672
      %v1937 = vadd.f32 %v1929, -0.28449672
      %v1938 = vadd.f32 %v1930, -0.28449672
      %v1939 = vadd.f32 %v1931, -0.28449672
      %v1940 = vmul.f32 %v1932, %v1884
      %v1941 = vmul.f32 %v1933, %v1885
      %v1942 = vmul.f32 %v1934, %v1886
      %v1943 = vmul.f32 %v1935, %v1887
      %v1944 = vmul.f32 %v1936, %v1888
      %v1945 = vmul.f32 %v1937, %v1889
      %v1946 = vmul.f32 %v1938, %v1890
      %v1947 = vmul.f32 %v1939, %v1891
      %v1948 = vadd.f32 %v1940, 0.2548296
      %v1949 = vadd.f32 %v1941, 0.2548296
      %v1950 = vadd.f32 %v1942, 0.2548296
      %v1951 = vadd.f32 %v1943, 0.2548296
      %v1952 = vadd.f32 %v1944, 0.2548296
      %v1953 = vadd.f32 %v1945, 0.2548296
      %v1954 = vadd.f32 %v1946, 0.2548296
      %v1955 = vadd.f32 %v1947, 0.2548296
      %v1956 = vmul.f32 %v1948, %v1884
      %v1957 = vmul.f32 %v1949, %v1885
      %v1958 = vmul.f32 %v1950, %v1886
      %v1959 = vmul.f32 %v1951, %v1887
      %v1960 = vmul.f32 %v1952, %v1888
      %v1961 = vmul.f32 %v1953, %v1889
      %v1962 = vmul.f32 %v1954, %v1890
      %v1963 = vmul.f32 %v1955, %v1891
      %v1964 = vsub.f32 0.0, %v1860
      %v1965 = vsub.f32 0.0, %v1861
      %v1966 = vsub.f32 0.0, %v1862
      %v1967 = vsub.f32 0.0, %v1863
      %v1968 = vsub.f32 0.0, %v1864
      %v1969 = vsub.f32 0.0, %v1865
      %v1970 = vsub.f32 0.0, %v1866
      %v1971 = vsub.f32 0.0, %v1867
      %v1972 = vmul.f32 %v1964, %v1860
      %v1973 = vmul.f32 %v1965, %v1861
      %v1974 = vmul.f32 %v1966, %v1862
      %v1975 = vmul.f32 %v1967, %v1863
      %v1976 = vmul.f32 %v1968, %v1864
      %v1977 = vmul.f32 %v1969, %v1865
      %v1978 = vmul.f32 %v1970, %v1866
      %v1979 = vmul.f32 %v1971, %v1867
      %v1980 = vmul.f32 %v1972, 1.442695
      %v1981 = vpow.pop %v1980
      %v1982 = vmul.f32 %v1973, 1.442695
      %v1983 = vpow.pop %v1982
      %v1984 = vmul.f32 %v1974, 1.442695
      %v1985 = vpow.pop %v1984
      %v1986 = vmul.f32 %v1975, 1.442695
      %v1987 = vpow.pop %v1986
      %v1988 = vmul.f32 %v1976, 1.442695
      %v1989 = vpow.pop %v1988
      %v1990 = vmul.f32 %v1977, 1.442695
      %v1991 = vpow.pop %v1990
      %v1992 = vmul.f32 %v1978, 1.442695
      %v1993 = vpow.pop %v1992
      %v1994 = vmul.f32 %v1979, 1.442695
      %v1995 = vpow.pop %v1994
      %v1996 = vmul.f32 %v1956, %v1981
      %v1997 = vmul.f32 %v1957, %v1983
      %v1998 = vmul.f32 %v1958, %v1985
      %v1999 = vmul.f32 %v1959, %v1987
      %v2000 = vmul.f32 %v1960, %v1989
      %v2001 = vmul.f32 %v1961, %v1991
      %v2002 = vmul.f32 %v1962, %v1993
      %v2003 = vmul.f32 %v1963, %v1995
      %v2004 = vsub.f32 1.0, %v1996
      %v2005 = vsub.f32 1.0, %v1997
      %v2006 = vsub.f32 1.0, %v1998
      %v2007 = vsub.f32 1.0, %v1999
      %v2008 = vsub.f32 1.0, %v2000
      %v2009 = vsub.f32 1.0, %v2001
      %v2010 = vsub.f32 1.0, %v2002
      %v2011 = vsub.f32 1.0, %v2003
      %v2012 = vmul.f32 %v1852, %v2004
      %v2013 = vmul.f32 %v1853, %v2005
      %v2014 = vmul.f32 %v1854, %v2006
      %v2015 = vmul.f32 %v1855, %v2007
      %v2016 = vmul.f32 %v1856, %v2008
      %v2017 = vmul.f32 %v1857, %v2009
      %v2018 = vmul.f32 %v1858, %v2010
      %v2019 = vmul.f32 %v1859, %v2011
      %v2020 = vmul.f32 %v1814, 0.5
      %v2021 = vmul.f32 %v1816, 0.5
      %v2022 = vmul.f32 %v1820, 0.5
      %v2023 = vmul.f32 %v1822, 0.5
      %v2024 = vmul.f32 %v1826, 0.5
      %v2025 = vmul.f32 %v1828, 0.5
      %v2026 = vmul.f32 %v1832, 0.5
      %v2027 = vmul.f32 %v1834, 0.5
      %v2028 = vadd.f32 %v2012, 1.0
      %v2029 = vadd.f32 %v2013, 1.0
      %v2030 = vadd.f32 %v2014, 1.0
      %v2031 = vadd.f32 %v2015, 1.0
      %v2032 = vadd.f32 %v2016, 1.0
      %v2033 = vadd.f32 %v2017, 1.0
      %v2034 = vadd.f32 %v2018, 1.0
      %v2035 = vadd.f32 %v2019, 1.0
      %v2036 = vmul.f32 %v2020, %v2028
      %v2037 = vmul.f32 %v2021, %v2029
      %v2038 = vmul.f32 %v2022, %v2030
      %v2039 = vmul.f32 %v2023, %v2031
      %v2040 = vmul.f32 %v2024, %v2032
      %v2041 = vmul.f32 %v2025, %v2033
      %v2042 = vmul.f32 %v2026, %v2034
      %v2043 = vmul.f32 %v2027, %v2035
      %2044 = vrot.lane.b32.xlu0 %v2036, 34
      %v2045 = vpop.permute.xlu0 %2044
      %2046 = vrot.lane.b32.xlu0 %v2038, 34
      %v2047 = vpop.permute.xlu0 %2046
      %2048 = vrot.lane.b32.xlu0 %v2040, 34
      %v2049 = vpop.permute.xlu0 %2048
      %2050 = vrot.lane.b32.xlu0 %v2042, 34
      %v2051 = vpop.permute.xlu0 %2050
      %2052 = vrot.lane.b32.xlu0 %v2037, 34
      %v2053 = vpop.permute.xlu0 %2052
      %2054 = vrot.lane.b32.xlu0 %v2039, 34
      %v2055 = vpop.permute.xlu0 %2054
      %2056 = vrot.lane.b32.xlu0 %v2041, 34
      %v2057 = vpop.permute.xlu0 %2056
      %2058 = vrot.lane.b32.xlu0 %v2043, 34
      %v2059 = vpop.permute.xlu0 %2058
      %vm2060 = vcmp.lt.s32.totalorder %v960, 34
      %v2061 = vsel %vm2060, %v2045, %v2053
      %v2062 = vsel %vm2060, %v2047, %v2055
      %v2063 = vsel %vm2060, %v2049, %v2057
      %v2064 = vsel %vm2060, %v2051, %v2059
      %v2065 = vsel %vm2060, %v2053, %v2045
      %v2066 = vsel %vm2060, %v2055, %v2047
      %v2067 = vsel %vm2060, %v2057, %v2049
      %v2068 = vsel %vm2060, %v2059, %v2051
      %2069 = vrot.lane.b32.xlu0 %v2036, 18
      %v2070 = vpop.permute.xlu0 %2069
      %2071 = vrot.lane.b32.xlu0 %v2038, 18
      %v2072 = vpop.permute.xlu0 %2071
      %2073 = vrot.lane.b32.xlu0 %v2040, 18
      %v2074 = vpop.permute.xlu0 %2073
      %2075 = vrot.lane.b32.xlu0 %v2042, 18
      %v2076 = vpop.permute.xlu0 %2075
      %2077 = vrot.lane.b32.xlu0 %v2037, 18
      %v2078 = vpop.permute.xlu0 %2077
      %2079 = vrot.lane.b32.xlu0 %v2039, 18
      %v2080 = vpop.permute.xlu0 %2079
      %2081 = vrot.lane.b32.xlu0 %v2041, 18
      %v2082 = vpop.permute.xlu0 %2081
      %2083 = vrot.lane.b32.xlu0 %v2043, 18
      %v2084 = vpop.permute.xlu0 %2083
      %vm2085 = vcmp.lt.s32.totalorder %v960, 18
      %v2086 = vsel %vm2085, %v2070, %v2078
      %v2087 = vsel %vm2085, %v2072, %v2080
      %v2088 = vsel %vm2085, %v2074, %v2082
      %v2089 = vsel %vm2085, %v2076, %v2084
      %v2090 = vsel %vm2085, %v2078, %v2070
      %v2091 = vsel %vm2085, %v2080, %v2072
      %v2092 = vsel %vm2085, %v2082, %v2074
      %v2093 = vsel %vm2085, %v2084, %v2076
      %vm2094 = vcmp.ge.s32.totalorder %v984, 2
      %vm2095 = vcmp.ge.s32.totalorder %v985, 2
      %v2096 = vsel %vm2094, %v2065, %v2090
      %v2097 = vsel %vm2095, %v2061, %v2086
      %v2098 = vsel %vm2094, %v2066, %v2091
      %v2099 = vsel %vm2095, %v2062, %v2087
      %v2100 = vsel %vm2094, %v2067, %v2092
      %v2101 = vsel %vm2095, %v2063, %v2088
      %v2102 = vsel %vm2094, %v2068, %v2093
      %v2103 = vsel %vm2095, %v2064, %v2089
      %2104 = vrot.lane.b32.xlu0 %v2036, 32
      %v2105 = vpop.permute.xlu0 %2104
      %2106 = vrot.lane.b32.xlu0 %v2038, 32
      %v2107 = vpop.permute.xlu0 %2106
      %2108 = vrot.lane.b32.xlu0 %v2040, 32
      %v2109 = vpop.permute.xlu0 %2108
      %2110 = vrot.lane.b32.xlu0 %v2042, 32
      %v2111 = vpop.permute.xlu0 %2110
      %2112 = vrot.lane.b32.xlu0 %v2037, 32
      %v2113 = vpop.permute.xlu0 %2112
      %2114 = vrot.lane.b32.xlu0 %v2039, 32
      %v2115 = vpop.permute.xlu0 %2114
      %2116 = vrot.lane.b32.xlu0 %v2041, 32
      %v2117 = vpop.permute.xlu0 %2116
      %2118 = vrot.lane.b32.xlu0 %v2043, 32
      %v2119 = vpop.permute.xlu0 %2118
      %vm2120 = vcmp.lt.s32.totalorder %v960, 32
      %v2121 = vsel %vm2120, %v2105, %v2113
      %v2122 = vsel %vm2120, %v2107, %v2115
      %v2123 = vsel %vm2120, %v2109, %v2117
      %v2124 = vsel %vm2120, %v2111, %v2119
      %v2125 = vsel %vm2120, %v2113, %v2105
      %v2126 = vsel %vm2120, %v2115, %v2107
      %v2127 = vsel %vm2120, %v2117, %v2109
      %v2128 = vsel %vm2120, %v2119, %v2111
      %2129 = vrot.lane.b32.xlu0 %v2036, 30
      %v2130 = vpop.permute.xlu0 %2129
      %2131 = vrot.lane.b32.xlu0 %v2038, 30
      %v2132 = vpop.permute.xlu0 %2131
      %2133 = vrot.lane.b32.xlu0 %v2040, 30
      %v2134 = vpop.permute.xlu0 %2133
      %2135 = vrot.lane.b32.xlu0 %v2042, 30
      %v2136 = vpop.permute.xlu0 %2135
      %2137 = vrot.lane.b32.xlu0 %v2037, 30
      %v2138 = vpop.permute.xlu0 %2137
      %2139 = vrot.lane.b32.xlu0 %v2039, 30
      %v2140 = vpop.permute.xlu0 %2139
      %2141 = vrot.lane.b32.xlu0 %v2041, 30
      %v2142 = vpop.permute.xlu0 %2141
      %2143 = vrot.lane.b32.xlu0 %v2043, 30
      %v2144 = vpop.permute.xlu0 %2143
      %vm2145 = vcmp.lt.s32.totalorder %v960, 30
      %v2146 = vsel %vm2145, %v2130, %v2138
      %v2147 = vsel %vm2145, %v2132, %v2140
      %v2148 = vsel %vm2145, %v2134, %v2142
      %v2149 = vsel %vm2145, %v2136, %v2144
      %v2150 = vsel %vm2145, %v2138, %v2130
      %v2151 = vsel %vm2145, %v2140, %v2132
      %v2152 = vsel %vm2145, %v2142, %v2134
      %v2153 = vsel %vm2145, %v2144, %v2136
      %2154 = vrot.lane.b32.xlu0 %v2036, 46
      %v2155 = vpop.permute.xlu0 %2154
      %2156 = vrot.lane.b32.xlu0 %v2038, 46
      %v2157 = vpop.permute.xlu0 %2156
      %2158 = vrot.lane.b32.xlu0 %v2040, 46
      %v2159 = vpop.permute.xlu0 %2158
      %2160 = vrot.lane.b32.xlu0 %v2042, 46
      %v2161 = vpop.permute.xlu0 %2160
      %2162 = vrot.lane.b32.xlu0 %v2037, 46
      %v2163 = vpop.permute.xlu0 %2162
      %2164 = vrot.lane.b32.xlu0 %v2039, 46
      %v2165 = vpop.permute.xlu0 %2164
      %2166 = vrot.lane.b32.xlu0 %v2041, 46
      %v2167 = vpop.permute.xlu0 %2166
      %2168 = vrot.lane.b32.xlu0 %v2043, 46
      %v2169 = vpop.permute.xlu0 %2168
      %vm2170 = vcmp.lt.s32.totalorder %v960, 46
      %v2171 = vsel %vm2170, %v2155, %v2163
      %v2172 = vsel %vm2170, %v2157, %v2165
      %v2173 = vsel %vm2170, %v2159, %v2167
      %v2174 = vsel %vm2170, %v2161, %v2169
      %v2175 = vsel %vm2170, %v2163, %v2155
      %v2176 = vsel %vm2170, %v2165, %v2157
      %v2177 = vsel %vm2170, %v2167, %v2159
      %v2178 = vsel %vm2170, %v2169, %v2161
      %vm2179 = vcmp.lt.s32.totalorder %v984, 14
      %vm2180 = vcmp.lt.s32.totalorder %v985, 14
      %v2181 = vsel %vm2179, %v2150, %v2175
      %v2182 = vsel %vm2180, %v2146, %v2171
      %v2183 = vsel %vm2179, %v2151, %v2176
      %v2184 = vsel %vm2180, %v2147, %v2172
      %v2185 = vsel %vm2179, %v2152, %v2177
      %v2186 = vsel %vm2180, %v2148, %v2173
      %v2187 = vsel %vm2179, %v2153, %v2178
      %v2188 = vsel %vm2180, %v2149, %v2174
      %2189 = vrot.lane.b32.xlu0 %v2036, 2
      %v2190 = vpop.permute.xlu0 %2189
      %2191 = vrot.lane.b32.xlu0 %v2038, 2
      %v2192 = vpop.permute.xlu0 %2191
      %2193 = vrot.lane.b32.xlu0 %v2040, 2
      %v2194 = vpop.permute.xlu0 %2193
      %2195 = vrot.lane.b32.xlu0 %v2042, 2
      %v2196 = vpop.permute.xlu0 %2195
      %2197 = vrot.lane.b32.xlu0 %v2037, 2
      %v2198 = vpop.permute.xlu0 %2197
      %2199 = vrot.lane.b32.xlu0 %v2039, 2
      %v2200 = vpop.permute.xlu0 %2199
      %2201 = vrot.lane.b32.xlu0 %v2041, 2
      %v2202 = vpop.permute.xlu0 %2201
      %2203 = vrot.lane.b32.xlu0 %v2043, 2
      %v2204 = vpop.permute.xlu0 %2203
      %vm2205 = vcmp.lt.s32.totalorder %v960, 2
      %v2206 = vsel %vm2205, %v2190, %v2198
      %v2207 = vsel %vm2205, %v2192, %v2200
      %v2208 = vsel %vm2205, %v2194, %v2202
      %v2209 = vsel %vm2205, %v2196, %v2204
      %v2210 = vsel %vm2205, %v2198, %v2190
      %v2211 = vsel %vm2205, %v2200, %v2192
      %v2212 = vsel %vm2205, %v2202, %v2194
      %v2213 = vsel %vm2205, %v2204, %v2196
      %2214 = vrot.lane.b32.xlu0 %v2036, 114
      %v2215 = vpop.permute.xlu0 %2214
      %2216 = vrot.lane.b32.xlu0 %v2038, 114
      %v2217 = vpop.permute.xlu0 %2216
      %2218 = vrot.lane.b32.xlu0 %v2040, 114
      %v2219 = vpop.permute.xlu0 %2218
      %2220 = vrot.lane.b32.xlu0 %v2042, 114
      %v2221 = vpop.permute.xlu0 %2220
      %2222 = vrot.lane.b32.xlu0 %v2037, 114
      %v2223 = vpop.permute.xlu0 %2222
      %2224 = vrot.lane.b32.xlu0 %v2039, 114
      %v2225 = vpop.permute.xlu0 %2224
      %2226 = vrot.lane.b32.xlu0 %v2041, 114
      %v2227 = vpop.permute.xlu0 %2226
      %2228 = vrot.lane.b32.xlu0 %v2043, 114
      %v2229 = vpop.permute.xlu0 %2228
      %vm2230 = vcmp.lt.s32.totalorder %v960, 114
      %v2231 = vsel %vm2230, %v2215, %v2223
      %v2232 = vsel %vm2230, %v2217, %v2225
      %v2233 = vsel %vm2230, %v2219, %v2227
      %v2234 = vsel %vm2230, %v2221, %v2229
      %v2235 = vsel %vm2230, %v2223, %v2215
      %v2236 = vsel %vm2230, %v2225, %v2217
      %v2237 = vsel %vm2230, %v2227, %v2219
      %v2238 = vsel %vm2230, %v2229, %v2221
      %v2239 = vsel %vm2094, %v2210, %v2231
      %v2240 = vsel %vm2095, %v2206, %v2235
      %v2241 = vsel %vm2094, %v2211, %v2232
      %v2242 = vsel %vm2095, %v2207, %v2236
      %v2243 = vsel %vm2094, %v2212, %v2233
      %v2244 = vsel %vm2095, %v2208, %v2237
      %v2245 = vsel %vm2094, %v2213, %v2234
      %v2246 = vsel %vm2095, %v2209, %v2238
      %2247 = vrot.lane.b32.xlu0 %v2036, 126
      %v2248 = vpop.permute.xlu0 %2247
      %2249 = vrot.lane.b32.xlu0 %v2038, 126
      %v2250 = vpop.permute.xlu0 %2249
      %2251 = vrot.lane.b32.xlu0 %v2040, 126
      %v2252 = vpop.permute.xlu0 %2251
      %2253 = vrot.lane.b32.xlu0 %v2042, 126
      %v2254 = vpop.permute.xlu0 %2253
      %2255 = vrot.lane.b32.xlu0 %v2037, 126
      %v2256 = vpop.permute.xlu0 %2255
      %2257 = vrot.lane.b32.xlu0 %v2039, 126
      %v2258 = vpop.permute.xlu0 %2257
      %2259 = vrot.lane.b32.xlu0 %v2041, 126
      %v2260 = vpop.permute.xlu0 %2259
      %2261 = vrot.lane.b32.xlu0 %v2043, 126
      %v2262 = vpop.permute.xlu0 %2261
      %vm2263 = vcmp.lt.s32.totalorder %v960, 126
      %v2264 = vsel %vm2263, %v2248, %v2256
      %v2265 = vsel %vm2263, %v2250, %v2258
      %v2266 = vsel %vm2263, %v2252, %v2260
      %v2267 = vsel %vm2263, %v2254, %v2262
      %v2268 = vsel %vm2263, %v2256, %v2248
      %v2269 = vsel %vm2263, %v2258, %v2250
      %v2270 = vsel %vm2263, %v2260, %v2252
      %v2271 = vsel %vm2263, %v2262, %v2254
      %2272 = vrot.lane.b32.xlu0 %v2036, 14
      %v2273 = vpop.permute.xlu0 %2272
      %2274 = vrot.lane.b32.xlu0 %v2038, 14
      %v2275 = vpop.permute.xlu0 %2274
      %2276 = vrot.lane.b32.xlu0 %v2040, 14
      %v2277 = vpop.permute.xlu0 %2276
      %2278 = vrot.lane.b32.xlu0 %v2042, 14
      %v2279 = vpop.permute.xlu0 %2278
      %2280 = vrot.lane.b32.xlu0 %v2037, 14
      %v2281 = vpop.permute.xlu0 %2280
      %2282 = vrot.lane.b32.xlu0 %v2039, 14
      %v2283 = vpop.permute.xlu0 %2282
      %2284 = vrot.lane.b32.xlu0 %v2041, 14
      %v2285 = vpop.permute.xlu0 %2284
      %2286 = vrot.lane.b32.xlu0 %v2043, 14
      %v2287 = vpop.permute.xlu0 %2286
      %vm2288 = vcmp.lt.s32.totalorder %v960, 14
      %v2289 = vsel %vm2288, %v2273, %v2281
      %v2290 = vsel %vm2288, %v2275, %v2283
      %v2291 = vsel %vm2288, %v2277, %v2285
      %v2292 = vsel %vm2288, %v2279, %v2287
      %v2293 = vsel %vm2288, %v2281, %v2273
      %v2294 = vsel %vm2288, %v2283, %v2275
      %v2295 = vsel %vm2288, %v2285, %v2277
      %v2296 = vsel %vm2288, %v2287, %v2279
      %v2297 = vsel %vm2179, %v2264, %v2293
      %v2298 = vsel %vm2180, %v2268, %v2289
      %v2299 = vsel %vm2179, %v2265, %v2294
      %v2300 = vsel %vm2180, %v2269, %v2290
      %v2301 = vsel %vm2179, %v2266, %v2295
      %v2302 = vsel %vm2180, %v2270, %v2291
      %v2303 = vsel %vm2179, %v2267, %v2296
      %v2304 = vsel %vm2180, %v2271, %v2292
      %2305 = vrot.lane.b32.xlu0 %v2036, 98
      %v2306 = vpop.permute.xlu0 %2305
      %2307 = vrot.lane.b32.xlu0 %v2038, 98
      %v2308 = vpop.permute.xlu0 %2307
      %2309 = vrot.lane.b32.xlu0 %v2040, 98
      %v2310 = vpop.permute.xlu0 %2309
      %2311 = vrot.lane.b32.xlu0 %v2042, 98
      %v2312 = vpop.permute.xlu0 %2311
      %2313 = vrot.lane.b32.xlu0 %v2037, 98
      %v2314 = vpop.permute.xlu0 %2313
      %2315 = vrot.lane.b32.xlu0 %v2039, 98
      %v2316 = vpop.permute.xlu0 %2315
      %2317 = vrot.lane.b32.xlu0 %v2041, 98
      %v2318 = vpop.permute.xlu0 %2317
      %2319 = vrot.lane.b32.xlu0 %v2043, 98
      %v2320 = vpop.permute.xlu0 %2319
      %vm2321 = vcmp.lt.s32.totalorder %v960, 98
      %v2322 = vsel %vm2321, %v2306, %v2314
      %v2323 = vsel %vm2321, %v2308, %v2316
      %v2324 = vsel %vm2321, %v2310, %v2318
      %v2325 = vsel %vm2321, %v2312, %v2320
      %v2326 = vsel %vm2321, %v2314, %v2306
      %v2327 = vsel %vm2321, %v2316, %v2308
      %v2328 = vsel %vm2321, %v2318, %v2310
      %v2329 = vsel %vm2321, %v2320, %v2312
      %2330 = vrot.lane.b32.xlu0 %v2036, 82
      %v2331 = vpop.permute.xlu0 %2330
      %2332 = vrot.lane.b32.xlu0 %v2038, 82
      %v2333 = vpop.permute.xlu0 %2332
      %2334 = vrot.lane.b32.xlu0 %v2040, 82
      %v2335 = vpop.permute.xlu0 %2334
      %2336 = vrot.lane.b32.xlu0 %v2042, 82
      %v2337 = vpop.permute.xlu0 %2336
      %2338 = vrot.lane.b32.xlu0 %v2037, 82
      %v2339 = vpop.permute.xlu0 %2338
      %2340 = vrot.lane.b32.xlu0 %v2039, 82
      %v2341 = vpop.permute.xlu0 %2340
      %2342 = vrot.lane.b32.xlu0 %v2041, 82
      %v2343 = vpop.permute.xlu0 %2342
      %2344 = vrot.lane.b32.xlu0 %v2043, 82
      %v2345 = vpop.permute.xlu0 %2344
      %vm2346 = vcmp.lt.s32.totalorder %v960, 82
      %v2347 = vsel %vm2346, %v2331, %v2339
      %v2348 = vsel %vm2346, %v2333, %v2341
      %v2349 = vsel %vm2346, %v2335, %v2343
      %v2350 = vsel %vm2346, %v2337, %v2345
      %v2351 = vsel %vm2346, %v2339, %v2331
      %v2352 = vsel %vm2346, %v2341, %v2333
      %v2353 = vsel %vm2346, %v2343, %v2335
      %v2354 = vsel %vm2346, %v2345, %v2337
      %v2355 = vsel %vm2094, %v2322, %v2347
      %v2356 = vsel %vm2095, %v2326, %v2351
      %v2357 = vsel %vm2094, %v2323, %v2348
      %v2358 = vsel %vm2095, %v2327, %v2352
      %v2359 = vsel %vm2094, %v2324, %v2349
      %v2360 = vsel %vm2095, %v2328, %v2353
      %v2361 = vsel %vm2094, %v2325, %v2350
      %v2362 = vsel %vm2095, %v2329, %v2354
      %2363 = vrot.lane.b32.xlu0 %v2036, 96
      %v2364 = vpop.permute.xlu0 %2363
      %2365 = vrot.lane.b32.xlu0 %v2038, 96
      %v2366 = vpop.permute.xlu0 %2365
      %2367 = vrot.lane.b32.xlu0 %v2040, 96
      %v2368 = vpop.permute.xlu0 %2367
      %2369 = vrot.lane.b32.xlu0 %v2042, 96
      %v2370 = vpop.permute.xlu0 %2369
      %2371 = vrot.lane.b32.xlu0 %v2037, 96
      %v2372 = vpop.permute.xlu0 %2371
      %2373 = vrot.lane.b32.xlu0 %v2039, 96
      %v2374 = vpop.permute.xlu0 %2373
      %2375 = vrot.lane.b32.xlu0 %v2041, 96
      %v2376 = vpop.permute.xlu0 %2375
      %2377 = vrot.lane.b32.xlu0 %v2043, 96
      %v2378 = vpop.permute.xlu0 %2377
      %vm2379 = vcmp.lt.s32.totalorder %v960, 96
      %v2380 = vsel %vm2379, %v2364, %v2372
      %v2381 = vsel %vm2379, %v2366, %v2374
      %v2382 = vsel %vm2379, %v2368, %v2376
      %v2383 = vsel %vm2379, %v2370, %v2378
      %v2384 = vsel %vm2379, %v2372, %v2364
      %v2385 = vsel %vm2379, %v2374, %v2366
      %v2386 = vsel %vm2379, %v2376, %v2368
      %v2387 = vsel %vm2379, %v2378, %v2370
      %2388 = vrot.lane.b32.xlu0 %v2036, 94
      %v2389 = vpop.permute.xlu0 %2388
      %2390 = vrot.lane.b32.xlu0 %v2038, 94
      %v2391 = vpop.permute.xlu0 %2390
      %2392 = vrot.lane.b32.xlu0 %v2040, 94
      %v2393 = vpop.permute.xlu0 %2392
      %2394 = vrot.lane.b32.xlu0 %v2042, 94
      %v2395 = vpop.permute.xlu0 %2394
      %2396 = vrot.lane.b32.xlu0 %v2037, 94
      %v2397 = vpop.permute.xlu0 %2396
      %2398 = vrot.lane.b32.xlu0 %v2039, 94
      %v2399 = vpop.permute.xlu0 %2398
      %2400 = vrot.lane.b32.xlu0 %v2041, 94
      %v2401 = vpop.permute.xlu0 %2400
      %2402 = vrot.lane.b32.xlu0 %v2043, 94
      %v2403 = vpop.permute.xlu0 %2402
      %vm2404 = vcmp.lt.s32.totalorder %v960, 94
      %v2405 = vsel %vm2404, %v2389, %v2397
      %v2406 = vsel %vm2404, %v2391, %v2399
      %v2407 = vsel %vm2404, %v2393, %v2401
      %v2408 = vsel %vm2404, %v2395, %v2403
      %v2409 = vsel %vm2404, %v2397, %v2389
      %v2410 = vsel %vm2404, %v2399, %v2391
      %v2411 = vsel %vm2404, %v2401, %v2393
      %v2412 = vsel %vm2404, %v2403, %v2395
      %2413 = vrot.lane.b32.xlu0 %v2036, 110
      %v2414 = vpop.permute.xlu0 %2413
      %2415 = vrot.lane.b32.xlu0 %v2038, 110
      %v2416 = vpop.permute.xlu0 %2415
      %2417 = vrot.lane.b32.xlu0 %v2040, 110
      %v2418 = vpop.permute.xlu0 %2417
      %2419 = vrot.lane.b32.xlu0 %v2042, 110
      %v2420 = vpop.permute.xlu0 %2419
      %2421 = vrot.lane.b32.xlu0 %v2037, 110
      %v2422 = vpop.permute.xlu0 %2421
      %2423 = vrot.lane.b32.xlu0 %v2039, 110
      %v2424 = vpop.permute.xlu0 %2423
      %2425 = vrot.lane.b32.xlu0 %v2041, 110
      %v2426 = vpop.permute.xlu0 %2425
      %2427 = vrot.lane.b32.xlu0 %v2043, 110
      %v2428 = vpop.permute.xlu0 %2427
      %vm2429 = vcmp.lt.s32.totalorder %v960, 110
      %v2430 = vsel %vm2429, %v2414, %v2422
      %v2431 = vsel %vm2429, %v2416, %v2424
      %v2432 = vsel %vm2429, %v2418, %v2426
      %v2433 = vsel %vm2429, %v2420, %v2428
      %v2434 = vsel %vm2429, %v2422, %v2414
      %v2435 = vsel %vm2429, %v2424, %v2416
      %v2436 = vsel %vm2429, %v2426, %v2418
      %v2437 = vsel %vm2429, %v2428, %v2420
      %v2438 = vsel %vm2179, %v2405, %v2430
      %v2439 = vsel %vm2180, %v2409, %v2434
      %v2440 = vsel %vm2179, %v2406, %v2431
      %v2441 = vsel %vm2180, %v2410, %v2435
      %v2442 = vsel %vm2179, %v2407, %v2432
      %v2443 = vsel %vm2180, %v2411, %v2436
      %v2444 = vsel %vm2179, %v2408, %v2433
      %v2445 = vsel %vm2180, %v2412, %v2437
      %2447 = vset.pattern.permute.xlu0 0
      %2448 = vperm.xlu0 %2447, %v1160
      %v2449 = vpop.permute.xlu0 %2448
      %2452 = vset.pattern.permute.xlu0 0
      %2453 = vperm.xlu0 %2452, %v1161
      %v2454 = vpop.permute.xlu0 %2453
      %2457 = vset.pattern.permute.xlu0 0
      %2458 = vperm.xlu0 %2457, %v1162
      %v2459 = vpop.permute.xlu0 %2458
      %2462 = vset.pattern.permute.xlu0 0
      %2463 = vperm.xlu0 %2462, %v1163
      %v2464 = vpop.permute.xlu0 %2463
      %v2467 = vsel %vm1645, %v1150, 0
      %v2470 = vsel %vm1645, %v1153, 0
      %v2473 = vsel %vm1645, %v1156, 0
      %v2476 = vsel %vm1645, %v1159, 0
      %2478 = vmatprep.subr.mxu0 %v2246
      %2479 = vmatpush1.msra.mxu0 %v2245
      %2480 = vmatprep.subr.mxu0 %v2244
      %2481 = vmatpush1.msra.mxu0 %v2243
      %2482 = vmatprep.subr.mxu0 %v2242
      %2483 = vmatpush1.msra.mxu0 %v2241
      %2484 = vmatprep.subr.mxu0 %v2240
      %2485 = vmatpush1.msra.mxu0 %v2239
      %2486 = vmatprep.subr.mxu0 %v2188
      %2487 = vmatpush1.msra.mxu0 %v2187
      %2488 = vmatprep.subr.mxu0 %v2186
      %2489 = vmatpush1.msra.mxu0 %v2185
      %2490 = vmatprep.subr.mxu0 %v2184
      %2491 = vmatpush1.msra.mxu0 %v2183
      %2492 = vmatprep.subr.mxu0 %v2182
      %2493 = vmatpush1.msra.mxu0 %v2181
      %2494 = vmatprep.subr.mxu0 %v2124
      %2495 = vmatpush1.msra.mxu0 %v2128
      %2496 = vmatprep.subr.mxu0 %v2123
      %2497 = vmatpush1.msra.mxu0 %v2127
      %2498 = vmatprep.subr.mxu0 %v2122
      %2499 = vmatpush1.msra.mxu0 %v2126
      %2500 = vmatprep.subr.mxu0 %v2121
      %2501 = vmatpush1.msra.mxu0 %v2125
      %2502 = vmatprep.subr.mxu0 %v2103
      %2503 = vmatpush1.msra.mxu0 %v2102
      %2504 = vmatprep.subr.mxu0 %v2101
      %2505 = vmatpush1.msra.mxu0 %v2100
      %2506 = vmatprep.subr.mxu0 %v2099
      %2507 = vmatpush1.msra.mxu0 %v2098
      %2508 = vmatprep.subr.mxu0 %v2097
      %2509 = vmatpush1.msra.mxu0 %v2096
      %2510 = vmatprep.subr.mxu0 %v2387
      %2511 = vmatpush2.msra.mxu0 %v2383
      %2512 = vmatprep.subr.mxu0 %v2386
      %2513 = vmatpush2.msra.mxu0 %v2382
      %2514 = vmatprep.subr.mxu0 %v2385
      %2515 = vmatpush2.msra.mxu0 %v2381
      %2516 = vmatprep.subr.mxu0 %v2384
      %2517 = vmatpush2.msra.mxu0 %v2380
      %2518 = vmatprep.subr.mxu0 %v2362
      %2519 = vmatpush2.msra.mxu0 %v2361
      %2520 = vmatprep.subr.mxu0 %v2360
      %2521 = vmatpush2.msra.mxu0 %v2359
      %2522 = vmatprep.subr.mxu0 %v2358
      %2523 = vmatpush2.msra.mxu0 %v2357
      %2524 = vmatprep.subr.mxu0 %v2356
      %2525 = vmatpush2.msra.mxu0 %v2355
      %2526 = vmatprep.subr.mxu0 %v2304
      %2527 = vmatpush2.msra.mxu0 %v2303
      %2528 = vmatprep.subr.mxu0 %v2302
      %2529 = vmatpush2.msra.mxu0 %v2301
      %2530 = vmatprep.subr.mxu0 %v2300
      %2531 = vmatpush2.msra.mxu0 %v2299
      %2532 = vmatprep.subr.mxu0 %v2298
      %2533 = vmatpush2.msra.mxu0 %v2297
      %2534 = vmatprep.subr.mxu0 %v2043
      %2535 = vmatpush2.msra.mxu0 %v2042
      %2536 = vmatprep.subr.mxu0 %v2041
      %2537 = vmatpush2.msra.mxu0 %v2040
      %2538 = vmatprep.subr.mxu0 %v2039
      %2539 = vmatpush2.msra.mxu0 %v2038
      %2540 = vmatprep.subr.mxu0 %v2037
      %2541 = vmatpush2.msra.mxu0 %v2036
      %2542 = vmatprep.mubr.f32.mxu0 %v1149
      %2543 = vmatmul.mubr.f32.gmra.mxu0 %v1148
      %v2544 = vpop.f32.mrf.mxu0
      %v2545 = vadd.f32 %v2449, %v2544
      %v2546 = vpop.f32.mrf.mxu0
      %v2547 = vadd.f32 %v2449, %v2546
      %2548 = vmatprep.mubr.f32.mxu0 %v1152
      %2549 = vmatmul.mubr.f32.gmra.mxu0 %v1151
      %v2550 = vpop.f32.mrf.mxu0
      %v2551 = vadd.f32 %v2454, %v2550
      %v2552 = vpop.f32.mrf.mxu0
      %v2553 = vadd.f32 %v2454, %v2552
      %2554 = vmatprep.mubr.f32.mxu0 %v1155
      %2555 = vmatmul.mubr.f32.gmra.mxu0 %v1154
      %v2556 = vpop.f32.mrf.mxu0
      %v2557 = vadd.f32 %v2459, %v2556
      %v2558 = vpop.f32.mrf.mxu0
      %v2559 = vadd.f32 %v2459, %v2558
      %2560 = vmatprep.mubr.f32.mxu0 %v1158
      %2561 = vmatmul.mubr.f32.gmra.mxu0 %v1157
      %v2562 = vpop.f32.mrf.mxu0
      %v2563 = vadd.f32 %v2464, %v2562
      %v2564 = vpop.f32.mrf.mxu0
      %v2565 = vadd.f32 %v2464, %v2564
      %2566 = vdwg.mxu0
      %2567 = vmatprep.subr.mxu0 0.0
      %2568 = vmatpush1.msra.mxu0 0.0
      %2569 = vmatprep.subr.mxu0 0.0
      %2570 = vmatpush1.msra.mxu0 0.0
      %2571 = vmatprep.subr.mxu0 0.0
      %2572 = vmatpush1.msra.mxu0 0.0
      %2573 = vmatprep.subr.mxu0 0.0
      %2574 = vmatpush1.msra.mxu0 0.0
      %2575 = vmatprep.subr.mxu0 0.0
      %2576 = vmatpush1.msra.mxu0 0.0
      %2577 = vmatprep.subr.mxu0 0.0
      %2578 = vmatpush1.msra.mxu0 0.0
      %2579 = vmatprep.subr.mxu0 0.0
      %2580 = vmatpush1.msra.mxu0 0.0
      %2581 = vmatprep.subr.mxu0 0.0
      %2582 = vmatpush1.msra.mxu0 0.0
      %2583 = vmatprep.subr.mxu0 0.0
      %2584 = vmatpush1.msra.mxu0 0.0
      %2585 = vmatprep.subr.mxu0 0.0
      %2586 = vmatpush1.msra.mxu0 0.0
      %2587 = vmatprep.subr.mxu0 0.0
      %2588 = vmatpush1.msra.mxu0 0.0
      %2589 = vmatprep.subr.mxu0 0.0
      %2590 = vmatpush1.msra.mxu0 0.0
      %2591 = vmatprep.subr.mxu0 %v2445
      %2592 = vmatpush1.msra.mxu0 %v2444
      %2593 = vmatprep.subr.mxu0 %v2443
      %2594 = vmatpush1.msra.mxu0 %v2442
      %2595 = vmatprep.subr.mxu0 %v2441
      %2596 = vmatpush1.msra.mxu0 %v2440
      %2597 = vmatprep.subr.mxu0 %v2439
      %2598 = vmatpush1.msra.mxu0 %v2438
      %2599 = vmatprep.subr.mxu0 0.0
      %2600 = vmatpush2.msra.mxu0 0.0
      %2601 = vmatprep.subr.mxu0 0.0
      %2602 = vmatpush2.msra.mxu0 0.0
      %2603 = vmatprep.subr.mxu0 0.0
      %2604 = vmatpush2.msra.mxu0 0.0
      %2605 = vmatprep.subr.mxu0 0.0
      %2606 = vmatpush2.msra.mxu0 0.0
      %2607 = vmatprep.subr.mxu0 0.0
      %2608 = vmatpush2.msra.mxu0 0.0
      %2609 = vmatprep.subr.mxu0 0.0
      %2610 = vmatpush2.msra.mxu0 0.0
      %2611 = vmatprep.subr.mxu0 0.0
      %2612 = vmatpush2.msra.mxu0 0.0
      %2613 = vmatprep.subr.mxu0 0.0
      %2614 = vmatpush2.msra.mxu0 0.0
      %2615 = vmatprep.subr.mxu0 0.0
      %2616 = vmatpush2.msra.mxu0 0.0
      %2617 = vmatprep.subr.mxu0 0.0
      %2618 = vmatpush2.msra.mxu0 0.0
      %2619 = vmatprep.subr.mxu0 0.0
      %2620 = vmatpush2.msra.mxu0 0.0
      %2621 = vmatprep.subr.mxu0 0.0
      %2622 = vmatpush2.msra.mxu0 0.0
      %2623 = vmatprep.subr.mxu0 0.0
      %2624 = vmatpush2.msra.mxu0 0.0
      %2625 = vmatprep.subr.mxu0 0.0
      %2626 = vmatpush2.msra.mxu0 0.0
      %2627 = vmatprep.subr.mxu0 0.0
      %2628 = vmatpush2.msra.mxu0 0.0
      %2629 = vmatprep.subr.mxu0 0.0
      %2630 = vmatpush2.msra.mxu0 0.0
      %2631 = vmatprep.mubr.f32.mxu0 0.0
      %2632 = vmatmul.mubr.f32.gmra.mxu0 %v2467
      %v2633 = vpop.f32.mrf.mxu0
      %v2634 = vadd.f32 %v2545, %v2633
      %v2635 = vpop.f32.mrf.mxu0
      %v2636 = vadd.f32 %v2547, %v2635
      %2637 = vmatprep.mubr.f32.mxu0 0.0
      %2638 = vmatmul.mubr.f32.gmra.mxu0 %v2470
      %v2639 = vpop.f32.mrf.mxu0
      %v2640 = vadd.f32 %v2551, %v2639
      %v2641 = vpop.f32.mrf.mxu0
      %v2642 = vadd.f32 %v2553, %v2641
      %2643 = vmatprep.mubr.f32.mxu0 0.0
      %2644 = vmatmul.mubr.f32.gmra.mxu0 %v2473
      %v2645 = vpop.f32.mrf.mxu0
      %v2646 = vadd.f32 %v2557, %v2645
      %v2647 = vpop.f32.mrf.mxu0
      %v2648 = vadd.f32 %v2559, %v2647
      %2649 = vmatprep.mubr.f32.mxu0 0.0
      %2650 = vmatmul.mubr.f32.gmra.mxu0 %v2476
      %v2651 = vpop.f32.mrf.mxu0
      %v2652 = vadd.f32 %v2563, %v2651
      %v2653 = vpop.f32.mrf.mxu0
      %v2654 = vadd.f32 %v2565, %v2653
      %2655 = vdwg.mxu0
      %v2656 = vmul.f32 %v2634, 0.70710677
      %v2657 = vmul.f32 %v2636, 0.70710677
      %v2658 = vmul.f32 %v2640, 0.70710677
      %v2659 = vmul.f32 %v2642, 0.70710677
      %v2660 = vmul.f32 %v2646, 0.70710677
      %v2661 = vmul.f32 %v2648, 0.70710677
      %v2662 = vmul.f32 %v2652, 0.70710677
      %v2663 = vmul.f32 %v2654, 0.70710677
      %vm2664 = vcmp.ge.f32.partialorder %v2656, 0.0
      %vm2665 = vcmp.ge.f32.partialorder %v2657, 0.0
      %vm2666 = vcmp.ge.f32.partialorder %v2658, 0.0
      %vm2667 = vcmp.ge.f32.partialorder %v2659, 0.0
      %vm2668 = vcmp.ge.f32.partialorder %v2660, 0.0
      %vm2669 = vcmp.ge.f32.partialorder %v2661, 0.0
      %vm2670 = vcmp.ge.f32.partialorder %v2662, 0.0
      %vm2671 = vcmp.ge.f32.partialorder %v2663, 0.0
      %v2672 = vsel %vm2664, 1.0, -1.0
      %v2673 = vsel %vm2665, 1.0, -1.0
      %v2674 = vsel %vm2666, 1.0, -1.0
      %v2675 = vsel %vm2667, 1.0, -1.0
      %v2676 = vsel %vm2668, 1.0, -1.0
      %v2677 = vsel %vm2669, 1.0, -1.0
      %v2678 = vsel %vm2670, 1.0, -1.0
      %v2679 = vsel %vm2671, 1.0, -1.0
      %v2680 = vand.u32 2147483647, %v2656
      %v2681 = vand.u32 2147483647, %v2657
      %v2682 = vand.u32 2147483647, %v2658
      %v2683 = vand.u32 2147483647, %v2659
      %v2684 = vand.u32 2147483647, %v2660
      %v2685 = vand.u32 2147483647, %v2661
      %v2686 = vand.u32 2147483647, %v2662
      %v2687 = vand.u32 2147483647, %v2663
      %v2688 = vmul.f32 %v2680, 0.3275911
      %v2689 = vmul.f32 %v2681, 0.3275911
      %v2690 = vmul.f32 %v2682, 0.3275911
      %v2691 = vmul.f32 %v2683, 0.3275911
      %v2692 = vmul.f32 %v2684, 0.3275911
      %v2693 = vmul.f32 %v2685, 0.3275911
      %v2694 = vmul.f32 %v2686, 0.3275911
      %v2695 = vmul.f32 %v2687, 0.3275911
      %v2696 = vadd.f32 %v2688, 1.0
      %v2697 = vadd.f32 %v2689, 1.0
      %v2698 = vadd.f32 %v2690, 1.0
      %v2699 = vadd.f32 %v2691, 1.0
      %v2700 = vadd.f32 %v2692, 1.0
      %v2701 = vadd.f32 %v2693, 1.0
      %v2702 = vadd.f32 %v2694, 1.0
      %v2703 = vadd.f32 %v2695, 1.0
      %v2704 = vrcp.pop %v2696
      %v2705 = vrcp.pop %v2697
      %v2706 = vrcp.pop %v2698
      %v2707 = vrcp.pop %v2699
      %v2708 = vrcp.pop %v2700
      %v2709 = vrcp.pop %v2701
      %v2710 = vrcp.pop %v2702
      %v2711 = vrcp.pop %v2703
      %v2712 = vmul.f32 %v2704, 1.0614054
      %v2713 = vmul.f32 %v2705, 1.0614054
      %v2714 = vmul.f32 %v2706, 1.0614054
      %v2715 = vmul.f32 %v2707, 1.0614054
      %v2716 = vmul.f32 %v2708, 1.0614054
      %v2717 = vmul.f32 %v2709, 1.0614054
      %v2718 = vmul.f32 %v2710, 1.0614054
      %v2719 = vmul.f32 %v2711, 1.0614054
      %v2720 = vadd.f32 %v2712, -1.4531521
      %v2721 = vadd.f32 %v2713, -1.4531521
      %v2722 = vadd.f32 %v2714, -1.4531521
      %v2723 = vadd.f32 %v2715, -1.4531521
      %v2724 = vadd.f32 %v2716, -1.4531521
      %v2725 = vadd.f32 %v2717, -1.4531521
      %v2726 = vadd.f32 %v2718, -1.4531521
      %v2727 = vadd.f32 %v2719, -1.4531521
      %v2728 = vmul.f32 %v2720, %v2704
      %v2729 = vmul.f32 %v2721, %v2705
      %v2730 = vmul.f32 %v2722, %v2706
      %v2731 = vmul.f32 %v2723, %v2707
      %v2732 = vmul.f32 %v2724, %v2708
      %v2733 = vmul.f32 %v2725, %v2709
      %v2734 = vmul.f32 %v2726, %v2710
      %v2735 = vmul.f32 %v2727, %v2711
      %v2736 = vadd.f32 %v2728, 1.4214138
      %v2737 = vadd.f32 %v2729, 1.4214138
      %v2738 = vadd.f32 %v2730, 1.4214138
      %v2739 = vadd.f32 %v2731, 1.4214138
      %v2740 = vadd.f32 %v2732, 1.4214138
      %v2741 = vadd.f32 %v2733, 1.4214138
      %v2742 = vadd.f32 %v2734, 1.4214138
      %v2743 = vadd.f32 %v2735, 1.4214138
      %v2744 = vmul.f32 %v2736, %v2704
      %v2745 = vmul.f32 %v2737, %v2705
      %v2746 = vmul.f32 %v2738, %v2706
      %v2747 = vmul.f32 %v2739, %v2707
      %v2748 = vmul.f32 %v2740, %v2708
      %v2749 = vmul.f32 %v2741, %v2709
      %v2750 = vmul.f32 %v2742, %v2710
      %v2751 = vmul.f32 %v2743, %v2711
      %v2752 = vadd.f32 %v2744, -0.28449672
      %v2753 = vadd.f32 %v2745, -0.28449672
      %v2754 = vadd.f32 %v2746, -0.28449672
      %v2755 = vadd.f32 %v2747, -0.28449672
      %v2756 = vadd.f32 %v2748, -0.28449672
      %v2757 = vadd.f32 %v2749, -0.28449672
      %v2758 = vadd.f32 %v2750, -0.28449672
      %v2759 = vadd.f32 %v2751, -0.28449672
      %v2760 = vmul.f32 %v2752, %v2704
      %v2761 = vmul.f32 %v2753, %v2705
      %v2762 = vmul.f32 %v2754, %v2706
      %v2763 = vmul.f32 %v2755, %v2707
      %v2764 = vmul.f32 %v2756, %v2708
      %v2765 = vmul.f32 %v2757, %v2709
      %v2766 = vmul.f32 %v2758, %v2710
      %v2767 = vmul.f32 %v2759, %v2711
      %v2768 = vadd.f32 %v2760, 0.2548296
      %v2769 = vadd.f32 %v2761, 0.2548296
      %v2770 = vadd.f32 %v2762, 0.2548296
      %v2771 = vadd.f32 %v2763, 0.2548296
      %v2772 = vadd.f32 %v2764, 0.2548296
      %v2773 = vadd.f32 %v2765, 0.2548296
      %v2774 = vadd.f32 %v2766, 0.2548296
      %v2775 = vadd.f32 %v2767, 0.2548296
      %v2776 = vmul.f32 %v2768, %v2704
      %v2777 = vmul.f32 %v2769, %v2705
      %v2778 = vmul.f32 %v2770, %v2706
      %v2779 = vmul.f32 %v2771, %v2707
      %v2780 = vmul.f32 %v2772, %v2708
      %v2781 = vmul.f32 %v2773, %v2709
      %v2782 = vmul.f32 %v2774, %v2710
      %v2783 = vmul.f32 %v2775, %v2711
      %v2784 = vsub.f32 0.0, %v2680
      %v2785 = vsub.f32 0.0, %v2681
      %v2786 = vsub.f32 0.0, %v2682
      %v2787 = vsub.f32 0.0, %v2683
      %v2788 = vsub.f32 0.0, %v2684
      %v2789 = vsub.f32 0.0, %v2685
      %v2790 = vsub.f32 0.0, %v2686
      %v2791 = vsub.f32 0.0, %v2687
      %v2792 = vmul.f32 %v2784, %v2680
      %v2793 = vmul.f32 %v2785, %v2681
      %v2794 = vmul.f32 %v2786, %v2682
      %v2795 = vmul.f32 %v2787, %v2683
      %v2796 = vmul.f32 %v2788, %v2684
      %v2797 = vmul.f32 %v2789, %v2685
      %v2798 = vmul.f32 %v2790, %v2686
      %v2799 = vmul.f32 %v2791, %v2687
      %v2800 = vmul.f32 %v2792, 1.442695
      %v2801 = vpow.pop %v2800
      %v2802 = vmul.f32 %v2793, 1.442695
      %v2803 = vpow.pop %v2802
      %v2804 = vmul.f32 %v2794, 1.442695
      %v2805 = vpow.pop %v2804
      %v2806 = vmul.f32 %v2795, 1.442695
      %v2807 = vpow.pop %v2806
      %v2808 = vmul.f32 %v2796, 1.442695
      %v2809 = vpow.pop %v2808
      %v2810 = vmul.f32 %v2797, 1.442695
      %v2811 = vpow.pop %v2810
      %v2812 = vmul.f32 %v2798, 1.442695
      %v2813 = vpow.pop %v2812
      %v2814 = vmul.f32 %v2799, 1.442695
      %v2815 = vpow.pop %v2814
      %v2816 = vmul.f32 %v2776, %v2801
      %v2817 = vmul.f32 %v2777, %v2803
      %v2818 = vmul.f32 %v2778, %v2805
      %v2819 = vmul.f32 %v2779, %v2807
      %v2820 = vmul.f32 %v2780, %v2809
      %v2821 = vmul.f32 %v2781, %v2811
      %v2822 = vmul.f32 %v2782, %v2813
      %v2823 = vmul.f32 %v2783, %v2815
      %v2824 = vsub.f32 1.0, %v2816
      %v2825 = vsub.f32 1.0, %v2817
      %v2826 = vsub.f32 1.0, %v2818
      %v2827 = vsub.f32 1.0, %v2819
      %v2828 = vsub.f32 1.0, %v2820
      %v2829 = vsub.f32 1.0, %v2821
      %v2830 = vsub.f32 1.0, %v2822
      %v2831 = vsub.f32 1.0, %v2823
      %v2832 = vmul.f32 %v2672, %v2824
      %v2833 = vmul.f32 %v2673, %v2825
      %v2834 = vmul.f32 %v2674, %v2826
      %v2835 = vmul.f32 %v2675, %v2827
      %v2836 = vmul.f32 %v2676, %v2828
      %v2837 = vmul.f32 %v2677, %v2829
      %v2838 = vmul.f32 %v2678, %v2830
      %v2839 = vmul.f32 %v2679, %v2831
      %v2840 = vmul.f32 %v2634, 0.5
      %v2841 = vmul.f32 %v2636, 0.5
      %v2842 = vmul.f32 %v2640, 0.5
      %v2843 = vmul.f32 %v2642, 0.5
      %v2844 = vmul.f32 %v2646, 0.5
      %v2845 = vmul.f32 %v2648, 0.5
      %v2846 = vmul.f32 %v2652, 0.5
      %v2847 = vmul.f32 %v2654, 0.5
      %v2848 = vadd.f32 %v2832, 1.0
      %v2849 = vadd.f32 %v2833, 1.0
      %v2850 = vadd.f32 %v2834, 1.0
      %v2851 = vadd.f32 %v2835, 1.0
      %v2852 = vadd.f32 %v2836, 1.0
      %v2853 = vadd.f32 %v2837, 1.0
      %v2854 = vadd.f32 %v2838, 1.0
      %v2855 = vadd.f32 %v2839, 1.0
      %v2856 = vmul.f32 %v2840, %v2848
      %v2857 = vmul.f32 %v2841, %v2849
      %v2858 = vmul.f32 %v2842, %v2850
      %v2859 = vmul.f32 %v2843, %v2851
      %v2860 = vmul.f32 %v2844, %v2852
      %v2861 = vmul.f32 %v2845, %v2853
      %v2862 = vmul.f32 %v2846, %v2854
      %v2863 = vmul.f32 %v2847, %v2855
      %2864 = vrot.lane.b32.xlu0 %v2856, 17
      %v2865 = vpop.permute.xlu0 %2864
      %2866 = vrot.lane.b32.xlu0 %v2858, 17
      %v2867 = vpop.permute.xlu0 %2866
      %2868 = vrot.lane.b32.xlu0 %v2860, 17
      %v2869 = vpop.permute.xlu0 %2868
      %2870 = vrot.lane.b32.xlu0 %v2862, 17
      %v2871 = vpop.permute.xlu0 %2870
      %2872 = vrot.lane.b32.xlu0 %v2857, 17
      %v2873 = vpop.permute.xlu0 %2872
      %2874 = vrot.lane.b32.xlu0 %v2859, 17
      %v2875 = vpop.permute.xlu0 %2874
      %2876 = vrot.lane.b32.xlu0 %v2861, 17
      %v2877 = vpop.permute.xlu0 %2876
      %2878 = vrot.lane.b32.xlu0 %v2863, 17
      %v2879 = vpop.permute.xlu0 %2878
      %v2880 = vsel %vm1339, %v2865, %v2873
      %v2881 = vsel %vm1339, %v2867, %v2875
      %v2882 = vsel %vm1339, %v2869, %v2877
      %v2883 = vsel %vm1339, %v2871, %v2879
      %v2884 = vsel %vm1339, %v2873, %v2865
      %v2885 = vsel %vm1339, %v2875, %v2867
      %v2886 = vsel %vm1339, %v2877, %v2869
      %v2887 = vsel %vm1339, %v2879, %v2871
      %2888 = vrot.lane.b32.xlu0 %v2856, 1
      %v2889 = vpop.permute.xlu0 %2888
      %2890 = vrot.lane.b32.xlu0 %v2858, 1
      %v2891 = vpop.permute.xlu0 %2890
      %2892 = vrot.lane.b32.xlu0 %v2860, 1
      %v2893 = vpop.permute.xlu0 %2892
      %2894 = vrot.lane.b32.xlu0 %v2862, 1
      %v2895 = vpop.permute.xlu0 %2894
      %2896 = vrot.lane.b32.xlu0 %v2857, 1
      %v2897 = vpop.permute.xlu0 %2896
      %2898 = vrot.lane.b32.xlu0 %v2859, 1
      %v2899 = vpop.permute.xlu0 %2898
      %2900 = vrot.lane.b32.xlu0 %v2861, 1
      %v2901 = vpop.permute.xlu0 %2900
      %2902 = vrot.lane.b32.xlu0 %v2863, 1
      %v2903 = vpop.permute.xlu0 %2902
      %v2904 = vsel %vm1364, %v2889, %v2897
      %v2905 = vsel %vm1364, %v2891, %v2899
      %v2906 = vsel %vm1364, %v2893, %v2901
      %v2907 = vsel %vm1364, %v2895, %v2903
      %v2908 = vsel %vm1364, %v2897, %v2889
      %v2909 = vsel %vm1364, %v2899, %v2891
      %v2910 = vsel %vm1364, %v2901, %v2893
      %v2911 = vsel %vm1364, %v2903, %v2895
      %v2912 = vsel %vm1373, %v2884, %v2908
      %v2913 = vsel %vm1374, %v2880, %v2904
      %v2914 = vsel %vm1373, %v2885, %v2909
      %v2915 = vsel %vm1374, %v2881, %v2905
      %v2916 = vsel %vm1373, %v2886, %v2910
      %v2917 = vsel %vm1374, %v2882, %v2906
      %v2918 = vsel %vm1373, %v2887, %v2911
      %v2919 = vsel %vm1374, %v2883, %v2907
      %2920 = vrot.lane.b32.xlu0 %v2856, 16
      %v2921 = vpop.permute.xlu0 %2920
      %2922 = vrot.lane.b32.xlu0 %v2858, 16
      %v2923 = vpop.permute.xlu0 %2922
      %2924 = vrot.lane.b32.xlu0 %v2860, 16
      %v2925 = vpop.permute.xlu0 %2924
      %2926 = vrot.lane.b32.xlu0 %v2862, 16
      %v2927 = vpop.permute.xlu0 %2926
      %2928 = vrot.lane.b32.xlu0 %v2857, 16
      %v2929 = vpop.permute.xlu0 %2928
      %2930 = vrot.lane.b32.xlu0 %v2859, 16
      %v2931 = vpop.permute.xlu0 %2930
      %2932 = vrot.lane.b32.xlu0 %v2861, 16
      %v2933 = vpop.permute.xlu0 %2932
      %2934 = vrot.lane.b32.xlu0 %v2863, 16
      %v2935 = vpop.permute.xlu0 %2934
      %v2936 = vsel %vm1399, %v2921, %v2929
      %v2937 = vsel %vm1399, %v2923, %v2931
      %v2938 = vsel %vm1399, %v2925, %v2933
      %v2939 = vsel %vm1399, %v2927, %v2935
      %v2940 = vsel %vm1399, %v2929, %v2921
      %v2941 = vsel %vm1399, %v2931, %v2923
      %v2942 = vsel %vm1399, %v2933, %v2925
      %v2943 = vsel %vm1399, %v2935, %v2927
      %2944 = vrot.lane.b32.xlu0 %v2856, 15
      %v2945 = vpop.permute.xlu0 %2944
      %2946 = vrot.lane.b32.xlu0 %v2858, 15
      %v2947 = vpop.permute.xlu0 %2946
      %2948 = vrot.lane.b32.xlu0 %v2860, 15
      %v2949 = vpop.permute.xlu0 %2948
      %2950 = vrot.lane.b32.xlu0 %v2862, 15
      %v2951 = vpop.permute.xlu0 %2950
      %2952 = vrot.lane.b32.xlu0 %v2857, 15
      %v2953 = vpop.permute.xlu0 %2952
      %2954 = vrot.lane.b32.xlu0 %v2859, 15
      %v2955 = vpop.permute.xlu0 %2954
      %2956 = vrot.lane.b32.xlu0 %v2861, 15
      %v2957 = vpop.permute.xlu0 %2956
      %2958 = vrot.lane.b32.xlu0 %v2863, 15
      %v2959 = vpop.permute.xlu0 %2958
      %v2960 = vsel %vm1424, %v2945, %v2953
      %v2961 = vsel %vm1424, %v2947, %v2955
      %v2962 = vsel %vm1424, %v2949, %v2957
      %v2963 = vsel %vm1424, %v2951, %v2959
      %v2964 = vsel %vm1424, %v2953, %v2945
      %v2965 = vsel %vm1424, %v2955, %v2947
      %v2966 = vsel %vm1424, %v2957, %v2949
      %v2967 = vsel %vm1424, %v2959, %v2951
      %2968 = vrot.lane.b32.xlu0 %v2856, 31
      %v2969 = vpop.permute.xlu0 %2968
      %2970 = vrot.lane.b32.xlu0 %v2858, 31
      %v2971 = vpop.permute.xlu0 %2970
      %2972 = vrot.lane.b32.xlu0 %v2860, 31
      %v2973 = vpop.permute.xlu0 %2972
      %2974 = vrot.lane.b32.xlu0 %v2862, 31
      %v2975 = vpop.permute.xlu0 %2974
      %2976 = vrot.lane.b32.xlu0 %v2857, 31
      %v2977 = vpop.permute.xlu0 %2976
      %2978 = vrot.lane.b32.xlu0 %v2859, 31
      %v2979 = vpop.permute.xlu0 %2978
      %2980 = vrot.lane.b32.xlu0 %v2861, 31
      %v2981 = vpop.permute.xlu0 %2980
      %2982 = vrot.lane.b32.xlu0 %v2863, 31
      %v2983 = vpop.permute.xlu0 %2982
      %v2984 = vsel %vm1449, %v2969, %v2977
      %v2985 = vsel %vm1449, %v2971, %v2979
      %v2986 = vsel %vm1449, %v2973, %v2981
      %v2987 = vsel %vm1449, %v2975, %v2983
      %v2988 = vsel %vm1449, %v2977, %v2969
      %v2989 = vsel %vm1449, %v2979, %v2971
      %v2990 = vsel %vm1449, %v2981, %v2973
      %v2991 = vsel %vm1449, %v2983, %v2975
      %v2992 = vsel %vm1458, %v2964, %v2988
      %v2993 = vsel %vm1459, %v2960, %v2984
      %v2994 = vsel %vm1458, %v2965, %v2989
      %v2995 = vsel %vm1459, %v2961, %v2985
      %v2996 = vsel %vm1458, %v2966, %v2990
      %v2997 = vsel %vm1459, %v2962, %v2986
      %v2998 = vsel %vm1458, %v2967, %v2991
      %v2999 = vsel %vm1459, %v2963, %v2987
      %3000 = vrot.lane.b32.xlu0 %v2856, 113
      %v3001 = vpop.permute.xlu0 %3000
      %3002 = vrot.lane.b32.xlu0 %v2858, 113
      %v3003 = vpop.permute.xlu0 %3002
      %3004 = vrot.lane.b32.xlu0 %v2860, 113
      %v3005 = vpop.permute.xlu0 %3004
      %3006 = vrot.lane.b32.xlu0 %v2862, 113
      %v3007 = vpop.permute.xlu0 %3006
      %3008 = vrot.lane.b32.xlu0 %v2857, 113
      %v3009 = vpop.permute.xlu0 %3008
      %3010 = vrot.lane.b32.xlu0 %v2859, 113
      %v3011 = vpop.permute.xlu0 %3010
      %3012 = vrot.lane.b32.xlu0 %v2861, 113
      %v3013 = vpop.permute.xlu0 %3012
      %3014 = vrot.lane.b32.xlu0 %v2863, 113
      %v3015 = vpop.permute.xlu0 %3014
      %v3016 = vsel %vm1484, %v3001, %v3009
      %v3017 = vsel %vm1484, %v3003, %v3011
      %v3018 = vsel %vm1484, %v3005, %v3013
      %v3019 = vsel %vm1484, %v3007, %v3015
      %v3020 = vsel %vm1484, %v3009, %v3001
      %v3021 = vsel %vm1484, %v3011, %v3003
      %v3022 = vsel %vm1484, %v3013, %v3005
      %v3023 = vsel %vm1484, %v3015, %v3007
      %v3024 = vsel %vm1373, %v2908, %v3016
      %v3025 = vsel %vm1374, %v2904, %v3020
      %v3026 = vsel %vm1373, %v2909, %v3017
      %v3027 = vsel %vm1374, %v2905, %v3021
      %v3028 = vsel %vm1373, %v2910, %v3018
      %v3029 = vsel %vm1374, %v2906, %v3022
      %v3030 = vsel %vm1373, %v2911, %v3019
      %v3031 = vsel %vm1374, %v2907, %v3023
      %3032 = vrot.lane.b32.xlu0 %v2856, 127
      %v3033 = vpop.permute.xlu0 %3032
      %3034 = vrot.lane.b32.xlu0 %v2858, 127
      %v3035 = vpop.permute.xlu0 %3034
      %3036 = vrot.lane.b32.xlu0 %v2860, 127
      %v3037 = vpop.permute.xlu0 %3036
      %3038 = vrot.lane.b32.xlu0 %v2862, 127
      %v3039 = vpop.permute.xlu0 %3038
      %3040 = vrot.lane.b32.xlu0 %v2857, 127
      %v3041 = vpop.permute.xlu0 %3040
      %3042 = vrot.lane.b32.xlu0 %v2859, 127
      %v3043 = vpop.permute.xlu0 %3042
      %3044 = vrot.lane.b32.xlu0 %v2861, 127
      %v3045 = vpop.permute.xlu0 %3044
      %3046 = vrot.lane.b32.xlu0 %v2863, 127
      %v3047 = vpop.permute.xlu0 %3046
      %v3048 = vsel %vm1517, %v3033, %v3041
      %v3049 = vsel %vm1517, %v3035, %v3043
      %v3050 = vsel %vm1517, %v3037, %v3045
      %v3051 = vsel %vm1517, %v3039, %v3047
      %v3052 = vsel %vm1517, %v3041, %v3033
      %v3053 = vsel %vm1517, %v3043, %v3035
      %v3054 = vsel %vm1517, %v3045, %v3037
      %v3055 = vsel %vm1517, %v3047, %v3039
      %v3056 = vsel %vm1458, %v3048, %v2964
      %v3057 = vsel %vm1459, %v3052, %v2960
      %v3058 = vsel %vm1458, %v3049, %v2965
      %v3059 = vsel %vm1459, %v3053, %v2961
      %v3060 = vsel %vm1458, %v3050, %v2966
      %v3061 = vsel %vm1459, %v3054, %v2962
      %v3062 = vsel %vm1458, %v3051, %v2967
      %v3063 = vsel %vm1459, %v3055, %v2963
      %3064 = vrot.lane.b32.xlu0 %v2856, 97
      %v3065 = vpop.permute.xlu0 %3064
      %3066 = vrot.lane.b32.xlu0 %v2858, 97
      %v3067 = vpop.permute.xlu0 %3066
      %3068 = vrot.lane.b32.xlu0 %v2860, 97
      %v3069 = vpop.permute.xlu0 %3068
      %3070 = vrot.lane.b32.xlu0 %v2862, 97
      %v3071 = vpop.permute.xlu0 %3070
      %3072 = vrot.lane.b32.xlu0 %v2857, 97
      %v3073 = vpop.permute.xlu0 %3072
      %3074 = vrot.lane.b32.xlu0 %v2859, 97
      %v3075 = vpop.permute.xlu0 %3074
      %3076 = vrot.lane.b32.xlu0 %v2861, 97
      %v3077 = vpop.permute.xlu0 %3076
      %3078 = vrot.lane.b32.xlu0 %v2863, 97
      %v3079 = vpop.permute.xlu0 %3078
      %v3080 = vsel %vm1550, %v3065, %v3073
      %v3081 = vsel %vm1550, %v3067, %v3075
      %v3082 = vsel %vm1550, %v3069, %v3077
      %v3083 = vsel %vm1550, %v3071, %v3079
      %v3084 = vsel %vm1550, %v3073, %v3065
      %v3085 = vsel %vm1550, %v3075, %v3067
      %v3086 = vsel %vm1550, %v3077, %v3069
      %v3087 = vsel %vm1550, %v3079, %v3071
      %v3088 = vsel %vm1373, %v3016, %v3080
      %v3089 = vsel %vm1374, %v3020, %v3084
      %v3090 = vsel %vm1373, %v3017, %v3081
      %v3091 = vsel %vm1374, %v3021, %v3085
      %v3092 = vsel %vm1373, %v3018, %v3082
      %v3093 = vsel %vm1374, %v3022, %v3086
      %v3094 = vsel %vm1373, %v3019, %v3083
      %v3095 = vsel %vm1374, %v3023, %v3087
      %3096 = vrot.lane.b32.xlu0 %v2856, 112
      %v3097 = vpop.permute.xlu0 %3096
      %3098 = vrot.lane.b32.xlu0 %v2858, 112
      %v3099 = vpop.permute.xlu0 %3098
      %3100 = vrot.lane.b32.xlu0 %v2860, 112
      %v3101 = vpop.permute.xlu0 %3100
      %3102 = vrot.lane.b32.xlu0 %v2862, 112
      %v3103 = vpop.permute.xlu0 %3102
      %3104 = vrot.lane.b32.xlu0 %v2857, 112
      %v3105 = vpop.permute.xlu0 %3104
      %3106 = vrot.lane.b32.xlu0 %v2859, 112
      %v3107 = vpop.permute.xlu0 %3106
      %3108 = vrot.lane.b32.xlu0 %v2861, 112
      %v3109 = vpop.permute.xlu0 %3108
      %3110 = vrot.lane.b32.xlu0 %v2863, 112
      %v3111 = vpop.permute.xlu0 %3110
      %v3112 = vsel %vm1583, %v3097, %v3105
      %v3113 = vsel %vm1583, %v3099, %v3107
      %v3114 = vsel %vm1583, %v3101, %v3109
      %v3115 = vsel %vm1583, %v3103, %v3111
      %v3116 = vsel %vm1583, %v3105, %v3097
      %v3117 = vsel %vm1583, %v3107, %v3099
      %v3118 = vsel %vm1583, %v3109, %v3101
      %v3119 = vsel %vm1583, %v3111, %v3103
      %3120 = vrot.lane.b32.xlu0 %v2856, 111
      %v3121 = vpop.permute.xlu0 %3120
      %3122 = vrot.lane.b32.xlu0 %v2858, 111
      %v3123 = vpop.permute.xlu0 %3122
      %3124 = vrot.lane.b32.xlu0 %v2860, 111
      %v3125 = vpop.permute.xlu0 %3124
      %3126 = vrot.lane.b32.xlu0 %v2862, 111
      %v3127 = vpop.permute.xlu0 %3126
      %3128 = vrot.lane.b32.xlu0 %v2857, 111
      %v3129 = vpop.permute.xlu0 %3128
      %3130 = vrot.lane.b32.xlu0 %v2859, 111
      %v3131 = vpop.permute.xlu0 %3130
      %3132 = vrot.lane.b32.xlu0 %v2861, 111
      %v3133 = vpop.permute.xlu0 %3132
      %3134 = vrot.lane.b32.xlu0 %v2863, 111
      %v3135 = vpop.permute.xlu0 %3134
      %v3136 = vsel %vm1608, %v3121, %v3129
      %v3137 = vsel %vm1608, %v3123, %v3131
      %v3138 = vsel %vm1608, %v3125, %v3133
      %v3139 = vsel %vm1608, %v3127, %v3135
      %v3140 = vsel %vm1608, %v3129, %v3121
      %v3141 = vsel %vm1608, %v3131, %v3123
      %v3142 = vsel %vm1608, %v3133, %v3125
      %v3143 = vsel %vm1608, %v3135, %v3127
      %v3144 = vsel %vm1458, %v3136, %v3048
      %v3145 = vsel %vm1459, %v3140, %v3052
      %v3146 = vsel %vm1458, %v3137, %v3049
      %v3147 = vsel %vm1459, %v3141, %v3053
      %v3148 = vsel %vm1458, %v3138, %v3050
      %v3149 = vsel %vm1459, %v3142, %v3054
      %v3150 = vsel %vm1458, %v3139, %v3051
      %v3151 = vsel %vm1459, %v3143, %v3055
      %3153 = vset.pattern.permute.xlu0 0
      %3154 = vperm.xlu0 %3153, %v1176
      %v3155 = vpop.permute.xlu0 %3154
      %3158 = vset.pattern.permute.xlu0 0
      %3159 = vperm.xlu0 %3158, %v1177
      %v3160 = vpop.permute.xlu0 %3159
      %3163 = vset.pattern.permute.xlu0 0
      %3164 = vperm.xlu0 %3163, %v1178
      %v3165 = vpop.permute.xlu0 %3164
      %3168 = vset.pattern.permute.xlu0 0
      %3169 = vperm.xlu0 %3168, %v1179
      %v3170 = vpop.permute.xlu0 %3169
      %v3173 = vsel %vm1645, %v1166, 0
      %v3176 = vsel %vm1645, %v1169, 0
      %v3179 = vsel %vm1645, %v1172, 0
      %v3182 = vsel %vm1645, %v1175, 0
      %3184 = vmatprep.subr.mxu0 %v3031
      %3185 = vmatpush1.msra.mxu0 %v3030
      %3186 = vmatprep.subr.mxu0 %v3029
      %3187 = vmatpush1.msra.mxu0 %v3028
      %3188 = vmatprep.subr.mxu0 %v3027
      %3189 = vmatpush1.msra.mxu0 %v3026
      %3190 = vmatprep.subr.mxu0 %v3025
      %3191 = vmatpush1.msra.mxu0 %v3024
      %3192 = vmatprep.subr.mxu0 %v2999
      %3193 = vmatpush1.msra.mxu0 %v2998
      %3194 = vmatprep.subr.mxu0 %v2997
      %3195 = vmatpush1.msra.mxu0 %v2996
      %3196 = vmatprep.subr.mxu0 %v2995
      %3197 = vmatpush1.msra.mxu0 %v2994
      %3198 = vmatprep.subr.mxu0 %v2993
      %3199 = vmatpush1.msra.mxu0 %v2992
      %3200 = vmatprep.subr.mxu0 %v2939
      %3201 = vmatpush1.msra.mxu0 %v2943
      %3202 = vmatprep.subr.mxu0 %v2938
      %3203 = vmatpush1.msra.mxu0 %v2942
      %3204 = vmatprep.subr.mxu0 %v2937
      %3205 = vmatpush1.msra.mxu0 %v2941
      %3206 = vmatprep.subr.mxu0 %v2936
      %3207 = vmatpush1.msra.mxu0 %v2940
      %3208 = vmatprep.subr.mxu0 %v2919
      %3209 = vmatpush1.msra.mxu0 %v2918
      %3210 = vmatprep.subr.mxu0 %v2917
      %3211 = vmatpush1.msra.mxu0 %v2916
      %3212 = vmatprep.subr.mxu0 %v2915
      %3213 = vmatpush1.msra.mxu0 %v2914
      %3214 = vmatprep.subr.mxu0 %v2913
      %3215 = vmatpush1.msra.mxu0 %v2912
      %3216 = vmatprep.subr.mxu0 %v3119
      %3217 = vmatpush2.msra.mxu0 %v3115
      %3218 = vmatprep.subr.mxu0 %v3118
      %3219 = vmatpush2.msra.mxu0 %v3114
      %3220 = vmatprep.subr.mxu0 %v3117
      %3221 = vmatpush2.msra.mxu0 %v3113
      %3222 = vmatprep.subr.mxu0 %v3116
      %3223 = vmatpush2.msra.mxu0 %v3112
      %3224 = vmatprep.subr.mxu0 %v3095
      %3225 = vmatpush2.msra.mxu0 %v3094
      %3226 = vmatprep.subr.mxu0 %v3093
      %3227 = vmatpush2.msra.mxu0 %v3092
      %3228 = vmatprep.subr.mxu0 %v3091
      %3229 = vmatpush2.msra.mxu0 %v3090
      %3230 = vmatprep.subr.mxu0 %v3089
      %3231 = vmatpush2.msra.mxu0 %v3088
      %3232 = vmatprep.subr.mxu0 %v3063
      %3233 = vmatpush2.msra.mxu0 %v3062
      %3234 = vmatprep.subr.mxu0 %v3061
      %3235 = vmatpush2.msra.mxu0 %v3060
      %3236 = vmatprep.subr.mxu0 %v3059
      %3237 = vmatpush2.msra.mxu0 %v3058
      %3238 = vmatprep.subr.mxu0 %v3057
      %3239 = vmatpush2.msra.mxu0 %v3056
      %3240 = vmatprep.subr.mxu0 %v2863
      %3241 = vmatpush2.msra.mxu0 %v2862
      %3242 = vmatprep.subr.mxu0 %v2861
      %3243 = vmatpush2.msra.mxu0 %v2860
      %3244 = vmatprep.subr.mxu0 %v2859
      %3245 = vmatpush2.msra.mxu0 %v2858
      %3246 = vmatprep.subr.mxu0 %v2857
      %3247 = vmatpush2.msra.mxu0 %v2856
      %3248 = vmatprep.mubr.f32.mxu0 %v1165
      %3249 = vmatmul.mubr.f32.gmra.mxu0 %v1164
      %v3250 = vpop.f32.mrf.mxu0
      %v3251 = vadd.f32 %v3155, %v3250
      %v3252 = vpop.f32.mrf.mxu0
      %v3253 = vadd.f32 %v3155, %v3252
      %3254 = vmatprep.mubr.f32.mxu0 %v1168
      %3255 = vmatmul.mubr.f32.gmra.mxu0 %v1167
      %v3256 = vpop.f32.mrf.mxu0
      %v3257 = vadd.f32 %v3160, %v3256
      %v3258 = vpop.f32.mrf.mxu0
      %v3259 = vadd.f32 %v3160, %v3258
      %3260 = vmatprep.mubr.f32.mxu0 %v1171
      %3261 = vmatmul.mubr.f32.gmra.mxu0 %v1170
      %v3262 = vpop.f32.mrf.mxu0
      %v3263 = vadd.f32 %v3165, %v3262
      %v3264 = vpop.f32.mrf.mxu0
      %v3265 = vadd.f32 %v3165, %v3264
      %3266 = vmatprep.mubr.f32.mxu0 %v1174
      %3267 = vmatmul.mubr.f32.gmra.mxu0 %v1173
      %v3268 = vpop.f32.mrf.mxu0
      %v3269 = vadd.f32 %v3170, %v3268
      %v3270 = vpop.f32.mrf.mxu0
      %v3271 = vadd.f32 %v3170, %v3270
      %3272 = vdwg.mxu0
      %3273 = vmatprep.subr.mxu0 0.0
      %3274 = vmatpush1.msra.mxu0 0.0
      %3275 = vmatprep.subr.mxu0 0.0
      %3276 = vmatpush1.msra.mxu0 0.0
      %3277 = vmatprep.subr.mxu0 0.0
      %3278 = vmatpush1.msra.mxu0 0.0
      %3279 = vmatprep.subr.mxu0 0.0
      %3280 = vmatpush1.msra.mxu0 0.0
      %3281 = vmatprep.subr.mxu0 0.0
      %3282 = vmatpush1.msra.mxu0 0.0
      %3283 = vmatprep.subr.mxu0 0.0
      %3284 = vmatpush1.msra.mxu0 0.0
      %3285 = vmatprep.subr.mxu0 0.0
      %3286 = vmatpush1.msra.mxu0 0.0
      %3287 = vmatprep.subr.mxu0 0.0
      %3288 = vmatpush1.msra.mxu0 0.0
      %3289 = vmatprep.subr.mxu0 0.0
      %3290 = vmatpush1.msra.mxu0 0.0
      %3291 = vmatprep.subr.mxu0 0.0
      %3292 = vmatpush1.msra.mxu0 0.0
      %3293 = vmatprep.subr.mxu0 0.0
      %3294 = vmatpush1.msra.mxu0 0.0
      %3295 = vmatprep.subr.mxu0 0.0
      %3296 = vmatpush1.msra.mxu0 0.0
      %3297 = vmatprep.subr.mxu0 %v3151
      %3298 = vmatpush1.msra.mxu0 %v3150
      %3299 = vmatprep.subr.mxu0 %v3149
      %3300 = vmatpush1.msra.mxu0 %v3148
      %3301 = vmatprep.subr.mxu0 %v3147
      %3302 = vmatpush1.msra.mxu0 %v3146
      %3303 = vmatprep.subr.mxu0 %v3145
      %3304 = vmatpush1.msra.mxu0 %v3144
      %3305 = vmatprep.subr.mxu0 0.0
      %3306 = vmatpush2.msra.mxu0 0.0
      %3307 = vmatprep.subr.mxu0 0.0
      %3308 = vmatpush2.msra.mxu0 0.0
      %3309 = vmatprep.subr.mxu0 0.0
      %3310 = vmatpush2.msra.mxu0 0.0
      %3311 = vmatprep.subr.mxu0 0.0
      %3312 = vmatpush2.msra.mxu0 0.0
      %3313 = vmatprep.subr.mxu0 0.0
      %3314 = vmatpush2.msra.mxu0 0.0
      %3315 = vmatprep.subr.mxu0 0.0
      %3316 = vmatpush2.msra.mxu0 0.0
      %3317 = vmatprep.subr.mxu0 0.0
      %3318 = vmatpush2.msra.mxu0 0.0
      %3319 = vmatprep.subr.mxu0 0.0
      %3320 = vmatpush2.msra.mxu0 0.0
      %3321 = vmatprep.subr.mxu0 0.0
      %3322 = vmatpush2.msra.mxu0 0.0
      %3323 = vmatprep.subr.mxu0 0.0
      %3324 = vmatpush2.msra.mxu0 0.0
      %3325 = vmatprep.subr.mxu0 0.0
      %3326 = vmatpush2.msra.mxu0 0.0
      %3327 = vmatprep.subr.mxu0 0.0
      %3328 = vmatpush2.msra.mxu0 0.0
      %3329 = vmatprep.subr.mxu0 0.0
      %3330 = vmatpush2.msra.mxu0 0.0
      %3331 = vmatprep.subr.mxu0 0.0
      %3332 = vmatpush2.msra.mxu0 0.0
      %3333 = vmatprep.subr.mxu0 0.0
      %3334 = vmatpush2.msra.mxu0 0.0
      %3335 = vmatprep.subr.mxu0 0.0
      %3336 = vmatpush2.msra.mxu0 0.0
      %3337 = vmatprep.mubr.f32.mxu0 0.0
      %3338 = vmatmul.mubr.f32.gmra.mxu0 %v3173
      %v3339 = vpop.f32.mrf.mxu0
      %v3340 = vadd.f32 %v3251, %v3339
      %v3341 = vpop.f32.mrf.mxu0
      %v3342 = vadd.f32 %v3253, %v3341
      %3343 = vmatprep.mubr.f32.mxu0 0.0
      %3344 = vmatmul.mubr.f32.gmra.mxu0 %v3176
      %v3345 = vpop.f32.mrf.mxu0
      %v3346 = vadd.f32 %v3257, %v3345
      %v3347 = vpop.f32.mrf.mxu0
      %v3348 = vadd.f32 %v3259, %v3347
      %3349 = vmatprep.mubr.f32.mxu0 0.0
      %3350 = vmatmul.mubr.f32.gmra.mxu0 %v3179
      %v3351 = vpop.f32.mrf.mxu0
      %v3352 = vadd.f32 %v3263, %v3351
      %v3353 = vpop.f32.mrf.mxu0
      %v3354 = vadd.f32 %v3265, %v3353
      %3355 = vmatprep.mubr.f32.mxu0 0.0
      %3356 = vmatmul.mubr.f32.gmra.mxu0 %v3182
      %v3357 = vpop.f32.mrf.mxu0
      %v3358 = vadd.f32 %v3269, %v3357
      %v3359 = vpop.f32.mrf.mxu0
      %v3360 = vadd.f32 %v3271, %v3359
      %3361 = vdwg.mxu0
      %v3362 = vadd.f32 %v1102, %v3340
      %v3363 = vadd.f32 %v1104, %v3342
      %v3364 = vadd.f32 %v1108, %v3346
      %v3365 = vadd.f32 %v1110, %v3348
      %v3366 = vadd.f32 %v1114, %v3352
      %v3367 = vadd.f32 %v1116, %v3354
      %v3368 = vadd.f32 %v1120, %v3358
      %v3369 = vadd.f32 %v1122, %v3360
      %v3370 = vadd.f32 %v3362, %v3363
      %3371 = vadd.xlane.f32.xlu0 %v3370
      %v3372 = vpop.xlane.xlu0 %3371
      %v3373 = vadd.f32 %v3364, %v3365
      %3374 = vadd.xlane.f32.xlu0 %v3373
      %v3375 = vpop.xlane.xlu0 %3374
      %v3376 = vadd.f32 %v3366, %v3367
      %3377 = vadd.xlane.f32.xlu0 %v3376
      %v3378 = vpop.xlane.xlu0 %3377
      %v3379 = vadd.f32 %v3368, %v3369
      %3380 = vadd.xlane.f32.xlu0 %v3379
      %v3381 = vpop.xlane.xlu0 %3380
      %v3382 = vadd.f32 %v3372, %v3375
      %v3383 = vadd.f32 %v3382, %v3378
      %v3384 = vadd.f32 %v3383, %v3381
      %v3385 = vrot.slane %v3384, 4
      %v3386 = vadd.f32 %v3384, %v3385
      %v3387 = vrot.slane %v3386, 2
      %v3388 = vadd.f32 %v3386, %v3387
      %v3389 = vrot.slane %v3388, 1
      %v3390 = vadd.f32 %v3388, %v3389
      %v3391 = vmul.f32 %v3390, %v1217
      %v3392 = vsub.f32 %v3362, %v3391
      %v3393 = vsub.f32 %v3363, %v3391
      %v3394 = vsub.f32 %v3364, %v3391
      %v3395 = vsub.f32 %v3365, %v3391
      %v3396 = vsub.f32 %v3366, %v3391
      %v3397 = vsub.f32 %v3367, %v3391
      %v3398 = vsub.f32 %v3368, %v3391
      %v3399 = vsub.f32 %v3369, %v3391
      %v3400 = vmul.f32 %v3392, %v3392
      %v3401 = vmul.f32 %v3393, %v3393
      %v3402 = vmul.f32 %v3394, %v3394
      %v3403 = vmul.f32 %v3395, %v3395
      %v3404 = vmul.f32 %v3396, %v3396
      %v3405 = vmul.f32 %v3397, %v3397
      %v3406 = vmul.f32 %v3398, %v3398
      %v3407 = vmul.f32 %v3399, %v3399
      %v3408 = vadd.f32 %v3400, %v3401
      %3409 = vadd.xlane.f32.xlu0 %v3408
      %v3410 = vpop.xlane.xlu0 %3409
      %v3411 = vadd.f32 %v3402, %v3403
      %3412 = vadd.xlane.f32.xlu0 %v3411
      %v3413 = vpop.xlane.xlu0 %3412
      %v3414 = vadd.f32 %v3404, %v3405
      %3415 = vadd.xlane.f32.xlu0 %v3414
      %v3416 = vpop.xlane.xlu0 %3415
      %v3417 = vadd.f32 %v3406, %v3407
      %3418 = vadd.xlane.f32.xlu0 %v3417
      %v3419 = vpop.xlane.xlu0 %3418
      %v3420 = vadd.f32 %v3410, %v3413
      %v3421 = vadd.f32 %v3420, %v3416
      %v3422 = vadd.f32 %v3421, %v3419
      %v3423 = vrot.slane %v3422, 4
      %v3424 = vadd.f32 %v3422, %v3423
      %v3425 = vrot.slane %v3424, 2
      %v3426 = vadd.f32 %v3424, %v3425
      %v3427 = vrot.slane %v3426, 1
      %v3428 = vadd.f32 %v3426, %v3427
      %v3429 = vmul.f32 %v3428, %v1217
      %v3430 = vadd.f32 %v3429, 1e-05
      %v3431 = vrsqrt.pop %v3430
      %v3432 = vmul.f32 %v3392, %v3431
      %v3433 = vmul.f32 %v3393, %v3431
      %v3434 = vmul.f32 %v3394, %v3431
      %v3435 = vmul.f32 %v3395, %v3431
      %v3436 = vmul.f32 %v3396, %v3431
      %v3437 = vmul.f32 %v3397, %v3431
      %v3438 = vmul.f32 %v3398, %v3431
      %v3439 = vmul.f32 %v3399, %v3431
      %3441 = vset.pattern.permute.xlu0 0
      %3442 = vperm.xlu0 %3441, %v1180
      %v3443 = vpop.permute.xlu0 %3442
      %3446 = vset.pattern.permute.xlu0 0
      %3447 = vperm.xlu0 %3446, %v1181
      %v3448 = vpop.permute.xlu0 %3447
      %3451 = vset.pattern.permute.xlu0 0
      %3452 = vperm.xlu0 %3451, %v1182
      %v3453 = vpop.permute.xlu0 %3452
      %3456 = vset.pattern.permute.xlu0 0
      %3457 = vperm.xlu0 %3456, %v1183
      %v3458 = vpop.permute.xlu0 %3457
      %v3460 = vmul.f32 %v3432, %v3443
      %v3461 = vmul.f32 %v3433, %v3443
      %v3462 = vmul.f32 %v3434, %v3448
      %v3463 = vmul.f32 %v3435, %v3448
      %v3464 = vmul.f32 %v3436, %v3453
      %v3465 = vmul.f32 %v3437, %v3453
      %v3466 = vmul.f32 %v3438, %v3458
      %v3467 = vmul.f32 %v3439, %v3458
      %3469 = vset.pattern.permute.xlu0 0
      %3470 = vperm.xlu0 %3469, %v1184
      %v3471 = vpop.permute.xlu0 %3470
      %3474 = vset.pattern.permute.xlu0 0
      %3475 = vperm.xlu0 %3474, %v1185
      %v3476 = vpop.permute.xlu0 %3475
      %3479 = vset.pattern.permute.xlu0 0
      %3480 = vperm.xlu0 %3479, %v1186
      %v3481 = vpop.permute.xlu0 %3480
      %3484 = vset.pattern.permute.xlu0 0
      %3485 = vperm.xlu0 %3484, %v1187
      %v3486 = vpop.permute.xlu0 %3485
      %v3488 = vadd.f32 %v3460, %v3471
      %v3489 = vadd.f32 %v3461, %v3471
      %v3490 = vadd.f32 %v3462, %v3476
      %v3491 = vadd.f32 %v3463, %v3476
      %v3492 = vadd.f32 %v3464, %v3481
      %v3493 = vadd.f32 %v3465, %v3481
      %v3494 = vadd.f32 %v3466, %v3486
      %v3495 = vadd.f32 %v3467, %v3486
      %v3497 = vsel %vm1645, %v1188, 0
      %v3500 = vsel %vm1645, %v1189, 0
      %v3503 = vsel %vm1645, %v1190, 0
      %v3506 = vsel %vm1645, %v1191, 0
      %3508 = vmatprep.subr.mxu0 0.0
      %3509 = vmatpush1.msra.mxu0 0.0
      %3510 = vmatprep.subr.mxu0 0.0
      %3511 = vmatpush1.msra.mxu0 0.0
      %3512 = vmatprep.subr.mxu0 0.0
      %3513 = vmatpush1.msra.mxu0 0.0
      %3514 = vmatprep.subr.mxu0 0.0
      %3515 = vmatpush1.msra.mxu0 0.0
      %3516 = vmatprep.subr.mxu0 0.0
      %3517 = vmatpush1.msra.mxu0 0.0
      %3518 = vmatprep.subr.mxu0 0.0
      %3519 = vmatpush1.msra.mxu0 0.0
      %3520 = vmatprep.subr.mxu0 0.0
      %3521 = vmatpush1.msra.mxu0 0.0
      %3522 = vmatprep.subr.mxu0 0.0
      %3523 = vmatpush1.msra.mxu0 0.0
      %3524 = vmatprep.subr.mxu0 0.0
      %3525 = vmatpush1.msra.mxu0 0.0
      %3526 = vmatprep.subr.mxu0 0.0
      %3527 = vmatpush1.msra.mxu0 0.0
      %3528 = vmatprep.subr.mxu0 0.0
      %3529 = vmatpush1.msra.mxu0 0.0
      %3530 = vmatprep.subr.mxu0 0.0
      %3531 = vmatpush1.msra.mxu0 0.0
      %3532 = vmatprep.subr.mxu0 %v3495
      %3533 = vmatpush1.msra.mxu0 %v3494
      %3534 = vmatprep.subr.mxu0 %v3493
      %3535 = vmatpush1.msra.mxu0 %v3492
      %3536 = vmatprep.subr.mxu0 %v3491
      %3537 = vmatpush1.msra.mxu0 %v3490
      %3538 = vmatprep.subr.mxu0 %v3489
      %3539 = vmatpush1.msra.mxu0 %v3488
      %3540 = vmatprep.subr.mxu0 0.0
      %3541 = vmatpush2.msra.mxu0 0.0
      %3542 = vmatprep.subr.mxu0 0.0
      %3543 = vmatpush2.msra.mxu0 0.0
      %3544 = vmatprep.subr.mxu0 0.0
      %3545 = vmatpush2.msra.mxu0 0.0
      %3546 = vmatprep.subr.mxu0 0.0
      %3547 = vmatpush2.msra.mxu0 0.0
      %3548 = vmatprep.subr.mxu0 0.0
      %3549 = vmatpush2.msra.mxu0 0.0
      %3550 = vmatprep.subr.mxu0 0.0
      %3551 = vmatpush2.msra.mxu0 0.0
      %3552 = vmatprep.subr.mxu0 0.0
      %3553 = vmatpush2.msra.mxu0 0.0
      %3554 = vmatprep.subr.mxu0 0.0
      %3555 = vmatpush2.msra.mxu0 0.0
      %3556 = vmatprep.subr.mxu0 0.0
      %3557 = vmatpush2.msra.mxu0 0.0
      %3558 = vmatprep.subr.mxu0 0.0
      %3559 = vmatpush2.msra.mxu0 0.0
      %3560 = vmatprep.subr.mxu0 0.0
      %3561 = vmatpush2.msra.mxu0 0.0
      %3562 = vmatprep.subr.mxu0 0.0
      %3563 = vmatpush2.msra.mxu0 0.0
      %3564 = vmatprep.subr.mxu0 0.0
      %3565 = vmatpush2.msra.mxu0 0.0
      %3566 = vmatprep.subr.mxu0 0.0
      %3567 = vmatpush2.msra.mxu0 0.0
      %3568 = vmatprep.subr.mxu0 0.0
      %3569 = vmatpush2.msra.mxu0 0.0
      %3570 = vmatprep.subr.mxu0 0.0
      %3571 = vmatpush2.msra.mxu0 0.0
      %3572 = vmatprep.mubr.f32.mxu0 0.0
      %3573 = vmatmul.mubr.f32.gmra.mxu0 %v3497
      %v3574 = vpop.f32.mrf.mxu0
      %v3575 = vadd.f32 0.0, %v3574
      %v3576 = vpop.f32.mrf.mxu0
      %v3577 = vadd.f32 0.0, %v3576
      %3578 = vmatprep.mubr.f32.mxu0 0.0
      %3579 = vmatmul.mubr.f32.gmra.mxu0 %v3500
      %v3580 = vpop.f32.mrf.mxu0
      %v3581 = vadd.f32 0.0, %v3580
      %v3582 = vpop.f32.mrf.mxu0
      %v3583 = vadd.f32 0.0, %v3582
      %3584 = vmatprep.mubr.f32.mxu0 0.0
      %3585 = vmatmul.mubr.f32.gmra.mxu0 %v3503
      %v3586 = vpop.f32.mrf.mxu0
      %v3587 = vadd.f32 0.0, %v3586
      %v3588 = vpop.f32.mrf.mxu0
      %v3589 = vadd.f32 0.0, %v3588
      %3590 = vmatprep.mubr.f32.mxu0 0.0
      %3591 = vmatmul.mubr.f32.gmra.mxu0 %v3506
      %v3592 = vpop.f32.mrf.mxu0
      %v3593 = vadd.f32 0.0, %v3592
      %v3594 = vpop.f32.mrf.mxu0
      %v3595 = vadd.f32 0.0, %v3594
      %3596 = vdwg.mxu0
      %v3597 = vmul.f32 %v3575, 0.70710677
      %v3598 = vmul.f32 %v3577, 0.70710677
      %v3599 = vmul.f32 %v3581, 0.70710677
      %v3600 = vmul.f32 %v3583, 0.70710677
      %v3601 = vmul.f32 %v3587, 0.70710677
      %v3602 = vmul.f32 %v3589, 0.70710677
      %v3603 = vmul.f32 %v3593, 0.70710677
      %v3604 = vmul.f32 %v3595, 0.70710677
      %vm3605 = vcmp.ge.f32.partialorder %v3597, 0.0
      %vm3606 = vcmp.ge.f32.partialorder %v3598, 0.0
      %vm3607 = vcmp.ge.f32.partialorder %v3599, 0.0
      %vm3608 = vcmp.ge.f32.partialorder %v3600, 0.0
      %vm3609 = vcmp.ge.f32.partialorder %v3601, 0.0
      %vm3610 = vcmp.ge.f32.partialorder %v3602, 0.0
      %vm3611 = vcmp.ge.f32.partialorder %v3603, 0.0
      %vm3612 = vcmp.ge.f32.partialorder %v3604, 0.0
      %v3613 = vsel %vm3605, 1.0, -1.0
      %v3614 = vsel %vm3606, 1.0, -1.0
      %v3615 = vsel %vm3607, 1.0, -1.0
      %v3616 = vsel %vm3608, 1.0, -1.0
      %v3617 = vsel %vm3609, 1.0, -1.0
      %v3618 = vsel %vm3610, 1.0, -1.0
      %v3619 = vsel %vm3611, 1.0, -1.0
      %v3620 = vsel %vm3612, 1.0, -1.0
      %v3621 = vand.u32 2147483647, %v3597
      %v3622 = vand.u32 2147483647, %v3598
      %v3623 = vand.u32 2147483647, %v3599
      %v3624 = vand.u32 2147483647, %v3600
      %v3625 = vand.u32 2147483647, %v3601
      %v3626 = vand.u32 2147483647, %v3602
      %v3627 = vand.u32 2147483647, %v3603
      %v3628 = vand.u32 2147483647, %v3604
      %v3629 = vmul.f32 %v3621, 0.3275911
      %v3630 = vmul.f32 %v3622, 0.3275911
      %v3631 = vmul.f32 %v3623, 0.3275911
      %v3632 = vmul.f32 %v3624, 0.3275911
      %v3633 = vmul.f32 %v3625, 0.3275911
      %v3634 = vmul.f32 %v3626, 0.3275911
      %v3635 = vmul.f32 %v3627, 0.3275911
      %v3636 = vmul.f32 %v3628, 0.3275911
      %v3637 = vadd.f32 %v3629, 1.0
      %v3638 = vadd.f32 %v3630, 1.0
      %v3639 = vadd.f32 %v3631, 1.0
      %v3640 = vadd.f32 %v3632, 1.0
      %v3641 = vadd.f32 %v3633, 1.0
      %v3642 = vadd.f32 %v3634, 1.0
      %v3643 = vadd.f32 %v3635, 1.0
      %v3644 = vadd.f32 %v3636, 1.0
      %v3645 = vrcp.pop %v3637
      %v3646 = vrcp.pop %v3638
      %v3647 = vrcp.pop %v3639
      %v3648 = vrcp.pop %v3640
      %v3649 = vrcp.pop %v3641
      %v3650 = vrcp.pop %v3642
      %v3651 = vrcp.pop %v3643
      %v3652 = vrcp.pop %v3644
      %v3653 = vmul.f32 %v3645, 1.0614054
      %v3654 = vmul.f32 %v3646, 1.0614054
      %v3655 = vmul.f32 %v3647, 1.0614054
      %v3656 = vmul.f32 %v3648, 1.0614054
      %v3657 = vmul.f32 %v3649, 1.0614054
      %v3658 = vmul.f32 %v3650, 1.0614054
      %v3659 = vmul.f32 %v3651, 1.0614054
      %v3660 = vmul.f32 %v3652, 1.0614054
      %v3661 = vadd.f32 %v3653, -1.4531521
      %v3662 = vadd.f32 %v3654, -1.4531521
      %v3663 = vadd.f32 %v3655, -1.4531521
      %v3664 = vadd.f32 %v3656, -1.4531521
      %v3665 = vadd.f32 %v3657, -1.4531521
      %v3666 = vadd.f32 %v3658, -1.4531521
      %v3667 = vadd.f32 %v3659, -1.4531521
      %v3668 = vadd.f32 %v3660, -1.4531521
      %v3669 = vmul.f32 %v3661, %v3645
      %v3670 = vmul.f32 %v3662, %v3646
      %v3671 = vmul.f32 %v3663, %v3647
      %v3672 = vmul.f32 %v3664, %v3648
      %v3673 = vmul.f32 %v3665, %v3649
      %v3674 = vmul.f32 %v3666, %v3650
      %v3675 = vmul.f32 %v3667, %v3651
      %v3676 = vmul.f32 %v3668, %v3652
      %v3677 = vadd.f32 %v3669, 1.4214138
      %v3678 = vadd.f32 %v3670, 1.4214138
      %v3679 = vadd.f32 %v3671, 1.4214138
      %v3680 = vadd.f32 %v3672, 1.4214138
      %v3681 = vadd.f32 %v3673, 1.4214138
      %v3682 = vadd.f32 %v3674, 1.4214138
      %v3683 = vadd.f32 %v3675, 1.4214138
      %v3684 = vadd.f32 %v3676, 1.4214138
      %v3685 = vmul.f32 %v3677, %v3645
      %v3686 = vmul.f32 %v3678, %v3646
      %v3687 = vmul.f32 %v3679, %v3647
      %v3688 = vmul.f32 %v3680, %v3648
      %v3689 = vmul.f32 %v3681, %v3649
      %v3690 = vmul.f32 %v3682, %v3650
      %v3691 = vmul.f32 %v3683, %v3651
      %v3692 = vmul.f32 %v3684, %v3652
      %v3693 = vadd.f32 %v3685, -0.28449672
      %v3694 = vadd.f32 %v3686, -0.28449672
      %v3695 = vadd.f32 %v3687, -0.28449672
      %v3696 = vadd.f32 %v3688, -0.28449672
      %v3697 = vadd.f32 %v3689, -0.28449672
      %v3698 = vadd.f32 %v3690, -0.28449672
      %v3699 = vadd.f32 %v3691, -0.28449672
      %v3700 = vadd.f32 %v3692, -0.28449672
      %v3701 = vmul.f32 %v3693, %v3645
      %v3702 = vmul.f32 %v3694, %v3646
      %v3703 = vmul.f32 %v3695, %v3647
      %v3704 = vmul.f32 %v3696, %v3648
      %v3705 = vmul.f32 %v3697, %v3649
      %v3706 = vmul.f32 %v3698, %v3650
      %v3707 = vmul.f32 %v3699, %v3651
      %v3708 = vmul.f32 %v3700, %v3652
      %v3709 = vadd.f32 %v3701, 0.2548296
      %v3710 = vadd.f32 %v3702, 0.2548296
      %v3711 = vadd.f32 %v3703, 0.2548296
      %v3712 = vadd.f32 %v3704, 0.2548296
      %v3713 = vadd.f32 %v3705, 0.2548296
      %v3714 = vadd.f32 %v3706, 0.2548296
      %v3715 = vadd.f32 %v3707, 0.2548296
      %v3716 = vadd.f32 %v3708, 0.2548296
      %v3717 = vmul.f32 %v3709, %v3645
      %v3718 = vmul.f32 %v3710, %v3646
      %v3719 = vmul.f32 %v3711, %v3647
      %v3720 = vmul.f32 %v3712, %v3648
      %v3721 = vmul.f32 %v3713, %v3649
      %v3722 = vmul.f32 %v3714, %v3650
      %v3723 = vmul.f32 %v3715, %v3651
      %v3724 = vmul.f32 %v3716, %v3652
      %v3725 = vsub.f32 0.0, %v3621
      %v3726 = vsub.f32 0.0, %v3622
      %v3727 = vsub.f32 0.0, %v3623
      %v3728 = vsub.f32 0.0, %v3624
      %v3729 = vsub.f32 0.0, %v3625
      %v3730 = vsub.f32 0.0, %v3626
      %v3731 = vsub.f32 0.0, %v3627
      %v3732 = vsub.f32 0.0, %v3628
      %v3733 = vmul.f32 %v3725, %v3621
      %v3734 = vmul.f32 %v3726, %v3622
      %v3735 = vmul.f32 %v3727, %v3623
      %v3736 = vmul.f32 %v3728, %v3624
      %v3737 = vmul.f32 %v3729, %v3625
      %v3738 = vmul.f32 %v3730, %v3626
      %v3739 = vmul.f32 %v3731, %v3627
      %v3740 = vmul.f32 %v3732, %v3628
      %v3741 = vmul.f32 %v3733, 1.442695
      %v3742 = vpow.pop %v3741
      %v3743 = vmul.f32 %v3734, 1.442695
      %v3744 = vpow.pop %v3743
      %v3745 = vmul.f32 %v3735, 1.442695
      %v3746 = vpow.pop %v3745
      %v3747 = vmul.f32 %v3736, 1.442695
      %v3748 = vpow.pop %v3747
      %v3749 = vmul.f32 %v3737, 1.442695
      %v3750 = vpow.pop %v3749
      %v3751 = vmul.f32 %v3738, 1.442695
      %v3752 = vpow.pop %v3751
      %v3753 = vmul.f32 %v3739, 1.442695
      %v3754 = vpow.pop %v3753
      %v3755 = vmul.f32 %v3740, 1.442695
      %v3756 = vpow.pop %v3755
      %v3757 = vmul.f32 %v3717, %v3742
      %v3758 = vmul.f32 %v3718, %v3744
      %v3759 = vmul.f32 %v3719, %v3746
      %v3760 = vmul.f32 %v3720, %v3748
      %v3761 = vmul.f32 %v3721, %v3750
      %v3762 = vmul.f32 %v3722, %v3752
      %v3763 = vmul.f32 %v3723, %v3754
      %v3764 = vmul.f32 %v3724, %v3756
      %v3765 = vsub.f32 1.0, %v3757
      %v3766 = vsub.f32 1.0, %v3758
      %v3767 = vsub.f32 1.0, %v3759
      %v3768 = vsub.f32 1.0, %v3760
      %v3769 = vsub.f32 1.0, %v3761
      %v3770 = vsub.f32 1.0, %v3762
      %v3771 = vsub.f32 1.0, %v3763
      %v3772 = vsub.f32 1.0, %v3764
      %v3773 = vmul.f32 %v3613, %v3765
      %v3774 = vmul.f32 %v3614, %v3766
      %v3775 = vmul.f32 %v3615, %v3767
      %v3776 = vmul.f32 %v3616, %v3768
      %v3777 = vmul.f32 %v3617, %v3769
      %v3778 = vmul.f32 %v3618, %v3770
      %v3779 = vmul.f32 %v3619, %v3771
      %v3780 = vmul.f32 %v3620, %v3772
      %v3781 = vmul.f32 %v3575, 0.5
      %v3782 = vmul.f32 %v3577, 0.5
      %v3783 = vmul.f32 %v3581, 0.5
      %v3784 = vmul.f32 %v3583, 0.5
      %v3785 = vmul.f32 %v3587, 0.5
      %v3786 = vmul.f32 %v3589, 0.5
      %v3787 = vmul.f32 %v3593, 0.5
      %v3788 = vmul.f32 %v3595, 0.5
      %v3789 = vadd.f32 %v3773, 1.0
      %v3790 = vadd.f32 %v3774, 1.0
      %v3791 = vadd.f32 %v3775, 1.0
      %v3792 = vadd.f32 %v3776, 1.0
      %v3793 = vadd.f32 %v3777, 1.0
      %v3794 = vadd.f32 %v3778, 1.0
      %v3795 = vadd.f32 %v3779, 1.0
      %v3796 = vadd.f32 %v3780, 1.0
      %v3797 = vmul.f32 %v3781, %v3789
      %v3798 = vmul.f32 %v3782, %v3790
      %v3799 = vmul.f32 %v3783, %v3791
      %v3800 = vmul.f32 %v3784, %v3792
      %v3801 = vmul.f32 %v3785, %v3793
      %v3802 = vmul.f32 %v3786, %v3794
      %v3803 = vmul.f32 %v3787, %v3795
      %v3804 = vmul.f32 %v3788, %v3796
      %v3806 = vsel %vm1645, %v1192, 0
      %v3809 = vsel %vm1645, %v1193, 0
      %v3812 = vsel %vm1645, %v1194, 0
      %v3815 = vsel %vm1645, %v1195, 0
      %3817 = vmatprep.subr.mxu0 0.0
      %3818 = vmatpush1.msra.mxu0 0.0
      %3819 = vmatprep.subr.mxu0 0.0
      %3820 = vmatpush1.msra.mxu0 0.0
      %3821 = vmatprep.subr.mxu0 0.0
      %3822 = vmatpush1.msra.mxu0 0.0
      %3823 = vmatprep.subr.mxu0 0.0
      %3824 = vmatpush1.msra.mxu0 0.0
      %3825 = vmatprep.subr.mxu0 0.0
      %3826 = vmatpush1.msra.mxu0 0.0
      %3827 = vmatprep.subr.mxu0 0.0
      %3828 = vmatpush1.msra.mxu0 0.0
      %3829 = vmatprep.subr.mxu0 0.0
      %3830 = vmatpush1.msra.mxu0 0.0
      %3831 = vmatprep.subr.mxu0 0.0
      %3832 = vmatpush1.msra.mxu0 0.0
      %3833 = vmatprep.subr.mxu0 0.0
      %3834 = vmatpush1.msra.mxu0 0.0
      %3835 = vmatprep.subr.mxu0 0.0
      %3836 = vmatpush1.msra.mxu0 0.0
      %3837 = vmatprep.subr.mxu0 0.0
      %3838 = vmatpush1.msra.mxu0 0.0
      %3839 = vmatprep.subr.mxu0 0.0
      %3840 = vmatpush1.msra.mxu0 0.0
      %3841 = vmatprep.subr.mxu0 %v3804
      %3842 = vmatpush1.msra.mxu0 %v3803
      %3843 = vmatprep.subr.mxu0 %v3802
      %3844 = vmatpush1.msra.mxu0 %v3801
      %3845 = vmatprep.subr.mxu0 %v3800
      %3846 = vmatpush1.msra.mxu0 %v3799
      %3847 = vmatprep.subr.mxu0 %v3798
      %3848 = vmatpush1.msra.mxu0 %v3797
      %3849 = vmatprep.subr.mxu0 0.0
      %3850 = vmatpush2.msra.mxu0 0.0
      %3851 = vmatprep.subr.mxu0 0.0
      %3852 = vmatpush2.msra.mxu0 0.0
      %3853 = vmatprep.subr.mxu0 0.0
      %3854 = vmatpush2.msra.mxu0 0.0
      %3855 = vmatprep.subr.mxu0 0.0
      %3856 = vmatpush2.msra.mxu0 0.0
      %3857 = vmatprep.subr.mxu0 0.0
      %3858 = vmatpush2.msra.mxu0 0.0
      %3859 = vmatprep.subr.mxu0 0.0
      %3860 = vmatpush2.msra.mxu0 0.0
      %3861 = vmatprep.subr.mxu0 0.0
      %3862 = vmatpush2.msra.mxu0 0.0
      %3863 = vmatprep.subr.mxu0 0.0
      %3864 = vmatpush2.msra.mxu0 0.0
      %3865 = vmatprep.subr.mxu0 0.0
      %3866 = vmatpush2.msra.mxu0 0.0
      %3867 = vmatprep.subr.mxu0 0.0
      %3868 = vmatpush2.msra.mxu0 0.0
      %3869 = vmatprep.subr.mxu0 0.0
      %3870 = vmatpush2.msra.mxu0 0.0
      %3871 = vmatprep.subr.mxu0 0.0
      %3872 = vmatpush2.msra.mxu0 0.0
      %3873 = vmatprep.subr.mxu0 0.0
      %3874 = vmatpush2.msra.mxu0 0.0
      %3875 = vmatprep.subr.mxu0 0.0
      %3876 = vmatpush2.msra.mxu0 0.0
      %3877 = vmatprep.subr.mxu0 0.0
      %3878 = vmatpush2.msra.mxu0 0.0
      %3879 = vmatprep.subr.mxu0 0.0
      %3880 = vmatpush2.msra.mxu0 0.0
      %3881 = vmatprep.mubr.f32.mxu0 0.0
      %3882 = vmatmul.mubr.f32.gmra.mxu0 %v3806
      %v3883 = vpop.f32.mrf.mxu0
      %v3884 = vadd.f32 0.0, %v3883
      %v3885 = vpop.f32.mrf.mxu0
      %v3886 = vadd.f32 0.0, %v3885
      %3887 = vmatprep.mubr.f32.mxu0 0.0
      %3888 = vmatmul.mubr.f32.gmra.mxu0 %v3809
      %v3889 = vpop.f32.mrf.mxu0
      %v3890 = vadd.f32 0.0, %v3889
      %v3891 = vpop.f32.mrf.mxu0
      %v3892 = vadd.f32 0.0, %v3891
      %3893 = vmatprep.mubr.f32.mxu0 0.0
      %3894 = vmatmul.mubr.f32.gmra.mxu0 %v3812
      %v3895 = vpop.f32.mrf.mxu0
      %v3896 = vadd.f32 0.0, %v3895
      %v3897 = vpop.f32.mrf.mxu0
      %v3898 = vadd.f32 0.0, %v3897
      %3899 = vmatprep.mubr.f32.mxu0 0.0
      %3900 = vmatmul.mubr.f32.gmra.mxu0 %v3815
      %v3901 = vpop.f32.mrf.mxu0
      %v3902 = vadd.f32 0.0, %v3901
      %v3903 = vpop.f32.mrf.mxu0
      %v3904 = vadd.f32 0.0, %v3903
      %3905 = vdwg.mxu0
      %v3906 = vadd.f32 %v3362, %v3884
      %v3907 = vadd.f32 %v3363, %v3886
      %v3908 = vadd.f32 %v3364, %v3890
      %v3909 = vadd.f32 %v3365, %v3892
      %v3910 = vadd.f32 %v3366, %v3896
      %v3911 = vadd.f32 %v3367, %v3898
      %v3912 = vadd.f32 %v3368, %v3902
      %v3913 = vadd.f32 %v3369, %v3904
      %v3914 = vld [vmem:[%s31] sm:$0xff]
      %v3915 = vld [vmem:[%s31 + $0x8] sm:$0xff]
      %v3916 = vld [vmem:[%s31 + $0x10] sm:$0xff]
      %v3917 = vld [vmem:[%s31 + $0x18] sm:$0xff]
      %v3918 = vld [vmem:[%s33] sm:$0xff]
      %v3919 = vld [vmem:[%s33 + $0x8] sm:$0xff]
      %v3920 = vld [vmem:[%s33 + $0x10] sm:$0xff]
      %v3921 = vld [vmem:[%s33 + $0x18] sm:$0xff]
      %v3922 = vld [vmem:[%s35] sm:$0xff]
      %v3923 = vld [vmem:[%s35 + $0x8] sm:$0xff]
      %v3924 = vld [vmem:[%s35 + $0x10] sm:$0xff]
      %v3925 = vld [vmem:[%s35 + $0x18] sm:$0xff]
      %v3926 = vld [vmem:[%s35 + $0x20] sm:$0xff]
      %v3927 = vld [vmem:[%s35 + $0x28] sm:$0xff]
      %v3928 = vld [vmem:[%s35 + $0x30] sm:$0xff]
      %v3929 = vld [vmem:[%s35 + $0x38] sm:$0xff]
      %v3930 = vld [vmem:[%s35 + $0x40] sm:$0xff]
      %v3931 = vld [vmem:[%s35 + $0x48] sm:$0xff]
      %v3932 = vld [vmem:[%s35 + $0x50] sm:$0xff]
      %v3933 = vld [vmem:[%s35 + $0x58] sm:$0xff]
      %v3934 = vld [vmem:[%s37] sm:$0xff]
      %v3935 = vld [vmem:[%s37 + $0x8] sm:$0xff]
      %v3936 = vld [vmem:[%s37 + $0x10] sm:$0xff]
      %v3937 = vld [vmem:[%s37 + $0x18] sm:$0xff]
      %v3938 = vld [vmem:[%s39] sm:$0xff]
      %v3939 = vld [vmem:[%s39 + $0x8] sm:$0xff]
      %v3940 = vld [vmem:[%s39 + $0x10] sm:$0xff]
      %v3941 = vld [vmem:[%s39 + $0x18] sm:$0xff]
      %v3942 = vld [vmem:[%s39 + $0x20] sm:$0xff]
      %v3943 = vld [vmem:[%s39 + $0x28] sm:$0xff]
      %v3944 = vld [vmem:[%s39 + $0x30] sm:$0xff]
      %v3945 = vld [vmem:[%s39 + $0x38] sm:$0xff]
      %v3946 = vld [vmem:[%s39 + $0x40] sm:$0xff]
      %v3947 = vld [vmem:[%s39 + $0x48] sm:$0xff]
      %v3948 = vld [vmem:[%s39 + $0x50] sm:$0xff]
      %v3949 = vld [vmem:[%s39 + $0x58] sm:$0xff]
      %v3950 = vld [vmem:[%s41] sm:$0xff]
      %v3951 = vld [vmem:[%s41 + $0x8] sm:$0xff]
      %v3952 = vld [vmem:[%s41 + $0x10] sm:$0xff]
      %v3953 = vld [vmem:[%s41 + $0x18] sm:$0xff]
      %v3954 = vld [vmem:[%s43] sm:$0xff]
      %v3955 = vld [vmem:[%s43 + $0x8] sm:$0xff]
      %v3956 = vld [vmem:[%s43 + $0x10] sm:$0xff]
      %v3957 = vld [vmem:[%s43 + $0x18] sm:$0xff]
      %v3958 = vld [vmem:[%s43 + $0x20] sm:$0xff]
      %v3959 = vld [vmem:[%s43 + $0x28] sm:$0xff]
      %v3960 = vld [vmem:[%s43 + $0x30] sm:$0xff]
      %v3961 = vld [vmem:[%s43 + $0x38] sm:$0xff]
      %v3962 = vld [vmem:[%s43 + $0x40] sm:$0xff]
      %v3963 = vld [vmem:[%s43 + $0x48] sm:$0xff]
      %v3964 = vld [vmem:[%s43 + $0x50] sm:$0xff]
      %v3965 = vld [vmem:[%s43 + $0x58] sm:$0xff]
      %v3966 = vld [vmem:[%s45] sm:$0xff]
      %v3967 = vld [vmem:[%s45 + $0x8] sm:$0xff]
      %v3968 = vld [vmem:[%s45 + $0x10] sm:$0xff]
      %v3969 = vld [vmem:[%s45 + $0x18] sm:$0xff]
      %v3970 = vld [vmem:[%s47] sm:$0xff]
      %v3971 = vld [vmem:[%s47 + $0x8] sm:$0xff]
      %v3972 = vld [vmem:[%s47 + $0x10] sm:$0xff]
      %v3973 = vld [vmem:[%s47 + $0x18] sm:$0xff]
      %v3974 = vld [vmem:[%s49] sm:$0xff]
      %v3975 = vld [vmem:[%s49 + $0x8] sm:$0xff]
      %v3976 = vld [vmem:[%s49 + $0x10] sm:$0xff]
      %v3977 = vld [vmem:[%s49 + $0x18] sm:$0xff]
      %v3978 = vld [vmem:[%s51] sm:$0xff]
      %v3979 = vld [vmem:[%s51 + $0x8] sm:$0xff]
      %v3980 = vld [vmem:[%s51 + $0x10] sm:$0xff]
      %v3981 = vld [vmem:[%s51 + $0x18] sm:$0xff]
      %v3982 = vld [vmem:[%s53] sm:$0xff]
      %v3983 = vld [vmem:[%s53 + $0x8] sm:$0xff]
      %v3984 = vld [vmem:[%s53 + $0x10] sm:$0xff]
      %v3985 = vld [vmem:[%s53 + $0x18] sm:$0xff]
      %v3986 = vadd.f32 %v3906, %v3907
      %3987 = vadd.xlane.f32.xlu0 %v3986
      %v3988 = vpop.xlane.xlu0 %3987
      %v3989 = vadd.f32 %v3908, %v3909
      %3990 = vadd.xlane.f32.xlu0 %v3989
      %v3991 = vpop.xlane.xlu0 %3990
      %v3992 = vadd.f32 %v3910, %v3911
      %3993 = vadd.xlane.f32.xlu0 %v3992
      %v3994 = vpop.xlane.xlu0 %3993
      %v3995 = vadd.f32 %v3912, %v3913
      %3996 = vadd.xlane.f32.xlu0 %v3995
      %v3997 = vpop.xlane.xlu0 %3996
      %v3998 = vadd.f32 %v3988, %v3991
      %v3999 = vadd.f32 %v3998, %v3994
      %v4000 = vadd.f32 %v3999, %v3997
      %v4001 = vrot.slane %v4000, 4
      %v4002 = vadd.f32 %v4000, %v4001
      %v4003 = vrot.slane %v4002, 2
      %v4004 = vadd.f32 %v4002, %v4003
      %v4005 = vrot.slane %v4004, 1
      %v4006 = vadd.f32 %v4004, %v4005
      %v4007 = vmul.f32 %v4006, %v1217
      %v4008 = vsub.f32 %v3906, %v4007
      %v4009 = vsub.f32 %v3907, %v4007
      %v4010 = vsub.f32 %v3908, %v4007
      %v4011 = vsub.f32 %v3909, %v4007
      %v4012 = vsub.f32 %v3910, %v4007
      %v4013 = vsub.f32 %v3911, %v4007
      %v4014 = vsub.f32 %v3912, %v4007
      %v4015 = vsub.f32 %v3913, %v4007
      %v4016 = vmul.f32 %v4008, %v4008
      %v4017 = vmul.f32 %v4009, %v4009
      %v4018 = vmul.f32 %v4010, %v4010
      %v4019 = vmul.f32 %v4011, %v4011
      %v4020 = vmul.f32 %v4012, %v4012
      %v4021 = vmul.f32 %v4013, %v4013
      %v4022 = vmul.f32 %v4014, %v4014
      %v4023 = vmul.f32 %v4015, %v4015
      %v4024 = vadd.f32 %v4016, %v4017
      %4025 = vadd.xlane.f32.xlu0 %v4024
      %v4026 = vpop.xlane.xlu0 %4025
      %v4027 = vadd.f32 %v4018, %v4019
      %4028 = vadd.xlane.f32.xlu0 %v4027
      %v4029 = vpop.xlane.xlu0 %4028
      %v4030 = vadd.f32 %v4020, %v4021
      %4031 = vadd.xlane.f32.xlu0 %v4030
      %v4032 = vpop.xlane.xlu0 %4031
      %v4033 = vadd.f32 %v4022, %v4023
      %4034 = vadd.xlane.f32.xlu0 %v4033
      %v4035 = vpop.xlane.xlu0 %4034
      %v4036 = vadd.f32 %v4026, %v4029
      %v4037 = vadd.f32 %v4036, %v4032
      %v4038 = vadd.f32 %v4037, %v4035
      %v4039 = vrot.slane %v4038, 4
      %v4040 = vadd.f32 %v4038, %v4039
      %v4041 = vrot.slane %v4040, 2
      %v4042 = vadd.f32 %v4040, %v4041
      %v4043 = vrot.slane %v4042, 1
      %v4044 = vadd.f32 %v4042, %v4043
      %v4045 = vmul.f32 %v4044, %v1217
      %v4046 = vadd.f32 %v4045, 1e-05
      %v4047 = vrsqrt.pop %v4046
      %v4048 = vmul.f32 %v4008, %v4047
      %v4049 = vmul.f32 %v4009, %v4047
      %v4050 = vmul.f32 %v4010, %v4047
      %v4051 = vmul.f32 %v4011, %v4047
      %v4052 = vmul.f32 %v4012, %v4047
      %v4053 = vmul.f32 %v4013, %v4047
      %v4054 = vmul.f32 %v4014, %v4047
      %v4055 = vmul.f32 %v4015, %v4047
      %4057 = vset.pattern.permute.xlu0 0
      %4058 = vperm.xlu0 %4057, %v3914
      %v4059 = vpop.permute.xlu0 %4058
      %4062 = vset.pattern.permute.xlu0 0
      %4063 = vperm.xlu0 %4062, %v3915
      %v4064 = vpop.permute.xlu0 %4063
      %4067 = vset.pattern.permute.xlu0 0
      %4068 = vperm.xlu0 %4067, %v3916
      %v4069 = vpop.permute.xlu0 %4068
      %4072 = vset.pattern.permute.xlu0 0
      %4073 = vperm.xlu0 %4072, %v3917
      %v4074 = vpop.permute.xlu0 %4073
      %v4076 = vmul.f32 %v4048, %v4059
      %v4077 = vmul.f32 %v4049, %v4059
      %v4078 = vmul.f32 %v4050, %v4064
      %v4079 = vmul.f32 %v4051, %v4064
      %v4080 = vmul.f32 %v4052, %v4069
      %v4081 = vmul.f32 %v4053, %v4069
      %v4082 = vmul.f32 %v4054, %v4074
      %v4083 = vmul.f32 %v4055, %v4074
      %4085 = vset.pattern.permute.xlu0 0
      %4086 = vperm.xlu0 %4085, %v3918
      %v4087 = vpop.permute.xlu0 %4086
      %4090 = vset.pattern.permute.xlu0 0
      %4091 = vperm.xlu0 %4090, %v3919
      %v4092 = vpop.permute.xlu0 %4091
      %4095 = vset.pattern.permute.xlu0 0
      %4096 = vperm.xlu0 %4095, %v3920
      %v4097 = vpop.permute.xlu0 %4096
      %4100 = vset.pattern.permute.xlu0 0
      %4101 = vperm.xlu0 %4100, %v3921
      %v4102 = vpop.permute.xlu0 %4101
      %v4104 = vadd.f32 %v4076, %v4087
      %v4105 = vadd.f32 %v4077, %v4087
      %v4106 = vadd.f32 %v4078, %v4092
      %v4107 = vadd.f32 %v4079, %v4092
      %v4108 = vadd.f32 %v4080, %v4097
      %v4109 = vadd.f32 %v4081, %v4097
      %v4110 = vadd.f32 %v4082, %v4102
      %v4111 = vadd.f32 %v4083, %v4102
      %4112 = vrot.lane.b32.xlu0 %v4104, 17
      %v4113 = vpop.permute.xlu0 %4112
      %4114 = vrot.lane.b32.xlu0 %v4106, 17
      %v4115 = vpop.permute.xlu0 %4114
      %4116 = vrot.lane.b32.xlu0 %v4108, 17
      %v4117 = vpop.permute.xlu0 %4116
      %4118 = vrot.lane.b32.xlu0 %v4110, 17
      %v4119 = vpop.permute.xlu0 %4118
      %4120 = vrot.lane.b32.xlu0 %v4105, 17
      %v4121 = vpop.permute.xlu0 %4120
      %4122 = vrot.lane.b32.xlu0 %v4107, 17
      %v4123 = vpop.permute.xlu0 %4122
      %4124 = vrot.lane.b32.xlu0 %v4109, 17
      %v4125 = vpop.permute.xlu0 %4124
      %4126 = vrot.lane.b32.xlu0 %v4111, 17
      %v4127 = vpop.permute.xlu0 %4126
      %v4128 = vsel %vm1339, %v4113, %v4121
      %v4129 = vsel %vm1339, %v4115, %v4123
      %v4130 = vsel %vm1339, %v4117, %v4125
      %v4131 = vsel %vm1339, %v4119, %v4127
      %v4132 = vsel %vm1339, %v4121, %v4113
      %v4133 = vsel %vm1339, %v4123, %v4115
      %v4134 = vsel %vm1339, %v4125, %v4117
      %v4135 = vsel %vm1339, %v4127, %v4119
      %4136 = vrot.lane.b32.xlu0 %v4104, 1
      %v4137 = vpop.permute.xlu0 %4136
      %4138 = vrot.lane.b32.xlu0 %v4106, 1
      %v4139 = vpop.permute.xlu0 %4138
      %4140 = vrot.lane.b32.xlu0 %v4108, 1
      %v4141 = vpop.permute.xlu0 %4140
      %4142 = vrot.lane.b32.xlu0 %v4110, 1
      %v4143 = vpop.permute.xlu0 %4142
      %4144 = vrot.lane.b32.xlu0 %v4105, 1
      %v4145 = vpop.permute.xlu0 %4144
      %4146 = vrot.lane.b32.xlu0 %v4107, 1
      %v4147 = vpop.permute.xlu0 %4146
      %4148 = vrot.lane.b32.xlu0 %v4109, 1
      %v4149 = vpop.permute.xlu0 %4148
      %4150 = vrot.lane.b32.xlu0 %v4111, 1
      %v4151 = vpop.permute.xlu0 %4150
      %v4152 = vsel %vm1364, %v4137, %v4145
      %v4153 = vsel %vm1364, %v4139, %v4147
      %v4154 = vsel %vm1364, %v4141, %v4149
      %v4155 = vsel %vm1364, %v4143, %v4151
      %v4156 = vsel %vm1364, %v4145, %v4137
      %v4157 = vsel %vm1364, %v4147, %v4139
      %v4158 = vsel %vm1364, %v4149, %v4141
      %v4159 = vsel %vm1364, %v4151, %v4143
      %v4160 = vsel %vm1373, %v4132, %v4156
      %v4161 = vsel %vm1374, %v4128, %v4152
      %v4162 = vsel %vm1373, %v4133, %v4157
      %v4163 = vsel %vm1374, %v4129, %v4153
      %v4164 = vsel %vm1373, %v4134, %v4158
      %v4165 = vsel %vm1374, %v4130, %v4154
      %v4166 = vsel %vm1373, %v4135, %v4159
      %v4167 = vsel %vm1374, %v4131, %v4155
      %4168 = vrot.lane.b32.xlu0 %v4104, 16
      %v4169 = vpop.permute.xlu0 %4168
      %4170 = vrot.lane.b32.xlu0 %v4106, 16
      %v4171 = vpop.permute.xlu0 %4170
      %4172 = vrot.lane.b32.xlu0 %v4108, 16
      %v4173 = vpop.permute.xlu0 %4172
      %4174 = vrot.lane.b32.xlu0 %v4110, 16
      %v4175 = vpop.permute.xlu0 %4174
      %4176 = vrot.lane.b32.xlu0 %v4105, 16
      %v4177 = vpop.permute.xlu0 %4176
      %4178 = vrot.lane.b32.xlu0 %v4107, 16
      %v4179 = vpop.permute.xlu0 %4178
      %4180 = vrot.lane.b32.xlu0 %v4109, 16
      %v4181 = vpop.permute.xlu0 %4180
      %4182 = vrot.lane.b32.xlu0 %v4111, 16
      %v4183 = vpop.permute.xlu0 %4182
      %v4184 = vsel %vm1399, %v4169, %v4177
      %v4185 = vsel %vm1399, %v4171, %v4179
      %v4186 = vsel %vm1399, %v4173, %v4181
      %v4187 = vsel %vm1399, %v4175, %v4183
      %v4188 = vsel %vm1399, %v4177, %v4169
      %v4189 = vsel %vm1399, %v4179, %v4171
      %v4190 = vsel %vm1399, %v4181, %v4173
      %v4191 = vsel %vm1399, %v4183, %v4175
      %4192 = vrot.lane.b32.xlu0 %v4104, 15
      %v4193 = vpop.permute.xlu0 %4192
      %4194 = vrot.lane.b32.xlu0 %v4106, 15
      %v4195 = vpop.permute.xlu0 %4194
      %4196 = vrot.lane.b32.xlu0 %v4108, 15
      %v4197 = vpop.permute.xlu0 %4196
      %4198 = vrot.lane.b32.xlu0 %v4110, 15
      %v4199 = vpop.permute.xlu0 %4198
      %4200 = vrot.lane.b32.xlu0 %v4105, 15
      %v4201 = vpop.permute.xlu0 %4200
      %4202 = vrot.lane.b32.xlu0 %v4107, 15
      %v4203 = vpop.permute.xlu0 %4202
      %4204 = vrot.lane.b32.xlu0 %v4109, 15
      %v4205 = vpop.permute.xlu0 %4204
      %4206 = vrot.lane.b32.xlu0 %v4111, 15
      %v4207 = vpop.permute.xlu0 %4206
      %v4208 = vsel %vm1424, %v4193, %v4201
      %v4209 = vsel %vm1424, %v4195, %v4203
      %v4210 = vsel %vm1424, %v4197, %v4205
      %v4211 = vsel %vm1424, %v4199, %v4207
      %v4212 = vsel %vm1424, %v4201, %v4193
      %v4213 = vsel %vm1424, %v4203, %v4195
      %v4214 = vsel %vm1424, %v4205, %v4197
      %v4215 = vsel %vm1424, %v4207, %v4199
      %4216 = vrot.lane.b32.xlu0 %v4104, 31
      %v4217 = vpop.permute.xlu0 %4216
      %4218 = vrot.lane.b32.xlu0 %v4106, 31
      %v4219 = vpop.permute.xlu0 %4218
      %4220 = vrot.lane.b32.xlu0 %v4108, 31
      %v4221 = vpop.permute.xlu0 %4220
      %4222 = vrot.lane.b32.xlu0 %v4110, 31
      %v4223 = vpop.permute.xlu0 %4222
      %4224 = vrot.lane.b32.xlu0 %v4105, 31
      %v4225 = vpop.permute.xlu0 %4224
      %4226 = vrot.lane.b32.xlu0 %v4107, 31
      %v4227 = vpop.permute.xlu0 %4226
      %4228 = vrot.lane.b32.xlu0 %v4109, 31
      %v4229 = vpop.permute.xlu0 %4228
      %4230 = vrot.lane.b32.xlu0 %v4111, 31
      %v4231 = vpop.permute.xlu0 %4230
      %v4232 = vsel %vm1449, %v4217, %v4225
      %v4233 = vsel %vm1449, %v4219, %v4227
      %v4234 = vsel %vm1449, %v4221, %v4229
      %v4235 = vsel %vm1449, %v4223, %v4231
      %v4236 = vsel %vm1449, %v4225, %v4217
      %v4237 = vsel %vm1449, %v4227, %v4219
      %v4238 = vsel %vm1449, %v4229, %v4221
      %v4239 = vsel %vm1449, %v4231, %v4223
      %v4240 = vsel %vm1458, %v4212, %v4236
      %v4241 = vsel %vm1459, %v4208, %v4232
      %v4242 = vsel %vm1458, %v4213, %v4237
      %v4243 = vsel %vm1459, %v4209, %v4233
      %v4244 = vsel %vm1458, %v4214, %v4238
      %v4245 = vsel %vm1459, %v4210, %v4234
      %v4246 = vsel %vm1458, %v4215, %v4239
      %v4247 = vsel %vm1459, %v4211, %v4235
      %4248 = vrot.lane.b32.xlu0 %v4104, 113
      %v4249 = vpop.permute.xlu0 %4248
      %4250 = vrot.lane.b32.xlu0 %v4106, 113
      %v4251 = vpop.permute.xlu0 %4250
      %4252 = vrot.lane.b32.xlu0 %v4108, 113
      %v4253 = vpop.permute.xlu0 %4252
      %4254 = vrot.lane.b32.xlu0 %v4110, 113
      %v4255 = vpop.permute.xlu0 %4254
      %4256 = vrot.lane.b32.xlu0 %v4105, 113
      %v4257 = vpop.permute.xlu0 %4256
      %4258 = vrot.lane.b32.xlu0 %v4107, 113
      %v4259 = vpop.permute.xlu0 %4258
      %4260 = vrot.lane.b32.xlu0 %v4109, 113
      %v4261 = vpop.permute.xlu0 %4260
      %4262 = vrot.lane.b32.xlu0 %v4111, 113
      %v4263 = vpop.permute.xlu0 %4262
      %v4264 = vsel %vm1484, %v4249, %v4257
      %v4265 = vsel %vm1484, %v4251, %v4259
      %v4266 = vsel %vm1484, %v4253, %v4261
      %v4267 = vsel %vm1484, %v4255, %v4263
      %v4268 = vsel %vm1484, %v4257, %v4249
      %v4269 = vsel %vm1484, %v4259, %v4251
      %v4270 = vsel %vm1484, %v4261, %v4253
      %v4271 = vsel %vm1484, %v4263, %v4255
      %v4272 = vsel %vm1373, %v4156, %v4264
      %v4273 = vsel %vm1374, %v4152, %v4268
      %v4274 = vsel %vm1373, %v4157, %v4265
      %v4275 = vsel %vm1374, %v4153, %v4269
      %v4276 = vsel %vm1373, %v4158, %v4266
      %v4277 = vsel %vm1374, %v4154, %v4270
      %v4278 = vsel %vm1373, %v4159, %v4267
      %v4279 = vsel %vm1374, %v4155, %v4271
      %4280 = vrot.lane.b32.xlu0 %v4104, 127
      %v4281 = vpop.permute.xlu0 %4280
      %4282 = vrot.lane.b32.xlu0 %v4106, 127
      %v4283 = vpop.permute.xlu0 %4282
      %4284 = vrot.lane.b32.xlu0 %v4108, 127
      %v4285 = vpop.permute.xlu0 %4284
      %4286 = vrot.lane.b32.xlu0 %v4110, 127
      %v4287 = vpop.permute.xlu0 %4286
      %4288 = vrot.lane.b32.xlu0 %v4105, 127
      %v4289 = vpop.permute.xlu0 %4288
      %4290 = vrot.lane.b32.xlu0 %v4107, 127
      %v4291 = vpop.permute.xlu0 %4290
      %4292 = vrot.lane.b32.xlu0 %v4109, 127
      %v4293 = vpop.permute.xlu0 %4292
      %4294 = vrot.lane.b32.xlu0 %v4111, 127
      %v4295 = vpop.permute.xlu0 %4294
      %v4296 = vsel %vm1517, %v4281, %v4289
      %v4297 = vsel %vm1517, %v4283, %v4291
      %v4298 = vsel %vm1517, %v4285, %v4293
      %v4299 = vsel %vm1517, %v4287, %v4295
      %v4300 = vsel %vm1517, %v4289, %v4281
      %v4301 = vsel %vm1517, %v4291, %v4283
      %v4302 = vsel %vm1517, %v4293, %v4285
      %v4303 = vsel %vm1517, %v4295, %v4287
      %v4304 = vsel %vm1458, %v4296, %v4212
      %v4305 = vsel %vm1459, %v4300, %v4208
      %v4306 = vsel %vm1458, %v4297, %v4213
      %v4307 = vsel %vm1459, %v4301, %v4209
      %v4308 = vsel %vm1458, %v4298, %v4214
      %v4309 = vsel %vm1459, %v4302, %v4210
      %v4310 = vsel %vm1458, %v4299, %v4215
      %v4311 = vsel %vm1459, %v4303, %v4211
      %4312 = vrot.lane.b32.xlu0 %v4104, 97
      %v4313 = vpop.permute.xlu0 %4312
      %4314 = vrot.lane.b32.xlu0 %v4106, 97
      %v4315 = vpop.permute.xlu0 %4314
      %4316 = vrot.lane.b32.xlu0 %v4108, 97
      %v4317 = vpop.permute.xlu0 %4316
      %4318 = vrot.lane.b32.xlu0 %v4110, 97
      %v4319 = vpop.permute.xlu0 %4318
      %4320 = vrot.lane.b32.xlu0 %v4105, 97
      %v4321 = vpop.permute.xlu0 %4320
      %4322 = vrot.lane.b32.xlu0 %v4107, 97
      %v4323 = vpop.permute.xlu0 %4322
      %4324 = vrot.lane.b32.xlu0 %v4109, 97
      %v4325 = vpop.permute.xlu0 %4324
      %4326 = vrot.lane.b32.xlu0 %v4111, 97
      %v4327 = vpop.permute.xlu0 %4326
      %v4328 = vsel %vm1550, %v4313, %v4321
      %v4329 = vsel %vm1550, %v4315, %v4323
      %v4330 = vsel %vm1550, %v4317, %v4325
      %v4331 = vsel %vm1550, %v4319, %v4327
      %v4332 = vsel %vm1550, %v4321, %v4313
      %v4333 = vsel %vm1550, %v4323, %v4315
      %v4334 = vsel %vm1550, %v4325, %v4317
      %v4335 = vsel %vm1550, %v4327, %v4319
      %v4336 = vsel %vm1373, %v4264, %v4328
      %v4337 = vsel %vm1374, %v4268, %v4332
      %v4338 = vsel %vm1373, %v4265, %v4329
      %v4339 = vsel %vm1374, %v4269, %v4333
      %v4340 = vsel %vm1373, %v4266, %v4330
      %v4341 = vsel %vm1374, %v4270, %v4334
      %v4342 = vsel %vm1373, %v4267, %v4331
      %v4343 = vsel %vm1374, %v4271, %v4335
      %4344 = vrot.lane.b32.xlu0 %v4104, 112
      %v4345 = vpop.permute.xlu0 %4344
      %4346 = vrot.lane.b32.xlu0 %v4106, 112
      %v4347 = vpop.permute.xlu0 %4346
      %4348 = vrot.lane.b32.xlu0 %v4108, 112
      %v4349 = vpop.permute.xlu0 %4348
      %4350 = vrot.lane.b32.xlu0 %v4110, 112
      %v4351 = vpop.permute.xlu0 %4350
      %4352 = vrot.lane.b32.xlu0 %v4105, 112
      %v4353 = vpop.permute.xlu0 %4352
      %4354 = vrot.lane.b32.xlu0 %v4107, 112
      %v4355 = vpop.permute.xlu0 %4354
      %4356 = vrot.lane.b32.xlu0 %v4109, 112
      %v4357 = vpop.permute.xlu0 %4356
      %4358 = vrot.lane.b32.xlu0 %v4111, 112
      %v4359 = vpop.permute.xlu0 %4358
      %v4360 = vsel %vm1583, %v4345, %v4353
      %v4361 = vsel %vm1583, %v4347, %v4355
      %v4362 = vsel %vm1583, %v4349, %v4357
      %v4363 = vsel %vm1583, %v4351, %v4359
      %v4364 = vsel %vm1583, %v4353, %v4345
      %v4365 = vsel %vm1583, %v4355, %v4347
      %v4366 = vsel %vm1583, %v4357, %v4349
      %v4367 = vsel %vm1583, %v4359, %v4351
      %4368 = vrot.lane.b32.xlu0 %v4104, 111
      %v4369 = vpop.permute.xlu0 %4368
      %4370 = vrot.lane.b32.xlu0 %v4106, 111
      %v4371 = vpop.permute.xlu0 %4370
      %4372 = vrot.lane.b32.xlu0 %v4108, 111
      %v4373 = vpop.permute.xlu0 %4372
      %4374 = vrot.lane.b32.xlu0 %v4110, 111
      %v4375 = vpop.permute.xlu0 %4374
      %4376 = vrot.lane.b32.xlu0 %v4105, 111
      %v4377 = vpop.permute.xlu0 %4376
      %4378 = vrot.lane.b32.xlu0 %v4107, 111
      %v4379 = vpop.permute.xlu0 %4378
      %4380 = vrot.lane.b32.xlu0 %v4109, 111
      %v4381 = vpop.permute.xlu0 %4380
      %4382 = vrot.lane.b32.xlu0 %v4111, 111
      %v4383 = vpop.permute.xlu0 %4382
      %v4384 = vsel %vm1608, %v4369, %v4377
      %v4385 = vsel %vm1608, %v4371, %v4379
      %v4386 = vsel %vm1608, %v4373, %v4381
      %v4387 = vsel %vm1608, %v4375, %v4383
      %v4388 = vsel %vm1608, %v4377, %v4369
      %v4389 = vsel %vm1608, %v4379, %v4371
      %v4390 = vsel %vm1608, %v4381, %v4373
      %v4391 = vsel %vm1608, %v4383, %v4375
      %v4392 = vsel %vm1458, %v4384, %v4296
      %v4393 = vsel %vm1459, %v4388, %v4300
      %v4394 = vsel %vm1458, %v4385, %v4297
      %v4395 = vsel %vm1459, %v4389, %v4301
      %v4396 = vsel %vm1458, %v4386, %v4298
      %v4397 = vsel %vm1459, %v4390, %v4302
      %v4398 = vsel %vm1458, %v4387, %v4299
      %v4399 = vsel %vm1459, %v4391, %v4303
      %4401 = vset.pattern.permute.xlu0 0
      %4402 = vperm.xlu0 %4401, %v3934
      %v4403 = vpop.permute.xlu0 %4402
      %4406 = vset.pattern.permute.xlu0 0
      %4407 = vperm.xlu0 %4406, %v3935
      %v4408 = vpop.permute.xlu0 %4407
      %4411 = vset.pattern.permute.xlu0 0
      %4412 = vperm.xlu0 %4411, %v3936
      %v4413 = vpop.permute.xlu0 %4412
      %4416 = vset.pattern.permute.xlu0 0
      %4417 = vperm.xlu0 %4416, %v3937
      %v4418 = vpop.permute.xlu0 %4417
      %v4421 = vsel %vm1645, %v3924, 0
      %v4424 = vsel %vm1645, %v3927, 0
      %v4427 = vsel %vm1645, %v3930, 0
      %v4430 = vsel %vm1645, %v3933, 0
      %4432 = vmatprep.subr.mxu0 %v4279
      %4433 = vmatpush1.msra.mxu0 %v4278
      %4434 = vmatprep.subr.mxu0 %v4277
      %4435 = vmatpush1.msra.mxu0 %v4276
      %4436 = vmatprep.subr.mxu0 %v4275
      %4437 = vmatpush1.msra.mxu0 %v4274
      %4438 = vmatprep.subr.mxu0 %v4273
      %4439 = vmatpush1.msra.mxu0 %v4272
      %4440 = vmatprep.subr.mxu0 %v4247
      %4441 = vmatpush1.msra.mxu0 %v4246
      %4442 = vmatprep.subr.mxu0 %v4245
      %4443 = vmatpush1.msra.mxu0 %v4244
      %4444 = vmatprep.subr.mxu0 %v4243
      %4445 = vmatpush1.msra.mxu0 %v4242
      %4446 = vmatprep.subr.mxu0 %v4241
      %4447 = vmatpush1.msra.mxu0 %v4240
      %4448 = vmatprep.subr.mxu0 %v4187
      %4449 = vmatpush1.msra.mxu0 %v4191
      %4450 = vmatprep.subr.mxu0 %v4186
      %4451 = vmatpush1.msra.mxu0 %v4190
      %4452 = vmatprep.subr.mxu0 %v4185
      %4453 = vmatpush1.msra.mxu0 %v4189
      %4454 = vmatprep.subr.mxu0 %v4184
      %4455 = vmatpush1.msra.mxu0 %v4188
      %4456 = vmatprep.subr.mxu0 %v4167
      %4457 = vmatpush1.msra.mxu0 %v4166
      %4458 = vmatprep.subr.mxu0 %v4165
      %4459 = vmatpush1.msra.mxu0 %v4164
      %4460 = vmatprep.subr.mxu0 %v4163
      %4461 = vmatpush1.msra.mxu0 %v4162
      %4462 = vmatprep.subr.mxu0 %v4161
      %4463 = vmatpush1.msra.mxu0 %v4160
      %4464 = vmatprep.subr.mxu0 %v4367
      %4465 = vmatpush2.msra.mxu0 %v4363
      %4466 = vmatprep.subr.mxu0 %v4366
      %4467 = vmatpush2.msra.mxu0 %v4362
      %4468 = vmatprep.subr.mxu0 %v4365
      %4469 = vmatpush2.msra.mxu0 %v4361
      %4470 = vmatprep.subr.mxu0 %v4364
      %4471 = vmatpush2.msra.mxu0 %v4360
      %4472 = vmatprep.subr.mxu0 %v4343
      %4473 = vmatpush2.msra.mxu0 %v4342
      %4474 = vmatprep.subr.mxu0 %v4341
      %4475 = vmatpush2.msra.mxu0 %v4340
      %4476 = vmatprep.subr.mxu0 %v4339
      %4477 = vmatpush2.msra.mxu0 %v4338
      %4478 = vmatprep.subr.mxu0 %v4337
      %4479 = vmatpush2.msra.mxu0 %v4336
      %4480 = vmatprep.subr.mxu0 %v4311
      %4481 = vmatpush2.msra.mxu0 %v4310
      %4482 = vmatprep.subr.mxu0 %v4309
      %4483 = vmatpush2.msra.mxu0 %v4308
      %4484 = vmatprep.subr.mxu0 %v4307
      %4485 = vmatpush2.msra.mxu0 %v4306
      %4486 = vmatprep.subr.mxu0 %v4305
      %4487 = vmatpush2.msra.mxu0 %v4304
      %4488 = vmatprep.subr.mxu0 %v4111
      %4489 = vmatpush2.msra.mxu0 %v4110
      %4490 = vmatprep.subr.mxu0 %v4109
      %4491 = vmatpush2.msra.mxu0 %v4108
      %4492 = vmatprep.subr.mxu0 %v4107
      %4493 = vmatpush2.msra.mxu0 %v4106
      %4494 = vmatprep.subr.mxu0 %v4105
      %4495 = vmatpush2.msra.mxu0 %v4104
      %4496 = vmatprep.mubr.f32.mxu0 %v3923
      %4497 = vmatmul.mubr.f32.gmra.mxu0 %v3922
      %v4498 = vpop.f32.mrf.mxu0
      %v4499 = vadd.f32 %v4403, %v4498
      %v4500 = vpop.f32.mrf.mxu0
      %v4501 = vadd.f32 %v4403, %v4500
      %4502 = vmatprep.mubr.f32.mxu0 %v3926
      %4503 = vmatmul.mubr.f32.gmra.mxu0 %v3925
      %v4504 = vpop.f32.mrf.mxu0
      %v4505 = vadd.f32 %v4408, %v4504
      %v4506 = vpop.f32.mrf.mxu0
      %v4507 = vadd.f32 %v4408, %v4506
      %4508 = vmatprep.mubr.f32.mxu0 %v3929
      %4509 = vmatmul.mubr.f32.gmra.mxu0 %v3928
      %v4510 = vpop.f32.mrf.mxu0
      %v4511 = vadd.f32 %v4413, %v4510
      %v4512 = vpop.f32.mrf.mxu0
      %v4513 = vadd.f32 %v4413, %v4512
      %4514 = vmatprep.mubr.f32.mxu0 %v3932
      %4515 = vmatmul.mubr.f32.gmra.mxu0 %v3931
      %v4516 = vpop.f32.mrf.mxu0
      %v4517 = vadd.f32 %v4418, %v4516
      %v4518 = vpop.f32.mrf.mxu0
      %v4519 = vadd.f32 %v4418, %v4518
      %4520 = vdwg.mxu0
      %4521 = vmatprep.subr.mxu0 0.0
      %4522 = vmatpush1.msra.mxu0 0.0
      %4523 = vmatprep.subr.mxu0 0.0
      %4524 = vmatpush1.msra.mxu0 0.0
      %4525 = vmatprep.subr.mxu0 0.0
      %4526 = vmatpush1.msra.mxu0 0.0
      %4527 = vmatprep.subr.mxu0 0.0
      %4528 = vmatpush1.msra.mxu0 0.0
      %4529 = vmatprep.subr.mxu0 0.0
      %4530 = vmatpush1.msra.mxu0 0.0
      %4531 = vmatprep.subr.mxu0 0.0
      %4532 = vmatpush1.msra.mxu0 0.0
      %4533 = vmatprep.subr.mxu0 0.0
      %4534 = vmatpush1.msra.mxu0 0.0
      %4535 = vmatprep.subr.mxu0 0.0
      %4536 = vmatpush1.msra.mxu0 0.0
      %4537 = vmatprep.subr.mxu0 0.0
      %4538 = vmatpush1.msra.mxu0 0.0
      %4539 = vmatprep.subr.mxu0 0.0
      %4540 = vmatpush1.msra.mxu0 0.0
      %4541 = vmatprep.subr.mxu0 0.0
      %4542 = vmatpush1.msra.mxu0 0.0
      %4543 = vmatprep.subr.mxu0 0.0
      %4544 = vmatpush1.msra.mxu0 0.0
      %4545 = vmatprep.subr.mxu0 %v4399
      %4546 = vmatpush1.msra.mxu0 %v4398
      %4547 = vmatprep.subr.mxu0 %v4397
      %4548 = vmatpush1.msra.mxu0 %v4396
      %4549 = vmatprep.subr.mxu0 %v4395
      %4550 = vmatpush1.msra.mxu0 %v4394
      %4551 = vmatprep.subr.mxu0 %v4393
      %4552 = vmatpush1.msra.mxu0 %v4392
      %4553 = vmatprep.subr.mxu0 0.0
      %4554 = vmatpush2.msra.mxu0 0.0
      %4555 = vmatprep.subr.mxu0 0.0
      %4556 = vmatpush2.msra.mxu0 0.0
      %4557 = vmatprep.subr.mxu0 0.0
      %4558 = vmatpush2.msra.mxu0 0.0
      %4559 = vmatprep.subr.mxu0 0.0
      %4560 = vmatpush2.msra.mxu0 0.0
      %4561 = vmatprep.subr.mxu0 0.0
      %4562 = vmatpush2.msra.mxu0 0.0
      %4563 = vmatprep.subr.mxu0 0.0
      %4564 = vmatpush2.msra.mxu0 0.0
      %4565 = vmatprep.subr.mxu0 0.0
      %4566 = vmatpush2.msra.mxu0 0.0
      %4567 = vmatprep.subr.mxu0 0.0
      %4568 = vmatpush2.msra.mxu0 0.0
      %4569 = vmatprep.subr.mxu0 0.0
      %4570 = vmatpush2.msra.mxu0 0.0
      %4571 = vmatprep.subr.mxu0 0.0
      %4572 = vmatpush2.msra.mxu0 0.0
      %4573 = vmatprep.subr.mxu0 0.0
      %4574 = vmatpush2.msra.mxu0 0.0
      %4575 = vmatprep.subr.mxu0 0.0
      %4576 = vmatpush2.msra.mxu0 0.0
      %4577 = vmatprep.subr.mxu0 0.0
      %4578 = vmatpush2.msra.mxu0 0.0
      %4579 = vmatprep.subr.mxu0 0.0
      %4580 = vmatpush2.msra.mxu0 0.0
      %4581 = vmatprep.subr.mxu0 0.0
      %4582 = vmatpush2.msra.mxu0 0.0
      %4583 = vmatprep.subr.mxu0 0.0
      %4584 = vmatpush2.msra.mxu0 0.0
      %4585 = vmatprep.mubr.f32.mxu0 0.0
      %4586 = vmatmul.mubr.f32.gmra.mxu0 %v4421
      %v4587 = vpop.f32.mrf.mxu0
      %v4588 = vadd.f32 %v4499, %v4587
      %v4589 = vpop.f32.mrf.mxu0
      %v4590 = vadd.f32 %v4501, %v4589
      %4591 = vmatprep.mubr.f32.mxu0 0.0
      %4592 = vmatmul.mubr.f32.gmra.mxu0 %v4424
      %v4593 = vpop.f32.mrf.mxu0
      %v4594 = vadd.f32 %v4505, %v4593
      %v4595 = vpop.f32.mrf.mxu0
      %v4596 = vadd.f32 %v4507, %v4595
      %4597 = vmatprep.mubr.f32.mxu0 0.0
      %4598 = vmatmul.mubr.f32.gmra.mxu0 %v4427
      %v4599 = vpop.f32.mrf.mxu0
      %v4600 = vadd.f32 %v4511, %v4599
      %v4601 = vpop.f32.mrf.mxu0
      %v4602 = vadd.f32 %v4513, %v4601
      %4603 = vmatprep.mubr.f32.mxu0 0.0
      %4604 = vmatmul.mubr.f32.gmra.mxu0 %v4430
      %v4605 = vpop.f32.mrf.mxu0
      %v4606 = vadd.f32 %v4517, %v4605
      %v4607 = vpop.f32.mrf.mxu0
      %v4608 = vadd.f32 %v4519, %v4607
      %4609 = vdwg.mxu0
      %v4610 = vmul.f32 %v4588, 0.70710677
      %v4611 = vmul.f32 %v4590, 0.70710677
      %v4612 = vmul.f32 %v4594, 0.70710677
      %v4613 = vmul.f32 %v4596, 0.70710677
      %v4614 = vmul.f32 %v4600, 0.70710677
      %v4615 = vmul.f32 %v4602, 0.70710677
      %v4616 = vmul.f32 %v4606, 0.70710677
      %v4617 = vmul.f32 %v4608, 0.70710677
      %vm4618 = vcmp.ge.f32.partialorder %v4610, 0.0
      %vm4619 = vcmp.ge.f32.partialorder %v4611, 0.0
      %vm4620 = vcmp.ge.f32.partialorder %v4612, 0.0
      %vm4621 = vcmp.ge.f32.partialorder %v4613, 0.0
      %vm4622 = vcmp.ge.f32.partialorder %v4614, 0.0
      %vm4623 = vcmp.ge.f32.partialorder %v4615, 0.0
      %vm4624 = vcmp.ge.f32.partialorder %v4616, 0.0
      %vm4625 = vcmp.ge.f32.partialorder %v4617, 0.0
      %v4626 = vsel %vm4618, 1.0, -1.0
      %v4627 = vsel %vm4619, 1.0, -1.0
      %v4628 = vsel %vm4620, 1.0, -1.0
      %v4629 = vsel %vm4621, 1.0, -1.0
      %v4630 = vsel %vm4622, 1.0, -1.0
      %v4631 = vsel %vm4623, 1.0, -1.0
      %v4632 = vsel %vm4624, 1.0, -1.0
      %v4633 = vsel %vm4625, 1.0, -1.0
      %v4634 = vand.u32 2147483647, %v4610
      %v4635 = vand.u32 2147483647, %v4611
      %v4636 = vand.u32 2147483647, %v4612
      %v4637 = vand.u32 2147483647, %v4613
      %v4638 = vand.u32 2147483647, %v4614
      %v4639 = vand.u32 2147483647, %v4615
      %v4640 = vand.u32 2147483647, %v4616
      %v4641 = vand.u32 2147483647, %v4617
      %v4642 = vmul.f32 %v4634, 0.3275911
      %v4643 = vmul.f32 %v4635, 0.3275911
      %v4644 = vmul.f32 %v4636, 0.3275911
      %v4645 = vmul.f32 %v4637, 0.3275911
      %v4646 = vmul.f32 %v4638, 0.3275911
      %v4647 = vmul.f32 %v4639, 0.3275911
      %v4648 = vmul.f32 %v4640, 0.3275911
      %v4649 = vmul.f32 %v4641, 0.3275911
      %v4650 = vadd.f32 %v4642, 1.0
      %v4651 = vadd.f32 %v4643, 1.0
      %v4652 = vadd.f32 %v4644, 1.0
      %v4653 = vadd.f32 %v4645, 1.0
      %v4654 = vadd.f32 %v4646, 1.0
      %v4655 = vadd.f32 %v4647, 1.0
      %v4656 = vadd.f32 %v4648, 1.0
      %v4657 = vadd.f32 %v4649, 1.0
      %v4658 = vrcp.pop %v4650
      %v4659 = vrcp.pop %v4651
      %v4660 = vrcp.pop %v4652
      %v4661 = vrcp.pop %v4653
      %v4662 = vrcp.pop %v4654
      %v4663 = vrcp.pop %v4655
      %v4664 = vrcp.pop %v4656
      %v4665 = vrcp.pop %v4657
      %v4666 = vmul.f32 %v4658, 1.0614054
      %v4667 = vmul.f32 %v4659, 1.0614054
      %v4668 = vmul.f32 %v4660, 1.0614054
      %v4669 = vmul.f32 %v4661, 1.0614054
      %v4670 = vmul.f32 %v4662, 1.0614054
      %v4671 = vmul.f32 %v4663, 1.0614054
      %v4672 = vmul.f32 %v4664, 1.0614054
      %v4673 = vmul.f32 %v4665, 1.0614054
      %v4674 = vadd.f32 %v4666, -1.4531521
      %v4675 = vadd.f32 %v4667, -1.4531521
      %v4676 = vadd.f32 %v4668, -1.4531521
      %v4677 = vadd.f32 %v4669, -1.4531521
      %v4678 = vadd.f32 %v4670, -1.4531521
      %v4679 = vadd.f32 %v4671, -1.4531521
      %v4680 = vadd.f32 %v4672, -1.4531521
      %v4681 = vadd.f32 %v4673, -1.4531521
      %v4682 = vmul.f32 %v4674, %v4658
      %v4683 = vmul.f32 %v4675, %v4659
      %v4684 = vmul.f32 %v4676, %v4660
      %v4685 = vmul.f32 %v4677, %v4661
      %v4686 = vmul.f32 %v4678, %v4662
      %v4687 = vmul.f32 %v4679, %v4663
      %v4688 = vmul.f32 %v4680, %v4664
      %v4689 = vmul.f32 %v4681, %v4665
      %v4690 = vadd.f32 %v4682, 1.4214138
      %v4691 = vadd.f32 %v4683, 1.4214138
      %v4692 = vadd.f32 %v4684, 1.4214138
      %v4693 = vadd.f32 %v4685, 1.4214138
      %v4694 = vadd.f32 %v4686, 1.4214138
      %v4695 = vadd.f32 %v4687, 1.4214138
      %v4696 = vadd.f32 %v4688, 1.4214138
      %v4697 = vadd.f32 %v4689, 1.4214138
      %v4698 = vmul.f32 %v4690, %v4658
      %v4699 = vmul.f32 %v4691, %v4659
      %v4700 = vmul.f32 %v4692, %v4660
      %v4701 = vmul.f32 %v4693, %v4661
      %v4702 = vmul.f32 %v4694, %v4662
      %v4703 = vmul.f32 %v4695, %v4663
      %v4704 = vmul.f32 %v4696, %v4664
      %v4705 = vmul.f32 %v4697, %v4665
      %v4706 = vadd.f32 %v4698, -0.28449672
      %v4707 = vadd.f32 %v4699, -0.28449672
      %v4708 = vadd.f32 %v4700, -0.28449672
      %v4709 = vadd.f32 %v4701, -0.28449672
      %v4710 = vadd.f32 %v4702, -0.28449672
      %v4711 = vadd.f32 %v4703, -0.28449672
      %v4712 = vadd.f32 %v4704, -0.28449672
      %v4713 = vadd.f32 %v4705, -0.28449672
      %v4714 = vmul.f32 %v4706, %v4658
      %v4715 = vmul.f32 %v4707, %v4659
      %v4716 = vmul.f32 %v4708, %v4660
      %v4717 = vmul.f32 %v4709, %v4661
      %v4718 = vmul.f32 %v4710, %v4662
      %v4719 = vmul.f32 %v4711, %v4663
      %v4720 = vmul.f32 %v4712, %v4664
      %v4721 = vmul.f32 %v4713, %v4665
      %v4722 = vadd.f32 %v4714, 0.2548296
      %v4723 = vadd.f32 %v4715, 0.2548296
      %v4724 = vadd.f32 %v4716, 0.2548296
      %v4725 = vadd.f32 %v4717, 0.2548296
      %v4726 = vadd.f32 %v4718, 0.2548296
      %v4727 = vadd.f32 %v4719, 0.2548296
      %v4728 = vadd.f32 %v4720, 0.2548296
      %v4729 = vadd.f32 %v4721, 0.2548296
      %v4730 = vmul.f32 %v4722, %v4658
      %v4731 = vmul.f32 %v4723, %v4659
      %v4732 = vmul.f32 %v4724, %v4660
      %v4733 = vmul.f32 %v4725, %v4661
      %v4734 = vmul.f32 %v4726, %v4662
      %v4735 = vmul.f32 %v4727, %v4663
      %v4736 = vmul.f32 %v4728, %v4664
      %v4737 = vmul.f32 %v4729, %v4665
      %v4738 = vsub.f32 0.0, %v4634
      %v4739 = vsub.f32 0.0, %v4635
      %v4740 = vsub.f32 0.0, %v4636
      %v4741 = vsub.f32 0.0, %v4637
      %v4742 = vsub.f32 0.0, %v4638
      %v4743 = vsub.f32 0.0, %v4639
      %v4744 = vsub.f32 0.0, %v4640
      %v4745 = vsub.f32 0.0, %v4641
      %v4746 = vmul.f32 %v4738, %v4634
      %v4747 = vmul.f32 %v4739, %v4635
      %v4748 = vmul.f32 %v4740, %v4636
      %v4749 = vmul.f32 %v4741, %v4637
      %v4750 = vmul.f32 %v4742, %v4638
      %v4751 = vmul.f32 %v4743, %v4639
      %v4752 = vmul.f32 %v4744, %v4640
      %v4753 = vmul.f32 %v4745, %v4641
      %v4754 = vmul.f32 %v4746, 1.442695
      %v4755 = vpow.pop %v4754
      %v4756 = vmul.f32 %v4747, 1.442695
      %v4757 = vpow.pop %v4756
      %v4758 = vmul.f32 %v4748, 1.442695
      %v4759 = vpow.pop %v4758
      %v4760 = vmul.f32 %v4749, 1.442695
      %v4761 = vpow.pop %v4760
      %v4762 = vmul.f32 %v4750, 1.442695
      %v4763 = vpow.pop %v4762
      %v4764 = vmul.f32 %v4751, 1.442695
      %v4765 = vpow.pop %v4764
      %v4766 = vmul.f32 %v4752, 1.442695
      %v4767 = vpow.pop %v4766
      %v4768 = vmul.f32 %v4753, 1.442695
      %v4769 = vpow.pop %v4768
      %v4770 = vmul.f32 %v4730, %v4755
      %v4771 = vmul.f32 %v4731, %v4757
      %v4772 = vmul.f32 %v4732, %v4759
      %v4773 = vmul.f32 %v4733, %v4761
      %v4774 = vmul.f32 %v4734, %v4763
      %v4775 = vmul.f32 %v4735, %v4765
      %v4776 = vmul.f32 %v4736, %v4767
      %v4777 = vmul.f32 %v4737, %v4769
      %v4778 = vsub.f32 1.0, %v4770
      %v4779 = vsub.f32 1.0, %v4771
      %v4780 = vsub.f32 1.0, %v4772
      %v4781 = vsub.f32 1.0, %v4773
      %v4782 = vsub.f32 1.0, %v4774
      %v4783 = vsub.f32 1.0, %v4775
      %v4784 = vsub.f32 1.0, %v4776
      %v4785 = vsub.f32 1.0, %v4777
      %v4786 = vmul.f32 %v4626, %v4778
      %v4787 = vmul.f32 %v4627, %v4779
      %v4788 = vmul.f32 %v4628, %v4780
      %v4789 = vmul.f32 %v4629, %v4781
      %v4790 = vmul.f32 %v4630, %v4782
      %v4791 = vmul.f32 %v4631, %v4783
      %v4792 = vmul.f32 %v4632, %v4784
      %v4793 = vmul.f32 %v4633, %v4785
      %v4794 = vmul.f32 %v4588, 0.5
      %v4795 = vmul.f32 %v4590, 0.5
      %v4796 = vmul.f32 %v4594, 0.5
      %v4797 = vmul.f32 %v4596, 0.5
      %v4798 = vmul.f32 %v4600, 0.5
      %v4799 = vmul.f32 %v4602, 0.5
      %v4800 = vmul.f32 %v4606, 0.5
      %v4801 = vmul.f32 %v4608, 0.5
      %v4802 = vadd.f32 %v4786, 1.0
      %v4803 = vadd.f32 %v4787, 1.0
      %v4804 = vadd.f32 %v4788, 1.0
      %v4805 = vadd.f32 %v4789, 1.0
      %v4806 = vadd.f32 %v4790, 1.0
      %v4807 = vadd.f32 %v4791, 1.0
      %v4808 = vadd.f32 %v4792, 1.0
      %v4809 = vadd.f32 %v4793, 1.0
      %v4810 = vmul.f32 %v4794, %v4802
      %v4811 = vmul.f32 %v4795, %v4803
      %v4812 = vmul.f32 %v4796, %v4804
      %v4813 = vmul.f32 %v4797, %v4805
      %v4814 = vmul.f32 %v4798, %v4806
      %v4815 = vmul.f32 %v4799, %v4807
      %v4816 = vmul.f32 %v4800, %v4808
      %v4817 = vmul.f32 %v4801, %v4809
      %4818 = vrot.lane.b32.xlu0 %v4810, 34
      %v4819 = vpop.permute.xlu0 %4818
      %4820 = vrot.lane.b32.xlu0 %v4812, 34
      %v4821 = vpop.permute.xlu0 %4820
      %4822 = vrot.lane.b32.xlu0 %v4814, 34
      %v4823 = vpop.permute.xlu0 %4822
      %4824 = vrot.lane.b32.xlu0 %v4816, 34
      %v4825 = vpop.permute.xlu0 %4824
      %4826 = vrot.lane.b32.xlu0 %v4811, 34
      %v4827 = vpop.permute.xlu0 %4826
      %4828 = vrot.lane.b32.xlu0 %v4813, 34
      %v4829 = vpop.permute.xlu0 %4828
      %4830 = vrot.lane.b32.xlu0 %v4815, 34
      %v4831 = vpop.permute.xlu0 %4830
      %4832 = vrot.lane.b32.xlu0 %v4817, 34
      %v4833 = vpop.permute.xlu0 %4832
      %v4834 = vsel %vm2060, %v4819, %v4827
      %v4835 = vsel %vm2060, %v4821, %v4829
      %v4836 = vsel %vm2060, %v4823, %v4831
      %v4837 = vsel %vm2060, %v4825, %v4833
      %v4838 = vsel %vm2060, %v4827, %v4819
      %v4839 = vsel %vm2060, %v4829, %v4821
      %v4840 = vsel %vm2060, %v4831, %v4823
      %v4841 = vsel %vm2060, %v4833, %v4825
      %4842 = vrot.lane.b32.xlu0 %v4810, 18
      %v4843 = vpop.permute.xlu0 %4842
      %4844 = vrot.lane.b32.xlu0 %v4812, 18
      %v4845 = vpop.permute.xlu0 %4844
      %4846 = vrot.lane.b32.xlu0 %v4814, 18
      %v4847 = vpop.permute.xlu0 %4846
      %4848 = vrot.lane.b32.xlu0 %v4816, 18
      %v4849 = vpop.permute.xlu0 %4848
      %4850 = vrot.lane.b32.xlu0 %v4811, 18
      %v4851 = vpop.permute.xlu0 %4850
      %4852 = vrot.lane.b32.xlu0 %v4813, 18
      %v4853 = vpop.permute.xlu0 %4852
      %4854 = vrot.lane.b32.xlu0 %v4815, 18
      %v4855 = vpop.permute.xlu0 %4854
      %4856 = vrot.lane.b32.xlu0 %v4817, 18
      %v4857 = vpop.permute.xlu0 %4856
      %v4858 = vsel %vm2085, %v4843, %v4851
      %v4859 = vsel %vm2085, %v4845, %v4853
      %v4860 = vsel %vm2085, %v4847, %v4855
      %v4861 = vsel %vm2085, %v4849, %v4857
      %v4862 = vsel %vm2085, %v4851, %v4843
      %v4863 = vsel %vm2085, %v4853, %v4845
      %v4864 = vsel %vm2085, %v4855, %v4847
      %v4865 = vsel %vm2085, %v4857, %v4849
      %v4866 = vsel %vm2094, %v4838, %v4862
      %v4867 = vsel %vm2095, %v4834, %v4858
      %v4868 = vsel %vm2094, %v4839, %v4863
      %v4869 = vsel %vm2095, %v4835, %v4859
      %v4870 = vsel %vm2094, %v4840, %v4864
      %v4871 = vsel %vm2095, %v4836, %v4860
      %v4872 = vsel %vm2094, %v4841, %v4865
      %v4873 = vsel %vm2095, %v4837, %v4861
      %4874 = vrot.lane.b32.xlu0 %v4810, 32
      %v4875 = vpop.permute.xlu0 %4874
      %4876 = vrot.lane.b32.xlu0 %v4812, 32
      %v4877 = vpop.permute.xlu0 %4876
      %4878 = vrot.lane.b32.xlu0 %v4814, 32
      %v4879 = vpop.permute.xlu0 %4878
      %4880 = vrot.lane.b32.xlu0 %v4816, 32
      %v4881 = vpop.permute.xlu0 %4880
      %4882 = vrot.lane.b32.xlu0 %v4811, 32
      %v4883 = vpop.permute.xlu0 %4882
      %4884 = vrot.lane.b32.xlu0 %v4813, 32
      %v4885 = vpop.permute.xlu0 %4884
      %4886 = vrot.lane.b32.xlu0 %v4815, 32
      %v4887 = vpop.permute.xlu0 %4886
      %4888 = vrot.lane.b32.xlu0 %v4817, 32
      %v4889 = vpop.permute.xlu0 %4888
      %v4890 = vsel %vm2120, %v4875, %v4883
      %v4891 = vsel %vm2120, %v4877, %v4885
      %v4892 = vsel %vm2120, %v4879, %v4887
      %v4893 = vsel %vm2120, %v4881, %v4889
      %v4894 = vsel %vm2120, %v4883, %v4875
      %v4895 = vsel %vm2120, %v4885, %v4877
      %v4896 = vsel %vm2120, %v4887, %v4879
      %v4897 = vsel %vm2120, %v4889, %v4881
      %4898 = vrot.lane.b32.xlu0 %v4810, 30
      %v4899 = vpop.permute.xlu0 %4898
      %4900 = vrot.lane.b32.xlu0 %v4812, 30
      %v4901 = vpop.permute.xlu0 %4900
      %4902 = vrot.lane.b32.xlu0 %v4814, 30
      %v4903 = vpop.permute.xlu0 %4902
      %4904 = vrot.lane.b32.xlu0 %v4816, 30
      %v4905 = vpop.permute.xlu0 %4904
      %4906 = vrot.lane.b32.xlu0 %v4811, 30
      %v4907 = vpop.permute.xlu0 %4906
      %4908 = vrot.lane.b32.xlu0 %v4813, 30
      %v4909 = vpop.permute.xlu0 %4908
      %4910 = vrot.lane.b32.xlu0 %v4815, 30
      %v4911 = vpop.permute.xlu0 %4910
      %4912 = vrot.lane.b32.xlu0 %v4817, 30
      %v4913 = vpop.permute.xlu0 %4912
      %v4914 = vsel %vm2145, %v4899, %v4907
      %v4915 = vsel %vm2145, %v4901, %v4909
      %v4916 = vsel %vm2145, %v4903, %v4911
      %v4917 = vsel %vm2145, %v4905, %v4913
      %v4918 = vsel %vm2145, %v4907, %v4899
      %v4919 = vsel %vm2145, %v4909, %v4901
      %v4920 = vsel %vm2145, %v4911, %v4903
      %v4921 = vsel %vm2145, %v4913, %v4905
      %4922 = vrot.lane.b32.xlu0 %v4810, 46
      %v4923 = vpop.permute.xlu0 %4922
      %4924 = vrot.lane.b32.xlu0 %v4812, 46
      %v4925 = vpop.permute.xlu0 %4924
      %4926 = vrot.lane.b32.xlu0 %v4814, 46
      %v4927 = vpop.permute.xlu0 %4926
      %4928 = vrot.lane.b32.xlu0 %v4816, 46
      %v4929 = vpop.permute.xlu0 %4928
      %4930 = vrot.lane.b32.xlu0 %v4811, 46
      %v4931 = vpop.permute.xlu0 %4930
      %4932 = vrot.lane.b32.xlu0 %v4813, 46
      %v4933 = vpop.permute.xlu0 %4932
      %4934 = vrot.lane.b32.xlu0 %v4815, 46
      %v4935 = vpop.permute.xlu0 %4934
      %4936 = vrot.lane.b32.xlu0 %v4817, 46
      %v4937 = vpop.permute.xlu0 %4936
      %v4938 = vsel %vm2170, %v4923, %v4931
      %v4939 = vsel %vm2170, %v4925, %v4933
      %v4940 = vsel %vm2170, %v4927, %v4935
      %v4941 = vsel %vm2170, %v4929, %v4937
      %v4942 = vsel %vm2170, %v4931, %v4923
      %v4943 = vsel %vm2170, %v4933, %v4925
      %v4944 = vsel %vm2170, %v4935, %v4927
      %v4945 = vsel %vm2170, %v4937, %v4929
      %v4946 = vsel %vm2179, %v4918, %v4942
      %v4947 = vsel %vm2180, %v4914, %v4938
      %v4948 = vsel %vm2179, %v4919, %v4943
      %v4949 = vsel %vm2180, %v4915, %v4939
      %v4950 = vsel %vm2179, %v4920, %v4944
      %v4951 = vsel %vm2180, %v4916, %v4940
      %v4952 = vsel %vm2179, %v4921, %v4945
      %v4953 = vsel %vm2180, %v4917, %v4941
      %4954 = vrot.lane.b32.xlu0 %v4810, 2
      %v4955 = vpop.permute.xlu0 %4954
      %4956 = vrot.lane.b32.xlu0 %v4812, 2
      %v4957 = vpop.permute.xlu0 %4956
      %4958 = vrot.lane.b32.xlu0 %v4814, 2
      %v4959 = vpop.permute.xlu0 %4958
      %4960 = vrot.lane.b32.xlu0 %v4816, 2
      %v4961 = vpop.permute.xlu0 %4960
      %4962 = vrot.lane.b32.xlu0 %v4811, 2
      %v4963 = vpop.permute.xlu0 %4962
      %4964 = vrot.lane.b32.xlu0 %v4813, 2
      %v4965 = vpop.permute.xlu0 %4964
      %4966 = vrot.lane.b32.xlu0 %v4815, 2
      %v4967 = vpop.permute.xlu0 %4966
      %4968 = vrot.lane.b32.xlu0 %v4817, 2
      %v4969 = vpop.permute.xlu0 %4968
      %v4970 = vsel %vm2205, %v4955, %v4963
      %v4971 = vsel %vm2205, %v4957, %v4965
      %v4972 = vsel %vm2205, %v4959, %v4967
      %v4973 = vsel %vm2205, %v4961, %v4969
      %v4974 = vsel %vm2205, %v4963, %v4955
      %v4975 = vsel %vm2205, %v4965, %v4957
      %v4976 = vsel %vm2205, %v4967, %v4959
      %v4977 = vsel %vm2205, %v4969, %v4961
      %4978 = vrot.lane.b32.xlu0 %v4810, 114
      %v4979 = vpop.permute.xlu0 %4978
      %4980 = vrot.lane.b32.xlu0 %v4812, 114
      %v4981 = vpop.permute.xlu0 %4980
      %4982 = vrot.lane.b32.xlu0 %v4814, 114
      %v4983 = vpop.permute.xlu0 %4982
      %4984 = vrot.lane.b32.xlu0 %v4816, 114
      %v4985 = vpop.permute.xlu0 %4984
      %4986 = vrot.lane.b32.xlu0 %v4811, 114
      %v4987 = vpop.permute.xlu0 %4986
      %4988 = vrot.lane.b32.xlu0 %v4813, 114
      %v4989 = vpop.permute.xlu0 %4988
      %4990 = vrot.lane.b32.xlu0 %v4815, 114
      %v4991 = vpop.permute.xlu0 %4990
      %4992 = vrot.lane.b32.xlu0 %v4817, 114
      %v4993 = vpop.permute.xlu0 %4992
      %v4994 = vsel %vm2230, %v4979, %v4987
      %v4995 = vsel %vm2230, %v4981, %v4989
      %v4996 = vsel %vm2230, %v4983, %v4991
      %v4997 = vsel %vm2230, %v4985, %v4993
      %v4998 = vsel %vm2230, %v4987, %v4979
      %v4999 = vsel %vm2230, %v4989, %v4981
      %v5000 = vsel %vm2230, %v4991, %v4983
      %v5001 = vsel %vm2230, %v4993, %v4985
      %v5002 = vsel %vm2094, %v4974, %v4994
      %v5003 = vsel %vm2095, %v4970, %v4998
      %v5004 = vsel %vm2094, %v4975, %v4995
      %v5005 = vsel %vm2095, %v4971, %v4999
      %v5006 = vsel %vm2094, %v4976, %v4996
      %v5007 = vsel %vm2095, %v4972, %v5000
      %v5008 = vsel %vm2094, %v4977, %v4997
      %v5009 = vsel %vm2095, %v4973, %v5001
      %5010 = vrot.lane.b32.xlu0 %v4810, 126
      %v5011 = vpop.permute.xlu0 %5010
      %5012 = vrot.lane.b32.xlu0 %v4812, 126
      %v5013 = vpop.permute.xlu0 %5012
      %5014 = vrot.lane.b32.xlu0 %v4814, 126
      %v5015 = vpop.permute.xlu0 %5014
      %5016 = vrot.lane.b32.xlu0 %v4816, 126
      %v5017 = vpop.permute.xlu0 %5016
      %5018 = vrot.lane.b32.xlu0 %v4811, 126
      %v5019 = vpop.permute.xlu0 %5018
      %5020 = vrot.lane.b32.xlu0 %v4813, 126
      %v5021 = vpop.permute.xlu0 %5020
      %5022 = vrot.lane.b32.xlu0 %v4815, 126
      %v5023 = vpop.permute.xlu0 %5022
      %5024 = vrot.lane.b32.xlu0 %v4817, 126
      %v5025 = vpop.permute.xlu0 %5024
      %v5026 = vsel %vm2263, %v5011, %v5019
      %v5027 = vsel %vm2263, %v5013, %v5021
      %v5028 = vsel %vm2263, %v5015, %v5023
      %v5029 = vsel %vm2263, %v5017, %v5025
      %v5030 = vsel %vm2263, %v5019, %v5011
      %v5031 = vsel %vm2263, %v5021, %v5013
      %v5032 = vsel %vm2263, %v5023, %v5015
      %v5033 = vsel %vm2263, %v5025, %v5017
      %5034 = vrot.lane.b32.xlu0 %v4810, 14
      %v5035 = vpop.permute.xlu0 %5034
      %5036 = vrot.lane.b32.xlu0 %v4812, 14
      %v5037 = vpop.permute.xlu0 %5036
      %5038 = vrot.lane.b32.xlu0 %v4814, 14
      %v5039 = vpop.permute.xlu0 %5038
      %5040 = vrot.lane.b32.xlu0 %v4816, 14
      %v5041 = vpop.permute.xlu0 %5040
      %5042 = vrot.lane.b32.xlu0 %v4811, 14
      %v5043 = vpop.permute.xlu0 %5042
      %5044 = vrot.lane.b32.xlu0 %v4813, 14
      %v5045 = vpop.permute.xlu0 %5044
      %5046 = vrot.lane.b32.xlu0 %v4815, 14
      %v5047 = vpop.permute.xlu0 %5046
      %5048 = vrot.lane.b32.xlu0 %v4817, 14
      %v5049 = vpop.permute.xlu0 %5048
      %v5050 = vsel %vm2288, %v5035, %v5043
      %v5051 = vsel %vm2288, %v5037, %v5045
      %v5052 = vsel %vm2288, %v5039, %v5047
      %v5053 = vsel %vm2288, %v5041, %v5049
      %v5054 = vsel %vm2288, %v5043, %v5035
      %v5055 = vsel %vm2288, %v5045, %v5037
      %v5056 = vsel %vm2288, %v5047, %v5039
      %v5057 = vsel %vm2288, %v5049, %v5041
      %v5058 = vsel %vm2179, %v5026, %v5054
      %v5059 = vsel %vm2180, %v5030, %v5050
      %v5060 = vsel %vm2179, %v5027, %v5055
      %v5061 = vsel %vm2180, %v5031, %v5051
      %v5062 = vsel %vm2179, %v5028, %v5056
      %v5063 = vsel %vm2180, %v5032, %v5052
      %v5064 = vsel %vm2179, %v5029, %v5057
      %v5065 = vsel %vm2180, %v5033, %v5053
      %5066 = vrot.lane.b32.xlu0 %v4810, 98
      %v5067 = vpop.permute.xlu0 %5066
      %5068 = vrot.lane.b32.xlu0 %v4812, 98
      %v5069 = vpop.permute.xlu0 %5068
      %5070 = vrot.lane.b32.xlu0 %v4814, 98
      %v5071 = vpop.permute.xlu0 %5070
      %5072 = vrot.lane.b32.xlu0 %v4816, 98
      %v5073 = vpop.permute.xlu0 %5072
      %5074 = vrot.lane.b32.xlu0 %v4811, 98
      %v5075 = vpop.permute.xlu0 %5074
      %5076 = vrot.lane.b32.xlu0 %v4813, 98
      %v5077 = vpop.permute.xlu0 %5076
      %5078 = vrot.lane.b32.xlu0 %v4815, 98
      %v5079 = vpop.permute.xlu0 %5078
      %5080 = vrot.lane.b32.xlu0 %v4817, 98
      %v5081 = vpop.permute.xlu0 %5080
      %v5082 = vsel %vm2321, %v5067, %v5075
      %v5083 = vsel %vm2321, %v5069, %v5077
      %v5084 = vsel %vm2321, %v5071, %v5079
      %v5085 = vsel %vm2321, %v5073, %v5081
      %v5086 = vsel %vm2321, %v5075, %v5067
      %v5087 = vsel %vm2321, %v5077, %v5069
      %v5088 = vsel %vm2321, %v5079, %v5071
      %v5089 = vsel %vm2321, %v5081, %v5073
      %5090 = vrot.lane.b32.xlu0 %v4810, 82
      %v5091 = vpop.permute.xlu0 %5090
      %5092 = vrot.lane.b32.xlu0 %v4812, 82
      %v5093 = vpop.permute.xlu0 %5092
      %5094 = vrot.lane.b32.xlu0 %v4814, 82
      %v5095 = vpop.permute.xlu0 %5094
      %5096 = vrot.lane.b32.xlu0 %v4816, 82
      %v5097 = vpop.permute.xlu0 %5096
      %5098 = vrot.lane.b32.xlu0 %v4811, 82
      %v5099 = vpop.permute.xlu0 %5098
      %5100 = vrot.lane.b32.xlu0 %v4813, 82
      %v5101 = vpop.permute.xlu0 %5100
      %5102 = vrot.lane.b32.xlu0 %v4815, 82
      %v5103 = vpop.permute.xlu0 %5102
      %5104 = vrot.lane.b32.xlu0 %v4817, 82
      %v5105 = vpop.permute.xlu0 %5104
      %v5106 = vsel %vm2346, %v5091, %v5099
      %v5107 = vsel %vm2346, %v5093, %v5101
      %v5108 = vsel %vm2346, %v5095, %v5103
      %v5109 = vsel %vm2346, %v5097, %v5105
      %v5110 = vsel %vm2346, %v5099, %v5091
      %v5111 = vsel %vm2346, %v5101, %v5093
      %v5112 = vsel %vm2346, %v5103, %v5095
      %v5113 = vsel %vm2346, %v5105, %v5097
      %v5114 = vsel %vm2094, %v5082, %v5106
      %v5115 = vsel %vm2095, %v5086, %v5110
      %v5116 = vsel %vm2094, %v5083, %v5107
      %v5117 = vsel %vm2095, %v5087, %v5111
      %v5118 = vsel %vm2094, %v5084, %v5108
      %v5119 = vsel %vm2095, %v5088, %v5112
      %v5120 = vsel %vm2094, %v5085, %v5109
      %v5121 = vsel %vm2095, %v5089, %v5113
      %5122 = vrot.lane.b32.xlu0 %v4810, 96
      %v5123 = vpop.permute.xlu0 %5122
      %5124 = vrot.lane.b32.xlu0 %v4812, 96
      %v5125 = vpop.permute.xlu0 %5124
      %5126 = vrot.lane.b32.xlu0 %v4814, 96
      %v5127 = vpop.permute.xlu0 %5126
      %5128 = vrot.lane.b32.xlu0 %v4816, 96
      %v5129 = vpop.permute.xlu0 %5128
      %5130 = vrot.lane.b32.xlu0 %v4811, 96
      %v5131 = vpop.permute.xlu0 %5130
      %5132 = vrot.lane.b32.xlu0 %v4813, 96
      %v5133 = vpop.permute.xlu0 %5132
      %5134 = vrot.lane.b32.xlu0 %v4815, 96
      %v5135 = vpop.permute.xlu0 %5134
      %5136 = vrot.lane.b32.xlu0 %v4817, 96
      %v5137 = vpop.permute.xlu0 %5136
      %v5138 = vsel %vm2379, %v5123, %v5131
      %v5139 = vsel %vm2379, %v5125, %v5133
      %v5140 = vsel %vm2379, %v5127, %v5135
      %v5141 = vsel %vm2379, %v5129, %v5137
      %v5142 = vsel %vm2379, %v5131, %v5123
      %v5143 = vsel %vm2379, %v5133, %v5125
      %v5144 = vsel %vm2379, %v5135, %v5127
      %v5145 = vsel %vm2379, %v5137, %v5129
      %5146 = vrot.lane.b32.xlu0 %v4810, 94
      %v5147 = vpop.permute.xlu0 %5146
      %5148 = vrot.lane.b32.xlu0 %v4812, 94
      %v5149 = vpop.permute.xlu0 %5148
      %5150 = vrot.lane.b32.xlu0 %v4814, 94
      %v5151 = vpop.permute.xlu0 %5150
      %5152 = vrot.lane.b32.xlu0 %v4816, 94
      %v5153 = vpop.permute.xlu0 %5152
      %5154 = vrot.lane.b32.xlu0 %v4811, 94
      %v5155 = vpop.permute.xlu0 %5154
      %5156 = vrot.lane.b32.xlu0 %v4813, 94
      %v5157 = vpop.permute.xlu0 %5156
      %5158 = vrot.lane.b32.xlu0 %v4815, 94
      %v5159 = vpop.permute.xlu0 %5158
      %5160 = vrot.lane.b32.xlu0 %v4817, 94
      %v5161 = vpop.permute.xlu0 %5160
      %v5162 = vsel %vm2404, %v5147, %v5155
      %v5163 = vsel %vm2404, %v5149, %v5157
      %v5164 = vsel %vm2404, %v5151, %v5159
      %v5165 = vsel %vm2404, %v5153, %v5161
      %v5166 = vsel %vm2404, %v5155, %v5147
      %v5167 = vsel %vm2404, %v5157, %v5149
      %v5168 = vsel %vm2404, %v5159, %v5151
      %v5169 = vsel %vm2404, %v5161, %v5153
      %5170 = vrot.lane.b32.xlu0 %v4810, 110
      %v5171 = vpop.permute.xlu0 %5170
      %5172 = vrot.lane.b32.xlu0 %v4812, 110
      %v5173 = vpop.permute.xlu0 %5172
      %5174 = vrot.lane.b32.xlu0 %v4814, 110
      %v5175 = vpop.permute.xlu0 %5174
      %5176 = vrot.lane.b32.xlu0 %v4816, 110
      %v5177 = vpop.permute.xlu0 %5176
      %5178 = vrot.lane.b32.xlu0 %v4811, 110
      %v5179 = vpop.permute.xlu0 %5178
      %5180 = vrot.lane.b32.xlu0 %v4813, 110
      %v5181 = vpop.permute.xlu0 %5180
      %5182 = vrot.lane.b32.xlu0 %v4815, 110
      %v5183 = vpop.permute.xlu0 %5182
      %5184 = vrot.lane.b32.xlu0 %v4817, 110
      %v5185 = vpop.permute.xlu0 %5184
      %v5186 = vsel %vm2429, %v5171, %v5179
      %v5187 = vsel %vm2429, %v5173, %v5181
      %v5188 = vsel %vm2429, %v5175, %v5183
      %v5189 = vsel %vm2429, %v5177, %v5185
      %v5190 = vsel %vm2429, %v5179, %v5171
      %v5191 = vsel %vm2429, %v5181, %v5173
      %v5192 = vsel %vm2429, %v5183, %v5175
      %v5193 = vsel %vm2429, %v5185, %v5177
      %v5194 = vsel %vm2179, %v5162, %v5186
      %v5195 = vsel %vm2180, %v5166, %v5190
      %v5196 = vsel %vm2179, %v5163, %v5187
      %v5197 = vsel %vm2180, %v5167, %v5191
      %v5198 = vsel %vm2179, %v5164, %v5188
      %v5199 = vsel %vm2180, %v5168, %v5192
      %v5200 = vsel %vm2179, %v5165, %v5189
      %v5201 = vsel %vm2180, %v5169, %v5193
      %5203 = vset.pattern.permute.xlu0 0
      %5204 = vperm.xlu0 %5203, %v3950
      %v5205 = vpop.permute.xlu0 %5204
      %5208 = vset.pattern.permute.xlu0 0
      %5209 = vperm.xlu0 %5208, %v3951
      %v5210 = vpop.permute.xlu0 %5209
      %5213 = vset.pattern.permute.xlu0 0
      %5214 = vperm.xlu0 %5213, %v3952
      %v5215 = vpop.permute.xlu0 %5214
      %5218 = vset.pattern.permute.xlu0 0
      %5219 = vperm.xlu0 %5218, %v3953
      %v5220 = vpop.permute.xlu0 %5219
      %v5223 = vsel %vm1645, %v3940, 0
      %v5226 = vsel %vm1645, %v3943, 0
      %v5229 = vsel %vm1645, %v3946, 0
      %v5232 = vsel %vm1645, %v3949, 0
      %5234 = vmatprep.subr.mxu0 %v5009
      %5235 = vmatpush1.msra.mxu0 %v5008
      %5236 = vmatprep.subr.mxu0 %v5007
      %5237 = vmatpush1.msra.mxu0 %v5006
      %5238 = vmatprep.subr.mxu0 %v5005
      %5239 = vmatpush1.msra.mxu0 %v5004
      %5240 = vmatprep.subr.mxu0 %v5003
      %5241 = vmatpush1.msra.mxu0 %v5002
      %5242 = vmatprep.subr.mxu0 %v4953
      %5243 = vmatpush1.msra.mxu0 %v4952
      %5244 = vmatprep.subr.mxu0 %v4951
      %5245 = vmatpush1.msra.mxu0 %v4950
      %5246 = vmatprep.subr.mxu0 %v4949
      %5247 = vmatpush1.msra.mxu0 %v4948
      %5248 = vmatprep.subr.mxu0 %v4947
      %5249 = vmatpush1.msra.mxu0 %v4946
      %5250 = vmatprep.subr.mxu0 %v4893
      %5251 = vmatpush1.msra.mxu0 %v4897
      %5252 = vmatprep.subr.mxu0 %v4892
      %5253 = vmatpush1.msra.mxu0 %v4896
      %5254 = vmatprep.subr.mxu0 %v4891
      %5255 = vmatpush1.msra.mxu0 %v4895
      %5256 = vmatprep.subr.mxu0 %v4890
      %5257 = vmatpush1.msra.mxu0 %v4894
      %5258 = vmatprep.subr.mxu0 %v4873
      %5259 = vmatpush1.msra.mxu0 %v4872
      %5260 = vmatprep.subr.mxu0 %v4871
      %5261 = vmatpush1.msra.mxu0 %v4870
      %5262 = vmatprep.subr.mxu0 %v4869
      %5263 = vmatpush1.msra.mxu0 %v4868
      %5264 = vmatprep.subr.mxu0 %v4867
      %5265 = vmatpush1.msra.mxu0 %v4866
      %5266 = vmatprep.subr.mxu0 %v5145
      %5267 = vmatpush2.msra.mxu0 %v5141
      %5268 = vmatprep.subr.mxu0 %v5144
      %5269 = vmatpush2.msra.mxu0 %v5140
      %5270 = vmatprep.subr.mxu0 %v5143
      %5271 = vmatpush2.msra.mxu0 %v5139
      %5272 = vmatprep.subr.mxu0 %v5142
      %5273 = vmatpush2.msra.mxu0 %v5138
      %5274 = vmatprep.subr.mxu0 %v5121
      %5275 = vmatpush2.msra.mxu0 %v5120
      %5276 = vmatprep.subr.mxu0 %v5119
      %5277 = vmatpush2.msra.mxu0 %v5118
      %5278 = vmatprep.subr.mxu0 %v5117
      %5279 = vmatpush2.msra.mxu0 %v5116
      %5280 = vmatprep.subr.mxu0 %v5115
      %5281 = vmatpush2.msra.mxu0 %v5114
      %5282 = vmatprep.subr.mxu0 %v5065
      %5283 = vmatpush2.msra.mxu0 %v5064
      %5284 = vmatprep.subr.mxu0 %v5063
      %5285 = vmatpush2.msra.mxu0 %v5062
      %5286 = vmatprep.subr.mxu0 %v5061
      %5287 = vmatpush2.msra.mxu0 %v5060
      %5288 = vmatprep.subr.mxu0 %v5059
      %5289 = vmatpush2.msra.mxu0 %v5058
      %5290 = vmatprep.subr.mxu0 %v4817
      %5291 = vmatpush2.msra.mxu0 %v4816
      %5292 = vmatprep.subr.mxu0 %v4815
      %5293 = vmatpush2.msra.mxu0 %v4814
      %5294 = vmatprep.subr.mxu0 %v4813
      %5295 = vmatpush2.msra.mxu0 %v4812
      %5296 = vmatprep.subr.mxu0 %v4811
      %5297 = vmatpush2.msra.mxu0 %v4810
      %5298 = vmatprep.mubr.f32.mxu0 %v3939
      %5299 = vmatmul.mubr.f32.gmra.mxu0 %v3938
      %v5300 = vpop.f32.mrf.mxu0
      %v5301 = vadd.f32 %v5205, %v5300
      %v5302 = vpop.f32.mrf.mxu0
      %v5303 = vadd.f32 %v5205, %v5302
      %5304 = vmatprep.mubr.f32.mxu0 %v3942
      %5305 = vmatmul.mubr.f32.gmra.mxu0 %v3941
      %v5306 = vpop.f32.mrf.mxu0
      %v5307 = vadd.f32 %v5210, %v5306
      %v5308 = vpop.f32.mrf.mxu0
      %v5309 = vadd.f32 %v5210, %v5308
      %5310 = vmatprep.mubr.f32.mxu0 %v3945
      %5311 = vmatmul.mubr.f32.gmra.mxu0 %v3944
      %v5312 = vpop.f32.mrf.mxu0
      %v5313 = vadd.f32 %v5215, %v5312
      %v5314 = vpop.f32.mrf.mxu0
      %v5315 = vadd.f32 %v5215, %v5314
      %5316 = vmatprep.mubr.f32.mxu0 %v3948
      %5317 = vmatmul.mubr.f32.gmra.mxu0 %v3947
      %v5318 = vpop.f32.mrf.mxu0
      %v5319 = vadd.f32 %v5220, %v5318
      %v5320 = vpop.f32.mrf.mxu0
      %v5321 = vadd.f32 %v5220, %v5320
      %5322 = vdwg.mxu0
      %5323 = vmatprep.subr.mxu0 0.0
      %5324 = vmatpush1.msra.mxu0 0.0
      %5325 = vmatprep.subr.mxu0 0.0
      %5326 = vmatpush1.msra.mxu0 0.0
      %5327 = vmatprep.subr.mxu0 0.0
      %5328 = vmatpush1.msra.mxu0 0.0
      %5329 = vmatprep.subr.mxu0 0.0
      %5330 = vmatpush1.msra.mxu0 0.0
      %5331 = vmatprep.subr.mxu0 0.0
      %5332 = vmatpush1.msra.mxu0 0.0
      %5333 = vmatprep.subr.mxu0 0.0
      %5334 = vmatpush1.msra.mxu0 0.0
      %5335 = vmatprep.subr.mxu0 0.0
      %5336 = vmatpush1.msra.mxu0 0.0
      %5337 = vmatprep.subr.mxu0 0.0
      %5338 = vmatpush1.msra.mxu0 0.0
      %5339 = vmatprep.subr.mxu0 0.0
      %5340 = vmatpush1.msra.mxu0 0.0
      %5341 = vmatprep.subr.mxu0 0.0
      %5342 = vmatpush1.msra.mxu0 0.0
      %5343 = vmatprep.subr.mxu0 0.0
      %5344 = vmatpush1.msra.mxu0 0.0
      %5345 = vmatprep.subr.mxu0 0.0
      %5346 = vmatpush1.msra.mxu0 0.0
      %5347 = vmatprep.subr.mxu0 %v5201
      %5348 = vmatpush1.msra.mxu0 %v5200
      %5349 = vmatprep.subr.mxu0 %v5199
      %5350 = vmatpush1.msra.mxu0 %v5198
      %5351 = vmatprep.subr.mxu0 %v5197
      %5352 = vmatpush1.msra.mxu0 %v5196
      %5353 = vmatprep.subr.mxu0 %v5195
      %5354 = vmatpush1.msra.mxu0 %v5194
      %5355 = vmatprep.subr.mxu0 0.0
      %5356 = vmatpush2.msra.mxu0 0.0
      %5357 = vmatprep.subr.mxu0 0.0
      %5358 = vmatpush2.msra.mxu0 0.0
      %5359 = vmatprep.subr.mxu0 0.0
      %5360 = vmatpush2.msra.mxu0 0.0
      %5361 = vmatprep.subr.mxu0 0.0
      %5362 = vmatpush2.msra.mxu0 0.0
      %5363 = vmatprep.subr.mxu0 0.0
      %5364 = vmatpush2.msra.mxu0 0.0
      %5365 = vmatprep.subr.mxu0 0.0
      %5366 = vmatpush2.msra.mxu0 0.0
      %5367 = vmatprep.subr.mxu0 0.0
      %5368 = vmatpush2.msra.mxu0 0.0
      %5369 = vmatprep.subr.mxu0 0.0
      %5370 = vmatpush2.msra.mxu0 0.0
      %5371 = vmatprep.subr.mxu0 0.0
      %5372 = vmatpush2.msra.mxu0 0.0
      %5373 = vmatprep.subr.mxu0 0.0
      %5374 = vmatpush2.msra.mxu0 0.0
      %5375 = vmatprep.subr.mxu0 0.0
      %5376 = vmatpush2.msra.mxu0 0.0
      %5377 = vmatprep.subr.mxu0 0.0
      %5378 = vmatpush2.msra.mxu0 0.0
      %5379 = vmatprep.subr.mxu0 0.0
      %5380 = vmatpush2.msra.mxu0 0.0
      %5381 = vmatprep.subr.mxu0 0.0
      %5382 = vmatpush2.msra.mxu0 0.0
      %5383 = vmatprep.subr.mxu0 0.0
      %5384 = vmatpush2.msra.mxu0 0.0
      %5385 = vmatprep.subr.mxu0 0.0
      %5386 = vmatpush2.msra.mxu0 0.0
      %5387 = vmatprep.mubr.f32.mxu0 0.0
      %5388 = vmatmul.mubr.f32.gmra.mxu0 %v5223
      %v5389 = vpop.f32.mrf.mxu0
      %v5390 = vadd.f32 %v5301, %v5389
      %v5391 = vpop.f32.mrf.mxu0
      %v5392 = vadd.f32 %v5303, %v5391
      %5393 = vmatprep.mubr.f32.mxu0 0.0
      %5394 = vmatmul.mubr.f32.gmra.mxu0 %v5226
      %v5395 = vpop.f32.mrf.mxu0
      %v5396 = vadd.f32 %v5307, %v5395
      %v5397 = vpop.f32.mrf.mxu0
      %v5398 = vadd.f32 %v5309, %v5397
      %5399 = vmatprep.mubr.f32.mxu0 0.0
      %5400 = vmatmul.mubr.f32.gmra.mxu0 %v5229
      %v5401 = vpop.f32.mrf.mxu0
      %v5402 = vadd.f32 %v5313, %v5401
      %v5403 = vpop.f32.mrf.mxu0
      %v5404 = vadd.f32 %v5315, %v5403
      %5405 = vmatprep.mubr.f32.mxu0 0.0
      %5406 = vmatmul.mubr.f32.gmra.mxu0 %v5232
      %v5407 = vpop.f32.mrf.mxu0
      %v5408 = vadd.f32 %v5319, %v5407
      %v5409 = vpop.f32.mrf.mxu0
      %v5410 = vadd.f32 %v5321, %v5409
      %5411 = vdwg.mxu0
      %v5412 = vmul.f32 %v5390, 0.70710677
      %v5413 = vmul.f32 %v5392, 0.70710677
      %v5414 = vmul.f32 %v5396, 0.70710677
      %v5415 = vmul.f32 %v5398, 0.70710677
      %v5416 = vmul.f32 %v5402, 0.70710677
      %v5417 = vmul.f32 %v5404, 0.70710677
      %v5418 = vmul.f32 %v5408, 0.70710677
      %v5419 = vmul.f32 %v5410, 0.70710677
      %vm5420 = vcmp.ge.f32.partialorder %v5412, 0.0
      %vm5421 = vcmp.ge.f32.partialorder %v5413, 0.0
      %vm5422 = vcmp.ge.f32.partialorder %v5414, 0.0
      %vm5423 = vcmp.ge.f32.partialorder %v5415, 0.0
      %vm5424 = vcmp.ge.f32.partialorder %v5416, 0.0
      %vm5425 = vcmp.ge.f32.partialorder %v5417, 0.0
      %vm5426 = vcmp.ge.f32.partialorder %v5418, 0.0
      %vm5427 = vcmp.ge.f32.partialorder %v5419, 0.0
      %v5428 = vsel %vm5420, 1.0, -1.0
      %v5429 = vsel %vm5421, 1.0, -1.0
      %v5430 = vsel %vm5422, 1.0, -1.0
      %v5431 = vsel %vm5423, 1.0, -1.0
      %v5432 = vsel %vm5424, 1.0, -1.0
      %v5433 = vsel %vm5425, 1.0, -1.0
      %v5434 = vsel %vm5426, 1.0, -1.0
      %v5435 = vsel %vm5427, 1.0, -1.0
      %v5436 = vand.u32 2147483647, %v5412
      %v5437 = vand.u32 2147483647, %v5413
      %v5438 = vand.u32 2147483647, %v5414
      %v5439 = vand.u32 2147483647, %v5415
      %v5440 = vand.u32 2147483647, %v5416
      %v5441 = vand.u32 2147483647, %v5417
      %v5442 = vand.u32 2147483647, %v5418
      %v5443 = vand.u32 2147483647, %v5419
      %v5444 = vmul.f32 %v5436, 0.3275911
      %v5445 = vmul.f32 %v5437, 0.3275911
      %v5446 = vmul.f32 %v5438, 0.3275911
      %v5447 = vmul.f32 %v5439, 0.3275911
      %v5448 = vmul.f32 %v5440, 0.3275911
      %v5449 = vmul.f32 %v5441, 0.3275911
      %v5450 = vmul.f32 %v5442, 0.3275911
      %v5451 = vmul.f32 %v5443, 0.3275911
      %v5452 = vadd.f32 %v5444, 1.0
      %v5453 = vadd.f32 %v5445, 1.0
      %v5454 = vadd.f32 %v5446, 1.0
      %v5455 = vadd.f32 %v5447, 1.0
      %v5456 = vadd.f32 %v5448, 1.0
      %v5457 = vadd.f32 %v5449, 1.0
      %v5458 = vadd.f32 %v5450, 1.0
      %v5459 = vadd.f32 %v5451, 1.0
      %v5460 = vrcp.pop %v5452
      %v5461 = vrcp.pop %v5453
      %v5462 = vrcp.pop %v5454
      %v5463 = vrcp.pop %v5455
      %v5464 = vrcp.pop %v5456
      %v5465 = vrcp.pop %v5457
      %v5466 = vrcp.pop %v5458
      %v5467 = vrcp.pop %v5459
      %v5468 = vmul.f32 %v5460, 1.0614054
      %v5469 = vmul.f32 %v5461, 1.0614054
      %v5470 = vmul.f32 %v5462, 1.0614054
      %v5471 = vmul.f32 %v5463, 1.0614054
      %v5472 = vmul.f32 %v5464, 1.0614054
      %v5473 = vmul.f32 %v5465, 1.0614054
      %v5474 = vmul.f32 %v5466, 1.0614054
      %v5475 = vmul.f32 %v5467, 1.0614054
      %v5476 = vadd.f32 %v5468, -1.4531521
      %v5477 = vadd.f32 %v5469, -1.4531521
      %v5478 = vadd.f32 %v5470, -1.4531521
      %v5479 = vadd.f32 %v5471, -1.4531521
      %v5480 = vadd.f32 %v5472, -1.4531521
      %v5481 = vadd.f32 %v5473, -1.4531521
      %v5482 = vadd.f32 %v5474, -1.4531521
      %v5483 = vadd.f32 %v5475, -1.4531521
      %v5484 = vmul.f32 %v5476, %v5460
      %v5485 = vmul.f32 %v5477, %v5461
      %v5486 = vmul.f32 %v5478, %v5462
      %v5487 = vmul.f32 %v5479, %v5463
      %v5488 = vmul.f32 %v5480, %v5464
      %v5489 = vmul.f32 %v5481, %v5465
      %v5490 = vmul.f32 %v5482, %v5466
      %v5491 = vmul.f32 %v5483, %v5467
      %v5492 = vadd.f32 %v5484, 1.4214138
      %v5493 = vadd.f32 %v5485, 1.4214138
      %v5494 = vadd.f32 %v5486, 1.4214138
      %v5495 = vadd.f32 %v5487, 1.4214138
      %v5496 = vadd.f32 %v5488, 1.4214138
      %v5497 = vadd.f32 %v5489, 1.4214138
      %v5498 = vadd.f32 %v5490, 1.4214138
      %v5499 = vadd.f32 %v5491, 1.4214138
      %v5500 = vmul.f32 %v5492, %v5460
      %v5501 = vmul.f32 %v5493, %v5461
      %v5502 = vmul.f32 %v5494, %v5462
      %v5503 = vmul.f32 %v5495, %v5463
      %v5504 = vmul.f32 %v5496, %v5464
      %v5505 = vmul.f32 %v5497, %v5465
      %v5506 = vmul.f32 %v5498, %v5466
      %v5507 = vmul.f32 %v5499, %v5467
      %v5508 = vadd.f32 %v5500, -0.28449672
      %v5509 = vadd.f32 %v5501, -0.28449672
      %v5510 = vadd.f32 %v5502, -0.28449672
      %v5511 = vadd.f32 %v5503, -0.28449672
      %v5512 = vadd.f32 %v5504, -0.28449672
      %v5513 = vadd.f32 %v5505, -0.28449672
      %v5514 = vadd.f32 %v5506, -0.28449672
      %v5515 = vadd.f32 %v5507, -0.28449672
      %v5516 = vmul.f32 %v5508, %v5460
      %v5517 = vmul.f32 %v5509, %v5461
      %v5518 = vmul.f32 %v5510, %v5462
      %v5519 = vmul.f32 %v5511, %v5463
      %v5520 = vmul.f32 %v5512, %v5464
      %v5521 = vmul.f32 %v5513, %v5465
      %v5522 = vmul.f32 %v5514, %v5466
      %v5523 = vmul.f32 %v5515, %v5467
      %v5524 = vadd.f32 %v5516, 0.2548296
      %v5525 = vadd.f32 %v5517, 0.2548296
      %v5526 = vadd.f32 %v5518, 0.2548296
      %v5527 = vadd.f32 %v5519, 0.2548296
      %v5528 = vadd.f32 %v5520, 0.2548296
      %v5529 = vadd.f32 %v5521, 0.2548296
      %v5530 = vadd.f32 %v5522, 0.2548296
      %v5531 = vadd.f32 %v5523, 0.2548296
      %v5532 = vmul.f32 %v5524, %v5460
      %v5533 = vmul.f32 %v5525, %v5461
      %v5534 = vmul.f32 %v5526, %v5462
      %v5535 = vmul.f32 %v5527, %v5463
      %v5536 = vmul.f32 %v5528, %v5464
      %v5537 = vmul.f32 %v5529, %v5465
      %v5538 = vmul.f32 %v5530, %v5466
      %v5539 = vmul.f32 %v5531, %v5467
      %v5540 = vsub.f32 0.0, %v5436
      %v5541 = vsub.f32 0.0, %v5437
      %v5542 = vsub.f32 0.0, %v5438
      %v5543 = vsub.f32 0.0, %v5439
      %v5544 = vsub.f32 0.0, %v5440
      %v5545 = vsub.f32 0.0, %v5441
      %v5546 = vsub.f32 0.0, %v5442
      %v5547 = vsub.f32 0.0, %v5443
      %v5548 = vmul.f32 %v5540, %v5436
      %v5549 = vmul.f32 %v5541, %v5437
      %v5550 = vmul.f32 %v5542, %v5438
      %v5551 = vmul.f32 %v5543, %v5439
      %v5552 = vmul.f32 %v5544, %v5440
      %v5553 = vmul.f32 %v5545, %v5441
      %v5554 = vmul.f32 %v5546, %v5442
      %v5555 = vmul.f32 %v5547, %v5443
      %v5556 = vmul.f32 %v5548, 1.442695
      %v5557 = vpow.pop %v5556
      %v5558 = vmul.f32 %v5549, 1.442695
      %v5559 = vpow.pop %v5558
      %v5560 = vmul.f32 %v5550, 1.442695
      %v5561 = vpow.pop %v5560
      %v5562 = vmul.f32 %v5551, 1.442695
      %v5563 = vpow.pop %v5562
      %v5564 = vmul.f32 %v5552, 1.442695
      %v5565 = vpow.pop %v5564
      %v5566 = vmul.f32 %v5553, 1.442695
      %v5567 = vpow.pop %v5566
      %v5568 = vmul.f32 %v5554, 1.442695
      %v5569 = vpow.pop %v5568
      %v5570 = vmul.f32 %v5555, 1.442695
      %v5571 = vpow.pop %v5570
      %v5572 = vmul.f32 %v5532, %v5557
      %v5573 = vmul.f32 %v5533, %v5559
      %v5574 = vmul.f32 %v5534, %v5561
      %v5575 = vmul.f32 %v5535, %v5563
      %v5576 = vmul.f32 %v5536, %v5565
      %v5577 = vmul.f32 %v5537, %v5567
      %v5578 = vmul.f32 %v5538, %v5569
      %v5579 = vmul.f32 %v5539, %v5571
      %v5580 = vsub.f32 1.0, %v5572
      %v5581 = vsub.f32 1.0, %v5573
      %v5582 = vsub.f32 1.0, %v5574
      %v5583 = vsub.f32 1.0, %v5575
      %v5584 = vsub.f32 1.0, %v5576
      %v5585 = vsub.f32 1.0, %v5577
      %v5586 = vsub.f32 1.0, %v5578
      %v5587 = vsub.f32 1.0, %v5579
      %v5588 = vmul.f32 %v5428, %v5580
      %v5589 = vmul.f32 %v5429, %v5581
      %v5590 = vmul.f32 %v5430, %v5582
      %v5591 = vmul.f32 %v5431, %v5583
      %v5592 = vmul.f32 %v5432, %v5584
      %v5593 = vmul.f32 %v5433, %v5585
      %v5594 = vmul.f32 %v5434, %v5586
      %v5595 = vmul.f32 %v5435, %v5587
      %v5596 = vmul.f32 %v5390, 0.5
      %v5597 = vmul.f32 %v5392, 0.5
      %v5598 = vmul.f32 %v5396, 0.5
      %v5599 = vmul.f32 %v5398, 0.5
      %v5600 = vmul.f32 %v5402, 0.5
      %v5601 = vmul.f32 %v5404, 0.5
      %v5602 = vmul.f32 %v5408, 0.5
      %v5603 = vmul.f32 %v5410, 0.5
      %v5604 = vadd.f32 %v5588, 1.0
      %v5605 = vadd.f32 %v5589, 1.0
      %v5606 = vadd.f32 %v5590, 1.0
      %v5607 = vadd.f32 %v5591, 1.0
      %v5608 = vadd.f32 %v5592, 1.0
      %v5609 = vadd.f32 %v5593, 1.0
      %v5610 = vadd.f32 %v5594, 1.0
      %v5611 = vadd.f32 %v5595, 1.0
      %v5612 = vmul.f32 %v5596, %v5604
      %v5613 = vmul.f32 %v5597, %v5605
      %v5614 = vmul.f32 %v5598, %v5606
      %v5615 = vmul.f32 %v5599, %v5607
      %v5616 = vmul.f32 %v5600, %v5608
      %v5617 = vmul.f32 %v5601, %v5609
      %v5618 = vmul.f32 %v5602, %v5610
      %v5619 = vmul.f32 %v5603, %v5611
      %5620 = vrot.lane.b32.xlu0 %v5612, 17
      %v5621 = vpop.permute.xlu0 %5620
      %5622 = vrot.lane.b32.xlu0 %v5614, 17
      %v5623 = vpop.permute.xlu0 %5622
      %5624 = vrot.lane.b32.xlu0 %v5616, 17
      %v5625 = vpop.permute.xlu0 %5624
      %5626 = vrot.lane.b32.xlu0 %v5618, 17
      %v5627 = vpop.permute.xlu0 %5626
      %5628 = vrot.lane.b32.xlu0 %v5613, 17
      %v5629 = vpop.permute.xlu0 %5628
      %5630 = vrot.lane.b32.xlu0 %v5615, 17
      %v5631 = vpop.permute.xlu0 %5630
      %5632 = vrot.lane.b32.xlu0 %v5617, 17
      %v5633 = vpop.permute.xlu0 %5632
      %5634 = vrot.lane.b32.xlu0 %v5619, 17
      %v5635 = vpop.permute.xlu0 %5634
      %v5636 = vsel %vm1339, %v5621, %v5629
      %v5637 = vsel %vm1339, %v5623, %v5631
      %v5638 = vsel %vm1339, %v5625, %v5633
      %v5639 = vsel %vm1339, %v5627, %v5635
      %v5640 = vsel %vm1339, %v5629, %v5621
      %v5641 = vsel %vm1339, %v5631, %v5623
      %v5642 = vsel %vm1339, %v5633, %v5625
      %v5643 = vsel %vm1339, %v5635, %v5627
      %5644 = vrot.lane.b32.xlu0 %v5612, 1
      %v5645 = vpop.permute.xlu0 %5644
      %5646 = vrot.lane.b32.xlu0 %v5614, 1
      %v5647 = vpop.permute.xlu0 %5646
      %5648 = vrot.lane.b32.xlu0 %v5616, 1
      %v5649 = vpop.permute.xlu0 %5648
      %5650 = vrot.lane.b32.xlu0 %v5618, 1
      %v5651 = vpop.permute.xlu0 %5650
      %5652 = vrot.lane.b32.xlu0 %v5613, 1
      %v5653 = vpop.permute.xlu0 %5652
      %5654 = vrot.lane.b32.xlu0 %v5615, 1
      %v5655 = vpop.permute.xlu0 %5654
      %5656 = vrot.lane.b32.xlu0 %v5617, 1
      %v5657 = vpop.permute.xlu0 %5656
      %5658 = vrot.lane.b32.xlu0 %v5619, 1
      %v5659 = vpop.permute.xlu0 %5658
      %v5660 = vsel %vm1364, %v5645, %v5653
      %v5661 = vsel %vm1364, %v5647, %v5655
      %v5662 = vsel %vm1364, %v5649, %v5657
      %v5663 = vsel %vm1364, %v5651, %v5659
      %v5664 = vsel %vm1364, %v5653, %v5645
      %v5665 = vsel %vm1364, %v5655, %v5647
      %v5666 = vsel %vm1364, %v5657, %v5649
      %v5667 = vsel %vm1364, %v5659, %v5651
      %v5668 = vsel %vm1373, %v5640, %v5664
      %v5669 = vsel %vm1374, %v5636, %v5660
      %v5670 = vsel %vm1373, %v5641, %v5665
      %v5671 = vsel %vm1374, %v5637, %v5661
      %v5672 = vsel %vm1373, %v5642, %v5666
      %v5673 = vsel %vm1374, %v5638, %v5662
      %v5674 = vsel %vm1373, %v5643, %v5667
      %v5675 = vsel %vm1374, %v5639, %v5663
      %5676 = vrot.lane.b32.xlu0 %v5612, 16
      %v5677 = vpop.permute.xlu0 %5676
      %5678 = vrot.lane.b32.xlu0 %v5614, 16
      %v5679 = vpop.permute.xlu0 %5678
      %5680 = vrot.lane.b32.xlu0 %v5616, 16
      %v5681 = vpop.permute.xlu0 %5680
      %5682 = vrot.lane.b32.xlu0 %v5618, 16
      %v5683 = vpop.permute.xlu0 %5682
      %5684 = vrot.lane.b32.xlu0 %v5613, 16
      %v5685 = vpop.permute.xlu0 %5684
      %5686 = vrot.lane.b32.xlu0 %v5615, 16
      %v5687 = vpop.permute.xlu0 %5686
      %5688 = vrot.lane.b32.xlu0 %v5617, 16
      %v5689 = vpop.permute.xlu0 %5688
      %5690 = vrot.lane.b32.xlu0 %v5619, 16
      %v5691 = vpop.permute.xlu0 %5690
      %v5692 = vsel %vm1399, %v5677, %v5685
      %v5693 = vsel %vm1399, %v5679, %v5687
      %v5694 = vsel %vm1399, %v5681, %v5689
      %v5695 = vsel %vm1399, %v5683, %v5691
      %v5696 = vsel %vm1399, %v5685, %v5677
      %v5697 = vsel %vm1399, %v5687, %v5679
      %v5698 = vsel %vm1399, %v5689, %v5681
      %v5699 = vsel %vm1399, %v5691, %v5683
      %5700 = vrot.lane.b32.xlu0 %v5612, 15
      %v5701 = vpop.permute.xlu0 %5700
      %5702 = vrot.lane.b32.xlu0 %v5614, 15
      %v5703 = vpop.permute.xlu0 %5702
      %5704 = vrot.lane.b32.xlu0 %v5616, 15
      %v5705 = vpop.permute.xlu0 %5704
      %5706 = vrot.lane.b32.xlu0 %v5618, 15
      %v5707 = vpop.permute.xlu0 %5706
      %5708 = vrot.lane.b32.xlu0 %v5613, 15
      %v5709 = vpop.permute.xlu0 %5708
      %5710 = vrot.lane.b32.xlu0 %v5615, 15
      %v5711 = vpop.permute.xlu0 %5710
      %5712 = vrot.lane.b32.xlu0 %v5617, 15
      %v5713 = vpop.permute.xlu0 %5712
      %5714 = vrot.lane.b32.xlu0 %v5619, 15
      %v5715 = vpop.permute.xlu0 %5714
      %v5716 = vsel %vm1424, %v5701, %v5709
      %v5717 = vsel %vm1424, %v5703, %v5711
      %v5718 = vsel %vm1424, %v5705, %v5713
      %v5719 = vsel %vm1424, %v5707, %v5715
      %v5720 = vsel %vm1424, %v5709, %v5701
      %v5721 = vsel %vm1424, %v5711, %v5703
      %v5722 = vsel %vm1424, %v5713, %v5705
      %v5723 = vsel %vm1424, %v5715, %v5707
      %5724 = vrot.lane.b32.xlu0 %v5612, 31
      %v5725 = vpop.permute.xlu0 %5724
      %5726 = vrot.lane.b32.xlu0 %v5614, 31
      %v5727 = vpop.permute.xlu0 %5726
      %5728 = vrot.lane.b32.xlu0 %v5616, 31
      %v5729 = vpop.permute.xlu0 %5728
      %5730 = vrot.lane.b32.xlu0 %v5618, 31
      %v5731 = vpop.permute.xlu0 %5730
      %5732 = vrot.lane.b32.xlu0 %v5613, 31
      %v5733 = vpop.permute.xlu0 %5732
      %5734 = vrot.lane.b32.xlu0 %v5615, 31
      %v5735 = vpop.permute.xlu0 %5734
      %5736 = vrot.lane.b32.xlu0 %v5617, 31
      %v5737 = vpop.permute.xlu0 %5736
      %5738 = vrot.lane.b32.xlu0 %v5619, 31
      %v5739 = vpop.permute.xlu0 %5738
      %v5740 = vsel %vm1449, %v5725, %v5733
      %v5741 = vsel %vm1449, %v5727, %v5735
      %v5742 = vsel %vm1449, %v5729, %v5737
      %v5743 = vsel %vm1449, %v5731, %v5739
      %v5744 = vsel %vm1449, %v5733, %v5725
      %v5745 = vsel %vm1449, %v5735, %v5727
      %v5746 = vsel %vm1449, %v5737, %v5729
      %v5747 = vsel %vm1449, %v5739, %v5731
      %v5748 = vsel %vm1458, %v5720, %v5744
      %v5749 = vsel %vm1459, %v5716, %v5740
      %v5750 = vsel %vm1458, %v5721, %v5745
      %v5751 = vsel %vm1459, %v5717, %v5741
      %v5752 = vsel %vm1458, %v5722, %v5746
      %v5753 = vsel %vm1459, %v5718, %v5742
      %v5754 = vsel %vm1458, %v5723, %v5747
      %v5755 = vsel %vm1459, %v5719, %v5743
      %5756 = vrot.lane.b32.xlu0 %v5612, 113
      %v5757 = vpop.permute.xlu0 %5756
      %5758 = vrot.lane.b32.xlu0 %v5614, 113
      %v5759 = vpop.permute.xlu0 %5758
      %5760 = vrot.lane.b32.xlu0 %v5616, 113
      %v5761 = vpop.permute.xlu0 %5760
      %5762 = vrot.lane.b32.xlu0 %v5618, 113
      %v5763 = vpop.permute.xlu0 %5762
      %5764 = vrot.lane.b32.xlu0 %v5613, 113
      %v5765 = vpop.permute.xlu0 %5764
      %5766 = vrot.lane.b32.xlu0 %v5615, 113
      %v5767 = vpop.permute.xlu0 %5766
      %5768 = vrot.lane.b32.xlu0 %v5617, 113
      %v5769 = vpop.permute.xlu0 %5768
      %5770 = vrot.lane.b32.xlu0 %v5619, 113
      %v5771 = vpop.permute.xlu0 %5770
      %v5772 = vsel %vm1484, %v5757, %v5765
      %v5773 = vsel %vm1484, %v5759, %v5767
      %v5774 = vsel %vm1484, %v5761, %v5769
      %v5775 = vsel %vm1484, %v5763, %v5771
      %v5776 = vsel %vm1484, %v5765, %v5757
      %v5777 = vsel %vm1484, %v5767, %v5759
      %v5778 = vsel %vm1484, %v5769, %v5761
      %v5779 = vsel %vm1484, %v5771, %v5763
      %v5780 = vsel %vm1373, %v5664, %v5772
      %v5781 = vsel %vm1374, %v5660, %v5776
      %v5782 = vsel %vm1373, %v5665, %v5773
      %v5783 = vsel %vm1374, %v5661, %v5777
      %v5784 = vsel %vm1373, %v5666, %v5774
      %v5785 = vsel %vm1374, %v5662, %v5778
      %v5786 = vsel %vm1373, %v5667, %v5775
      %v5787 = vsel %vm1374, %v5663, %v5779
      %5788 = vrot.lane.b32.xlu0 %v5612, 127
      %v5789 = vpop.permute.xlu0 %5788
      %5790 = vrot.lane.b32.xlu0 %v5614, 127
      %v5791 = vpop.permute.xlu0 %5790
      %5792 = vrot.lane.b32.xlu0 %v5616, 127
      %v5793 = vpop.permute.xlu0 %5792
      %5794 = vrot.lane.b32.xlu0 %v5618, 127
      %v5795 = vpop.permute.xlu0 %5794
      %5796 = vrot.lane.b32.xlu0 %v5613, 127
      %v5797 = vpop.permute.xlu0 %5796
      %5798 = vrot.lane.b32.xlu0 %v5615, 127
      %v5799 = vpop.permute.xlu0 %5798
      %5800 = vrot.lane.b32.xlu0 %v5617, 127
      %v5801 = vpop.permute.xlu0 %5800
      %5802 = vrot.lane.b32.xlu0 %v5619, 127
      %v5803 = vpop.permute.xlu0 %5802
      %v5804 = vsel %vm1517, %v5789, %v5797
      %v5805 = vsel %vm1517, %v5791, %v5799
      %v5806 = vsel %vm1517, %v5793, %v5801
      %v5807 = vsel %vm1517, %v5795, %v5803
      %v5808 = vsel %vm1517, %v5797, %v5789
      %v5809 = vsel %vm1517, %v5799, %v5791
      %v5810 = vsel %vm1517, %v5801, %v5793
      %v5811 = vsel %vm1517, %v5803, %v5795
      %v5812 = vsel %vm1458, %v5804, %v5720
      %v5813 = vsel %vm1459, %v5808, %v5716
      %v5814 = vsel %vm1458, %v5805, %v5721
      %v5815 = vsel %vm1459, %v5809, %v5717
      %v5816 = vsel %vm1458, %v5806, %v5722
      %v5817 = vsel %vm1459, %v5810, %v5718
      %v5818 = vsel %vm1458, %v5807, %v5723
      %v5819 = vsel %vm1459, %v5811, %v5719
      %5820 = vrot.lane.b32.xlu0 %v5612, 97
      %v5821 = vpop.permute.xlu0 %5820
      %5822 = vrot.lane.b32.xlu0 %v5614, 97
      %v5823 = vpop.permute.xlu0 %5822
      %5824 = vrot.lane.b32.xlu0 %v5616, 97
      %v5825 = vpop.permute.xlu0 %5824
      %5826 = vrot.lane.b32.xlu0 %v5618, 97
      %v5827 = vpop.permute.xlu0 %5826
      %5828 = vrot.lane.b32.xlu0 %v5613, 97
      %v5829 = vpop.permute.xlu0 %5828
      %5830 = vrot.lane.b32.xlu0 %v5615, 97
      %v5831 = vpop.permute.xlu0 %5830
      %5832 = vrot.lane.b32.xlu0 %v5617, 97
      %v5833 = vpop.permute.xlu0 %5832
      %5834 = vrot.lane.b32.xlu0 %v5619, 97
      %v5835 = vpop.permute.xlu0 %5834
      %v5836 = vsel %vm1550, %v5821, %v5829
      %v5837 = vsel %vm1550, %v5823, %v5831
      %v5838 = vsel %vm1550, %v5825, %v5833
      %v5839 = vsel %vm1550, %v5827, %v5835
      %v5840 = vsel %vm1550, %v5829, %v5821
      %v5841 = vsel %vm1550, %v5831, %v5823
      %v5842 = vsel %vm1550, %v5833, %v5825
      %v5843 = vsel %vm1550, %v5835, %v5827
      %v5844 = vsel %vm1373, %v5772, %v5836
      %v5845 = vsel %vm1374, %v5776, %v5840
      %v5846 = vsel %vm1373, %v5773, %v5837
      %v5847 = vsel %vm1374, %v5777, %v5841
      %v5848 = vsel %vm1373, %v5774, %v5838
      %v5849 = vsel %vm1374, %v5778, %v5842
      %v5850 = vsel %vm1373, %v5775, %v5839
      %v5851 = vsel %vm1374, %v5779, %v5843
      %5852 = vrot.lane.b32.xlu0 %v5612, 112
      %v5853 = vpop.permute.xlu0 %5852
      %5854 = vrot.lane.b32.xlu0 %v5614, 112
      %v5855 = vpop.permute.xlu0 %5854
      %5856 = vrot.lane.b32.xlu0 %v5616, 112
      %v5857 = vpop.permute.xlu0 %5856
      %5858 = vrot.lane.b32.xlu0 %v5618, 112
      %v5859 = vpop.permute.xlu0 %5858
      %5860 = vrot.lane.b32.xlu0 %v5613, 112
      %v5861 = vpop.permute.xlu0 %5860
      %5862 = vrot.lane.b32.xlu0 %v5615, 112
      %v5863 = vpop.permute.xlu0 %5862
      %5864 = vrot.lane.b32.xlu0 %v5617, 112
      %v5865 = vpop.permute.xlu0 %5864
      %5866 = vrot.lane.b32.xlu0 %v5619, 112
      %v5867 = vpop.permute.xlu0 %5866
      %v5868 = vsel %vm1583, %v5853, %v5861
      %v5869 = vsel %vm1583, %v5855, %v5863
      %v5870 = vsel %vm1583, %v5857, %v5865
      %v5871 = vsel %vm1583, %v5859, %v5867
      %v5872 = vsel %vm1583, %v5861, %v5853
      %v5873 = vsel %vm1583, %v5863, %v5855
      %v5874 = vsel %vm1583, %v5865, %v5857
      %v5875 = vsel %vm1583, %v5867, %v5859
      %5876 = vrot.lane.b32.xlu0 %v5612, 111
      %v5877 = vpop.permute.xlu0 %5876
      %5878 = vrot.lane.b32.xlu0 %v5614, 111
      %v5879 = vpop.permute.xlu0 %5878
      %5880 = vrot.lane.b32.xlu0 %v5616, 111
      %v5881 = vpop.permute.xlu0 %5880
      %5882 = vrot.lane.b32.xlu0 %v5618, 111
      %v5883 = vpop.permute.xlu0 %5882
      %5884 = vrot.lane.b32.xlu0 %v5613, 111
      %v5885 = vpop.permute.xlu0 %5884
      %5886 = vrot.lane.b32.xlu0 %v5615, 111
      %v5887 = vpop.permute.xlu0 %5886
      %5888 = vrot.lane.b32.xlu0 %v5617, 111
      %v5889 = vpop.permute.xlu0 %5888
      %5890 = vrot.lane.b32.xlu0 %v5619, 111
      %v5891 = vpop.permute.xlu0 %5890
      %v5892 = vsel %vm1608, %v5877, %v5885
      %v5893 = vsel %vm1608, %v5879, %v5887
      %v5894 = vsel %vm1608, %v5881, %v5889
      %v5895 = vsel %vm1608, %v5883, %v5891
      %v5896 = vsel %vm1608, %v5885, %v5877
      %v5897 = vsel %vm1608, %v5887, %v5879
      %v5898 = vsel %vm1608, %v5889, %v5881
      %v5899 = vsel %vm1608, %v5891, %v5883
      %v5900 = vsel %vm1458, %v5892, %v5804
      %v5901 = vsel %vm1459, %v5896, %v5808
      %v5902 = vsel %vm1458, %v5893, %v5805
      %v5903 = vsel %vm1459, %v5897, %v5809
      %v5904 = vsel %vm1458, %v5894, %v5806
      %v5905 = vsel %vm1459, %v5898, %v5810
      %v5906 = vsel %vm1458, %v5895, %v5807
      %v5907 = vsel %vm1459, %v5899, %v5811
      %5909 = vset.pattern.permute.xlu0 0
      %5910 = vperm.xlu0 %5909, %v3966
      %v5911 = vpop.permute.xlu0 %5910
      %5914 = vset.pattern.permute.xlu0 0
      %5915 = vperm.xlu0 %5914, %v3967
      %v5916 = vpop.permute.xlu0 %5915
      %5919 = vset.pattern.permute.xlu0 0
      %5920 = vperm.xlu0 %5919, %v3968
      %v5921 = vpop.permute.xlu0 %5920
      %5924 = vset.pattern.permute.xlu0 0
      %5925 = vperm.xlu0 %5924, %v3969
      %v5926 = vpop.permute.xlu0 %5925
      %v5929 = vsel %vm1645, %v3956, 0
      %v5932 = vsel %vm1645, %v3959, 0
      %v5935 = vsel %vm1645, %v3962, 0
      %v5938 = vsel %vm1645, %v3965, 0
      %5940 = vmatprep.subr.mxu0 %v5787
      %5941 = vmatpush1.msra.mxu0 %v5786
      %5942 = vmatprep.subr.mxu0 %v5785
      %5943 = vmatpush1.msra.mxu0 %v5784
      %5944 = vmatprep.subr.mxu0 %v5783
      %5945 = vmatpush1.msra.mxu0 %v5782
      %5946 = vmatprep.subr.mxu0 %v5781
      %5947 = vmatpush1.msra.mxu0 %v5780
      %5948 = vmatprep.subr.mxu0 %v5755
      %5949 = vmatpush1.msra.mxu0 %v5754
      %5950 = vmatprep.subr.mxu0 %v5753
      %5951 = vmatpush1.msra.mxu0 %v5752
      %5952 = vmatprep.subr.mxu0 %v5751
      %5953 = vmatpush1.msra.mxu0 %v5750
      %5954 = vmatprep.subr.mxu0 %v5749
      %5955 = vmatpush1.msra.mxu0 %v5748
      %5956 = vmatprep.subr.mxu0 %v5695
      %5957 = vmatpush1.msra.mxu0 %v5699
      %5958 = vmatprep.subr.mxu0 %v5694
      %5959 = vmatpush1.msra.mxu0 %v5698
      %5960 = vmatprep.subr.mxu0 %v5693
      %5961 = vmatpush1.msra.mxu0 %v5697
      %5962 = vmatprep.subr.mxu0 %v5692
      %5963 = vmatpush1.msra.mxu0 %v5696
      %5964 = vmatprep.subr.mxu0 %v5675
      %5965 = vmatpush1.msra.mxu0 %v5674
      %5966 = vmatprep.subr.mxu0 %v5673
      %5967 = vmatpush1.msra.mxu0 %v5672
      %5968 = vmatprep.subr.mxu0 %v5671
      %5969 = vmatpush1.msra.mxu0 %v5670
      %5970 = vmatprep.subr.mxu0 %v5669
      %5971 = vmatpush1.msra.mxu0 %v5668
      %5972 = vmatprep.subr.mxu0 %v5875
      %5973 = vmatpush2.msra.mxu0 %v5871
      %5974 = vmatprep.subr.mxu0 %v5874
      %5975 = vmatpush2.msra.mxu0 %v5870
      %5976 = vmatprep.subr.mxu0 %v5873
      %5977 = vmatpush2.msra.mxu0 %v5869
      %5978 = vmatprep.subr.mxu0 %v5872
      %5979 = vmatpush2.msra.mxu0 %v5868
      %5980 = vmatprep.subr.mxu0 %v5851
      %5981 = vmatpush2.msra.mxu0 %v5850
      %5982 = vmatprep.subr.mxu0 %v5849
      %5983 = vmatpush2.msra.mxu0 %v5848
      %5984 = vmatprep.subr.mxu0 %v5847
      %5985 = vmatpush2.msra.mxu0 %v5846
      %5986 = vmatprep.subr.mxu0 %v5845
      %5987 = vmatpush2.msra.mxu0 %v5844
      %5988 = vmatprep.subr.mxu0 %v5819
      %5989 = vmatpush2.msra.mxu0 %v5818
      %5990 = vmatprep.subr.mxu0 %v5817
      %5991 = vmatpush2.msra.mxu0 %v5816
      %5992 = vmatprep.subr.mxu0 %v5815
      %5993 = vmatpush2.msra.mxu0 %v5814
      %5994 = vmatprep.subr.mxu0 %v5813
      %5995 = vmatpush2.msra.mxu0 %v5812
      %5996 = vmatprep.subr.mxu0 %v5619
      %5997 = vmatpush2.msra.mxu0 %v5618
      %5998 = vmatprep.subr.mxu0 %v5617
      %5999 = vmatpush2.msra.mxu0 %v5616
      %6000 = vmatprep.subr.mxu0 %v5615
      %6001 = vmatpush2.msra.mxu0 %v5614
      %6002 = vmatprep.subr.mxu0 %v5613
      %6003 = vmatpush2.msra.mxu0 %v5612
      %6004 = vmatprep.mubr.f32.mxu0 %v3955
      %6005 = vmatmul.mubr.f32.gmra.mxu0 %v3954
      %v6006 = vpop.f32.mrf.mxu0
      %v6007 = vadd.f32 %v5911, %v6006
      %v6008 = vpop.f32.mrf.mxu0
      %v6009 = vadd.f32 %v5911, %v6008
      %6010 = vmatprep.mubr.f32.mxu0 %v3958
      %6011 = vmatmul.mubr.f32.gmra.mxu0 %v3957
      %v6012 = vpop.f32.mrf.mxu0
      %v6013 = vadd.f32 %v5916, %v6012
      %v6014 = vpop.f32.mrf.mxu0
      %v6015 = vadd.f32 %v5916, %v6014
      %6016 = vmatprep.mubr.f32.mxu0 %v3961
      %6017 = vmatmul.mubr.f32.gmra.mxu0 %v3960
      %v6018 = vpop.f32.mrf.mxu0
      %v6019 = vadd.f32 %v5921, %v6018
      %v6020 = vpop.f32.mrf.mxu0
      %v6021 = vadd.f32 %v5921, %v6020
      %6022 = vmatprep.mubr.f32.mxu0 %v3964
      %6023 = vmatmul.mubr.f32.gmra.mxu0 %v3963
      %v6024 = vpop.f32.mrf.mxu0
      %v6025 = vadd.f32 %v5926, %v6024
      %v6026 = vpop.f32.mrf.mxu0
      %v6027 = vadd.f32 %v5926, %v6026
      %6028 = vdwg.mxu0
      %6029 = vmatprep.subr.mxu0 0.0
      %6030 = vmatpush1.msra.mxu0 0.0
      %6031 = vmatprep.subr.mxu0 0.0
      %6032 = vmatpush1.msra.mxu0 0.0
      %6033 = vmatprep.subr.mxu0 0.0
      %6034 = vmatpush1.msra.mxu0 0.0
      %6035 = vmatprep.subr.mxu0 0.0
      %6036 = vmatpush1.msra.mxu0 0.0
      %6037 = vmatprep.subr.mxu0 0.0
      %6038 = vmatpush1.msra.mxu0 0.0
      %6039 = vmatprep.subr.mxu0 0.0
      %6040 = vmatpush1.msra.mxu0 0.0
      %6041 = vmatprep.subr.mxu0 0.0
      %6042 = vmatpush1.msra.mxu0 0.0
      %6043 = vmatprep.subr.mxu0 0.0
      %6044 = vmatpush1.msra.mxu0 0.0
      %6045 = vmatprep.subr.mxu0 0.0
      %6046 = vmatpush1.msra.mxu0 0.0
      %6047 = vmatprep.subr.mxu0 0.0
      %6048 = vmatpush1.msra.mxu0 0.0
      %6049 = vmatprep.subr.mxu0 0.0
      %6050 = vmatpush1.msra.mxu0 0.0
      %6051 = vmatprep.subr.mxu0 0.0
      %6052 = vmatpush1.msra.mxu0 0.0
      %6053 = vmatprep.subr.mxu0 %v5907
      %6054 = vmatpush1.msra.mxu0 %v5906
      %6055 = vmatprep.subr.mxu0 %v5905
      %6056 = vmatpush1.msra.mxu0 %v5904
      %6057 = vmatprep.subr.mxu0 %v5903
      %6058 = vmatpush1.msra.mxu0 %v5902
      %6059 = vmatprep.subr.mxu0 %v5901
      %6060 = vmatpush1.msra.mxu0 %v5900
      %6061 = vmatprep.subr.mxu0 0.0
      %6062 = vmatpush2.msra.mxu0 0.0
      %6063 = vmatprep.subr.mxu0 0.0
      %6064 = vmatpush2.msra.mxu0 0.0
      %6065 = vmatprep.subr.mxu0 0.0
      %6066 = vmatpush2.msra.mxu0 0.0
      %6067 = vmatprep.subr.mxu0 0.0
      %6068 = vmatpush2.msra.mxu0 0.0
      %6069 = vmatprep.subr.mxu0 0.0
      %6070 = vmatpush2.msra.mxu0 0.0
      %6071 = vmatprep.subr.mxu0 0.0
      %6072 = vmatpush2.msra.mxu0 0.0
      %6073 = vmatprep.subr.mxu0 0.0
      %6074 = vmatpush2.msra.mxu0 0.0
      %6075 = vmatprep.subr.mxu0 0.0
      %6076 = vmatpush2.msra.mxu0 0.0
      %6077 = vmatprep.subr.mxu0 0.0
      %6078 = vmatpush2.msra.mxu0 0.0
      %6079 = vmatprep.subr.mxu0 0.0
      %6080 = vmatpush2.msra.mxu0 0.0
      %6081 = vmatprep.subr.mxu0 0.0
      %6082 = vmatpush2.msra.mxu0 0.0
      %6083 = vmatprep.subr.mxu0 0.0
      %6084 = vmatpush2.msra.mxu0 0.0
      %6085 = vmatprep.subr.mxu0 0.0
      %6086 = vmatpush2.msra.mxu0 0.0
      %6087 = vmatprep.subr.mxu0 0.0
      %6088 = vmatpush2.msra.mxu0 0.0
      %6089 = vmatprep.subr.mxu0 0.0
      %6090 = vmatpush2.msra.mxu0 0.0
      %6091 = vmatprep.subr.mxu0 0.0
      %6092 = vmatpush2.msra.mxu0 0.0
      %6093 = vmatprep.mubr.f32.mxu0 0.0
      %6094 = vmatmul.mubr.f32.gmra.mxu0 %v5929
      %v6095 = vpop.f32.mrf.mxu0
      %v6096 = vadd.f32 %v6007, %v6095
      %v6097 = vpop.f32.mrf.mxu0
      %v6098 = vadd.f32 %v6009, %v6097
      %6099 = vmatprep.mubr.f32.mxu0 0.0
      %6100 = vmatmul.mubr.f32.gmra.mxu0 %v5932
      %v6101 = vpop.f32.mrf.mxu0
      %v6102 = vadd.f32 %v6013, %v6101
      %v6103 = vpop.f32.mrf.mxu0
      %v6104 = vadd.f32 %v6015, %v6103
      %6105 = vmatprep.mubr.f32.mxu0 0.0
      %6106 = vmatmul.mubr.f32.gmra.mxu0 %v5935
      %v6107 = vpop.f32.mrf.mxu0
      %v6108 = vadd.f32 %v6019, %v6107
      %v6109 = vpop.f32.mrf.mxu0
      %v6110 = vadd.f32 %v6021, %v6109
      %6111 = vmatprep.mubr.f32.mxu0 0.0
      %6112 = vmatmul.mubr.f32.gmra.mxu0 %v5938
      %v6113 = vpop.f32.mrf.mxu0
      %v6114 = vadd.f32 %v6025, %v6113
      %v6115 = vpop.f32.mrf.mxu0
      %v6116 = vadd.f32 %v6027, %v6115
      %6117 = vdwg.mxu0
      %v6118 = vadd.f32 %v3906, %v6096
      %v6119 = vadd.f32 %v3907, %v6098
      %v6120 = vadd.f32 %v3908, %v6102
      %v6121 = vadd.f32 %v3909, %v6104
      %v6122 = vadd.f32 %v3910, %v6108
      %v6123 = vadd.f32 %v3911, %v6110
      %v6124 = vadd.f32 %v3912, %v6114
      %v6125 = vadd.f32 %v3913, %v6116
      %v6126 = vadd.f32 %v6118, %v6119
      %6127 = vadd.xlane.f32.xlu0 %v6126
      %v6128 = vpop.xlane.xlu0 %6127
      %v6129 = vadd.f32 %v6120, %v6121
      %6130 = vadd.xlane.f32.xlu0 %v6129
      %v6131 = vpop.xlane.xlu0 %6130
      %v6132 = vadd.f32 %v6122, %v6123
      %6133 = vadd.xlane.f32.xlu0 %v6132
      %v6134 = vpop.xlane.xlu0 %6133
      %v6135 = vadd.f32 %v6124, %v6125
      %6136 = vadd.xlane.f32.xlu0 %v6135
      %v6137 = vpop.xlane.xlu0 %6136
      %v6138 = vadd.f32 %v6128, %v6131
      %v6139 = vadd.f32 %v6138, %v6134
      %v6140 = vadd.f32 %v6139, %v6137
      %v6141 = vrot.slane %v6140, 4
      %v6142 = vadd.f32 %v6140, %v6141
      %v6143 = vrot.slane %v6142, 2
      %v6144 = vadd.f32 %v6142, %v6143
      %v6145 = vrot.slane %v6144, 1
      %v6146 = vadd.f32 %v6144, %v6145
      %v6147 = vmul.f32 %v6146, %v1217
      %v6148 = vsub.f32 %v6118, %v6147
      %v6149 = vsub.f32 %v6119, %v6147
      %v6150 = vsub.f32 %v6120, %v6147
      %v6151 = vsub.f32 %v6121, %v6147
      %v6152 = vsub.f32 %v6122, %v6147
      %v6153 = vsub.f32 %v6123, %v6147
      %v6154 = vsub.f32 %v6124, %v6147
      %v6155 = vsub.f32 %v6125, %v6147
      %v6156 = vmul.f32 %v6148, %v6148
      %v6157 = vmul.f32 %v6149, %v6149
      %v6158 = vmul.f32 %v6150, %v6150
      %v6159 = vmul.f32 %v6151, %v6151
      %v6160 = vmul.f32 %v6152, %v6152
      %v6161 = vmul.f32 %v6153, %v6153
      %v6162 = vmul.f32 %v6154, %v6154
      %v6163 = vmul.f32 %v6155, %v6155
      %v6164 = vadd.f32 %v6156, %v6157
      %6165 = vadd.xlane.f32.xlu0 %v6164
      %v6166 = vpop.xlane.xlu0 %6165
      %v6167 = vadd.f32 %v6158, %v6159
      %6168 = vadd.xlane.f32.xlu0 %v6167
      %v6169 = vpop.xlane.xlu0 %6168
      %v6170 = vadd.f32 %v6160, %v6161
      %6171 = vadd.xlane.f32.xlu0 %v6170
      %v6172 = vpop.xlane.xlu0 %6171
      %v6173 = vadd.f32 %v6162, %v6163
      %6174 = vadd.xlane.f32.xlu0 %v6173
      %v6175 = vpop.xlane.xlu0 %6174
      %v6176 = vadd.f32 %v6166, %v6169
      %v6177 = vadd.f32 %v6176, %v6172
      %v6178 = vadd.f32 %v6177, %v6175
      %v6179 = vrot.slane %v6178, 4
      %v6180 = vadd.f32 %v6178, %v6179
      %v6181 = vrot.slane %v6180, 2
      %v6182 = vadd.f32 %v6180, %v6181
      %v6183 = vrot.slane %v6182, 1
      %v6184 = vadd.f32 %v6182, %v6183
      %v6185 = vmul.f32 %v6184, %v1217
      %v6186 = vadd.f32 %v6185, 1e-05
      %v6187 = vrsqrt.pop %v6186
      %v6188 = vmul.f32 %v6148, %v6187
      %v6189 = vmul.f32 %v6149, %v6187
      %v6190 = vmul.f32 %v6150, %v6187
      %v6191 = vmul.f32 %v6151, %v6187
      %v6192 = vmul.f32 %v6152, %v6187
      %v6193 = vmul.f32 %v6153, %v6187
      %v6194 = vmul.f32 %v6154, %v6187
      %v6195 = vmul.f32 %v6155, %v6187
      %6197 = vset.pattern.permute.xlu0 0
      %6198 = vperm.xlu0 %6197, %v3970
      %v6199 = vpop.permute.xlu0 %6198
      %6202 = vset.pattern.permute.xlu0 0
      %6203 = vperm.xlu0 %6202, %v3971
      %v6204 = vpop.permute.xlu0 %6203
      %6207 = vset.pattern.permute.xlu0 0
      %6208 = vperm.xlu0 %6207, %v3972
      %v6209 = vpop.permute.xlu0 %6208
      %6212 = vset.pattern.permute.xlu0 0
      %6213 = vperm.xlu0 %6212, %v3973
      %v6214 = vpop.permute.xlu0 %6213
      %v6216 = vmul.f32 %v6188, %v6199
      %v6217 = vmul.f32 %v6189, %v6199
      %v6218 = vmul.f32 %v6190, %v6204
      %v6219 = vmul.f32 %v6191, %v6204
      %v6220 = vmul.f32 %v6192, %v6209
      %v6221 = vmul.f32 %v6193, %v6209
      %v6222 = vmul.f32 %v6194, %v6214
      %v6223 = vmul.f32 %v6195, %v6214
      %6225 = vset.pattern.permute.xlu0 0
      %6226 = vperm.xlu0 %6225, %v3974
      %v6227 = vpop.permute.xlu0 %6226
      %6230 = vset.pattern.permute.xlu0 0
      %6231 = vperm.xlu0 %6230, %v3975
      %v6232 = vpop.permute.xlu0 %6231
      %6235 = vset.pattern.permute.xlu0 0
      %6236 = vperm.xlu0 %6235, %v3976
      %v6237 = vpop.permute.xlu0 %6236
      %6240 = vset.pattern.permute.xlu0 0
      %6241 = vperm.xlu0 %6240, %v3977
      %v6242 = vpop.permute.xlu0 %6241
      %v6244 = vadd.f32 %v6216, %v6227
      %v6245 = vadd.f32 %v6217, %v6227
      %v6246 = vadd.f32 %v6218, %v6232
      %v6247 = vadd.f32 %v6219, %v6232
      %v6248 = vadd.f32 %v6220, %v6237
      %v6249 = vadd.f32 %v6221, %v6237
      %v6250 = vadd.f32 %v6222, %v6242
      %v6251 = vadd.f32 %v6223, %v6242
      %v6253 = vsel %vm1645, %v3978, 0
      %v6256 = vsel %vm1645, %v3979, 0
      %v6259 = vsel %vm1645, %v3980, 0
      %v6262 = vsel %vm1645, %v3981, 0
      %6264 = vmatprep.subr.mxu0 0.0
      %6265 = vmatpush1.msra.mxu0 0.0
      %6266 = vmatprep.subr.mxu0 0.0
      %6267 = vmatpush1.msra.mxu0 0.0
      %6268 = vmatprep.subr.mxu0 0.0
      %6269 = vmatpush1.msra.mxu0 0.0
      %6270 = vmatprep.subr.mxu0 0.0
      %6271 = vmatpush1.msra.mxu0 0.0
      %6272 = vmatprep.subr.mxu0 0.0
      %6273 = vmatpush1.msra.mxu0 0.0
      %6274 = vmatprep.subr.mxu0 0.0
      %6275 = vmatpush1.msra.mxu0 0.0
      %6276 = vmatprep.subr.mxu0 0.0
      %6277 = vmatpush1.msra.mxu0 0.0
      %6278 = vmatprep.subr.mxu0 0.0
      %6279 = vmatpush1.msra.mxu0 0.0
      %6280 = vmatprep.subr.mxu0 0.0
      %6281 = vmatpush1.msra.mxu0 0.0
      %6282 = vmatprep.subr.mxu0 0.0
      %6283 = vmatpush1.msra.mxu0 0.0
      %6284 = vmatprep.subr.mxu0 0.0
      %6285 = vmatpush1.msra.mxu0 0.0
      %6286 = vmatprep.subr.mxu0 0.0
      %6287 = vmatpush1.msra.mxu0 0.0
      %6288 = vmatprep.subr.mxu0 %v6251
      %6289 = vmatpush1.msra.mxu0 %v6250
      %6290 = vmatprep.subr.mxu0 %v6249
      %6291 = vmatpush1.msra.mxu0 %v6248
      %6292 = vmatprep.subr.mxu0 %v6247
      %6293 = vmatpush1.msra.mxu0 %v6246
      %6294 = vmatprep.subr.mxu0 %v6245
      %6295 = vmatpush1.msra.mxu0 %v6244
      %6296 = vmatprep.subr.mxu0 0.0
      %6297 = vmatpush2.msra.mxu0 0.0
      %6298 = vmatprep.subr.mxu0 0.0
      %6299 = vmatpush2.msra.mxu0 0.0
      %6300 = vmatprep.subr.mxu0 0.0
      %6301 = vmatpush2.msra.mxu0 0.0
      %6302 = vmatprep.subr.mxu0 0.0
      %6303 = vmatpush2.msra.mxu0 0.0
      %6304 = vmatprep.subr.mxu0 0.0
      %6305 = vmatpush2.msra.mxu0 0.0
      %6306 = vmatprep.subr.mxu0 0.0
      %6307 = vmatpush2.msra.mxu0 0.0
      %6308 = vmatprep.subr.mxu0 0.0
      %6309 = vmatpush2.msra.mxu0 0.0
      %6310 = vmatprep.subr.mxu0 0.0
      %6311 = vmatpush2.msra.mxu0 0.0
      %6312 = vmatprep.subr.mxu0 0.0
      %6313 = vmatpush2.msra.mxu0 0.0
      %6314 = vmatprep.subr.mxu0 0.0
      %6315 = vmatpush2.msra.mxu0 0.0
      %6316 = vmatprep.subr.mxu0 0.0
      %6317 = vmatpush2.msra.mxu0 0.0
      %6318 = vmatprep.subr.mxu0 0.0
      %6319 = vmatpush2.msra.mxu0 0.0
      %6320 = vmatprep.subr.mxu0 0.0
      %6321 = vmatpush2.msra.mxu0 0.0
      %6322 = vmatprep.subr.mxu0 0.0
      %6323 = vmatpush2.msra.mxu0 0.0
      %6324 = vmatprep.subr.mxu0 0.0
      %6325 = vmatpush2.msra.mxu0 0.0
      %6326 = vmatprep.subr.mxu0 0.0
      %6327 = vmatpush2.msra.mxu0 0.0
      %6328 = vmatprep.mubr.f32.mxu0 0.0
      %6329 = vmatmul.mubr.f32.gmra.mxu0 %v6253
      %v6330 = vpop.f32.mrf.mxu0
      %v6331 = vadd.f32 0.0, %v6330
      %v6332 = vpop.f32.mrf.mxu0
      %v6333 = vadd.f32 0.0, %v6332
      %6334 = vmatprep.mubr.f32.mxu0 0.0
      %6335 = vmatmul.mubr.f32.gmra.mxu0 %v6256
      %v6336 = vpop.f32.mrf.mxu0
      %v6337 = vadd.f32 0.0, %v6336
      %v6338 = vpop.f32.mrf.mxu0
      %v6339 = vadd.f32 0.0, %v6338
      %6340 = vmatprep.mubr.f32.mxu0 0.0
      %6341 = vmatmul.mubr.f32.gmra.mxu0 %v6259
      %v6342 = vpop.f32.mrf.mxu0
      %v6343 = vadd.f32 0.0, %v6342
      %v6344 = vpop.f32.mrf.mxu0
      %v6345 = vadd.f32 0.0, %v6344
      %6346 = vmatprep.mubr.f32.mxu0 0.0
      %6347 = vmatmul.mubr.f32.gmra.mxu0 %v6262
      %v6348 = vpop.f32.mrf.mxu0
      %v6349 = vadd.f32 0.0, %v6348
      %v6350 = vpop.f32.mrf.mxu0
      %v6351 = vadd.f32 0.0, %v6350
      %6352 = vdwg.mxu0
      %v6353 = vmul.f32 %v6331, 0.70710677
      %v6354 = vmul.f32 %v6333, 0.70710677
      %v6355 = vmul.f32 %v6337, 0.70710677
      %v6356 = vmul.f32 %v6339, 0.70710677
      %v6357 = vmul.f32 %v6343, 0.70710677
      %v6358 = vmul.f32 %v6345, 0.70710677
      %v6359 = vmul.f32 %v6349, 0.70710677
      %v6360 = vmul.f32 %v6351, 0.70710677
      %vm6361 = vcmp.ge.f32.partialorder %v6353, 0.0
      %vm6362 = vcmp.ge.f32.partialorder %v6354, 0.0
      %vm6363 = vcmp.ge.f32.partialorder %v6355, 0.0
      %vm6364 = vcmp.ge.f32.partialorder %v6356, 0.0
      %vm6365 = vcmp.ge.f32.partialorder %v6357, 0.0
      %vm6366 = vcmp.ge.f32.partialorder %v6358, 0.0
      %vm6367 = vcmp.ge.f32.partialorder %v6359, 0.0
      %vm6368 = vcmp.ge.f32.partialorder %v6360, 0.0
      %v6369 = vsel %vm6361, 1.0, -1.0
      %v6370 = vsel %vm6362, 1.0, -1.0
      %v6371 = vsel %vm6363, 1.0, -1.0
      %v6372 = vsel %vm6364, 1.0, -1.0
      %v6373 = vsel %vm6365, 1.0, -1.0
      %v6374 = vsel %vm6366, 1.0, -1.0
      %v6375 = vsel %vm6367, 1.0, -1.0
      %v6376 = vsel %vm6368, 1.0, -1.0
      %v6377 = vand.u32 2147483647, %v6353
      %v6378 = vand.u32 2147483647, %v6354
      %v6379 = vand.u32 2147483647, %v6355
      %v6380 = vand.u32 2147483647, %v6356
      %v6381 = vand.u32 2147483647, %v6357
      %v6382 = vand.u32 2147483647, %v6358
      %v6383 = vand.u32 2147483647, %v6359
      %v6384 = vand.u32 2147483647, %v6360
      %v6385 = vmul.f32 %v6377, 0.3275911
      %v6386 = vmul.f32 %v6378, 0.3275911
      %v6387 = vmul.f32 %v6379, 0.3275911
      %v6388 = vmul.f32 %v6380, 0.3275911
      %v6389 = vmul.f32 %v6381, 0.3275911
      %v6390 = vmul.f32 %v6382, 0.3275911
      %v6391 = vmul.f32 %v6383, 0.3275911
      %v6392 = vmul.f32 %v6384, 0.3275911
      %v6393 = vadd.f32 %v6385, 1.0
      %v6394 = vadd.f32 %v6386, 1.0
      %v6395 = vadd.f32 %v6387, 1.0
      %v6396 = vadd.f32 %v6388, 1.0
      %v6397 = vadd.f32 %v6389, 1.0
      %v6398 = vadd.f32 %v6390, 1.0
      %v6399 = vadd.f32 %v6391, 1.0
      %v6400 = vadd.f32 %v6392, 1.0
      %v6401 = vrcp.pop %v6393
      %v6402 = vrcp.pop %v6394
      %v6403 = vrcp.pop %v6395
      %v6404 = vrcp.pop %v6396
      %v6405 = vrcp.pop %v6397
      %v6406 = vrcp.pop %v6398
      %v6407 = vrcp.pop %v6399
      %v6408 = vrcp.pop %v6400
      %v6409 = vmul.f32 %v6401, 1.0614054
      %v6410 = vmul.f32 %v6402, 1.0614054
      %v6411 = vmul.f32 %v6403, 1.0614054
      %v6412 = vmul.f32 %v6404, 1.0614054
      %v6413 = vmul.f32 %v6405, 1.0614054
      %v6414 = vmul.f32 %v6406, 1.0614054
      %v6415 = vmul.f32 %v6407, 1.0614054
      %v6416 = vmul.f32 %v6408, 1.0614054
      %v6417 = vadd.f32 %v6409, -1.4531521
      %v6418 = vadd.f32 %v6410, -1.4531521
      %v6419 = vadd.f32 %v6411, -1.4531521
      %v6420 = vadd.f32 %v6412, -1.4531521
      %v6421 = vadd.f32 %v6413, -1.4531521
      %v6422 = vadd.f32 %v6414, -1.4531521
      %v6423 = vadd.f32 %v6415, -1.4531521
      %v6424 = vadd.f32 %v6416, -1.4531521
      %v6425 = vmul.f32 %v6417, %v6401
      %v6426 = vmul.f32 %v6418, %v6402
      %v6427 = vmul.f32 %v6419, %v6403
      %v6428 = vmul.f32 %v6420, %v6404
      %v6429 = vmul.f32 %v6421, %v6405
      %v6430 = vmul.f32 %v6422, %v6406
      %v6431 = vmul.f32 %v6423, %v6407
      %v6432 = vmul.f32 %v6424, %v6408
      %v6433 = vadd.f32 %v6425, 1.4214138
      %v6434 = vadd.f32 %v6426, 1.4214138
      %v6435 = vadd.f32 %v6427, 1.4214138
      %v6436 = vadd.f32 %v6428, 1.4214138
      %v6437 = vadd.f32 %v6429, 1.4214138
      %v6438 = vadd.f32 %v6430, 1.4214138
      %v6439 = vadd.f32 %v6431, 1.4214138
      %v6440 = vadd.f32 %v6432, 1.4214138
      %v6441 = vmul.f32 %v6433, %v6401
      %v6442 = vmul.f32 %v6434, %v6402
      %v6443 = vmul.f32 %v6435, %v6403
      %v6444 = vmul.f32 %v6436, %v6404
      %v6445 = vmul.f32 %v6437, %v6405
      %v6446 = vmul.f32 %v6438, %v6406
      %v6447 = vmul.f32 %v6439, %v6407
      %v6448 = vmul.f32 %v6440, %v6408
      %v6449 = vadd.f32 %v6441, -0.28449672
      %v6450 = vadd.f32 %v6442, -0.28449672
      %v6451 = vadd.f32 %v6443, -0.28449672
      %v6452 = vadd.f32 %v6444, -0.28449672
      %v6453 = vadd.f32 %v6445, -0.28449672
      %v6454 = vadd.f32 %v6446, -0.28449672
      %v6455 = vadd.f32 %v6447, -0.28449672
      %v6456 = vadd.f32 %v6448, -0.28449672
      %v6457 = vmul.f32 %v6449, %v6401
      %v6458 = vmul.f32 %v6450, %v6402
      %v6459 = vmul.f32 %v6451, %v6403
      %v6460 = vmul.f32 %v6452, %v6404
      %v6461 = vmul.f32 %v6453, %v6405
      %v6462 = vmul.f32 %v6454, %v6406
      %v6463 = vmul.f32 %v6455, %v6407
      %v6464 = vmul.f32 %v6456, %v6408
      %v6465 = vadd.f32 %v6457, 0.2548296
      %v6466 = vadd.f32 %v6458, 0.2548296
      %v6467 = vadd.f32 %v6459, 0.2548296
      %v6468 = vadd.f32 %v6460, 0.2548296
      %v6469 = vadd.f32 %v6461, 0.2548296
      %v6470 = vadd.f32 %v6462, 0.2548296
      %v6471 = vadd.f32 %v6463, 0.2548296
      %v6472 = vadd.f32 %v6464, 0.2548296
      %v6473 = vmul.f32 %v6465, %v6401
      %v6474 = vmul.f32 %v6466, %v6402
      %v6475 = vmul.f32 %v6467, %v6403
      %v6476 = vmul.f32 %v6468, %v6404
      %v6477 = vmul.f32 %v6469, %v6405
      %v6478 = vmul.f32 %v6470, %v6406
      %v6479 = vmul.f32 %v6471, %v6407
      %v6480 = vmul.f32 %v6472, %v6408
      %v6481 = vsub.f32 0.0, %v6377
      %v6482 = vsub.f32 0.0, %v6378
      %v6483 = vsub.f32 0.0, %v6379
      %v6484 = vsub.f32 0.0, %v6380
      %v6485 = vsub.f32 0.0, %v6381
      %v6486 = vsub.f32 0.0, %v6382
      %v6487 = vsub.f32 0.0, %v6383
      %v6488 = vsub.f32 0.0, %v6384
      %v6489 = vmul.f32 %v6481, %v6377
      %v6490 = vmul.f32 %v6482, %v6378
      %v6491 = vmul.f32 %v6483, %v6379
      %v6492 = vmul.f32 %v6484, %v6380
      %v6493 = vmul.f32 %v6485, %v6381
      %v6494 = vmul.f32 %v6486, %v6382
      %v6495 = vmul.f32 %v6487, %v6383
      %v6496 = vmul.f32 %v6488, %v6384
      %v6497 = vmul.f32 %v6489, 1.442695
      %v6498 = vpow.pop %v6497
      %v6499 = vmul.f32 %v6490, 1.442695
      %v6500 = vpow.pop %v6499
      %v6501 = vmul.f32 %v6491, 1.442695
      %v6502 = vpow.pop %v6501
      %v6503 = vmul.f32 %v6492, 1.442695
      %v6504 = vpow.pop %v6503
      %v6505 = vmul.f32 %v6493, 1.442695
      %v6506 = vpow.pop %v6505
      %v6507 = vmul.f32 %v6494, 1.442695
      %v6508 = vpow.pop %v6507
      %v6509 = vmul.f32 %v6495, 1.442695
      %v6510 = vpow.pop %v6509
      %v6511 = vmul.f32 %v6496, 1.442695
      %v6512 = vpow.pop %v6511
      %v6513 = vmul.f32 %v6473, %v6498
      %v6514 = vmul.f32 %v6474, %v6500
      %v6515 = vmul.f32 %v6475, %v6502
      %v6516 = vmul.f32 %v6476, %v6504
      %v6517 = vmul.f32 %v6477, %v6506
      %v6518 = vmul.f32 %v6478, %v6508
      %v6519 = vmul.f32 %v6479, %v6510
      %v6520 = vmul.f32 %v6480, %v6512
      %v6521 = vsub.f32 1.0, %v6513
      %v6522 = vsub.f32 1.0, %v6514
      %v6523 = vsub.f32 1.0, %v6515
      %v6524 = vsub.f32 1.0, %v6516
      %v6525 = vsub.f32 1.0, %v6517
      %v6526 = vsub.f32 1.0, %v6518
      %v6527 = vsub.f32 1.0, %v6519
      %v6528 = vsub.f32 1.0, %v6520
      %v6529 = vmul.f32 %v6369, %v6521
      %v6530 = vmul.f32 %v6370, %v6522
      %v6531 = vmul.f32 %v6371, %v6523
      %v6532 = vmul.f32 %v6372, %v6524
      %v6533 = vmul.f32 %v6373, %v6525
      %v6534 = vmul.f32 %v6374, %v6526
      %v6535 = vmul.f32 %v6375, %v6527
      %v6536 = vmul.f32 %v6376, %v6528
      %v6537 = vmul.f32 %v6331, 0.5
      %v6538 = vmul.f32 %v6333, 0.5
      %v6539 = vmul.f32 %v6337, 0.5
      %v6540 = vmul.f32 %v6339, 0.5
      %v6541 = vmul.f32 %v6343, 0.5
      %v6542 = vmul.f32 %v6345, 0.5
      %v6543 = vmul.f32 %v6349, 0.5
      %v6544 = vmul.f32 %v6351, 0.5
      %v6545 = vadd.f32 %v6529, 1.0
      %v6546 = vadd.f32 %v6530, 1.0
      %v6547 = vadd.f32 %v6531, 1.0
      %v6548 = vadd.f32 %v6532, 1.0
      %v6549 = vadd.f32 %v6533, 1.0
      %v6550 = vadd.f32 %v6534, 1.0
      %v6551 = vadd.f32 %v6535, 1.0
      %v6552 = vadd.f32 %v6536, 1.0
      %v6553 = vmul.f32 %v6537, %v6545
      %v6554 = vmul.f32 %v6538, %v6546
      %v6555 = vmul.f32 %v6539, %v6547
      %v6556 = vmul.f32 %v6540, %v6548
      %v6557 = vmul.f32 %v6541, %v6549
      %v6558 = vmul.f32 %v6542, %v6550
      %v6559 = vmul.f32 %v6543, %v6551
      %v6560 = vmul.f32 %v6544, %v6552
      %v6562 = vsel %vm1645, %v3982, 0
      %v6565 = vsel %vm1645, %v3983, 0
      %v6568 = vsel %vm1645, %v3984, 0
      %v6571 = vsel %vm1645, %v3985, 0
      %6573 = vmatprep.subr.mxu0 0.0
      %6574 = vmatpush1.msra.mxu0 0.0
      %6575 = vmatprep.subr.mxu0 0.0
      %6576 = vmatpush1.msra.mxu0 0.0
      %6577 = vmatprep.subr.mxu0 0.0
      %6578 = vmatpush1.msra.mxu0 0.0
      %6579 = vmatprep.subr.mxu0 0.0
      %6580 = vmatpush1.msra.mxu0 0.0
      %6581 = vmatprep.subr.mxu0 0.0
      %6582 = vmatpush1.msra.mxu0 0.0
      %6583 = vmatprep.subr.mxu0 0.0
      %6584 = vmatpush1.msra.mxu0 0.0
      %6585 = vmatprep.subr.mxu0 0.0
      %6586 = vmatpush1.msra.mxu0 0.0
      %6587 = vmatprep.subr.mxu0 0.0
      %6588 = vmatpush1.msra.mxu0 0.0
      %6589 = vmatprep.subr.mxu0 0.0
      %6590 = vmatpush1.msra.mxu0 0.0
      %6591 = vmatprep.subr.mxu0 0.0
      %6592 = vmatpush1.msra.mxu0 0.0
      %6593 = vmatprep.subr.mxu0 0.0
      %6594 = vmatpush1.msra.mxu0 0.0
      %6595 = vmatprep.subr.mxu0 0.0
      %6596 = vmatpush1.msra.mxu0 0.0
      %6597 = vmatprep.subr.mxu0 %v6560
      %6598 = vmatpush1.msra.mxu0 %v6559
      %6599 = vmatprep.subr.mxu0 %v6558
      %6600 = vmatpush1.msra.mxu0 %v6557
      %6601 = vmatprep.subr.mxu0 %v6556
      %6602 = vmatpush1.msra.mxu0 %v6555
      %6603 = vmatprep.subr.mxu0 %v6554
      %6604 = vmatpush1.msra.mxu0 %v6553
      %6605 = vmatprep.subr.mxu0 0.0
      %6606 = vmatpush2.msra.mxu0 0.0
      %6607 = vmatprep.subr.mxu0 0.0
      %6608 = vmatpush2.msra.mxu0 0.0
      %6609 = vmatprep.subr.mxu0 0.0
      %6610 = vmatpush2.msra.mxu0 0.0
      %6611 = vmatprep.subr.mxu0 0.0
      %6612 = vmatpush2.msra.mxu0 0.0
      %6613 = vmatprep.subr.mxu0 0.0
      %6614 = vmatpush2.msra.mxu0 0.0
      %6615 = vmatprep.subr.mxu0 0.0
      %6616 = vmatpush2.msra.mxu0 0.0
      %6617 = vmatprep.subr.mxu0 0.0
      %6618 = vmatpush2.msra.mxu0 0.0
      %6619 = vmatprep.subr.mxu0 0.0
      %6620 = vmatpush2.msra.mxu0 0.0
      %6621 = vmatprep.subr.mxu0 0.0
      %6622 = vmatpush2.msra.mxu0 0.0
      %6623 = vmatprep.subr.mxu0 0.0
      %6624 = vmatpush2.msra.mxu0 0.0
      %6625 = vmatprep.subr.mxu0 0.0
      %6626 = vmatpush2.msra.mxu0 0.0
      %6627 = vmatprep.subr.mxu0 0.0
      %6628 = vmatpush2.msra.mxu0 0.0
      %6629 = vmatprep.subr.mxu0 0.0
      %6630 = vmatpush2.msra.mxu0 0.0
      %6631 = vmatprep.subr.mxu0 0.0
      %6632 = vmatpush2.msra.mxu0 0.0
      %6633 = vmatprep.subr.mxu0 0.0
      %6634 = vmatpush2.msra.mxu0 0.0
      %6635 = vmatprep.subr.mxu0 0.0
      %6636 = vmatpush2.msra.mxu0 0.0
      %6637 = vmatprep.mubr.f32.mxu0 0.0
      %6638 = vmatmul.mubr.f32.gmra.mxu0 %v6562
      %v6639 = vpop.f32.mrf.mxu0
      %v6640 = vadd.f32 0.0, %v6639
      %v6641 = vpop.f32.mrf.mxu0
      %v6642 = vadd.f32 0.0, %v6641
      %6643 = vmatprep.mubr.f32.mxu0 0.0
      %6644 = vmatmul.mubr.f32.gmra.mxu0 %v6565
      %v6645 = vpop.f32.mrf.mxu0
      %v6646 = vadd.f32 0.0, %v6645
      %v6647 = vpop.f32.mrf.mxu0
      %v6648 = vadd.f32 0.0, %v6647
      %6649 = vmatprep.mubr.f32.mxu0 0.0
      %6650 = vmatmul.mubr.f32.gmra.mxu0 %v6568
      %v6651 = vpop.f32.mrf.mxu0
      %v6652 = vadd.f32 0.0, %v6651
      %v6653 = vpop.f32.mrf.mxu0
      %v6654 = vadd.f32 0.0, %v6653
      %6655 = vmatprep.mubr.f32.mxu0 0.0
      %6656 = vmatmul.mubr.f32.gmra.mxu0 %v6571
      %v6657 = vpop.f32.mrf.mxu0
      %v6658 = vadd.f32 0.0, %v6657
      %v6659 = vpop.f32.mrf.mxu0
      %v6660 = vadd.f32 0.0, %v6659
      %6661 = vdwg.mxu0
      %v6662 = vadd.f32 %v6118, %v6640
      %v6663 = vadd.f32 %v6119, %v6642
      %v6664 = vadd.f32 %v6120, %v6646
      %v6665 = vadd.f32 %v6121, %v6648
      %v6666 = vadd.f32 %v6122, %v6652
      %v6667 = vadd.f32 %v6123, %v6654
      %v6668 = vadd.f32 %v6124, %v6658
      %v6669 = vadd.f32 %v6125, %v6660
      %v6670 = vld [vmem:[%s55] sm:$0xff]
      %v6671 = vld [vmem:[%s55 + $0x8] sm:$0xff]
      %v6672 = vld [vmem:[%s55 + $0x10] sm:$0xff]
      %v6673 = vld [vmem:[%s55 + $0x18] sm:$0xff]
      %v6674 = vld [vmem:[%s57] sm:$0xff]
      %v6675 = vld [vmem:[%s57 + $0x8] sm:$0xff]
      %v6676 = vld [vmem:[%s57 + $0x10] sm:$0xff]
      %v6677 = vld [vmem:[%s57 + $0x18] sm:$0xff]
      %v6678 = vld [vmem:[%s59] sm:$0xf]
      %v6679 = vld [vmem:[%s61] sm:$0xf]
      %v6680 = vadd.f32 %v6662, %v6663
      %6681 = vadd.xlane.f32.xlu0 %v6680
      %v6682 = vpop.xlane.xlu0 %6681
      %v6683 = vadd.f32 %v6664, %v6665
      %6684 = vadd.xlane.f32.xlu0 %v6683
      %v6685 = vpop.xlane.xlu0 %6684
      %v6686 = vadd.f32 %v6666, %v6667
      %6687 = vadd.xlane.f32.xlu0 %v6686
      %v6688 = vpop.xlane.xlu0 %6687
      %v6689 = vadd.f32 %v6668, %v6669
      %6690 = vadd.xlane.f32.xlu0 %v6689
      %v6691 = vpop.xlane.xlu0 %6690
      %v6692 = vadd.f32 %v6682, %v6685
      %v6693 = vadd.f32 %v6692, %v6688
      %v6694 = vadd.f32 %v6693, %v6691
      %v6695 = vrot.slane %v6694, 4
      %v6696 = vadd.f32 %v6694, %v6695
      %v6697 = vrot.slane %v6696, 2
      %v6698 = vadd.f32 %v6696, %v6697
      %v6699 = vrot.slane %v6698, 1
      %v6700 = vadd.f32 %v6698, %v6699
      %v6701 = vmul.f32 %v6700, %v1217
      %v6702 = vsub.f32 %v6662, %v6701
      %v6703 = vsub.f32 %v6663, %v6701
      %v6704 = vsub.f32 %v6664, %v6701
      %v6705 = vsub.f32 %v6665, %v6701
      %v6706 = vsub.f32 %v6666, %v6701
      %v6707 = vsub.f32 %v6667, %v6701
      %v6708 = vsub.f32 %v6668, %v6701
      %v6709 = vsub.f32 %v6669, %v6701
      %v6710 = vmul.f32 %v6702, %v6702
      %v6711 = vmul.f32 %v6703, %v6703
      %v6712 = vmul.f32 %v6704, %v6704
      %v6713 = vmul.f32 %v6705, %v6705
      %v6714 = vmul.f32 %v6706, %v6706
      %v6715 = vmul.f32 %v6707, %v6707
      %v6716 = vmul.f32 %v6708, %v6708
      %v6717 = vmul.f32 %v6709, %v6709
      %v6718 = vadd.f32 %v6710, %v6711
      %6719 = vadd.xlane.f32.xlu0 %v6718
      %v6720 = vpop.xlane.xlu0 %6719
      %v6721 = vadd.f32 %v6712, %v6713
      %6722 = vadd.xlane.f32.xlu0 %v6721
      %v6723 = vpop.xlane.xlu0 %6722
      %v6724 = vadd.f32 %v6714, %v6715
      %6725 = vadd.xlane.f32.xlu0 %v6724
      %v6726 = vpop.xlane.xlu0 %6725
      %v6727 = vadd.f32 %v6716, %v6717
      %6728 = vadd.xlane.f32.xlu0 %v6727
      %v6729 = vpop.xlane.xlu0 %6728
      %v6730 = vadd.f32 %v6720, %v6723
      %v6731 = vadd.f32 %v6730, %v6726
      %v6732 = vadd.f32 %v6731, %v6729
      %v6733 = vrot.slane %v6732, 4
      %v6734 = vadd.f32 %v6732, %v6733
      %v6735 = vrot.slane %v6734, 2
      %v6736 = vadd.f32 %v6734, %v6735
      %v6737 = vrot.slane %v6736, 1
      %v6738 = vadd.f32 %v6736, %v6737
      %v6739 = vmul.f32 %v6738, %v1217
      %v6740 = vadd.f32 %v6739, 1e-05
      %v6741 = vrsqrt.pop %v6740
      %v6742 = vmul.f32 %v6702, %v6741
      %v6743 = vmul.f32 %v6703, %v6741
      %v6744 = vmul.f32 %v6704, %v6741
      %v6745 = vmul.f32 %v6705, %v6741
      %v6746 = vmul.f32 %v6706, %v6741
      %v6747 = vmul.f32 %v6707, %v6741
      %v6748 = vmul.f32 %v6708, %v6741
      %v6749 = vmul.f32 %v6709, %v6741
      %6751 = vset.pattern.permute.xlu0 0
      %6752 = vperm.xlu0 %6751, %v6670
      %v6753 = vpop.permute.xlu0 %6752
      %6756 = vset.pattern.permute.xlu0 0
      %6757 = vperm.xlu0 %6756, %v6671
      %v6758 = vpop.permute.xlu0 %6757
      %6761 = vset.pattern.permute.xlu0 0
      %6762 = vperm.xlu0 %6761, %v6672
      %v6763 = vpop.permute.xlu0 %6762
      %6766 = vset.pattern.permute.xlu0 0
      %6767 = vperm.xlu0 %6766, %v6673
      %v6768 = vpop.permute.xlu0 %6767
      %v6770 = vmul.f32 %v6742, %v6753
      %v6771 = vmul.f32 %v6743, %v6753
      %v6772 = vmul.f32 %v6744, %v6758
      %v6773 = vmul.f32 %v6745, %v6758
      %v6774 = vmul.f32 %v6746, %v6763
      %v6775 = vmul.f32 %v6747, %v6763
      %v6776 = vmul.f32 %v6748, %v6768
      %v6777 = vmul.f32 %v6749, %v6768
      %6779 = vset.pattern.permute.xlu0 0
      %6780 = vperm.xlu0 %6779, %v6674
      %v6781 = vpop.permute.xlu0 %6780
      %6784 = vset.pattern.permute.xlu0 0
      %6785 = vperm.xlu0 %6784, %v6675
      %v6786 = vpop.permute.xlu0 %6785
      %6789 = vset.pattern.permute.xlu0 0
      %6790 = vperm.xlu0 %6789, %v6676
      %v6791 = vpop.permute.xlu0 %6790
      %6794 = vset.pattern.permute.xlu0 0
      %6795 = vperm.xlu0 %6794, %v6677
      %v6796 = vpop.permute.xlu0 %6795
      %v6798 = vadd.f32 %v6770, %v6781
      %v6799 = vadd.f32 %v6771, %v6781
      %v6800 = vadd.f32 %v6772, %v6786
      %v6801 = vadd.f32 %v6773, %v6786
      %v6802 = vadd.f32 %v6774, %v6791
      %v6803 = vadd.f32 %v6775, %v6791
      %v6804 = vadd.f32 %v6776, %v6796
      %v6805 = vadd.f32 %v6777, %v6796
      %6807 = vset.pattern.permute.xlu0 0
      %6808 = vperm.xlu0 %6807, %v6679
      %v6809 = vpop.permute.xlu0 %6808
      %v6812 = vsel %vm1645, %v6678, 0
      %6814 = vmatprep.subr.mxu0 0.0
      %6815 = vmatpush1.msra.mxu0 0.0
      %6816 = vmatprep.subr.mxu0 0.0
      %6817 = vmatpush1.msra.mxu0 0.0
      %6818 = vmatprep.subr.mxu0 0.0
      %6819 = vmatpush1.msra.mxu0 0.0
      %6820 = vmatprep.subr.mxu0 0.0
      %6821 = vmatpush1.msra.mxu0 0.0
      %6822 = vmatprep.subr.mxu0 0.0
      %6823 = vmatpush1.msra.mxu0 0.0
      %6824 = vmatprep.subr.mxu0 0.0
      %6825 = vmatpush1.msra.mxu0 0.0
      %6826 = vmatprep.subr.mxu0 0.0
      %6827 = vmatpush1.msra.mxu0 0.0
      %6828 = vmatprep.subr.mxu0 0.0
      %6829 = vmatpush1.msra.mxu0 0.0
      %6830 = vmatprep.subr.mxu0 0.0
      %6831 = vmatpush1.msra.mxu0 0.0
      %6832 = vmatprep.subr.mxu0 0.0
      %6833 = vmatpush1.msra.mxu0 0.0
      %6834 = vmatprep.subr.mxu0 0.0
      %6835 = vmatpush1.msra.mxu0 0.0
      %6836 = vmatprep.subr.mxu0 0.0
      %6837 = vmatpush1.msra.mxu0 0.0
      %6838 = vmatprep.subr.mxu0 %v6805
      %6839 = vmatpush1.msra.mxu0 %v6804
      %6840 = vmatprep.subr.mxu0 %v6803
      %6841 = vmatpush1.msra.mxu0 %v6802
      %6842 = vmatprep.subr.mxu0 %v6801
      %6843 = vmatpush1.msra.mxu0 %v6800
      %6844 = vmatprep.subr.mxu0 %v6799
      %6845 = vmatpush1.msra.mxu0 %v6798
      %6846 = vmatprep.subr.mxu0 0.0
      %6847 = vmatpush2.msra.mxu0 0.0
      %6848 = vmatprep.subr.mxu0 0.0
      %6849 = vmatpush2.msra.mxu0 0.0
      %6850 = vmatprep.subr.mxu0 0.0
      %6851 = vmatpush2.msra.mxu0 0.0
      %6852 = vmatprep.subr.mxu0 0.0
      %6853 = vmatpush2.msra.mxu0 0.0
      %6854 = vmatprep.subr.mxu0 0.0
      %6855 = vmatpush2.msra.mxu0 0.0
      %6856 = vmatprep.subr.mxu0 0.0
      %6857 = vmatpush2.msra.mxu0 0.0
      %6858 = vmatprep.subr.mxu0 0.0
      %6859 = vmatpush2.msra.mxu0 0.0
      %6860 = vmatprep.subr.mxu0 0.0
      %6861 = vmatpush2.msra.mxu0 0.0
      %6862 = vmatprep.subr.mxu0 0.0
      %6863 = vmatpush2.msra.mxu0 0.0
      %6864 = vmatprep.subr.mxu0 0.0
      %6865 = vmatpush2.msra.mxu0 0.0
      %6866 = vmatprep.subr.mxu0 0.0
      %6867 = vmatpush2.msra.mxu0 0.0
      %6868 = vmatprep.subr.mxu0 0.0
      %6869 = vmatpush2.msra.mxu0 0.0
      %6870 = vmatprep.subr.mxu0 0.0
      %6871 = vmatpush2.msra.mxu0 0.0
      %6872 = vmatprep.subr.mxu0 0.0
      %6873 = vmatpush2.msra.mxu0 0.0
      %6874 = vmatprep.subr.mxu0 0.0
      %6875 = vmatpush2.msra.mxu0 0.0
      %6876 = vmatprep.subr.mxu0 0.0
      %6877 = vmatpush2.msra.mxu0 0.0
      %6878 = vmatprep.mubr.f32.mxu0 0.0
      %6879 = vmatmul.mubr.f32.gmra.mxu0 %v6812
      %v6880 = vpop.f32.mrf.mxu0
      %v6881 = vadd.f32 %v6809, %v6880
      %v6882 = vpop.f32.mrf.mxu0
      %v6883 = vadd.f32 %v6809, %v6882
      %6884 = vdwg.mxu0
      %v6887 = vcombine.low %v6881, %v6883
      %6889 = vst [vmem:[%s958] sm:$0xff] %v6887
      %p6890 = scmp.lt.s32.totalorder %s74, 1
      %s6891 = scalar_select %p6890, %s74, 1
      %s6892 = smul.addr %s6891, 2
      %s6893 = smul.addr %s6892, 4
      %s6894 = scalar_lea.vmem %s63, %s6893
      // Predicated region
      $region145: #{simple_cnn_forward.1} parent=143 // pred_check
        %p6895 = pneg %p748
      $region146: #{simple_cnn_forward.1} parent=143 // pred_check_branch
        %6897 = sbr.rel (%p6895) target = $region148
      $region147: #{simple_cnn_forward.1} parent=143 // pred_region
        _
      $region148: #{simple_cnn_forward.1} parent=143 // pred_fallthru
        _
    $region144: #{simple_cnn_forward.1} parent=5 // pred_fallthru
      _
    %p6898 = scmp.le.s32.totalorder 2, %s69
    // Predicated region
    $region149: #{simple_cnn_forward.1} parent=5 // pred_check
      %p6899 = pneg %p6898
    $region150: #{simple_cnn_forward.1} parent=5 // pred_check_branch
      %6901 = sbr.rel (%p6899) target = $region152
    $region151: #{simple_cnn_forward.1} parent=5 // pred_region
      %s6902 = ssub.s32 %s69, 2
      // Predicated region
      $region153: #{simple_cnn_forward.1} parent=151 // pred_check
        %p6903 = pneg %p754
      $region154: #{simple_cnn_forward.1} parent=151 // pred_check_branch
        %6905 = sbr.rel (%p6903) target = $region156
      $region155: #{simple_cnn_forward.1} parent=151 // pred_region
        %p6906 = scmp.lt.s32.totalorder %s75, 1
        %s6907 = scalar_select %p6906, %s75, 1
        %s6908 = smul.addr %s6907, 2
        %s6909 = smul.addr %s6908, 4
        %s6910 = scalar_lea.vmem %s63, %s6909
      $region156: #{simple_cnn_forward.1} parent=151 // pred_fallthru
        _
    $region152: #{simple_cnn_forward.1} parent=5 // pred_fallthru
      _
  $region6: #{simple_cnn_forward.1} parent=0 // loop_footer
    %s73 = sadd.s32 1, %s69
  $region7: #{simple_cnn_forward.1} parent=0 // loop_footer_branch
    %68 = sbr.rel target = $region3
  $region8: #{simple_cnn_forward.1} parent=0 // loop_exit
    _

</llo_original>
